<compile_context>
chip_gen: v7x
topology: tpu7x:2x2x1
jax: 0.10.0
libtpu: 0.0.40
codegen_flags: <defaults>
</compile_context>

<pallas_src>
import functools

import jax
import jax.numpy as jnp
from jax.experimental import pallas as pl
from jax.experimental.pallas import tpu as pltpu


# ----------------------------------------------------------------------------
# helpers
# ----------------------------------------------------------------------------
@functools.lru_cache(maxsize=None)
def _vmem_limit_bytes():
    # 128 MiB chips (v5e/v6e) -> 96 MiB scoped limit; 64 MiB chips (v7x) -> 48 MiB.
    try:
        cap = int(pltpu.get_tpu_info().vmem_capacity_bytes)
        return int(min(96 * 1024 * 1024, max(32 * 1024 * 1024, (cap * 3) // 4)))
    except Exception:
        return 48 * 1024 * 1024


def _cparams(sem):
    return pltpu.CompilerParams(
        dimension_semantics=sem,
        vmem_limit_bytes=_vmem_limit_bytes(),
    )


def _row_tile(m, cap=2048):
    """Row tile for (M, C) matmul-style kernels: single block when it fits
    (no forced split -- pure overhead on single-TensorCore v5e/v6e), otherwise
    multiple-of-8 tiles of up to `cap` rows."""
    if m <= cap:
        return m, m
    tm = cap - cap % 8
    mp = ((m + tm - 1) // tm) * tm
    return tm, mp


def _hw_tile(hw, cap=2048):
    """Spatial tile for the per-image HW reduction loop (must divide HW)."""
    if hw <= cap:
        return hw
    for t in range(cap - cap % 128, 0, -128):
        if hw % t == 0:
            return t
    return hw  # TODO(synk): may exceed VMEM for huge, awkwardly factored H*W


def _pad_rows(x, mp):
    m = x.shape[0]
    return x if mp == m else jnp.pad(x, ((0, mp - m), (0, 0)))


# ----------------------------------------------------------------------------
# Kernel 1: fused 1x1 branch heads = one matmul + bias + ReLU.
# Output lanes: [b2_in(0:32) | b3_in(32:64) | b1(64:96) | zeros(96:128)].
# ----------------------------------------------------------------------------
def _mm_bias_relu_kernel(x_ref, w_ref, b_ref, o_ref):
    acc = jnp.dot(x_ref[...], w_ref[...], preferred_element_type=jnp.float32)
    o_ref[...] = jnp.maximum(acc + b_ref[...], 0.0).astype(o_ref.dtype)


def fused_1x1_conv(x_rows_bf16, w_bf16, b_f32, out_dtype=jnp.bfloat16):
    m, k = x_rows_bf16.shape
    nout = w_bf16.shape[1]
    tm, mp = _row_tile(m)
    xp = _pad_rows(x_rows_bf16, mp)
    out = pl.pallas_call(
        _mm_bias_relu_kernel,
        out_shape=jax.ShapeDtypeStruct((mp, nout), out_dtype),
        grid=(mp // tm,),
        in_specs=[
            pl.BlockSpec((tm, k), lambda i: (i, 0)),
            pl.BlockSpec((k, nout), lambda i: (0, 0)),
            pl.BlockSpec((1, nout), lambda i: (0, 0)),
        ],
        out_specs=pl.BlockSpec((tm, nout), lambda i: (i, 0)),
        compiler_params=_cparams(("parallel",)),
    )(xp, w_bf16, b_f32.reshape(1, nout))
    return out[:m]


# ----------------------------------------------------------------------------
# Kernel 2: 3x3 'same' conv + ReLU.  The im2col patch (HW, 9*cin) is built
# once in a VMEM scratch buffer from the first `cin` channels of the padded
# input and fed to a SINGLE full-depth dot (K = 9*cin).
# ----------------------------------------------------------------------------
def _conv3x3_kernel(xp_ref, w_ref, b_ref, o_ref, patch_ref, *, H, W, cin):
    cout = o_ref.shape[-1]
    t = 0
    for dy in range(3):
        for dx in range(3):
            win = xp_ref[0, dy:dy + H, dx:dx + W, 0:cin]        # (H, W, cin)
            patch_ref[:, t * cin:(t + 1) * cin] = win.reshape(H * W, cin)
            t += 1
    acc = jnp.dot(patch_ref[...], w_ref[...], preferred_element_type=jnp.float32)
    acc = jnp.maximum(acc + b_ref[...], 0.0)
    o_ref[...] = acc.reshape(1, H, W, cout).astype(o_ref.dtype)


def conv3x3_same_relu(x_nhwc, w_bf16, b_f32, cin, out_dtype=jnp.bfloat16):
    n, h, w, cfull = x_nhwc.shape
    cout = w_bf16.shape[-1]
    xp = jnp.pad(x_nhwc, ((0, 0), (1, 1), (1, 1), (0, 0)))
    # TODO(synk): spatially tile with a 1-px halo for large H*W (v7x 64 MiB VMEM).
    return pl.pallas_call(
        functools.partial(_conv3x3_kernel, H=h, W=w, cin=cin),
        out_shape=jax.ShapeDtypeStruct((n, h, w, cout), out_dtype),
        grid=(n,),
        in_specs=[
            pl.BlockSpec((1, h + 2, w + 2, cfull), lambda i: (i, 0, 0, 0)),
            pl.BlockSpec((9 * cin, cout), lambda i: (0, 0)),
            pl.BlockSpec((1, cout), lambda i: (0, 0)),
        ],
        out_specs=pl.BlockSpec((1, h, w, cout), lambda i: (i, 0, 0, 0)),
        scratch_shapes=[pltpu.VMEM((h * w, 9 * cin), jnp.bfloat16)],
        compiler_params=_cparams(("parallel",)),
    )(xp, w_bf16, b_f32.reshape(1, cout))


# ----------------------------------------------------------------------------
# Kernel 3: 1x1 "concat" conv.  The 128-channel concat is assembled in a VMEM
# scratch tile (no HBM concat) and consumed by ONE K=128 dot; bias and the
# `* scale` are folded in.  y is stored as bf16.
# ----------------------------------------------------------------------------
def _concat_conv_kernel(br_ref, ca_ref, cb_ref, w_ref, b_ref, o_ref, cat_ref,
                        *, scale):
    cat_ref[:, 0:64] = cb_ref[...]             # b3   (64 ch)
    cat_ref[:, 64:96] = ca_ref[:, 48:80]       # b2   (32 ch)
    cat_ref[:, 96:128] = br_ref[:, 64:96]      # b1   (32 ch)
    acc = jnp.dot(cat_ref[...], w_ref[...], preferred_element_type=jnp.float32)
    o_ref[...] = ((acc + b_ref[...]) * scale).astype(o_ref.dtype)


def concat_conv_scaled(br, ca_rows, cb_rows, w_perm_bf16, bias, scale,
                       out_dtype=jnp.bfloat16):
    m = br.shape[0]
    nout = w_perm_bf16.shape[1]
    tm, mp = _row_tile(m)
    brp, cap_, cbp = (_pad_rows(t, mp) for t in (br, ca_rows, cb_rows))
    out = pl.pallas_call(
        functools.partial(_concat_conv_kernel, scale=scale),
        out_shape=jax.ShapeDtypeStruct((mp, nout), out_dtype),
        grid=(mp // tm,),
        in_specs=[
            pl.BlockSpec((tm, 128), lambda i: (i, 0)),
            pl.BlockSpec((tm, 80), lambda i: (i, 0)),
            pl.BlockSpec((tm, 64), lambda i: (i, 0)),
            pl.BlockSpec((128, nout), lambda i: (0, 0)),
            pl.BlockSpec((1, nout), lambda i: (0, 0)),
        ],
        out_specs=pl.BlockSpec((tm, nout), lambda i: (i, 0)),
        scratch_shapes=[pltpu.VMEM((tm, 128), jnp.bfloat16)],
        compiler_params=_cparams(("parallel",)),
    )(brp, cap_, cbp, w_perm_bf16, bias.reshape(1, nout))
    return out[:m]


# ----------------------------------------------------------------------------
# Kernel 4: CBAM channel attention, fused: tiled global avg+max pool
# ('arbitrary' HW reduction with VMEM accumulators) + shared MLP + sigmoid on
# the final reduction step.  Emits ca (N,1,C) directly.
# ----------------------------------------------------------------------------
def _pool_mlp_kernel(y_ref, w1_ref, b1_ref, w2_ref, b2_ref, ca_ref,
                     sum_sc, max_sc, *, inv_hw):
    t = pl.program_id(1)

    @pl.when(t == 0)
    def _():
        sum_sc[...] = jnp.zeros_like(sum_sc)
        max_sc[...] = jnp.full_like(max_sc, -jnp.inf)

    y = y_ref[...].astype(jnp.float32)                         # (1, thw, C)
    sum_sc[...] = sum_sc[...] + jnp.sum(y, axis=1, keepdims=True)
    max_sc[...] = jnp.maximum(max_sc[...], jnp.max(y, axis=1, keepdims=True))

    @pl.when(t == pl.num_programs(1) - 1)
    def _():
        avg = sum_sc[0] * inv_hw                               # (1, C)
        mx = max_sc[0]                                         # (1, C)

        def mlp(v):
            h = jnp.maximum(
                jnp.dot(v, w1_ref[...], preferred_element_type=jnp.float32)
                + b1_ref[...], 0.0)
            return jnp.dot(h, w2_ref[...],
                           preferred_element_type=jnp.float32) + b2_ref[...]

        ca_ref[...] = jax.nn.sigmoid(mlp(avg) + mlp(mx))[None]


def cbam_channel_attention(y3, w1, b1, w2, b2):
    n, hw, c = y3.shape
    hd = w1.shape[1]
    thw = _hw_tile(hw)
    return pl.pallas_call(
        functools.partial(_pool_mlp_kernel, inv_hw=1.0 / hw),
        out_shape=jax.ShapeDtypeStruct((n, 1, c), jnp.float32),
        grid=(n, hw // thw),
        in_specs=[
            pl.BlockSpec((1, thw, c), lambda i, t: (i, t, 0)),
            pl.BlockSpec((c, hd), lambda i, t: (0, 0)),
            pl.BlockSpec((1, hd), lambda i, t: (0, 0)),
            pl.BlockSpec((hd, c), lambda i, t: (0, 0)),
            pl.BlockSpec((1, c), lambda i, t: (0, 0)),
        ],
        out_specs=pl.BlockSpec((1, 1, c), lambda i, t: (i, 0, 0)),
        scratch_shapes=[pltpu.VMEM((1, 1, c), jnp.float32),
                        pltpu.VMEM((1, 1, c), jnp.float32)],
        compiler_params=_cparams(("parallel", "arbitrary")),
    )(y3, w1, b1.reshape(1, hd), w2, b2.reshape(1, c))


# ----------------------------------------------------------------------------
# Kernel 5: fully fused CBAM tail: spatial descriptor (channel mean/max of
# y*ca) + 7x7 spatial-attention conv (VPU, 98 scalar FMAs from SMEM weights)
# + sigmoid + apply + residual add + final ReLU.  y1 and the descriptor maps
# never leave VMEM.
# ----------------------------------------------------------------------------
def _residual_fuse_kernel(saw_ref, x_ref, y_ref, ca_ref, o_ref, *, H, W):
    f32 = jnp.float32
    y1 = y_ref[0].astype(f32) * ca_ref[0]                      # (H, W, C)
    mean_c = jnp.mean(y1, axis=-1)                             # (H, W)
    max_c = jnp.max(y1, axis=-1)                               # (H, W)

    def pad3(m):                                               # 3-px zero halo
        zr = jnp.zeros((3, W), f32)
        m = jnp.concatenate([zr, m, zr], axis=0)
        zc = jnp.zeros((H + 6, 3), f32)
        return jnp.concatenate([zc, m, zc], axis=1)

    maps = (pad3(mean_c), pad3(max_c))
    # TODO(synk): lane-pack the (H, W) maps when W << 128 to fill vregs.
    acc = jnp.zeros((H, W), f32) + saw_ref[98]                 # bias
    for c in range(2):
        for dy in range(7):
            for dx in range(7):
                acc = acc + saw_ref[c * 49 + dy * 7 + dx] * \
                    maps[c][dy:dy + H, dx:dx + W]
    sa = jax.nn.sigmoid(acc)[..., None]                        # (H, W, 1)
    out = x_ref[0].astype(f32) + y1 * sa
    o_ref[...] = jnp.maximum(out, 0.0)[None].astype(o_ref.dtype)


def residual_spatial_fuse(x_nhwc, y_nhwc, ca, sa_w, sa_b):
    n, h, w, c = x_nhwc.shape
    # HWIO (7,7,2,1) -> (c, dy, dx) flat order + bias, as an SMEM scalar table.
    saw = jnp.concatenate(
        [jnp.transpose(sa_w[:, :, :, 0], (2, 0, 1)).reshape(98),
         sa_b.reshape(1)]).astype(jnp.float32)
    # TODO(synk): spatially tile per-image blocks (3-px halo) for large H*W.
    return pl.pallas_call(
        functools.partial(_residual_fuse_kernel, H=h, W=w),
        out_shape=jax.ShapeDtypeStruct((n, h, w, c), jnp.float32),
        grid=(n,),
        in_specs=[
            pl.BlockSpec(memory_space=pltpu.MemorySpace.SMEM),
            pl.BlockSpec((1, h, w, c), lambda i: (i, 0, 0, 0)),
            pl.BlockSpec((1, h, w, c), lambda i: (i, 0, 0, 0)),
            pl.BlockSpec((1, 1, c), lambda i: (i, 0, 0)),
        ],
        out_specs=pl.BlockSpec((1, h, w, c), lambda i: (i, 0, 0, 0)),
        compiler_params=_cparams(("parallel",)),
    )(saw, x_nhwc, y_nhwc, ca)


# ----------------------------------------------------------------------------
# Deterministic parameter initialization (shapes follow the module __init__).
# ----------------------------------------------------------------------------
def _conv_params(key, kh, kw, cin, cout):
    kw_, kb_ = jax.random.split(key)
    fan_in = kh * kw * cin
    w = jax.random.normal(kw_, (kh, kw, cin, cout), jnp.float32) / jnp.sqrt(float(fan_in))
    b = jax.random.normal(kb_, (cout,), jnp.float32) * 0.01
    return w, b


def init_inception_a_params(key, in_channel, n_hidden):
    keys = jax.random.split(key, 10)
    p = {}
    p["b1"] = _conv_params(keys[0], 1, 1, in_channel, 32)
    p["b2_1"] = _conv_params(keys[1], 1, 1, in_channel, 32)
    p["b2_2"] = _conv_params(keys[2], 3, 3, 32, 32)
    p["b3_1"] = _conv_params(keys[3], 1, 1, in_channel, 32)
    p["b3_2"] = _conv_params(keys[4], 3, 3, 32, 48)
    p["b3_3"] = _conv_params(keys[5], 3, 3, 48, 64)
    p["concat"] = _conv_params(keys[6], 1, 1, 128, 384)
    # CBAM channel-attention shared MLP (in_channel -> n_hidden -> in_channel)
    p["mlp_w1"] = jax.random.normal(keys[7], (in_channel, n_hidden), jnp.float32) / jnp.sqrt(float(in_channel))
    p["mlp_b1"] = jnp.zeros((n_hidden,), jnp.float32)
    p["mlp_w2"] = jax.random.normal(keys[8], (n_hidden, in_channel), jnp.float32) / jnp.sqrt(float(n_hidden))
    p["mlp_b2"] = jnp.zeros((in_channel,), jnp.float32)
    # CBAM spatial-attention 7x7 conv: 2 -> 1, padding 'same'
    p["sa"] = _conv_params(keys[9], 7, 7, 2, 1)
    return p


# ----------------------------------------------------------------------------
# Inception_A forward.
# ----------------------------------------------------------------------------
def inception_a_forward(params, x_nchw, scale=1.0):
    f32, bf16 = jnp.float32, jnp.bfloat16
    N, C, H, W = x_nchw.shape
    assert C == 384, "residual X + out requires in_channel == 384 (concat_conv out)"
    M, HW = N * H * W, H * W

    # Single NHWC bf16 copy of the input (cast folded into the transpose);
    # used by both the 1x1 heads and the residual add.
    x = jnp.transpose(x_nchw, (0, 2, 3, 1)).astype(bf16)           # (N,H,W,384)
    x_rows = x.reshape(M, C)

    # ---- fused 1x1 heads: lanes [b2_in | b3_in | b1 | zero-pad] -> 128 ----
    w_b1, bias_b1 = params["b1"]
    w_b21, bias_b21 = params["b2_1"]
    w_b31, bias_b31 = params["b3_1"]
    w_head = jnp.concatenate(
        [w_b21.reshape(C, 32), w_b31.reshape(C, 32), w_b1.reshape(C, 32),
         jnp.zeros((C, 32), f32)], axis=1).astype(bf16)            # (384,128)
    b_head = jnp.concatenate(
        [bias_b21, bias_b31, bias_b1, jnp.zeros((32,), f32)])       # (128,)
    br = fused_1x1_conv(x_rows, w_head, b_head)                    # (M,128) bf16

    # ---- block-diagonal fused 3x3 conv: b2_2 (32->32) + b3_2 (32->48) ----
    # output lanes: [b3_mid(0:48) | b2(48:80)]
    w22, b22 = params["b2_2"]
    w32, b32 = params["b3_2"]
    wA = jnp.zeros((9, 64, 80), f32)
    wA = wA.at[:, 0:32, 48:80].set(w22.reshape(9, 32, 32))
    wA = wA.at[:, 32:64, 0:48].set(w32.reshape(9, 32, 48))
    wA = wA.reshape(9 * 64, 80).astype(bf16)
    bA = jnp.concatenate([b32, b22])                               # (80,)
    cA = conv3x3_same_relu(br.reshape(N, H, W, 128), wA, bA, cin=64)  # (N,H,W,80)

    # ---- 3x3 conv b3_3: 48 -> 64 (input = first 48 lanes of cA) ----
    w33, b33 = params["b3_3"]
    wB = w33.reshape(9 * 48, 64).astype(bf16)
    cB = conv3x3_same_relu(cA, wB, b33, cin=48)                    # (N,H,W,64)

    # ---- 1x1 concat conv + scale (in-kernel concat order [b3 | b2 | b1]) ----
    wc, bc = params["concat"]
    wc = wc.reshape(128, 384)
    wc_perm = jnp.concatenate([wc[64:128], wc[32:64], wc[0:32]], axis=0).astype(bf16)
    y = concat_conv_scaled(br, cA.reshape(M, 80), cB.reshape(M, 64),
                           wc_perm, bc, scale)                     # (M,384) bf16

    # ---- CBAM channel attention (pool + MLP + sigmoid fused) ----
    ca = cbam_channel_attention(y.reshape(N, HW, C), params["mlp_w1"],
                                params["mlp_b1"], params["mlp_w2"],
                                params["mlp_b2"])                  # (N,1,384) f32

    # ---- fused: spatial descriptor + 7x7 SA conv + apply + residual + ReLU ----
    sa_w, sa_b = params["sa"]
    out = residual_spatial_fuse(x, y.reshape(N, H, W, C), ca, sa_w, sa_b)
    return jnp.transpose(out, (0, 3, 1, 2))                        # back to NCHW f32


if __name__ == "__main__":
    in_channel = 384   # required by the residual connection (concat_conv -> 384)
    n_hidden = 32
    N, H, W = 2, 8, 8

    key = jax.random.PRNGKey(0)
    kx, kp = jax.random.split(key)
    x = jax.random.normal(kx, (N, in_channel, H, W), jnp.float32)
    params = init_inception_a_params(kp, in_channel, n_hidden)

    fwd = jax.jit(lambda p, xx: inception_a_forward(p, xx, scale=1.0))
    out = jax.block_until_ready(fwd(params, x))
    assert out.shape == (N, in_channel, H, W)
    assert bool(jnp.all(jnp.isfinite(out)))
    print("KERNEL_OK")
</pallas_src>

<mosaic_0001>
module attributes {stable_mosaic.version = 11 : i64} {
  func.func @_mm_bias_relu_kernel(%arg0: i32, %arg1: memref<128x384xbf16, #tpu.memory_space<vmem>>, %arg2: memref<384x128xbf16, #tpu.memory_space<vmem>>, %arg3: memref<1x128xf32, #tpu.memory_space<vmem>>, %arg4: memref<128x128xbf16, #tpu.memory_space<vmem>>) attributes {dimension_semantics = [#tpu.dimension_semantics<parallel>], iteration_bounds = array<i64: 1>, scalar_prefetch = 0 : i64, scratch_operands = 0 : i64, tpu.core_type = #tpu.core_type<tc>, window_params = [{transform_indices = @transform_0, window_bounds = array<i64: 128, 384>}, {pipeline_mode = #tpu.pipeline_mode<synchronous>, transform_indices = @transform_1, window_bounds = array<i64: 384, 128>}, {pipeline_mode = #tpu.pipeline_mode<synchronous>, transform_indices = @transform_2, window_bounds = array<i64: 1, 128>}, {transform_indices = @transform_3, window_bounds = array<i64: 128, 128>}]} {
    %c0 = arith.constant 0 : index
    %c0_0 = arith.constant 0 : index
    %0 = vector.load %arg1[%c0, %c0_0] : memref<128x384xbf16, #tpu.memory_space<vmem>>, vector<128x384xbf16>
    %c0_1 = arith.constant 0 : index
    %c0_2 = arith.constant 0 : index
    %1 = vector.load %arg2[%c0_1, %c0_2] : memref<384x128xbf16, #tpu.memory_space<vmem>>, vector<384x128xbf16>
    %cst = arith.constant dense<0.000000e+00> : vector<128x128xf32>
    %2 = tpu.matmul %0, %1, %cst {dimension_numbers = #tpu.dot_dimension_numbers<[1], [0], [0], [1], [0, 0, 1, 1], [], []>} : vector<128x384xbf16>, vector<384x128xbf16>, vector<128x128xf32> -> vector<128x128xf32>
    %c0_3 = arith.constant 0 : index
    %c0_4 = arith.constant 0 : index
    %3 = vector.load %arg3[%c0_3, %c0_4] : memref<1x128xf32, #tpu.memory_space<vmem>>, vector<1x128xf32>
    %4 = vector.broadcast %3 : vector<1x128xf32> to vector<128x128xf32>
    %5 = arith.addf %2, %4 : vector<128x128xf32>
    %cst_5 = arith.constant 0.000000e+00 : f32
    %6 = vector.broadcast %cst_5 : f32 to vector<128x128xf32>
    %7 = arith.maximumf %5, %6 : vector<128x128xf32>
    %8 = arith.truncf %7 : vector<128x128xf32> to vector<128x128xbf16>
    %c0_6 = arith.constant 0 : index
    %c0_7 = arith.constant 0 : index
    %9 = vector.load %arg4[%c0_6, %c0_7] : memref<128x128xbf16, #tpu.memory_space<vmem>>, vector<128x128xbf16>
    tpu.vector_store %arg4[%c0_6, %c0_7], %8 {strides = array<i32>} : memref<128x128xbf16, #tpu.memory_space<vmem>>, vector<128x128xbf16>,
    return
  }
  func.func @transform_0(%arg0: i32) -> (i32, i32) {
    %c0_i32 = arith.constant 0 : i32
    %c0_i32_0 = arith.constant 0 : i32
    return %arg0, %c0_i32 : i32, i32
  }
  func.func @transform_1(%arg0: i32) -> (i32, i32) {
    %c0_i32 = arith.constant 0 : i32
    %c0_i32_0 = arith.constant 0 : i32
    %c0_i32_1 = arith.constant 0 : i32
    return %c0_i32, %c0_i32_0 : i32, i32
  }
  func.func @transform_2(%arg0: i32) -> (i32, i32) {
    %c0_i32 = arith.constant 0 : i32
    %c0_i32_0 = arith.constant 0 : i32
    %c0_i32_1 = arith.constant 0 : i32
    return %c0_i32, %c0_i32_0 : i32, i32
  }
  func.func @transform_3(%arg0: i32) -> (i32, i32) {
    %c0_i32 = arith.constant 0 : i32
    %c0_i32_0 = arith.constant 0 : i32
    return %arg0, %c0_i32 : i32, i32
  }
}

module attributes {stable_mosaic.version = 11 : i64} {
  func.func @_conv3x3_kernel(%arg0: i32, %arg1: memref<1x10x10x128xbf16, #tpu.memory_space<vmem>>, %arg2: memref<576x80xbf16, #tpu.memory_space<vmem>>, %arg3: memref<1x80xf32, #tpu.memory_space<vmem>>, %arg4: memref<1x8x8x80xbf16, #tpu.memory_space<vmem>>, %arg5: memref<64x576xbf16, #tpu.memory_space<vmem>>) attributes {dimension_semantics = [#tpu.dimension_semantics<parallel>], iteration_bounds = array<i64: 2>, scalar_prefetch = 0 : i64, scratch_operands = 1 : i64, tpu.core_type = #tpu.core_type<tc>, window_params = [{transform_indices = @transform_0, window_bounds = array<i64: 1, 10, 10, 128>}, {pipeline_mode = #tpu.pipeline_mode<synchronous>, transform_indices = @transform_1, window_bounds = array<i64: 576, 80>}, {pipeline_mode = #tpu.pipeline_mode<synchronous>, transform_indices = @transform_2, window_bounds = array<i64: 1, 80>}, {transform_indices = @transform_3, window_bounds = array<i64: 1, 8, 8, 80>}]} {
    %c0 = arith.constant 0 : index
    %c0_0 = arith.constant 0 : index
    %c0_1 = arith.constant 0 : index
    %c0_2 = arith.constant 0 : index
    %0 = vector.load %arg1[%c0, %c0_0, %c0_1, %c0_2] : memref<1x10x10x128xbf16, #tpu.memory_space<vmem>>, vector<1x8x8x64xbf16>
    %1 = vector.shape_cast %0 : vector<1x8x8x64xbf16> to vector<8x8x64xbf16>
    %2 = vector.shape_cast %1 : vector<8x8x64xbf16> to vector<64x64xbf16>
    %c0_3 = arith.constant 0 : index
    %c0_4 = arith.constant 0 : index
    %3 = vector.load %arg5[%c0_3, %c0_4] : memref<64x576xbf16, #tpu.memory_space<vmem>>, vector<64x64xbf16>
    tpu.vector_store %arg5[%c0_3, %c0_4], %2 {strides = array<i32>} : memref<64x576xbf16, #tpu.memory_space<vmem>>, vector<64x64xbf16>,
    %c0_5 = arith.constant 0 : index
    %c0_6 = arith.constant 0 : index
    %c1 = arith.constant 1 : index
    %c0_7 = arith.constant 0 : index
    %4 = vector.load %arg1[%c0_5, %c0_6, %c1, %c0_7] : memref<1x10x10x128xbf16, #tpu.memory_space<vmem>>, vector<1x8x8x64xbf16>
    %5 = vector.shape_cast %4 : vector<1x8x8x64xbf16> to vector<8x8x64xbf16>
    %6 = vector.shape_cast %5 : vector<8x8x64xbf16> to vector<64x64xbf16>
    %c0_8 = arith.constant 0 : index
    %c64 = arith.constant 64 : index
    %7 = vector.load %arg5[%c0_8, %c64] : memref<64x576xbf16, #tpu.memory_space<vmem>>, vector<64x64xbf16>
    tpu.vector_store %arg5[%c0_8, %c64], %6 {strides = array<i32>} : memref<64x576xbf16, #tpu.memory_space<vmem>>, vector<64x64xbf16>,
    %c0_9 = arith.constant 0 : index
    %c0_10 = arith.constant 0 : index
    %c2 = arith.constant 2 : index
    %c0_11 = arith.constant 0 : index
    %8 = vector.load %arg1[%c0_9, %c0_10, %c2, %c0_11] : memref<1x10x10x128xbf16, #tpu.memory_space<vmem>>, vector<1x8x8x64xbf16>
    %9 = vector.shape_cast %8 : vector<1x8x8x64xbf16> to vector<8x8x64xbf16>
    %10 = vector.shape_cast %9 : vector<8x8x64xbf16> to vector<64x64xbf16>
    %c0_12 = arith.constant 0 : index
    %c128 = arith.constant 128 : index
    %11 = vector.load %arg5[%c0_12, %c128] : memref<64x576xbf16, #tpu.memory_space<vmem>>, vector<64x64xbf16>
    tpu.vector_store %arg5[%c0_12, %c128], %10 {strides = array<i32>} : memref<64x576xbf16, #tpu.memory_space<vmem>>, vector<64x64xbf16>,
    %c0_13 = arith.constant 0 : index
    %c1_14 = arith.constant 1 : index
    %c0_15 = arith.constant 0 : index
    %c0_16 = arith.constant 0 : index
    %12 = vector.load %arg1[%c0_13, %c1_14, %c0_15, %c0_16] : memref<1x10x10x128xbf16, #tpu.memory_space<vmem>>, vector<1x8x8x64xbf16>
    %13 = vector.shape_cast %12 : vector<1x8x8x64xbf16> to vector<8x8x64xbf16>
    %14 = vector.shape_cast %13 : vector<8x8x64xbf16> to vector<64x64xbf16>
    %c0_17 = arith.constant 0 : index
    %c192 = arith.constant 192 : index
    %15 = vector.load %arg5[%c0_17, %c192] : memref<64x576xbf16, #tpu.memory_space<vmem>>, vector<64x64xbf16>
    tpu.vector_store %arg5[%c0_17, %c192], %14 {strides = array<i32>} : memref<64x576xbf16, #tpu.memory_space<vmem>>, vector<64x64xbf16>,
    %c0_18 = arith.constant 0 : index
    %c1_19 = arith.constant 1 : index
    %c1_20 = arith.constant 1 : index
    %c0_21 = arith.constant 0 : index
    %16 = vector.load %arg1[%c0_18, %c1_19, %c1_20, %c0_21] : memref<1x10x10x128xbf16, #tpu.memory_space<vmem>>, vector<1x8x8x64xbf16>
    %17 = vector.shape_cast %16 : vector<1x8x8x64xbf16> to vector<8x8x64xbf16>
    %18 = vector.shape_cast %17 : vector<8x8x64xbf16> to vector<64x64xbf16>
    %c0_22 = arith.constant 0 : index
    %c256 = arith.constant 256 : index
    %19 = vector.load %arg5[%c0_22, %c256] : memref<64x576xbf16, #tpu.memory_space<vmem>>, vector<64x64xbf16>
    tpu.vector_store %arg5[%c0_22, %c256], %18 {strides = array<i32>} : memref<64x576xbf16, #tpu.memory_space<vmem>>, vector<64x64xbf16>,
    %c0_23 = arith.constant 0 : index
    %c1_24 = arith.constant 1 : index
    %c2_25 = arith.constant 2 : index
    %c0_26 = arith.constant 0 : index
    %20 = vector.load %arg1[%c0_23, %c1_24, %c2_25, %c0_26] : memref<1x10x10x128xbf16, #tpu.memory_space<vmem>>, vector<1x8x8x64xbf16>
    %21 = vector.shape_cast %20 : vector<1x8x8x64xbf16> to vector<8x8x64xbf16>
    %22 = vector.shape_cast %21 : vector<8x8x64xbf16> to vector<64x64xbf16>
    %c0_27 = arith.constant 0 : index
    %c320 = arith.constant 320 : index
    %23 = vector.load %arg5[%c0_27, %c320] : memref<64x576xbf16, #tpu.memory_space<vmem>>, vector<64x64xbf16>
    tpu.vector_store %arg5[%c0_27, %c320], %22 {strides = array<i32>} : memref<64x576xbf16, #tpu.memory_space<vmem>>, vector<64x64xbf16>,
    %c0_28 = arith.constant 0 : index
    %c2_29 = arith.constant 2 : index
    %c0_30 = arith.constant 0 : index
    %c0_31 = arith.constant 0 : index
    %24 = vector.load %arg1[%c0_28, %c2_29, %c0_30, %c0_31] : memref<1x10x10x128xbf16, #tpu.memory_space<vmem>>, vector<1x8x8x64xbf16>
    %25 = vector.shape_cast %24 : vector<1x8x8x64xbf16> to vector<8x8x64xbf16>
    %26 = vector.shape_cast %25 : vector<8x8x64xbf16> to vector<64x64xbf16>
    %c0_32 = arith.constant 0 : index
    %c384 = arith.constant 384 : index
    %27 = vector.load %arg5[%c0_32, %c384] : memref<64x576xbf16, #tpu.memory_space<vmem>>, vector<64x64xbf16>
    tpu.vector_store %arg5[%c0_32, %c384], %26 {strides = array<i32>} : memref<64x576xbf16, #tpu.memory_space<vmem>>, vector<64x64xbf16>,
    %c0_33 = arith.constant 0 : index
    %c2_34 = arith.constant 2 : index
    %c1_35 = arith.constant 1 : index
    %c0_36 = arith.constant 0 : index
    %28 = vector.load %arg1[%c0_33, %c2_34, %c1_35, %c0_36] : memref<1x10x10x128xbf16, #tpu.memory_space<vmem>>, vector<1x8x8x64xbf16>
    %29 = vector.shape_cast %28 : vector<1x8x8x64xbf16> to vector<8x8x64xbf16>
    %30 = vector.shape_cast %29 : vector<8x8x64xbf16> to vector<64x64xbf16>
    %c0_37 = arith.constant 0 : index
    %c448 = arith.constant 448 : index
    %31 = vector.load %arg5[%c0_37, %c448] : memref<64x576xbf16, #tpu.memory_space<vmem>>, vector<64x64xbf16>
    tpu.vector_store %arg5[%c0_37, %c448], %30 {strides = array<i32>} : memref<64x576xbf16, #tpu.memory_space<vmem>>, vector<64x64xbf16>,
    %c0_38 = arith.constant 0 : index
    %c2_39 = arith.constant 2 : index
    %c2_40 = arith.constant 2 : index
    %c0_41 = arith.constant 0 : index
    %32 = vector.load %arg1[%c0_38, %c2_39, %c2_40, %c0_41] : memref<1x10x10x128xbf16, #tpu.memory_space<vmem>>, vector<1x8x8x64xbf16>
    %33 = vector.shape_cast %32 : vector<1x8x8x64xbf16> to vector<8x8x64xbf16>
    %34 = vector.shape_cast %33 : vector<8x8x64xbf16> to vector<64x64xbf16>
    %c0_42 = arith.constant 0 : index
    %c512 = arith.constant 512 : index
    %35 = vector.load %arg5[%c0_42, %c512] : memref<64x576xbf16, #tpu.memory_space<vmem>>, vector<64x64xbf16>
    tpu.vector_store %arg5[%c0_42, %c512], %34 {strides = array<i32>} : memref<64x576xbf16, #tpu.memory_space<vmem>>, vector<64x64xbf16>,
    %c0_43 = arith.constant 0 : index
    %c0_44 = arith.constant 0 : index
    %36 = vector.load %arg5[%c0_43, %c0_44] : memref<64x576xbf16, #tpu.memory_space<vmem>>, vector<64x576xbf16>
    %c0_45 = arith.constant 0 : index
    %c0_46 = arith.constant 0 : index
    %37 = vector.load %arg2[%c0_45, %c0_46] : memref<576x80xbf16, #tpu.memory_space<vmem>>, vector<576x80xbf16>
    %cst = arith.constant dense<0.000000e+00> : vector<64x80xf32>
    %38 = tpu.matmul %36, %37, %cst {dimension_numbers = #tpu.dot_dimension_numbers<[1], [0], [0], [1], [0, 0, 1, 1], [], []>} : vector<64x576xbf16>, vector<576x80xbf16>, vector<64x80xf32> -> vector<64x80xf32>
    %c0_47 = arith.constant 0 : index
    %c0_48 = arith.constant 0 : index
    %39 = vector.load %arg3[%c0_47, %c0_48] : memref<1x80xf32, #tpu.memory_space<vmem>>, vector<1x80xf32>
    %40 = vector.broadcast %39 : vector<1x80xf32> to vector<64x80xf32>
    %41 = arith.addf %38, %40 : vector<64x80xf32>
    %cst_49 = arith.constant 0.000000e+00 : f32
    %42 = vector.broadcast %cst_49 : f32 to vector<64x80xf32>
    %43 = arith.maximumf %41, %42 : vector<64x80xf32>
    %44 = vector.shape_cast %43 : vector<64x80xf32> to vector<1x8x8x80xf32>
    %45 = arith.truncf %44 : vector<1x8x8x80xf32> to vector<1x8x8x80xbf16>
    %c0_50 = arith.constant 0 : index
    %c0_51 = arith.constant 0 : index
    %c0_52 = arith.constant 0 : index
    %c0_53 = arith.constant 0 : index
    %46 = vector.load %arg4[%c0_50, %c0_51, %c0_52, %c0_53] : memref<1x8x8x80xbf16, #tpu.memory_space<vmem>>, vector<1x8x8x80xbf16>
    tpu.vector_store %arg4[%c0_50, %c0_51, %c0_52, %c0_53], %45 {strides = array<i32>} : memref<1x8x8x80xbf16, #tpu.memory_space<vmem>>, vector<1x8x8x80xbf16>,
    return
  }
  func.func @transform_0(%arg0: i32) -> (i32, i32, i32, i32) {
    %c0_i32 = arith.constant 0 : i32
    %c0_i32_0 = arith.constant 0 : i32
    %c0_i32_1 = arith.constant 0 : i32
    %c0_i32_2 = arith.constant 0 : i32
    return %arg0, %c0_i32, %c0_i32_0, %c0_i32_1 : i32, i32, i32, i32
  }
  func.func @transform_1(%arg0: i32) -> (i32, i32) {
    %c0_i32 = arith.constant 0 : i32
    %c0_i32_0 = arith.constant 0 : i32
    %c0_i32_1 = arith.constant 0 : i32
    return %c0_i32, %c0_i32_0 : i32, i32
  }
  func.func @transform_2(%arg0: i32) -> (i32, i32) {
    %c0_i32 = arith.constant 0 : i32
    %c0_i32_0 = arith.constant 0 : i32
    %c0_i32_1 = arith.constant 0 : i32
    return %c0_i32, %c0_i32_0 : i32, i32
  }
  func.func @transform_3(%arg0: i32) -> (i32, i32, i32, i32) {
    %c0_i32 = arith.constant 0 : i32
    %c0_i32_0 = arith.constant 0 : i32
    %c0_i32_1 = arith.constant 0 : i32
    %c0_i32_2 = arith.constant 0 : i32
    return %arg0, %c0_i32, %c0_i32_0, %c0_i32_1 : i32, i32, i32, i32
  }
}

module attributes {stable_mosaic.version = 11 : i64} {
  func.func @_conv3x3_kernel(%arg0: i32, %arg1: memref<1x10x10x80xbf16, #tpu.memory_space<vmem>>, %arg2: memref<432x64xbf16, #tpu.memory_space<vmem>>, %arg3: memref<1x64xf32, #tpu.memory_space<vmem>>, %arg4: memref<1x8x8x64xbf16, #tpu.memory_space<vmem>>, %arg5: memref<64x432xbf16, #tpu.memory_space<vmem>>) attributes {dimension_semantics = [#tpu.dimension_semantics<parallel>], iteration_bounds = array<i64: 2>, scalar_prefetch = 0 : i64, scratch_operands = 1 : i64, tpu.core_type = #tpu.core_type<tc>, window_params = [{transform_indices = @transform_0, window_bounds = array<i64: 1, 10, 10, 80>}, {pipeline_mode = #tpu.pipeline_mode<synchronous>, transform_indices = @transform_1, window_bounds = array<i64: 432, 64>}, {pipeline_mode = #tpu.pipeline_mode<synchronous>, transform_indices = @transform_2, window_bounds = array<i64: 1, 64>}, {transform_indices = @transform_3, window_bounds = array<i64: 1, 8, 8, 64>}]} {
    %c0 = arith.constant 0 : index
    %c0_0 = arith.constant 0 : index
    %c0_1 = arith.constant 0 : index
    %c0_2 = arith.constant 0 : index
    %0 = vector.load %arg1[%c0, %c0_0, %c0_1, %c0_2] : memref<1x10x10x80xbf16, #tpu.memory_space<vmem>>, vector<1x8x8x48xbf16>
    %1 = vector.shape_cast %0 : vector<1x8x8x48xbf16> to vector<8x8x48xbf16>
    %2 = vector.shape_cast %1 : vector<8x8x48xbf16> to vector<64x48xbf16>
    %c0_3 = arith.constant 0 : index
    %c0_4 = arith.constant 0 : index
    %3 = vector.load %arg5[%c0_3, %c0_4] : memref<64x432xbf16, #tpu.memory_space<vmem>>, vector<64x48xbf16>
    tpu.vector_store %arg5[%c0_3, %c0_4], %2 {strides = array<i32>} : memref<64x432xbf16, #tpu.memory_space<vmem>>, vector<64x48xbf16>,
    %c0_5 = arith.constant 0 : index
    %c0_6 = arith.constant 0 : index
    %c1 = arith.constant 1 : index
    %c0_7 = arith.constant 0 : index
    %4 = vector.load %arg1[%c0_5, %c0_6, %c1, %c0_7] : memref<1x10x10x80xbf16, #tpu.memory_space<vmem>>, vector<1x8x8x48xbf16>
    %5 = vector.shape_cast %4 : vector<1x8x8x48xbf16> to vector<8x8x48xbf16>
    %6 = vector.shape_cast %5 : vector<8x8x48xbf16> to vector<64x48xbf16>
    %c0_8 = arith.constant 0 : index
    %c48 = arith.constant 48 : index
    %7 = vector.load %arg5[%c0_8, %c48] : memref<64x432xbf16, #tpu.memory_space<vmem>>, vector<64x48xbf16>
    tpu.vector_store %arg5[%c0_8, %c48], %6 {strides = array<i32>} : memref<64x432xbf16, #tpu.memory_space<vmem>>, vector<64x48xbf16>,
    %c0_9 = arith.constant 0 : index
    %c0_10 = arith.constant 0 : index
    %c2 = arith.constant 2 : index
    %c0_11 = arith.constant 0 : index
    %8 = vector.load %arg1[%c0_9, %c0_10, %c2, %c0_11] : memref<1x10x10x80xbf16, #tpu.memory_space<vmem>>, vector<1x8x8x48xbf16>
    %9 = vector.shape_cast %8 : vector<1x8x8x48xbf16> to vector<8x8x48xbf16>
    %10 = vector.shape_cast %9 : vector<8x8x48xbf16> to vector<64x48xbf16>
    %c0_12 = arith.constant 0 : index
    %c96 = arith.constant 96 : index
    %11 = vector.load %arg5[%c0_12, %c96] : memref<64x432xbf16, #tpu.memory_space<vmem>>, vector<64x48xbf16>
    tpu.vector_store %arg5[%c0_12, %c96], %10 {strides = array<i32>} : memref<64x432xbf16, #tpu.memory_space<vmem>>, vector<64x48xbf16>,
    %c0_13 = arith.constant 0 : index
    %c1_14 = arith.constant 1 : index
    %c0_15 = arith.constant 0 : index
    %c0_16 = arith.constant 0 : index
    %12 = vector.load %arg1[%c0_13, %c1_14, %c0_15, %c0_16] : memref<1x10x10x80xbf16, #tpu.memory_space<vmem>>, vector<1x8x8x48xbf16>
    %13 = vector.shape_cast %12 : vector<1x8x8x48xbf16> to vector<8x8x48xbf16>
    %14 = vector.shape_cast %13 : vector<8x8x48xbf16> to vector<64x48xbf16>
    %c0_17 = arith.constant 0 : index
    %c144 = arith.constant 144 : index
    %15 = vector.load %arg5[%c0_17, %c144] : memref<64x432xbf16, #tpu.memory_space<vmem>>, vector<64x48xbf16>
    tpu.vector_store %arg5[%c0_17, %c144], %14 {strides = array<i32>} : memref<64x432xbf16, #tpu.memory_space<vmem>>, vector<64x48xbf16>,
    %c0_18 = arith.constant 0 : index
    %c1_19 = arith.constant 1 : index
    %c1_20 = arith.constant 1 : index
    %c0_21 = arith.constant 0 : index
    %16 = vector.load %arg1[%c0_18, %c1_19, %c1_20, %c0_21] : memref<1x10x10x80xbf16, #tpu.memory_space<vmem>>, vector<1x8x8x48xbf16>
    %17 = vector.shape_cast %16 : vector<1x8x8x48xbf16> to vector<8x8x48xbf16>
    %18 = vector.shape_cast %17 : vector<8x8x48xbf16> to vector<64x48xbf16>
    %c0_22 = arith.constant 0 : index
    %c192 = arith.constant 192 : index
    %19 = vector.load %arg5[%c0_22, %c192] : memref<64x432xbf16, #tpu.memory_space<vmem>>, vector<64x48xbf16>
    tpu.vector_store %arg5[%c0_22, %c192], %18 {strides = array<i32>} : memref<64x432xbf16, #tpu.memory_space<vmem>>, vector<64x48xbf16>,
    %c0_23 = arith.constant 0 : index
    %c1_24 = arith.constant 1 : index
    %c2_25 = arith.constant 2 : index
    %c0_26 = arith.constant 0 : index
    %20 = vector.load %arg1[%c0_23, %c1_24, %c2_25, %c0_26] : memref<1x10x10x80xbf16, #tpu.memory_space<vmem>>, vector<1x8x8x48xbf16>
    %21 = vector.shape_cast %20 : vector<1x8x8x48xbf16> to vector<8x8x48xbf16>
    %22 = vector.shape_cast %21 : vector<8x8x48xbf16> to vector<64x48xbf16>
    %c0_27 = arith.constant 0 : index
    %c240 = arith.constant 240 : index
    %23 = vector.load %arg5[%c0_27, %c240] : memref<64x432xbf16, #tpu.memory_space<vmem>>, vector<64x48xbf16>
    tpu.vector_store %arg5[%c0_27, %c240], %22 {strides = array<i32>} : memref<64x432xbf16, #tpu.memory_space<vmem>>, vector<64x48xbf16>,
    %c0_28 = arith.constant 0 : index
    %c2_29 = arith.constant 2 : index
    %c0_30 = arith.constant 0 : index
    %c0_31 = arith.constant 0 : index
    %24 = vector.load %arg1[%c0_28, %c2_29, %c0_30, %c0_31] : memref<1x10x10x80xbf16, #tpu.memory_space<vmem>>, vector<1x8x8x48xbf16>
    %25 = vector.shape_cast %24 : vector<1x8x8x48xbf16> to vector<8x8x48xbf16>
    %26 = vector.shape_cast %25 : vector<8x8x48xbf16> to vector<64x48xbf16>
    %c0_32 = arith.constant 0 : index
    %c288 = arith.constant 288 : index
    %27 = vector.load %arg5[%c0_32, %c288] : memref<64x432xbf16, #tpu.memory_space<vmem>>, vector<64x48xbf16>
    tpu.vector_store %arg5[%c0_32, %c288], %26 {strides = array<i32>} : memref<64x432xbf16, #tpu.memory_space<vmem>>, vector<64x48xbf16>,
    %c0_33 = arith.constant 0 : index
    %c2_34 = arith.constant 2 : index
    %c1_35 = arith.constant 1 : index
    %c0_36 = arith.constant 0 : index
    %28 = vector.load %arg1[%c0_33, %c2_34, %c1_35, %c0_36] : memref<1x10x10x80xbf16, #tpu.memory_space<vmem>>, vector<1x8x8x48xbf16>
    %29 = vector.shape_cast %28 : vector<1x8x8x48xbf16> to vector<8x8x48xbf16>
    %30 = vector.shape_cast %29 : vector<8x8x48xbf16> to vector<64x48xbf16>
    %c0_37 = arith.constant 0 : index
    %c336 = arith.constant 336 : index
    %31 = vector.load %arg5[%c0_37, %c336] : memref<64x432xbf16, #tpu.memory_space<vmem>>, vector<64x48xbf16>
    tpu.vector_store %arg5[%c0_37, %c336], %30 {strides = array<i32>} : memref<64x432xbf16, #tpu.memory_space<vmem>>, vector<64x48xbf16>,
    %c0_38 = arith.constant 0 : index
    %c2_39 = arith.constant 2 : index
    %c2_40 = arith.constant 2 : index
    %c0_41 = arith.constant 0 : index
    %32 = vector.load %arg1[%c0_38, %c2_39, %c2_40, %c0_41] : memref<1x10x10x80xbf16, #tpu.memory_space<vmem>>, vector<1x8x8x48xbf16>
    %33 = vector.shape_cast %32 : vector<1x8x8x48xbf16> to vector<8x8x48xbf16>
    %34 = vector.shape_cast %33 : vector<8x8x48xbf16> to vector<64x48xbf16>
    %c0_42 = arith.constant 0 : index
    %c384 = arith.constant 384 : index
    %35 = vector.load %arg5[%c0_42, %c384] : memref<64x432xbf16, #tpu.memory_space<vmem>>, vector<64x48xbf16>
    tpu.vector_store %arg5[%c0_42, %c384], %34 {strides = array<i32>} : memref<64x432xbf16, #tpu.memory_space<vmem>>, vector<64x48xbf16>,
    %c0_43 = arith.constant 0 : index
    %c0_44 = arith.constant 0 : index
    %36 = vector.load %arg5[%c0_43, %c0_44] : memref<64x432xbf16, #tpu.memory_space<vmem>>, vector<64x432xbf16>
    %c0_45 = arith.constant 0 : index
    %c0_46 = arith.constant 0 : index
    %37 = vector.load %arg2[%c0_45, %c0_46] : memref<432x64xbf16, #tpu.memory_space<vmem>>, vector<432x64xbf16>
    %cst = arith.constant dense<0.000000e+00> : vector<64x64xf32>
    %38 = tpu.matmul %36, %37, %cst {dimension_numbers = #tpu.dot_dimension_numbers<[1], [0], [0], [1], [0, 0, 1, 1], [], []>} : vector<64x432xbf16>, vector<432x64xbf16>, vector<64x64xf32> -> vector<64x64xf32>
    %c0_47 = arith.constant 0 : index
    %c0_48 = arith.constant 0 : index
    %39 = vector.load %arg3[%c0_47, %c0_48] : memref<1x64xf32, #tpu.memory_space<vmem>>, vector<1x64xf32>
    %40 = vector.broadcast %39 : vector<1x64xf32> to vector<64x64xf32>
    %41 = arith.addf %38, %40 : vector<64x64xf32>
    %cst_49 = arith.constant 0.000000e+00 : f32
    %42 = vector.broadcast %cst_49 : f32 to vector<64x64xf32>
    %43 = arith.maximumf %41, %42 : vector<64x64xf32>
    %44 = vector.shape_cast %43 : vector<64x64xf32> to vector<1x8x8x64xf32>
    %45 = arith.truncf %44 : vector<1x8x8x64xf32> to vector<1x8x8x64xbf16>
    %c0_50 = arith.constant 0 : index
    %c0_51 = arith.constant 0 : index
    %c0_52 = arith.constant 0 : index
    %c0_53 = arith.constant 0 : index
    %46 = vector.load %arg4[%c0_50, %c0_51, %c0_52, %c0_53] : memref<1x8x8x64xbf16, #tpu.memory_space<vmem>>, vector<1x8x8x64xbf16>
    tpu.vector_store %arg4[%c0_50, %c0_51, %c0_52, %c0_53], %45 {strides = array<i32>} : memref<1x8x8x64xbf16, #tpu.memory_space<vmem>>, vector<1x8x8x64xbf16>,
    return
  }
  func.func @transform_0(%arg0: i32) -> (i32, i32, i32, i32) {
    %c0_i32 = arith.constant 0 : i32
    %c0_i32_0 = arith.constant 0 : i32
    %c0_i32_1 = arith.constant 0 : i32
    %c0_i32_2 = arith.constant 0 : i32
    return %arg0, %c0_i32, %c0_i32_0, %c0_i32_1 : i32, i32, i32, i32
  }
  func.func @transform_1(%arg0: i32) -> (i32, i32) {
    %c0_i32 = arith.constant 0 : i32
    %c0_i32_0 = arith.constant 0 : i32
    %c0_i32_1 = arith.constant 0 : i32
    return %c0_i32, %c0_i32_0 : i32, i32
  }
  func.func @transform_2(%arg0: i32) -> (i32, i32) {
    %c0_i32 = arith.constant 0 : i32
    %c0_i32_0 = arith.constant 0 : i32
    %c0_i32_1 = arith.constant 0 : i32
    return %c0_i32, %c0_i32_0 : i32, i32
  }
  func.func @transform_3(%arg0: i32) -> (i32, i32, i32, i32) {
    %c0_i32 = arith.constant 0 : i32
    %c0_i32_0 = arith.constant 0 : i32
    %c0_i32_1 = arith.constant 0 : i32
    %c0_i32_2 = arith.constant 0 : i32
    return %arg0, %c0_i32, %c0_i32_0, %c0_i32_1 : i32, i32, i32, i32
  }
}

module attributes {stable_mosaic.version = 11 : i64} {
  func.func @_pool_mlp_kernel(%arg0: i32, %arg1: i32, %arg2: memref<1x64x384xbf16, #tpu.memory_space<vmem>>, %arg3: memref<384x32xf32, #tpu.memory_space<vmem>>, %arg4: memref<1x32xf32, #tpu.memory_space<vmem>>, %arg5: memref<32x384xf32, #tpu.memory_space<vmem>>, %arg6: memref<1x384xf32, #tpu.memory_space<vmem>>, %arg7: memref<1x1x384xf32, #tpu.memory_space<vmem>>, %arg8: memref<1x1x384xf32, #tpu.memory_space<vmem>>, %arg9: memref<1x1x384xf32, #tpu.memory_space<vmem>>) attributes {dimension_semantics = [#tpu.dimension_semantics<parallel>, #tpu.dimension_semantics<arbitrary>], iteration_bounds = array<i64: 2, 1>, scalar_prefetch = 0 : i64, scratch_operands = 2 : i64, tpu.core_type = #tpu.core_type<tc>, window_params = [{transform_indices = @transform_0, window_bounds = array<i64: 1, 64, 384>}, {pipeline_mode = #tpu.pipeline_mode<synchronous>, transform_indices = @transform_1, window_bounds = array<i64: 384, 32>}, {pipeline_mode = #tpu.pipeline_mode<synchronous>, transform_indices = @transform_2, window_bounds = array<i64: 1, 32>}, {pipeline_mode = #tpu.pipeline_mode<synchronous>, transform_indices = @transform_3, window_bounds = array<i64: 32, 384>}, {pipeline_mode = #tpu.pipeline_mode<synchronous>, transform_indices = @transform_4, window_bounds = array<i64: 1, 384>}, {transform_indices = @transform_5, window_bounds = array<i64: 1, 1, 384>}]} {
    %c0_i32 = arith.constant 0 : i32
    %0 = arith.cmpi eq, %arg1, %c0_i32 : i32
    %1 = arith.extui %0 : i1 to i32
    %c0_i32_0 = arith.constant 0 : i32
    %2 = arith.cmpi ne, %1, %c0_i32_0 : i32
    scf.if %2 {
      %cst_18 = arith.constant 0.000000e+00 : f32
      %18 = vector.broadcast %cst_18 : f32 to vector<1x1x384xf32>
      %c0_19 = arith.constant 0 : index
      %c0_20 = arith.constant 0 : index
      %c0_21 = arith.constant 0 : index
      %19 = vector.load %arg8[%c0_19, %c0_20, %c0_21] : memref<1x1x384xf32, #tpu.memory_space<vmem>>, vector<1x1x384xf32>
      tpu.vector_store %arg8[%c0_19, %c0_20, %c0_21], %18 {strides = array<i32>} : memref<1x1x384xf32, #tpu.memory_space<vmem>>, vector<1x1x384xf32>,
      %cst_22 = arith.constant 0xFF800000 : f32
      %20 = vector.broadcast %cst_22 : f32 to vector<1x1x384xf32>
      %c0_23 = arith.constant 0 : index
      %c0_24 = arith.constant 0 : index
      %c0_25 = arith.constant 0 : index
      %21 = vector.load %arg9[%c0_23, %c0_24, %c0_25] : memref<1x1x384xf32, #tpu.memory_space<vmem>>, vector<1x1x384xf32>
      tpu.vector_store %arg9[%c0_23, %c0_24, %c0_25], %20 {strides = array<i32>} : memref<1x1x384xf32, #tpu.memory_space<vmem>>, vector<1x1x384xf32>,
    } else {
    }
    %c0 = arith.constant 0 : index
    %c0_1 = arith.constant 0 : index
    %c0_2 = arith.constant 0 : index
    %3 = vector.load %arg2[%c0, %c0_1, %c0_2] : memref<1x64x384xbf16, #tpu.memory_space<vmem>>, vector<1x64x384xbf16>
    %4 = arith.extf %3 : vector<1x64x384xbf16> to vector<1x64x384xf32>
    %c0_3 = arith.constant 0 : index
    %c0_4 = arith.constant 0 : index
    %c0_5 = arith.constant 0 : index
    %5 = vector.load %arg8[%c0_3, %c0_4, %c0_5] : memref<1x1x384xf32, #tpu.memory_space<vmem>>, vector<1x1x384xf32>
    %cst = arith.constant dense<0.000000e+00> : vector<1x384xf32>
    %6 = vector.multi_reduction <add>, %4, %cst [1] : vector<1x64x384xf32> to vector<1x384xf32>
    %7 = vector.shape_cast %6 : vector<1x384xf32> to vector<1x1x384xf32>
    %8 = arith.addf %5, %7 : vector<1x1x384xf32>
    %c0_6 = arith.constant 0 : index
    %c0_7 = arith.constant 0 : index
    %c0_8 = arith.constant 0 : index
    %9 = vector.load %arg8[%c0_6, %c0_7, %c0_8] : memref<1x1x384xf32, #tpu.memory_space<vmem>>, vector<1x1x384xf32>
    tpu.vector_store %arg8[%c0_6, %c0_7, %c0_8], %8 {strides = array<i32>} : memref<1x1x384xf32, #tpu.memory_space<vmem>>, vector<1x1x384xf32>,
    %c0_9 = arith.constant 0 : index
    %c0_10 = arith.constant 0 : index
    %c0_11 = arith.constant 0 : index
    %10 = vector.load %arg9[%c0_9, %c0_10, %c0_11] : memref<1x1x384xf32, #tpu.memory_space<vmem>>, vector<1x1x384xf32>
    %cst_12 = arith.constant dense<0xFF800000> : vector<1x384xf32>
    %11 = vector.multi_reduction <maximumf>, %4, %cst_12 [1] : vector<1x64x384xf32> to vector<1x384xf32>
    %12 = vector.shape_cast %11 : vector<1x384xf32> to vector<1x1x384xf32>
    %13 = arith.maximumf %10, %12 : vector<1x1x384xf32>
    %c0_13 = arith.constant 0 : index
    %c0_14 = arith.constant 0 : index
    %c0_15 = arith.constant 0 : index
    %14 = vector.load %arg9[%c0_13, %c0_14, %c0_15] : memref<1x1x384xf32, #tpu.memory_space<vmem>>, vector<1x1x384xf32>
    tpu.vector_store %arg9[%c0_13, %c0_14, %c0_15], %13 {strides = array<i32>} : memref<1x1x384xf32, #tpu.memory_space<vmem>>, vector<1x1x384xf32>,
    %c0_i32_16 = arith.constant 0 : i32
    %15 = arith.cmpi eq, %arg1, %c0_i32_16 : i32
    %16 = arith.extui %15 : i1 to i32
    %c0_i32_17 = arith.constant 0 : i32
    %17 = arith.cmpi ne, %16, %c0_i32_17 : i32
    scf.if %17 {
      %c0_18 = arith.constant 0 : index
      %c0_19 = arith.constant 0 : index
      %c0_20 = arith.constant 0 : index
      %18 = vector.load %arg8[%c0_18, %c0_19, %c0_20] : memref<1x1x384xf32, #tpu.memory_space<vmem>>, vector<1x1x384xf32>
      %19 = vector.shape_cast %18 : vector<1x1x384xf32> to vector<1x384xf32>
      %cst_21 = arith.constant 1.562500e-02 : f32
      %20 = vector.broadcast %cst_21 : f32 to vector<1x384xf32>
      %21 = arith.mulf %19, %20 : vector<1x384xf32>
      %c0_22 = arith.constant 0 : index
      %c0_23 = arith.constant 0 : index
      %c0_24 = arith.constant 0 : index
      %22 = vector.load %arg9[%c0_22, %c0_23, %c0_24] : memref<1x1x384xf32, #tpu.memory_space<vmem>>, vector<1x1x384xf32>
      %23 = vector.shape_cast %22 : vector<1x1x384xf32> to vector<1x384xf32>
      %c0_25 = arith.constant 0 : index
      %c0_26 = arith.constant 0 : index
      %24 = vector.load %arg3[%c0_25, %c0_26] : memref<384x32xf32, #tpu.memory_space<vmem>>, vector<384x32xf32>
      %cst_27 = arith.constant dense<0.000000e+00> : vector<1x32xf32>
      %25 = tpu.matmul %21, %24, %cst_27 {dimension_numbers = #tpu.dot_dimension_numbers<[1], [0], [0], [1], [0, 0, 1, 1], [], []>} : vector<1x384xf32>, vector<384x32xf32>, vector<1x32xf32> -> vector<1x32xf32>
      %c0_28 = arith.constant 0 : index
      %c0_29 = arith.constant 0 : index
      %26 = vector.load %arg4[%c0_28, %c0_29] : memref<1x32xf32, #tpu.memory_space<vmem>>, vector<1x32xf32>
      %27 = arith.addf %25, %26 : vector<1x32xf32>
      %cst_30 = arith.constant 0.000000e+00 : f32
      %28 = vector.broadcast %cst_30 : f32 to vector<1x32xf32>
      %29 = arith.maximumf %27, %28 : vector<1x32xf32>
      %c0_31 = arith.constant 0 : index
      %c0_32 = arith.constant 0 : index
      %30 = vector.load %arg5[%c0_31, %c0_32] : memref<32x384xf32, #tpu.memory_space<vmem>>, vector<32x384xf32>
      %cst_33 = arith.constant dense<0.000000e+00> : vector<1x384xf32>
      %31 = tpu.matmul %29, %30, %cst_33 {dimension_numbers = #tpu.dot_dimension_numbers<[1], [0], [0], [1], [0, 0, 1, 1], [], []>} : vector<1x32xf32>, vector<32x384xf32>, vector<1x384xf32> -> vector<1x384xf32>
      %c0_34 = arith.constant 0 : index
      %c0_35 = arith.constant 0 : index
      %32 = vector.load %arg6[%c0_34, %c0_35] : memref<1x384xf32, #tpu.memory_space<vmem>>, vector<1x384xf32>
      %33 = arith.addf %31, %32 : vector<1x384xf32>
      %c0_36 = arith.constant 0 : index
      %c0_37 = arith.constant 0 : index
      %34 = vector.load %arg3[%c0_36, %c0_37] : memref<384x32xf32, #tpu.memory_space<vmem>>, vector<384x32xf32>
      %cst_38 = arith.constant dense<0.000000e+00> : vector<1x32xf32>
      %35 = tpu.matmul %23, %34, %cst_38 {dimension_numbers = #tpu.dot_dimension_numbers<[1], [0], [0], [1], [0, 0, 1, 1], [], []>} : vector<1x384xf32>, vector<384x32xf32>, vector<1x32xf32> -> vector<1x32xf32>
      %c0_39 = arith.constant 0 : index
      %c0_40 = arith.constant 0 : index
      %36 = vector.load %arg4[%c0_39, %c0_40] : memref<1x32xf32, #tpu.memory_space<vmem>>, vector<1x32xf32>
      %37 = arith.addf %35, %36 : vector<1x32xf32>
      %cst_41 = arith.constant 0.000000e+00 : f32
      %38 = vector.broadcast %cst_41 : f32 to vector<1x32xf32>
      %39 = arith.maximumf %37, %38 : vector<1x32xf32>
      %c0_42 = arith.constant 0 : index
      %c0_43 = arith.constant 0 : index
      %40 = vector.load %arg5[%c0_42, %c0_43] : memref<32x384xf32, #tpu.memory_space<vmem>>, vector<32x384xf32>
      %cst_44 = arith.constant dense<0.000000e+00> : vector<1x384xf32>
      %41 = tpu.matmul %39, %40, %cst_44 {dimension_numbers = #tpu.dot_dimension_numbers<[1], [0], [0], [1], [0, 0, 1, 1], [], []>} : vector<1x32xf32>, vector<32x384xf32>, vector<1x384xf32> -> vector<1x384xf32>
      %c0_45 = arith.constant 0 : index
      %c0_46 = arith.constant 0 : index
      %42 = vector.load %arg6[%c0_45, %c0_46] : memref<1x384xf32, #tpu.memory_space<vmem>>, vector<1x384xf32>
      %43 = arith.addf %41, %42 : vector<1x384xf32>
      %44 = arith.addf %33, %43 : vector<1x384xf32>
      %45 = arith.negf %44 : vector<1x384xf32>
      %46 = math.exp %45 : vector<1x384xf32>
      %cst_47 = arith.constant 1.000000e+00 : f32
      %47 = vector.broadcast %cst_47 : f32 to vector<1x384xf32>
      %48 = arith.addf %47, %46 : vector<1x384xf32>
      %49 = arith.divf %47, %48 : vector<1x384xf32>
      %50 = vector.shape_cast %49 : vector<1x384xf32> to vector<1x1x384xf32>
      %c0_48 = arith.constant 0 : index
      %c0_49 = arith.constant 0 : index
      %c0_50 = arith.constant 0 : index
      %51 = vector.load %arg7[%c0_48, %c0_49, %c0_50] : memref<1x1x384xf32, #tpu.memory_space<vmem>>, vector<1x1x384xf32>
      tpu.vector_store %arg7[%c0_48, %c0_49, %c0_50], %50 {strides = array<i32>} : memref<1x1x384xf32, #tpu.memory_space<vmem>>, vector<1x1x384xf32>,
    } else {
    }
    return
  }
  func.func @transform_0(%arg0: i32, %arg1: i32) -> (i32, i32, i32) {
    %c0_i32 = arith.constant 0 : i32
    %c0_i32_0 = arith.constant 0 : i32
    return %arg0, %arg1, %c0_i32 : i32, i32, i32
  }
  func.func @transform_1(%arg0: i32, %arg1: i32) -> (i32, i32) {
    %c0_i32 = arith.constant 0 : i32
    %c0_i32_0 = arith.constant 0 : i32
    %c0_i32_1 = arith.constant 0 : i32
    return %c0_i32, %c0_i32_0 : i32, i32
  }
  func.func @transform_2(%arg0: i32, %arg1: i32) -> (i32, i32) {
    %c0_i32 = arith.constant 0 : i32
    %c0_i32_0 = arith.constant 0 : i32
    %c0_i32_1 = arith.constant 0 : i32
    return %c0_i32, %c0_i32_0 : i32, i32
  }
  func.func @transform_3(%arg0: i32, %arg1: i32) -> (i32, i32) {
    %c0_i32 = arith.constant 0 : i32
    %c0_i32_0 = arith.constant 0 : i32
    %c0_i32_1 = arith.constant 0 : i32
    return %c0_i32, %c0_i32_0 : i32, i32
  }
  func.func @transform_4(%arg0: i32, %arg1: i32) -> (i32, i32) {
    %c0_i32 = arith.constant 0 : i32
    %c0_i32_0 = arith.constant 0 : i32
    %c0_i32_1 = arith.constant 0 : i32
    return %c0_i32, %c0_i32_0 : i32, i32
  }
  func.func @transform_5(%arg0: i32, %arg1: i32) -> (i32, i32, i32) {
    %c0_i32 = arith.constant 0 : i32
    %c0_i32_0 = arith.constant 0 : i32
    %c0_i32_1 = arith.constant 0 : i32
    return %arg0, %c0_i32, %c0_i32_0 : i32, i32, i32
  }
}

module attributes {stable_mosaic.version = 11 : i64} {
  func.func @_concat_conv_kernel(%arg0: i32, %arg1: memref<128x128xbf16, #tpu.memory_space<vmem>>, %arg2: memref<128x80xbf16, #tpu.memory_space<vmem>>, %arg3: memref<128x64xbf16, #tpu.memory_space<vmem>>, %arg4: memref<128x384xbf16, #tpu.memory_space<vmem>>, %arg5: memref<1x384xf32, #tpu.memory_space<vmem>>, %arg6: memref<128x384xbf16, #tpu.memory_space<vmem>>, %arg7: memref<128x128xbf16, #tpu.memory_space<vmem>>) attributes {dimension_semantics = [#tpu.dimension_semantics<parallel>], iteration_bounds = array<i64: 1>, scalar_prefetch = 0 : i64, scratch_operands = 1 : i64, tpu.core_type = #tpu.core_type<tc>, window_params = [{transform_indices = @transform_0, window_bounds = array<i64: 128, 128>}, {transform_indices = @transform_1, window_bounds = array<i64: 128, 80>}, {transform_indices = @transform_2, window_bounds = array<i64: 128, 64>}, {pipeline_mode = #tpu.pipeline_mode<synchronous>, transform_indices = @transform_3, window_bounds = array<i64: 128, 384>}, {pipeline_mode = #tpu.pipeline_mode<synchronous>, transform_indices = @transform_4, window_bounds = array<i64: 1, 384>}, {transform_indices = @transform_5, window_bounds = array<i64: 128, 384>}]} {
    %c0 = arith.constant 0 : index
    %c0_0 = arith.constant 0 : index
    %0 = vector.load %arg3[%c0, %c0_0] : memref<128x64xbf16, #tpu.memory_space<vmem>>, vector<128x64xbf16>
    %c0_1 = arith.constant 0 : index
    %c0_2 = arith.constant 0 : index
    %1 = vector.load %arg7[%c0_1, %c0_2] : memref<128x128xbf16, #tpu.memory_space<vmem>>, vector<128x64xbf16>
    tpu.vector_store %arg7[%c0_1, %c0_2], %0 {strides = array<i32>} : memref<128x128xbf16, #tpu.memory_space<vmem>>, vector<128x64xbf16>,
    %c0_3 = arith.constant 0 : index
    %c48 = arith.constant 48 : index
    %2 = vector.load %arg2[%c0_3, %c48] : memref<128x80xbf16, #tpu.memory_space<vmem>>, vector<128x32xbf16>
    %c0_4 = arith.constant 0 : index
    %c64 = arith.constant 64 : index
    %3 = vector.load %arg7[%c0_4, %c64] : memref<128x128xbf16, #tpu.memory_space<vmem>>, vector<128x32xbf16>
    tpu.vector_store %arg7[%c0_4, %c64], %2 {strides = array<i32>} : memref<128x128xbf16, #tpu.memory_space<vmem>>, vector<128x32xbf16>,
    %c0_5 = arith.constant 0 : index
    %c64_6 = arith.constant 64 : index
    %4 = vector.load %arg1[%c0_5, %c64_6] : memref<128x128xbf16, #tpu.memory_space<vmem>>, vector<128x32xbf16>
    %c0_7 = arith.constant 0 : index
    %c96 = arith.constant 96 : index
    %5 = vector.load %arg7[%c0_7, %c96] : memref<128x128xbf16, #tpu.memory_space<vmem>>, vector<128x32xbf16>
    tpu.vector_store %arg7[%c0_7, %c96], %4 {strides = array<i32>} : memref<128x128xbf16, #tpu.memory_space<vmem>>, vector<128x32xbf16>,
    %c0_8 = arith.constant 0 : index
    %c0_9 = arith.constant 0 : index
    %6 = vector.load %arg7[%c0_8, %c0_9] : memref<128x128xbf16, #tpu.memory_space<vmem>>, vector<128x128xbf16>
    %c0_10 = arith.constant 0 : index
    %c0_11 = arith.constant 0 : index
    %7 = vector.load %arg4[%c0_10, %c0_11] : memref<128x384xbf16, #tpu.memory_space<vmem>>, vector<128x384xbf16>
    %cst = arith.constant dense<0.000000e+00> : vector<128x384xf32>
    %8 = tpu.matmul %6, %7, %cst {dimension_numbers = #tpu.dot_dimension_numbers<[1], [0], [0], [1], [0, 0, 1, 1], [], []>} : vector<128x128xbf16>, vector<128x384xbf16>, vector<128x384xf32> -> vector<128x384xf32>
    %c0_12 = arith.constant 0 : index
    %c0_13 = arith.constant 0 : index
    %9 = vector.load %arg5[%c0_12, %c0_13] : memref<1x384xf32, #tpu.memory_space<vmem>>, vector<1x384xf32>
    %10 = vector.broadcast %9 : vector<1x384xf32> to vector<128x384xf32>
    %11 = arith.addf %8, %10 : vector<128x384xf32>
    %cst_14 = arith.constant 1.000000e+00 : f32
    %12 = vector.broadcast %cst_14 : f32 to vector<128x384xf32>
    %13 = arith.mulf %11, %12 : vector<128x384xf32>
    %14 = arith.truncf %13 : vector<128x384xf32> to vector<128x384xbf16>
    %c0_15 = arith.constant 0 : index
    %c0_16 = arith.constant 0 : index
    %15 = vector.load %arg6[%c0_15, %c0_16] : memref<128x384xbf16, #tpu.memory_space<vmem>>, vector<128x384xbf16>
    tpu.vector_store %arg6[%c0_15, %c0_16], %14 {strides = array<i32>} : memref<128x384xbf16, #tpu.memory_space<vmem>>, vector<128x384xbf16>,
    return
  }
  func.func @transform_0(%arg0: i32) -> (i32, i32) {
    %c0_i32 = arith.constant 0 : i32
    %c0_i32_0 = arith.constant 0 : i32
    return %arg0, %c0_i32 : i32, i32
  }
  func.func @transform_1(%arg0: i32) -> (i32, i32) {
    %c0_i32 = arith.constant 0 : i32
    %c0_i32_0 = arith.constant 0 : i32
    return %arg0, %c0_i32 : i32, i32
  }
  func.func @transform_2(%arg0: i32) -> (i32, i32) {
    %c0_i32 = arith.constant 0 : i32
    %c0_i32_0 = arith.constant 0 : i32
    return %arg0, %c0_i32 : i32, i32
  }
  func.func @transform_3(%arg0: i32) -> (i32, i32) {
    %c0_i32 = arith.constant 0 : i32
    %c0_i32_0 = arith.constant 0 : i32
    %c0_i32_1 = arith.constant 0 : i32
    return %c0_i32, %c0_i32_0 : i32, i32
  }
  func.func @transform_4(%arg0: i32) -> (i32, i32) {
    %c0_i32 = arith.constant 0 : i32
    %c0_i32_0 = arith.constant 0 : i32
    %c0_i32_1 = arith.constant 0 : i32
    return %c0_i32, %c0_i32_0 : i32, i32
  }
  func.func @transform_5(%arg0: i32) -> (i32, i32) {
    %c0_i32 = arith.constant 0 : i32
    %c0_i32_0 = arith.constant 0 : i32
    return %arg0, %c0_i32 : i32, i32
  }
}

module attributes {stable_mosaic.version = 11 : i64} {
  func.func @_residual_fuse_kernel(%arg0: i32, %arg1: memref<99xf32, #tpu.memory_space<smem>>, %arg2: memref<1x8x8x384xbf16, #tpu.memory_space<vmem>>, %arg3: memref<1x8x8x384xbf16, #tpu.memory_space<vmem>>, %arg4: memref<1x1x384xf32, #tpu.memory_space<vmem>>, %arg5: memref<1x8x8x384xf32, #tpu.memory_space<vmem>>) attributes {dimension_semantics = [#tpu.dimension_semantics<parallel>], iteration_bounds = array<i64: 2>, scalar_prefetch = 0 : i64, scratch_operands = 0 : i64, tpu.core_type = #tpu.core_type<tc>, window_params = [{transform_indices = @transform_0, window_bounds = array<i64: 99>}, {transform_indices = @transform_1, window_bounds = array<i64: 1, 8, 8, 384>}, {transform_indices = @transform_2, window_bounds = array<i64: 1, 8, 8, 384>}, {transform_indices = @transform_3, window_bounds = array<i64: 1, 1, 384>}, {transform_indices = @transform_4, window_bounds = array<i64: 1, 8, 8, 384>}]} {
    %c0 = arith.constant 0 : index
    %c0_0 = arith.constant 0 : index
    %c0_1 = arith.constant 0 : index
    %c0_2 = arith.constant 0 : index
    %0 = vector.load %arg3[%c0, %c0_0, %c0_1, %c0_2] : memref<1x8x8x384xbf16, #tpu.memory_space<vmem>>, vector<1x8x8x384xbf16>
    %1 = vector.shape_cast %0 : vector<1x8x8x384xbf16> to vector<8x8x384xbf16>
    %2 = arith.extf %1 : vector<8x8x384xbf16> to vector<8x8x384xf32>
    %c0_3 = arith.constant 0 : index
    %c0_4 = arith.constant 0 : index
    %c0_5 = arith.constant 0 : index
    %3 = vector.load %arg4[%c0_3, %c0_4, %c0_5] : memref<1x1x384xf32, #tpu.memory_space<vmem>>, vector<1x1x384xf32>
    %4 = vector.shape_cast %3 : vector<1x1x384xf32> to vector<1x384xf32>
    %5 = vector.shape_cast %4 : vector<1x384xf32> to vector<1x1x384xf32>
    %6 = vector.broadcast %5 : vector<1x1x384xf32> to vector<8x8x384xf32>
    %7 = arith.mulf %2, %6 : vector<8x8x384xf32>
    %cst = arith.constant dense<0.000000e+00> : vector<8x8xf32>
    %8 = vector.multi_reduction <add>, %7, %cst [2] : vector<8x8x384xf32> to vector<8x8xf32>
    %cst_6 = arith.constant 3.840000e+02 : f32
    %9 = vector.broadcast %cst_6 : f32 to vector<8x8xf32>
    %10 = arith.divf %8, %9 : vector<8x8xf32>
    %cst_7 = arith.constant dense<0xFF800000> : vector<8x8xf32>
    %11 = vector.multi_reduction <maximumf>, %7, %cst_7 [2] : vector<8x8x384xf32> to vector<8x8xf32>
    %cst_8 = arith.constant 0.000000e+00 : f32
    %12 = vector.broadcast %cst_8 : f32 to vector<3x8xf32>
    %13 = tpu.concatenate %12, %10, %12 in 0 : vector<3x8xf32>, vector<8x8xf32>, vector<3x8xf32> -> vector<14x8xf32>
    %cst_9 = arith.constant 0.000000e+00 : f32
    %14 = vector.broadcast %cst_9 : f32 to vector<14x3xf32>
    %15 = tpu.concatenate %14, %13, %14 in 1 : vector<14x3xf32>, vector<14x8xf32>, vector<14x3xf32> -> vector<14x14xf32>
    %cst_10 = arith.constant 0.000000e+00 : f32
    %16 = vector.broadcast %cst_10 : f32 to vector<3x8xf32>
    %17 = tpu.concatenate %16, %11, %16 in 0 : vector<3x8xf32>, vector<8x8xf32>, vector<3x8xf32> -> vector<14x8xf32>
    %cst_11 = arith.constant 0.000000e+00 : f32
    %18 = vector.broadcast %cst_11 : f32 to vector<14x3xf32>
    %19 = tpu.concatenate %18, %17, %18 in 1 : vector<14x3xf32>, vector<14x8xf32>, vector<14x3xf32> -> vector<14x14xf32>
    %cst_12 = arith.constant 0.000000e+00 : f32
    %20 = vector.broadcast %cst_12 : f32 to vector<8x8xf32>
    %c98 = arith.constant 98 : index
    %21 = memref.load %arg1[%c98] : memref<99xf32, #tpu.memory_space<smem>>
    %22 = vector.broadcast %21 : f32 to vector<8x8xf32>
    %23 = arith.addf %20, %22 : vector<8x8xf32>
    %c0_13 = arith.constant 0 : index
    %24 = memref.load %arg1[%c0_13] : memref<99xf32, #tpu.memory_space<smem>>
    %25 = vector.extract_strided_slice %15 {offsets = [0, 0], sizes = [8, 8], strides = [1, 1]} : vector<14x14xf32> to vector<8x8xf32>
    %26 = vector.broadcast %24 : f32 to vector<8x8xf32>
    %27 = arith.mulf %26, %25 : vector<8x8xf32>
    %28 = arith.addf %23, %27 : vector<8x8xf32>
    %c1 = arith.constant 1 : index
    %29 = memref.load %arg1[%c1] : memref<99xf32, #tpu.memory_space<smem>>
    %30 = vector.extract_strided_slice %15 {offsets = [0, 1], sizes = [8, 8], strides = [1, 1]} : vector<14x14xf32> to vector<8x8xf32>
    %31 = vector.broadcast %29 : f32 to vector<8x8xf32>
    %32 = arith.mulf %31, %30 : vector<8x8xf32>
    %33 = arith.addf %28, %32 : vector<8x8xf32>
    %c2 = arith.constant 2 : index
    %34 = memref.load %arg1[%c2] : memref<99xf32, #tpu.memory_space<smem>>
    %35 = vector.extract_strided_slice %15 {offsets = [0, 2], sizes = [8, 8], strides = [1, 1]} : vector<14x14xf32> to vector<8x8xf32>
    %36 = vector.broadcast %34 : f32 to vector<8x8xf32>
    %37 = arith.mulf %36, %35 : vector<8x8xf32>
    %38 = arith.addf %33, %37 : vector<8x8xf32>
    %c3 = arith.constant 3 : index
    %39 = memref.load %arg1[%c3] : memref<99xf32, #tpu.memory_space<smem>>
    %40 = vector.extract_strided_slice %15 {offsets = [0, 3], sizes = [8, 8], strides = [1, 1]} : vector<14x14xf32> to vector<8x8xf32>
    %41 = vector.broadcast %39 : f32 to vector<8x8xf32>
    %42 = arith.mulf %41, %40 : vector<8x8xf32>
    %43 = arith.addf %38, %42 : vector<8x8xf32>
    %c4 = arith.constant 4 : index
    %44 = memref.load %arg1[%c4] : memref<99xf32, #tpu.memory_space<smem>>
    %45 = vector.extract_strided_slice %15 {offsets = [0, 4], sizes = [8, 8], strides = [1, 1]} : vector<14x14xf32> to vector<8x8xf32>
    %46 = vector.broadcast %44 : f32 to vector<8x8xf32>
    %47 = arith.mulf %46, %45 : vector<8x8xf32>
    %48 = arith.addf %43, %47 : vector<8x8xf32>
    %c5 = arith.constant 5 : index
    %49 = memref.load %arg1[%c5] : memref<99xf32, #tpu.memory_space<smem>>
    %50 = vector.extract_strided_slice %15 {offsets = [0, 5], sizes = [8, 8], strides = [1, 1]} : vector<14x14xf32> to vector<8x8xf32>
    %51 = vector.broadcast %49 : f32 to vector<8x8xf32>
    %52 = arith.mulf %51, %50 : vector<8x8xf32>
    %53 = arith.addf %48, %52 : vector<8x8xf32>
    %c6 = arith.constant 6 : index
    %54 = memref.load %arg1[%c6] : memref<99xf32, #tpu.memory_space<smem>>
    %55 = vector.extract_strided_slice %15 {offsets = [0, 6], sizes = [8, 8], strides = [1, 1]} : vector<14x14xf32> to vector<8x8xf32>
    %56 = vector.broadcast %54 : f32 to vector<8x8xf32>
    %57 = arith.mulf %56, %55 : vector<8x8xf32>
    %58 = arith.addf %53, %57 : vector<8x8xf32>
    %c7 = arith.constant 7 : index
    %59 = memref.load %arg1[%c7] : memref<99xf32, #tpu.memory_space<smem>>
    %60 = vector.extract_strided_slice %15 {offsets = [1, 0], sizes = [8, 8], strides = [1, 1]} : vector<14x14xf32> to vector<8x8xf32>
    %61 = vector.broadcast %59 : f32 to vector<8x8xf32>
    %62 = arith.mulf %61, %60 : vector<8x8xf32>
    %63 = arith.addf %58, %62 : vector<8x8xf32>
    %c8 = arith.constant 8 : index
    %64 = memref.load %arg1[%c8] : memref<99xf32, #tpu.memory_space<smem>>
    %65 = vector.extract_strided_slice %15 {offsets = [1, 1], sizes = [8, 8], strides = [1, 1]} : vector<14x14xf32> to vector<8x8xf32>
    %66 = vector.broadcast %64 : f32 to vector<8x8xf32>
    %67 = arith.mulf %66, %65 : vector<8x8xf32>
    %68 = arith.addf %63, %67 : vector<8x8xf32>
    %c9 = arith.constant 9 : index
    %69 = memref.load %arg1[%c9] : memref<99xf32, #tpu.memory_space<smem>>
    %70 = vector.extract_strided_slice %15 {offsets = [1, 2], sizes = [8, 8], strides = [1, 1]} : vector<14x14xf32> to vector<8x8xf32>
    %71 = vector.broadcast %69 : f32 to vector<8x8xf32>
    %72 = arith.mulf %71, %70 : vector<8x8xf32>
    %73 = arith.addf %68, %72 : vector<8x8xf32>
    %c10 = arith.constant 10 : index
    %74 = memref.load %arg1[%c10] : memref<99xf32, #tpu.memory_space<smem>>
    %75 = vector.extract_strided_slice %15 {offsets = [1, 3], sizes = [8, 8], strides = [1, 1]} : vector<14x14xf32> to vector<8x8xf32>
    %76 = vector.broadcast %74 : f32 to vector<8x8xf32>
    %77 = arith.mulf %76, %75 : vector<8x8xf32>
    %78 = arith.addf %73, %77 : vector<8x8xf32>
    %c11 = arith.constant 11 : index
    %79 = memref.load %arg1[%c11] : memref<99xf32, #tpu.memory_space<smem>>
    %80 = vector.extract_strided_slice %15 {offsets = [1, 4], sizes = [8, 8], strides = [1, 1]} : vector<14x14xf32> to vector<8x8xf32>
    %81 = vector.broadcast %79 : f32 to vector<8x8xf32>
    %82 = arith.mulf %81, %80 : vector<8x8xf32>
    %83 = arith.addf %78, %82 : vector<8x8xf32>
    %c12 = arith.constant 12 : index
    %84 = memref.load %arg1[%c12] : memref<99xf32, #tpu.memory_space<smem>>
    %85 = vector.extract_strided_slice %15 {offsets = [1, 5], sizes = [8, 8], strides = [1, 1]} : vector<14x14xf32> to vector<8x8xf32>
    %86 = vector.broadcast %84 : f32 to vector<8x8xf32>
    %87 = arith.mulf %86, %85 : vector<8x8xf32>
    %88 = arith.addf %83, %87 : vector<8x8xf32>
    %c13 = arith.constant 13 : index
    %89 = memref.load %arg1[%c13] : memref<99xf32, #tpu.memory_space<smem>>
    %90 = vector.extract_strided_slice %15 {offsets = [1, 6], sizes = [8, 8], strides = [1, 1]} : vector<14x14xf32> to vector<8x8xf32>
    %91 = vector.broadcast %89 : f32 to vector<8x8xf32>
    %92 = arith.mulf %91, %90 : vector<8x8xf32>
    %93 = arith.addf %88, %92 : vector<8x8xf32>
    %c14 = arith.constant 14 : index
    %94 = memref.load %arg1[%c14] : memref<99xf32, #tpu.memory_space<smem>>
    %95 = vector.extract_strided_slice %15 {offsets = [2, 0], sizes = [8, 8], strides = [1, 1]} : vector<14x14xf32> to vector<8x8xf32>
    %96 = vector.broadcast %94 : f32 to vector<8x8xf32>
    %97 = arith.mulf %96, %95 : vector<8x8xf32>
    %98 = arith.addf %93, %97 : vector<8x8xf32>
    %c15 = arith.constant 15 : index
    %99 = memref.load %arg1[%c15] : memref<99xf32, #tpu.memory_space<smem>>
    %100 = vector.extract_strided_slice %15 {offsets = [2, 1], sizes = [8, 8], strides = [1, 1]} : vector<14x14xf32> to vector<8x8xf32>
    %101 = vector.broadcast %99 : f32 to vector<8x8xf32>
    %102 = arith.mulf %101, %100 : vector<8x8xf32>
    %103 = arith.addf %98, %102 : vector<8x8xf32>
    %c16 = arith.constant 16 : index
    %104 = memref.load %arg1[%c16] : memref<99xf32, #tpu.memory_space<smem>>
    %105 = vector.extract_strided_slice %15 {offsets = [2, 2], sizes = [8, 8], strides = [1, 1]} : vector<14x14xf32> to vector<8x8xf32>
    %106 = vector.broadcast %104 : f32 to vector<8x8xf32>
    %107 = arith.mulf %106, %105 : vector<8x8xf32>
    %108 = arith.addf %103, %107 : vector<8x8xf32>
    %c17 = arith.constant 17 : index
    %109 = memref.load %arg1[%c17] : memref<99xf32, #tpu.memory_space<smem>>
    %110 = vector.extract_strided_slice %15 {offsets = [2, 3], sizes = [8, 8], strides = [1, 1]} : vector<14x14xf32> to vector<8x8xf32>
    %111 = vector.broadcast %109 : f32 to vector<8x8xf32>
    %112 = arith.mulf %111, %110 : vector<8x8xf32>
    %113 = arith.addf %108, %112 : vector<8x8xf32>
    %c18 = arith.constant 18 : index
    %114 = memref.load %arg1[%c18] : memref<99xf32, #tpu.memory_space<smem>>
    %115 = vector.extract_strided_slice %15 {offsets = [2, 4], sizes = [8, 8], strides = [1, 1]} : vector<14x14xf32> to vector<8x8xf32>
    %116 = vector.broadcast %114 : f32 to vector<8x8xf32>
    %117 = arith.mulf %116, %115 : vector<8x8xf32>
    %118 = arith.addf %113, %117 : vector<8x8xf32>
    %c19 = arith.constant 19 : index
    %119 = memref.load %arg1[%c19] : memref<99xf32, #tpu.memory_space<smem>>
    %120 = vector.extract_strided_slice %15 {offsets = [2, 5], sizes = [8, 8], strides = [1, 1]} : vector<14x14xf32> to vector<8x8xf32>
    %121 = vector.broadcast %119 : f32 to vector<8x8xf32>
    %122 = arith.mulf %121, %120 : vector<8x8xf32>
    %123 = arith.addf %118, %122 : vector<8x8xf32>
    %c20 = arith.constant 20 : index
    %124 = memref.load %arg1[%c20] : memref<99xf32, #tpu.memory_space<smem>>
    %125 = vector.extract_strided_slice %15 {offsets = [2, 6], sizes = [8, 8], strides = [1, 1]} : vector<14x14xf32> to vector<8x8xf32>
    %126 = vector.broadcast %124 : f32 to vector<8x8xf32>
    %127 = arith.mulf %126, %125 : vector<8x8xf32>
    %128 = arith.addf %123, %127 : vector<8x8xf32>
    %c21 = arith.constant 21 : index
    %129 = memref.load %arg1[%c21] : memref<99xf32, #tpu.memory_space<smem>>
    %130 = vector.extract_strided_slice %15 {offsets = [3, 0], sizes = [8, 8], strides = [1, 1]} : vector<14x14xf32> to vector<8x8xf32>
    %131 = vector.broadcast %129 : f32 to vector<8x8xf32>
    %132 = arith.mulf %131, %130 : vector<8x8xf32>
    %133 = arith.addf %128, %132 : vector<8x8xf32>
    %c22 = arith.constant 22 : index
    %134 = memref.load %arg1[%c22] : memref<99xf32, #tpu.memory_space<smem>>
    %135 = vector.extract_strided_slice %15 {offsets = [3, 1], sizes = [8, 8], strides = [1, 1]} : vector<14x14xf32> to vector<8x8xf32>
    %136 = vector.broadcast %134 : f32 to vector<8x8xf32>
    %137 = arith.mulf %136, %135 : vector<8x8xf32>
    %138 = arith.addf %133, %137 : vector<8x8xf32>
    %c23 = arith.constant 23 : index
    %139 = memref.load %arg1[%c23] : memref<99xf32, #tpu.memory_space<smem>>
    %140 = vector.extract_strided_slice %15 {offsets = [3, 2], sizes = [8, 8], strides = [1, 1]} : vector<14x14xf32> to vector<8x8xf32>
    %141 = vector.broadcast %139 : f32 to vector<8x8xf32>
    %142 = arith.mulf %141, %140 : vector<8x8xf32>
    %143 = arith.addf %138, %142 : vector<8x8xf32>
    %c24 = arith.constant 24 : index
    %144 = memref.load %arg1[%c24] : memref<99xf32, #tpu.memory_space<smem>>
    %145 = vector.extract_strided_slice %15 {offsets = [3, 3], sizes = [8, 8], strides = [1, 1]} : vector<14x14xf32> to vector<8x8xf32>
    %146 = vector.broadcast %144 : f32 to vector<8x8xf32>
    %147 = arith.mulf %146, %145 : vector<8x8xf32>
    %148 = arith.addf %143, %147 : vector<8x8xf32>
    %c25 = arith.constant 25 : index
    %149 = memref.load %arg1[%c25] : memref<99xf32, #tpu.memory_space<smem>>
    %150 = vector.extract_strided_slice %15 {offsets = [3, 4], sizes = [8, 8], strides = [1, 1]} : vector<14x14xf32> to vector<8x8xf32>
    %151 = vector.broadcast %149 : f32 to vector<8x8xf32>
    %152 = arith.mulf %151, %150 : vector<8x8xf32>
    %153 = arith.addf %148, %152 : vector<8x8xf32>
    %c26 = arith.constant 26 : index
    %154 = memref.load %arg1[%c26] : memref<99xf32, #tpu.memory_space<smem>>
    %155 = vector.extract_strided_slice %15 {offsets = [3, 5], sizes = [8, 8], strides = [1, 1]} : vector<14x14xf32> to vector<8x8xf32>
    %156 = vector.broadcast %154 : f32 to vector<8x8xf32>
    %157 = arith.mulf %156, %155 : vector<8x8xf32>
    %158 = arith.addf %153, %157 : vector<8x8xf32>
    %c27 = arith.constant 27 : index
    %159 = memref.load %arg1[%c27] : memref<99xf32, #tpu.memory_space<smem>>
    %160 = vector.extract_strided_slice %15 {offsets = [3, 6], sizes = [8, 8], strides = [1, 1]} : vector<14x14xf32> to vector<8x8xf32>
    %161 = vector.broadcast %159 : f32 to vector<8x8xf32>
    %162 = arith.mulf %161, %160 : vector<8x8xf32>
    %163 = arith.addf %158, %162 : vector<8x8xf32>
    %c28 = arith.constant 28 : index
    %164 = memref.load %arg1[%c28] : memref<99xf32, #tpu.memory_space<smem>>
    %165 = vector.extract_strided_slice %15 {offsets = [4, 0], sizes = [8, 8], strides = [1, 1]} : vector<14x14xf32> to vector<8x8xf32>
    %166 = vector.broadcast %164 : f32 to vector<8x8xf32>
    %167 = arith.mulf %166, %165 : vector<8x8xf32>
    %168 = arith.addf %163, %167 : vector<8x8xf32>
    %c29 = arith.constant 29 : index
    %169 = memref.load %arg1[%c29] : memref<99xf32, #tpu.memory_space<smem>>
    %170 = vector.extract_strided_slice %15 {offsets = [4, 1], sizes = [8, 8], strides = [1, 1]} : vector<14x14xf32> to vector<8x8xf32>
    %171 = vector.broadcast %169 : f32 to vector<8x8xf32>
    %172 = arith.mulf %171, %170 : vector<8x8xf32>
    %173 = arith.addf %168, %172 : vector<8x8xf32>
    %c30 = arith.constant 30 : index
    %174 = memref.load %arg1[%c30] : memref<99xf32, #tpu.memory_space<smem>>
    %175 = vector.extract_strided_slice %15 {offsets = [4, 2], sizes = [8, 8], strides = [1, 1]} : vector<14x14xf32> to vector<8x8xf32>
    %176 = vector.broadcast %174 : f32 to vector<8x8xf32>
    %177 = arith.mulf %176, %175 : vector<8x8xf32>
    %178 = arith.addf %173, %177 : vector<8x8xf32>
    %c31 = arith.constant 31 : index
    %179 = memref.load %arg1[%c31] : memref<99xf32, #tpu.memory_space<smem>>
    %180 = vector.extract_strided_slice %15 {offsets = [4, 3], sizes = [8, 8], strides = [1, 1]} : vector<14x14xf32> to vector<8x8xf32>
    %181 = vector.broadcast %179 : f32 to vector<8x8xf32>
    %182 = arith.mulf %181, %180 : vector<8x8xf32>
    %183 = arith.addf %178, %182 : vector<8x8xf32>
    %c32 = arith.constant 32 : index
    %184 = memref.load %arg1[%c32] : memref<99xf32, #tpu.memory_space<smem>>
    %185 = vector.extract_strided_slice %15 {offsets = [4, 4], sizes = [8, 8], strides = [1, 1]} : vector<14x14xf32> to vector<8x8xf32>
    %186 = vector.broadcast %184 : f32 to vector<8x8xf32>
    %187 = arith.mulf %186, %185 : vector<8x8xf32>
    %188 = arith.addf %183, %187 : vector<8x8xf32>
    %c33 = arith.constant 33 : index
    %189 = memref.load %arg1[%c33] : memref<99xf32, #tpu.memory_space<smem>>
    %190 = vector.extract_strided_slice %15 {offsets = [4, 5], sizes = [8, 8], strides = [1, 1]} : vector<14x14xf32> to vector<8x8xf32>
    %191 = vector.broadcast %189 : f32 to vector<8x8xf32>
    %192 = arith.mulf %191, %190 : vector<8x8xf32>
    %193 = arith.addf %188, %192 : vector<8x8xf32>
    %c34 = arith.constant 34 : index
    %194 = memref.load %arg1[%c34] : memref<99xf32, #tpu.memory_space<smem>>
    %195 = vector.extract_strided_slice %15 {offsets = [4, 6], sizes = [8, 8], strides = [1, 1]} : vector<14x14xf32> to vector<8x8xf32>
    %196 = vector.broadcast %194 : f32 to vector<8x8xf32>
    %197 = arith.mulf %196, %195 : vector<8x8xf32>
    %198 = arith.addf %193, %197 : vector<8x8xf32>
    %c35 = arith.constant 35 : index
    %199 = memref.load %arg1[%c35] : memref<99xf32, #tpu.memory_space<smem>>
    %200 = vector.extract_strided_slice %15 {offsets = [5, 0], sizes = [8, 8], strides = [1, 1]} : vector<14x14xf32> to vector<8x8xf32>
    %201 = vector.broadcast %199 : f32 to vector<8x8xf32>
    %202 = arith.mulf %201, %200 : vector<8x8xf32>
    %203 = arith.addf %198, %202 : vector<8x8xf32>
    %c36 = arith.constant 36 : index
    %204 = memref.load %arg1[%c36] : memref<99xf32, #tpu.memory_space<smem>>
    %205 = vector.extract_strided_slice %15 {offsets = [5, 1], sizes = [8, 8], strides = [1, 1]} : vector<14x14xf32> to vector<8x8xf32>
    %206 = vector.broadcast %204 : f32 to vector<8x8xf32>
    %207 = arith.mulf %206, %205 : vector<8x8xf32>
    %208 = arith.addf %203, %207 : vector<8x8xf32>
    %c37 = arith.constant 37 : index
    %209 = memref.load %arg1[%c37] : memref<99xf32, #tpu.memory_space<smem>>
    %210 = vector.extract_strided_slice %15 {offsets = [5, 2], sizes = [8, 8], strides = [1, 1]} : vector<14x14xf32> to vector<8x8xf32>
    %211 = vector.broadcast %209 : f32 to vector<8x8xf32>
    %212 = arith.mulf %211, %210 : vector<8x8xf32>
    %213 = arith.addf %208, %212 : vector<8x8xf32>
    %c38 = arith.constant 38 : index
    %214 = memref.load %arg1[%c38] : memref<99xf32, #tpu.memory_space<smem>>
    %215 = vector.extract_strided_slice %15 {offsets = [5, 3], sizes = [8, 8], strides = [1, 1]} : vector<14x14xf32> to vector<8x8xf32>
    %216 = vector.broadcast %214 : f32 to vector<8x8xf32>
    %217 = arith.mulf %216, %215 : vector<8x8xf32>
    %218 = arith.addf %213, %217 : vector<8x8xf32>
    %c39 = arith.constant 39 : index
    %219 = memref.load %arg1[%c39] : memref<99xf32, #tpu.memory_space<smem>>
    %220 = vector.extract_strided_slice %15 {offsets = [5, 4], sizes = [8, 8], strides = [1, 1]} : vector<14x14xf32> to vector<8x8xf32>
    %221 = vector.broadcast %219 : f32 to vector<8x8xf32>
    %222 = arith.mulf %221, %220 : vector<8x8xf32>
    %223 = arith.addf %218, %222 : vector<8x8xf32>
    %c40 = arith.constant 40 : index
    %224 = memref.load %arg1[%c40] : memref<99xf32, #tpu.memory_space<smem>>
    %225 = vector.extract_strided_slice %15 {offsets = [5, 5], sizes = [8, 8], strides = [1, 1]} : vector<14x14xf32> to vector<8x8xf32>
    %226 = vector.broadcast %224 : f32 to vector<8x8xf32>
    %227 = arith.mulf %226, %225 : vector<8x8xf32>
    %228 = arith.addf %223, %227 : vector<8x8xf32>
    %c41 = arith.constant 41 : index
    %229 = memref.load %arg1[%c41] : memref<99xf32, #tpu.memory_space<smem>>
    %230 = vector.extract_strided_slice %15 {offsets = [5, 6], sizes = [8, 8], strides = [1, 1]} : vector<14x14xf32> to vector<8x8xf32>
    %231 = vector.broadcast %229 : f32 to vector<8x8xf32>
    %232 = arith.mulf %231, %230 : vector<8x8xf32>
    %233 = arith.addf %228, %232 : vector<8x8xf32>
    %c42 = arith.constant 42 : index
    %234 = memref.load %arg1[%c42] : memref<99xf32, #tpu.memory_space<smem>>
    %235 = vector.extract_strided_slice %15 {offsets = [6, 0], sizes = [8, 8], strides = [1, 1]} : vector<14x14xf32> to vector<8x8xf32>
    %236 = vector.broadcast %234 : f32 to vector<8x8xf32>
    %237 = arith.mulf %236, %235 : vector<8x8xf32>
    %238 = arith.addf %233, %237 : vector<8x8xf32>
    %c43 = arith.constant 43 : index
    %239 = memref.load %arg1[%c43] : memref<99xf32, #tpu.memory_space<smem>>
    %240 = vector.extract_strided_slice %15 {offsets = [6, 1], sizes = [8, 8], strides = [1, 1]} : vector<14x14xf32> to vector<8x8xf32>
    %241 = vector.broadcast %239 : f32 to vector<8x8xf32>
    %242 = arith.mulf %241, %240 : vector<8x8xf32>
    %243 = arith.addf %238, %242 : vector<8x8xf32>
    %c44 = arith.constant 44 : index
    %244 = memref.load %arg1[%c44] : memref<99xf32, #tpu.memory_space<smem>>
    %245 = vector.extract_strided_slice %15 {offsets = [6, 2], sizes = [8, 8], strides = [1, 1]} : vector<14x14xf32> to vector<8x8xf32>
    %246 = vector.broadcast %244 : f32 to vector<8x8xf32>
    %247 = arith.mulf %246, %245 : vector<8x8xf32>
    %248 = arith.addf %243, %247 : vector<8x8xf32>
    %c45 = arith.constant 45 : index
    %249 = memref.load %arg1[%c45] : memref<99xf32, #tpu.memory_space<smem>>
    %250 = vector.extract_strided_slice %15 {offsets = [6, 3], sizes = [8, 8], strides = [1, 1]} : vector<14x14xf32> to vector<8x8xf32>
    %251 = vector.broadcast %249 : f32 to vector<8x8xf32>
    %252 = arith.mulf %251, %250 : vector<8x8xf32>
    %253 = arith.addf %248, %252 : vector<8x8xf32>
    %c46 = arith.constant 46 : index
    %254 = memref.load %arg1[%c46] : memref<99xf32, #tpu.memory_space<smem>>
    %255 = vector.extract_strided_slice %15 {offsets = [6, 4], sizes = [8, 8], strides = [1, 1]} : vector<14x14xf32> to vector<8x8xf32>
    %256 = vector.broadcast %254 : f32 to vector<8x8xf32>
    %257 = arith.mulf %256, %255 : vector<8x8xf32>
    %258 = arith.addf %253, %257 : vector<8x8xf32>
    %c47 = arith.constant 47 : index
    %259 = memref.load %arg1[%c47] : memref<99xf32, #tpu.memory_space<smem>>
    %260 = vector.extract_strided_slice %15 {offsets = [6, 5], sizes = [8, 8], strides = [1, 1]} : vector<14x14xf32> to vector<8x8xf32>
    %261 = vector.broadcast %259 : f32 to vector<8x8xf32>
    %262 = arith.mulf %261, %260 : vector<8x8xf32>
    %263 = arith.addf %258, %262 : vector<8x8xf32>
    %c48 = arith.constant 48 : index
    %264 = memref.load %arg1[%c48] : memref<99xf32, #tpu.memory_space<smem>>
    %265 = vector.extract_strided_slice %15 {offsets = [6, 6], sizes = [8, 8], strides = [1, 1]} : vector<14x14xf32> to vector<8x8xf32>
    %266 = vector.broadcast %264 : f32 to vector<8x8xf32>
    %267 = arith.mulf %266, %265 : vector<8x8xf32>
    %268 = arith.addf %263, %267 : vector<8x8xf32>
    %c49 = arith.constant 49 : index
    %269 = memref.load %arg1[%c49] : memref<99xf32, #tpu.memory_space<smem>>
    %270 = vector.extract_strided_slice %19 {offsets = [0, 0], sizes = [8, 8], strides = [1, 1]} : vector<14x14xf32> to vector<8x8xf32>
    %271 = vector.broadcast %269 : f32 to vector<8x8xf32>
    %272 = arith.mulf %271, %270 : vector<8x8xf32>
    %273 = arith.addf %268, %272 : vector<8x8xf32>
    %c50 = arith.constant 50 : index
    %274 = memref.load %arg1[%c50] : memref<99xf32, #tpu.memory_space<smem>>
    %275 = vector.extract_strided_slice %19 {offsets = [0, 1], sizes = [8, 8], strides = [1, 1]} : vector<14x14xf32> to vector<8x8xf32>
    %276 = vector.broadcast %274 : f32 to vector<8x8xf32>
    %277 = arith.mulf %276, %275 : vector<8x8xf32>
    %278 = arith.addf %273, %277 : vector<8x8xf32>
    %c51 = arith.constant 51 : index
    %279 = memref.load %arg1[%c51] : memref<99xf32, #tpu.memory_space<smem>>
    %280 = vector.extract_strided_slice %19 {offsets = [0, 2], sizes = [8, 8], strides = [1, 1]} : vector<14x14xf32> to vector<8x8xf32>
    %281 = vector.broadcast %279 : f32 to vector<8x8xf32>
    %282 = arith.mulf %281, %280 : vector<8x8xf32>
    %283 = arith.addf %278, %282 : vector<8x8xf32>
    %c52 = arith.constant 52 : index
    %284 = memref.load %arg1[%c52] : memref<99xf32, #tpu.memory_space<smem>>
    %285 = vector.extract_strided_slice %19 {offsets = [0, 3], sizes = [8, 8], strides = [1, 1]} : vector<14x14xf32> to vector<8x8xf32>
    %286 = vector.broadcast %284 : f32 to vector<8x8xf32>
    %287 = arith.mulf %286, %285 : vector<8x8xf32>
    %288 = arith.addf %283, %287 : vector<8x8xf32>
    %c53 = arith.constant 53 : index
    %289 = memref.load %arg1[%c53] : memref<99xf32, #tpu.memory_space<smem>>
    %290 = vector.extract_strided_slice %19 {offsets = [0, 4], sizes = [8, 8], strides = [1, 1]} : vector<14x14xf32> to vector<8x8xf32>
    %291 = vector.broadcast %289 : f32 to vector<8x8xf32>
    %292 = arith.mulf %291, %290 : vector<8x8xf32>
    %293 = arith.addf %288, %292 : vector<8x8xf32>
    %c54 = arith.constant 54 : index
    %294 = memref.load %arg1[%c54] : memref<99xf32, #tpu.memory_space<smem>>
    %295 = vector.extract_strided_slice %19 {offsets = [0, 5], sizes = [8, 8], strides = [1, 1]} : vector<14x14xf32> to vector<8x8xf32>
    %296 = vector.broadcast %294 : f32 to vector<8x8xf32>
    %297 = arith.mulf %296, %295 : vector<8x8xf32>
    %298 = arith.addf %293, %297 : vector<8x8xf32>
    %c55 = arith.constant 55 : index
    %299 = memref.load %arg1[%c55] : memref<99xf32, #tpu.memory_space<smem>>
    %300 = vector.extract_strided_slice %19 {offsets = [0, 6], sizes = [8, 8], strides = [1, 1]} : vector<14x14xf32> to vector<8x8xf32>
    %301 = vector.broadcast %299 : f32 to vector<8x8xf32>
    %302 = arith.mulf %301, %300 : vector<8x8xf32>
    %303 = arith.addf %298, %302 : vector<8x8xf32>
    %c56 = arith.constant 56 : index
    %304 = memref.load %arg1[%c56] : memref<99xf32, #tpu.memory_space<smem>>
    %305 = vector.extract_strided_slice %19 {offsets = [1, 0], sizes = [8, 8], strides = [1, 1]} : vector<14x14xf32> to vector<8x8xf32>
    %306 = vector.broadcast %304 : f32 to vector<8x8xf32>
    %307 = arith.mulf %306, %305 : vector<8x8xf32>
    %308 = arith.addf %303, %307 : vector<8x8xf32>
    %c57 = arith.constant 57 : index
    %309 = memref.load %arg1[%c57] : memref<99xf32, #tpu.memory_space<smem>>
    %310 = vector.extract_strided_slice %19 {offsets = [1, 1], sizes = [8, 8], strides = [1, 1]} : vector<14x14xf32> to vector<8x8xf32>
    %311 = vector.broadcast %309 : f32 to vector<8x8xf32>
    %312 = arith.mulf %311, %310 : vector<8x8xf32>
    %313 = arith.addf %308, %312 : vector<8x8xf32>
    %c58 = arith.constant 58 : index
    %314 = memref.load %arg1[%c58] : memref<99xf32, #tpu.memory_space<smem>>
    %315 = vector.extract_strided_slice %19 {offsets = [1, 2], sizes = [8, 8], strides = [1, 1]} : vector<14x14xf32> to vector<8x8xf32>
    %316 = vector.broadcast %314 : f32 to vector<8x8xf32>
    %317 = arith.mulf %316, %315 : vector<8x8xf32>
    %318 = arith.addf %313, %317 : vector<8x8xf32>
    %c59 = arith.constant 59 : index
    %319 = memref.load %arg1[%c59] : memref<99xf32, #tpu.memory_space<smem>>
    %320 = vector.extract_strided_slice %19 {offsets = [1, 3], sizes = [8, 8], strides = [1, 1]} : vector<14x14xf32> to vector<8x8xf32>
    %321 = vector.broadcast %319 : f32 to vector<8x8xf32>
    %322 = arith.mulf %321, %320 : vector<8x8xf32>
    %323 = arith.addf %318, %322 : vector<8x8xf32>
    %c60 = arith.constant 60 : index
    %324 = memref.load %arg1[%c60] : memref<99xf32, #tpu.memory_space<smem>>
    %325 = vector.extract_strided_slice %19 {offsets = [1, 4], sizes = [8, 8], strides = [1, 1]} : vector<14x14xf32> to vector<8x8xf32>
    %326 = vector.broadcast %324 : f32 to vector<8x8xf32>
    %327 = arith.mulf %326, %325 : vector<8x8xf32>
    %328 = arith.addf %323, %327 : vector<8x8xf32>
    %c61 = arith.constant 61 : index
    %329 = memref.load %arg1[%c61] : memref<99xf32, #tpu.memory_space<smem>>
    %330 = vector.extract_strided_slice %19 {offsets = [1, 5], sizes = [8, 8], strides = [1, 1]} : vector<14x14xf32> to vector<8x8xf32>
    %331 = vector.broadcast %329 : f32 to vector<8x8xf32>
    %332 = arith.mulf %331, %330 : vector<8x8xf32>
    %333 = arith.addf %328, %332 : vector<8x8xf32>
    %c62 = arith.constant 62 : index
    %334 = memref.load %arg1[%c62] : memref<99xf32, #tpu.memory_space<smem>>
    %335 = vector.extract_strided_slice %19 {offsets = [1, 6], sizes = [8, 8], strides = [1, 1]} : vector<14x14xf32> to vector<8x8xf32>
    %336 = vector.broadcast %334 : f32 to vector<8x8xf32>
    %337 = arith.mulf %336, %335 : vector<8x8xf32>
    %338 = arith.addf %333, %337 : vector<8x8xf32>
    %c63 = arith.constant 63 : index
    %339 = memref.load %arg1[%c63] : memref<99xf32, #tpu.memory_space<smem>>
    %340 = vector.extract_strided_slice %19 {offsets = [2, 0], sizes = [8, 8], strides = [1, 1]} : vector<14x14xf32> to vector<8x8xf32>
    %341 = vector.broadcast %339 : f32 to vector<8x8xf32>
    %342 = arith.mulf %341, %340 : vector<8x8xf32>
    %343 = arith.addf %338, %342 : vector<8x8xf32>
    %c64 = arith.constant 64 : index
    %344 = memref.load %arg1[%c64] : memref<99xf32, #tpu.memory_space<smem>>
    %345 = vector.extract_strided_slice %19 {offsets = [2, 1], sizes = [8, 8], strides = [1, 1]} : vector<14x14xf32> to vector<8x8xf32>
    %346 = vector.broadcast %344 : f32 to vector<8x8xf32>
    %347 = arith.mulf %346, %345 : vector<8x8xf32>
    %348 = arith.addf %343, %347 : vector<8x8xf32>
    %c65 = arith.constant 65 : index
    %349 = memref.load %arg1[%c65] : memref<99xf32, #tpu.memory_space<smem>>
    %350 = vector.extract_strided_slice %19 {offsets = [2, 2], sizes = [8, 8], strides = [1, 1]} : vector<14x14xf32> to vector<8x8xf32>
    %351 = vector.broadcast %349 : f32 to vector<8x8xf32>
    %352 = arith.mulf %351, %350 : vector<8x8xf32>
    %353 = arith.addf %348, %352 : vector<8x8xf32>
    %c66 = arith.constant 66 : index
    %354 = memref.load %arg1[%c66] : memref<99xf32, #tpu.memory_space<smem>>
    %355 = vector.extract_strided_slice %19 {offsets = [2, 3], sizes = [8, 8], strides = [1, 1]} : vector<14x14xf32> to vector<8x8xf32>
    %356 = vector.broadcast %354 : f32 to vector<8x8xf32>
    %357 = arith.mulf %356, %355 : vector<8x8xf32>
    %358 = arith.addf %353, %357 : vector<8x8xf32>
    %c67 = arith.constant 67 : index
    %359 = memref.load %arg1[%c67] : memref<99xf32, #tpu.memory_space<smem>>
    %360 = vector.extract_strided_slice %19 {offsets = [2, 4], sizes = [8, 8], strides = [1, 1]} : vector<14x14xf32> to vector<8x8xf32>
    %361 = vector.broadcast %359 : f32 to vector<8x8xf32>
    %362 = arith.mulf %361, %360 : vector<8x8xf32>
    %363 = arith.addf %358, %362 : vector<8x8xf32>
    %c68 = arith.constant 68 : index
    %364 = memref.load %arg1[%c68] : memref<99xf32, #tpu.memory_space<smem>>
    %365 = vector.extract_strided_slice %19 {offsets = [2, 5], sizes = [8, 8], strides = [1, 1]} : vector<14x14xf32> to vector<8x8xf32>
    %366 = vector.broadcast %364 : f32 to vector<8x8xf32>
    %367 = arith.mulf %366, %365 : vector<8x8xf32>
    %368 = arith.addf %363, %367 : vector<8x8xf32>
    %c69 = arith.constant 69 : index
    %369 = memref.load %arg1[%c69] : memref<99xf32, #tpu.memory_space<smem>>
    %370 = vector.extract_strided_slice %19 {offsets = [2, 6], sizes = [8, 8], strides = [1, 1]} : vector<14x14xf32> to vector<8x8xf32>
    %371 = vector.broadcast %369 : f32 to vector<8x8xf32>
    %372 = arith.mulf %371, %370 : vector<8x8xf32>
    %373 = arith.addf %368, %372 : vector<8x8xf32>
    %c70 = arith.constant 70 : index
    %374 = memref.load %arg1[%c70] : memref<99xf32, #tpu.memory_space<smem>>
    %375 = vector.extract_strided_slice %19 {offsets = [3, 0], sizes = [8, 8], strides = [1, 1]} : vector<14x14xf32> to vector<8x8xf32>
    %376 = vector.broadcast %374 : f32 to vector<8x8xf32>
    %377 = arith.mulf %376, %375 : vector<8x8xf32>
    %378 = arith.addf %373, %377 : vector<8x8xf32>
    %c71 = arith.constant 71 : index
    %379 = memref.load %arg1[%c71] : memref<99xf32, #tpu.memory_space<smem>>
    %380 = vector.extract_strided_slice %19 {offsets = [3, 1], sizes = [8, 8], strides = [1, 1]} : vector<14x14xf32> to vector<8x8xf32>
    %381 = vector.broadcast %379 : f32 to vector<8x8xf32>
    %382 = arith.mulf %381, %380 : vector<8x8xf32>
    %383 = arith.addf %378, %382 : vector<8x8xf32>
    %c72 = arith.constant 72 : index
    %384 = memref.load %arg1[%c72] : memref<99xf32, #tpu.memory_space<smem>>
    %385 = vector.extract_strided_slice %19 {offsets = [3, 2], sizes = [8, 8], strides = [1, 1]} : vector<14x14xf32> to vector<8x8xf32>
    %386 = vector.broadcast %384 : f32 to vector<8x8xf32>
    %387 = arith.mulf %386, %385 : vector<8x8xf32>
    %388 = arith.addf %383, %387 : vector<8x8xf32>
    %c73 = arith.constant 73 : index
    %389 = memref.load %arg1[%c73] : memref<99xf32, #tpu.memory_space<smem>>
    %390 = vector.extract_strided_slice %19 {offsets = [3, 3], sizes = [8, 8], strides = [1, 1]} : vector<14x14xf32> to vector<8x8xf32>
    %391 = vector.broadcast %389 : f32 to vector<8x8xf32>
    %392 = arith.mulf %391, %390 : vector<8x8xf32>
    %393 = arith.addf %388, %392 : vector<8x8xf32>
    %c74 = arith.constant 74 : index
    %394 = memref.load %arg1[%c74] : memref<99xf32, #tpu.memory_space<smem>>
    %395 = vector.extract_strided_slice %19 {offsets = [3, 4], sizes = [8, 8], strides = [1, 1]} : vector<14x14xf32> to vector<8x8xf32>
    %396 = vector.broadcast %394 : f32 to vector<8x8xf32>
    %397 = arith.mulf %396, %395 : vector<8x8xf32>
    %398 = arith.addf %393, %397 : vector<8x8xf32>
    %c75 = arith.constant 75 : index
    %399 = memref.load %arg1[%c75] : memref<99xf32, #tpu.memory_space<smem>>
    %400 = vector.extract_strided_slice %19 {offsets = [3, 5], sizes = [8, 8], strides = [1, 1]} : vector<14x14xf32> to vector<8x8xf32>
    %401 = vector.broadcast %399 : f32 to vector<8x8xf32>
    %402 = arith.mulf %401, %400 : vector<8x8xf32>
    %403 = arith.addf %398, %402 : vector<8x8xf32>
    %c76 = arith.constant 76 : index
    %404 = memref.load %arg1[%c76] : memref<99xf32, #tpu.memory_space<smem>>
    %405 = vector.extract_strided_slice %19 {offsets = [3, 6], sizes = [8, 8], strides = [1, 1]} : vector<14x14xf32> to vector<8x8xf32>
    %406 = vector.broadcast %404 : f32 to vector<8x8xf32>
    %407 = arith.mulf %406, %405 : vector<8x8xf32>
    %408 = arith.addf %403, %407 : vector<8x8xf32>
    %c77 = arith.constant 77 : index
    %409 = memref.load %arg1[%c77] : memref<99xf32, #tpu.memory_space<smem>>
    %410 = vector.extract_strided_slice %19 {offsets = [4, 0], sizes = [8, 8], strides = [1, 1]} : vector<14x14xf32> to vector<8x8xf32>
    %411 = vector.broadcast %409 : f32 to vector<8x8xf32>
    %412 = arith.mulf %411, %410 : vector<8x8xf32>
    %413 = arith.addf %408, %412 : vector<8x8xf32>
    %c78 = arith.constant 78 : index
    %414 = memref.load %arg1[%c78] : memref<99xf32, #tpu.memory_space<smem>>
    %415 = vector.extract_strided_slice %19 {offsets = [4, 1], sizes = [8, 8], strides = [1, 1]} : vector<14x14xf32> to vector<8x8xf32>
    %416 = vector.broadcast %414 : f32 to vector<8x8xf32>
    %417 = arith.mulf %416, %415 : vector<8x8xf32>
    %418 = arith.addf %413, %417 : vector<8x8xf32>
    %c79 = arith.constant 79 : index
    %419 = memref.load %arg1[%c79] : memref<99xf32, #tpu.memory_space<smem>>
    %420 = vector.extract_strided_slice %19 {offsets = [4, 2], sizes = [8, 8], strides = [1, 1]} : vector<14x14xf32> to vector<8x8xf32>
    %421 = vector.broadcast %419 : f32 to vector<8x8xf32>
    %422 = arith.mulf %421, %420 : vector<8x8xf32>
    %423 = arith.addf %418, %422 : vector<8x8xf32>
    %c80 = arith.constant 80 : index
    %424 = memref.load %arg1[%c80] : memref<99xf32, #tpu.memory_space<smem>>
    %425 = vector.extract_strided_slice %19 {offsets = [4, 3], sizes = [8, 8], strides = [1, 1]} : vector<14x14xf32> to vector<8x8xf32>
    %426 = vector.broadcast %424 : f32 to vector<8x8xf32>
    %427 = arith.mulf %426, %425 : vector<8x8xf32>
    %428 = arith.addf %423, %427 : vector<8x8xf32>
    %c81 = arith.constant 81 : index
    %429 = memref.load %arg1[%c81] : memref<99xf32, #tpu.memory_space<smem>>
    %430 = vector.extract_strided_slice %19 {offsets = [4, 4], sizes = [8, 8], strides = [1, 1]} : vector<14x14xf32> to vector<8x8xf32>
    %431 = vector.broadcast %429 : f32 to vector<8x8xf32>
    %432 = arith.mulf %431, %430 : vector<8x8xf32>
    %433 = arith.addf %428, %432 : vector<8x8xf32>
    %c82 = arith.constant 82 : index
    %434 = memref.load %arg1[%c82] : memref<99xf32, #tpu.memory_space<smem>>
    %435 = vector.extract_strided_slice %19 {offsets = [4, 5], sizes = [8, 8], strides = [1, 1]} : vector<14x14xf32> to vector<8x8xf32>
    %436 = vector.broadcast %434 : f32 to vector<8x8xf32>
    %437 = arith.mulf %436, %435 : vector<8x8xf32>
    %438 = arith.addf %433, %437 : vector<8x8xf32>
    %c83 = arith.constant 83 : index
    %439 = memref.load %arg1[%c83] : memref<99xf32, #tpu.memory_space<smem>>
    %440 = vector.extract_strided_slice %19 {offsets = [4, 6], sizes = [8, 8], strides = [1, 1]} : vector<14x14xf32> to vector<8x8xf32>
    %441 = vector.broadcast %439 : f32 to vector<8x8xf32>
    %442 = arith.mulf %441, %440 : vector<8x8xf32>
    %443 = arith.addf %438, %442 : vector<8x8xf32>
    %c84 = arith.constant 84 : index
    %444 = memref.load %arg1[%c84] : memref<99xf32, #tpu.memory_space<smem>>
    %445 = vector.extract_strided_slice %19 {offsets = [5, 0], sizes = [8, 8], strides = [1, 1]} : vector<14x14xf32> to vector<8x8xf32>
    %446 = vector.broadcast %444 : f32 to vector<8x8xf32>
    %447 = arith.mulf %446, %445 : vector<8x8xf32>
    %448 = arith.addf %443, %447 : vector<8x8xf32>
    %c85 = arith.constant 85 : index
    %449 = memref.load %arg1[%c85] : memref<99xf32, #tpu.memory_space<smem>>
    %450 = vector.extract_strided_slice %19 {offsets = [5, 1], sizes = [8, 8], strides = [1, 1]} : vector<14x14xf32> to vector<8x8xf32>
    %451 = vector.broadcast %449 : f32 to vector<8x8xf32>
    %452 = arith.mulf %451, %450 : vector<8x8xf32>
    %453 = arith.addf %448, %452 : vector<8x8xf32>
    %c86 = arith.constant 86 : index
    %454 = memref.load %arg1[%c86] : memref<99xf32, #tpu.memory_space<smem>>
    %455 = vector.extract_strided_slice %19 {offsets = [5, 2], sizes = [8, 8], strides = [1, 1]} : vector<14x14xf32> to vector<8x8xf32>
    %456 = vector.broadcast %454 : f32 to vector<8x8xf32>
    %457 = arith.mulf %456, %455 : vector<8x8xf32>
    %458 = arith.addf %453, %457 : vector<8x8xf32>
    %c87 = arith.constant 87 : index
    %459 = memref.load %arg1[%c87] : memref<99xf32, #tpu.memory_space<smem>>
    %460 = vector.extract_strided_slice %19 {offsets = [5, 3], sizes = [8, 8], strides = [1, 1]} : vector<14x14xf32> to vector<8x8xf32>
    %461 = vector.broadcast %459 : f32 to vector<8x8xf32>
    %462 = arith.mulf %461, %460 : vector<8x8xf32>
    %463 = arith.addf %458, %462 : vector<8x8xf32>
    %c88 = arith.constant 88 : index
    %464 = memref.load %arg1[%c88] : memref<99xf32, #tpu.memory_space<smem>>
    %465 = vector.extract_strided_slice %19 {offsets = [5, 4], sizes = [8, 8], strides = [1, 1]} : vector<14x14xf32> to vector<8x8xf32>
    %466 = vector.broadcast %464 : f32 to vector<8x8xf32>
    %467 = arith.mulf %466, %465 : vector<8x8xf32>
    %468 = arith.addf %463, %467 : vector<8x8xf32>
    %c89 = arith.constant 89 : index
    %469 = memref.load %arg1[%c89] : memref<99xf32, #tpu.memory_space<smem>>
    %470 = vector.extract_strided_slice %19 {offsets = [5, 5], sizes = [8, 8], strides = [1, 1]} : vector<14x14xf32> to vector<8x8xf32>
    %471 = vector.broadcast %469 : f32 to vector<8x8xf32>
    %472 = arith.mulf %471, %470 : vector<8x8xf32>
    %473 = arith.addf %468, %472 : vector<8x8xf32>
    %c90 = arith.constant 90 : index
    %474 = memref.load %arg1[%c90] : memref<99xf32, #tpu.memory_space<smem>>
    %475 = vector.extract_strided_slice %19 {offsets = [5, 6], sizes = [8, 8], strides = [1, 1]} : vector<14x14xf32> to vector<8x8xf32>
    %476 = vector.broadcast %474 : f32 to vector<8x8xf32>
    %477 = arith.mulf %476, %475 : vector<8x8xf32>
    %478 = arith.addf %473, %477 : vector<8x8xf32>
    %c91 = arith.constant 91 : index
    %479 = memref.load %arg1[%c91] : memref<99xf32, #tpu.memory_space<smem>>
    %480 = vector.extract_strided_slice %19 {offsets = [6, 0], sizes = [8, 8], strides = [1, 1]} : vector<14x14xf32> to vector<8x8xf32>
    %481 = vector.broadcast %479 : f32 to vector<8x8xf32>
    %482 = arith.mulf %481, %480 : vector<8x8xf32>
    %483 = arith.addf %478, %482 : vector<8x8xf32>
    %c92 = arith.constant 92 : index
    %484 = memref.load %arg1[%c92] : memref<99xf32, #tpu.memory_space<smem>>
    %485 = vector.extract_strided_slice %19 {offsets = [6, 1], sizes = [8, 8], strides = [1, 1]} : vector<14x14xf32> to vector<8x8xf32>
    %486 = vector.broadcast %484 : f32 to vector<8x8xf32>
    %487 = arith.mulf %486, %485 : vector<8x8xf32>
    %488 = arith.addf %483, %487 : vector<8x8xf32>
    %c93 = arith.constant 93 : index
    %489 = memref.load %arg1[%c93] : memref<99xf32, #tpu.memory_space<smem>>
    %490 = vector.extract_strided_slice %19 {offsets = [6, 2], sizes = [8, 8], strides = [1, 1]} : vector<14x14xf32> to vector<8x8xf32>
    %491 = vector.broadcast %489 : f32 to vector<8x8xf32>
    %492 = arith.mulf %491, %490 : vector<8x8xf32>
    %493 = arith.addf %488, %492 : vector<8x8xf32>
    %c94 = arith.constant 94 : index
    %494 = memref.load %arg1[%c94] : memref<99xf32, #tpu.memory_space<smem>>
    %495 = vector.extract_strided_slice %19 {offsets = [6, 3], sizes = [8, 8], strides = [1, 1]} : vector<14x14xf32> to vector<8x8xf32>
    %496 = vector.broadcast %494 : f32 to vector<8x8xf32>
    %497 = arith.mulf %496, %495 : vector<8x8xf32>
    %498 = arith.addf %493, %497 : vector<8x8xf32>
    %c95 = arith.constant 95 : index
    %499 = memref.load %arg1[%c95] : memref<99xf32, #tpu.memory_space<smem>>
    %500 = vector.extract_strided_slice %19 {offsets = [6, 4], sizes = [8, 8], strides = [1, 1]} : vector<14x14xf32> to vector<8x8xf32>
    %501 = vector.broadcast %499 : f32 to vector<8x8xf32>
    %502 = arith.mulf %501, %500 : vector<8x8xf32>
    %503 = arith.addf %498, %502 : vector<8x8xf32>
    %c96 = arith.constant 96 : index
    %504 = memref.load %arg1[%c96] : memref<99xf32, #tpu.memory_space<smem>>
    %505 = vector.extract_strided_slice %19 {offsets = [6, 5], sizes = [8, 8], strides = [1, 1]} : vector<14x14xf32> to vector<8x8xf32>
    %506 = vector.broadcast %504 : f32 to vector<8x8xf32>
    %507 = arith.mulf %506, %505 : vector<8x8xf32>
    %508 = arith.addf %503, %507 : vector<8x8xf32>
    %c97 = arith.constant 97 : index
    %509 = memref.load %arg1[%c97] : memref<99xf32, #tpu.memory_space<smem>>
    %510 = vector.extract_strided_slice %19 {offsets = [6, 6], sizes = [8, 8], strides = [1, 1]} : vector<14x14xf32> to vector<8x8xf32>
    %511 = vector.broadcast %509 : f32 to vector<8x8xf32>
    %512 = arith.mulf %511, %510 : vector<8x8xf32>
    %513 = arith.addf %508, %512 : vector<8x8xf32>
    %514 = arith.negf %513 : vector<8x8xf32>
    %515 = math.exp %514 : vector<8x8xf32>
    %cst_14 = arith.constant 1.000000e+00 : f32
    %516 = vector.broadcast %cst_14 : f32 to vector<8x8xf32>
    %517 = arith.addf %516, %515 : vector<8x8xf32>
    %518 = arith.divf %516, %517 : vector<8x8xf32>
    %519 = vector.shape_cast %518 : vector<8x8xf32> to vector<8x8x1xf32>
    %c0_15 = arith.constant 0 : index
    %c0_16 = arith.constant 0 : index
    %c0_17 = arith.constant 0 : index
    %c0_18 = arith.constant 0 : index
    %520 = vector.load %arg2[%c0_15, %c0_16, %c0_17, %c0_18] : memref<1x8x8x384xbf16, #tpu.memory_space<vmem>>, vector<1x8x8x384xbf16>
    %521 = vector.shape_cast %520 : vector<1x8x8x384xbf16> to vector<8x8x384xbf16>
    %522 = arith.extf %521 : vector<8x8x384xbf16> to vector<8x8x384xf32>
    %523 = vector.broadcast %519 : vector<8x8x1xf32> to vector<8x8x384xf32>
    %524 = arith.mulf %7, %523 : vector<8x8x384xf32>
    %525 = arith.addf %522, %524 : vector<8x8x384xf32>
    %cst_19 = arith.constant 0.000000e+00 : f32
    %526 = vector.broadcast %cst_19 : f32 to vector<8x8x384xf32>
    %527 = arith.maximumf %525, %526 : vector<8x8x384xf32>
    %528 = vector.shape_cast %527 : vector<8x8x384xf32> to vector<1x8x8x384xf32>
    %c0_20 = arith.constant 0 : index
    %c0_21 = arith.constant 0 : index
    %c0_22 = arith.constant 0 : index
    %c0_23 = arith.constant 0 : index
    %529 = vector.load %arg5[%c0_20, %c0_21, %c0_22, %c0_23] : memref<1x8x8x384xf32, #tpu.memory_space<vmem>>, vector<1x8x8x384xf32>
    tpu.vector_store %arg5[%c0_20, %c0_21, %c0_22, %c0_23], %528 {strides = array<i32>} : memref<1x8x8x384xf32, #tpu.memory_space<vmem>>, vector<1x8x8x384xf32>,
    return
  }
  func.func @transform_0(%arg0: i32) -> i32 {
    %c0_i32 = arith.constant 0 : i32
    %c0_i32_0 = arith.constant 0 : i32
    return %c0_i32 : i32
  }
  func.func @transform_1(%arg0: i32) -> (i32, i32, i32, i32) {
    %c0_i32 = arith.constant 0 : i32
    %c0_i32_0 = arith.constant 0 : i32
    %c0_i32_1 = arith.constant 0 : i32
    %c0_i32_2 = arith.constant 0 : i32
    return %arg0, %c0_i32, %c0_i32_0, %c0_i32_1 : i32, i32, i32, i32
  }
  func.func @transform_2(%arg0: i32) -> (i32, i32, i32, i32) {
    %c0_i32 = arith.constant 0 : i32
    %c0_i32_0 = arith.constant 0 : i32
    %c0_i32_1 = arith.constant 0 : i32
    %c0_i32_2 = arith.constant 0 : i32
    return %arg0, %c0_i32, %c0_i32_0, %c0_i32_1 : i32, i32, i32, i32
  }
  func.func @transform_3(%arg0: i32) -> (i32, i32, i32) {
    %c0_i32 = arith.constant 0 : i32
    %c0_i32_0 = arith.constant 0 : i32
    %c0_i32_1 = arith.constant 0 : i32
    return %arg0, %c0_i32, %c0_i32_0 : i32, i32, i32
  }
  func.func @transform_4(%arg0: i32) -> (i32, i32, i32, i32) {
    %c0_i32 = arith.constant 0 : i32
    %c0_i32_0 = arith.constant 0 : i32
    %c0_i32_1 = arith.constant 0 : i32
    %c0_i32_2 = arith.constant 0 : i32
    return %arg0, %c0_i32, %c0_i32_0, %c0_i32_1 : i32, i32, i32, i32
  }
}

</mosaic_0001>

<llo_original>
// kernel: _lambda_.6
$region0: #{_lambda_.6}
  #allocation0 [shape = 'u32[]', space=smem, size = 0x4, offset = 0x4, fixed_abs, tag = 'smem constant byte address 0x4 - core index']
  #allocation1 [shape = 'u32[144,128]{1,0:T(1,128)}', space=vmem, size = 0x12000, scoped, tag = 'internal scratch']
  %s0 = inlined_call_operand.vmem [shape: bf16[128,384], index: 0, kind: input, shape index: {}]
  %s1 = inlined_call_operand.vmem [shape: bf16[384,128], index: 1, kind: input, shape index: {}]
  %s2 = inlined_call_operand.vmem [shape: f32[1,128], index: 2, kind: input, shape index: {}]
  %s3 = inlined_call_operand.vmem [shape: bf16[128,128], index: 3, kind: output, shape index: {}]
  %s4 = sld [smem:[#allocation0]]
  $region22: #{_lambda_.6} parent=0
    _
  %s6 = ssub.s32 1, %s4
  %s7 = scalar_select 0, %s6, %s4
  // Predicated region
  $region2: #{_lambda_.6} parent=0 // pred_check
    _
  $region3: #{_lambda_.6} parent=0 // pred_check_branch
    %9 = sbr.rel (0) target = $region5
  $region4: #{_lambda_.6} parent=0 // pred_region
    _
  $region5: #{_lambda_.6} parent=0 // pred_fallthru
    _
  // Predicated region
  $region6: #{_lambda_.6} parent=0 // pred_check
    _
  $region7: #{_lambda_.6} parent=0 // pred_check_branch
    %11 = sbr.rel (0) target = $region9
  $region8: #{_lambda_.6} parent=0 // pred_region
    _
  $region9: #{_lambda_.6} parent=0 // pred_fallthru
    _
  // Predicated region
  $region10: #{_lambda_.6} parent=0 // pred_check
    _
  $region11: #{_lambda_.6} parent=0 // pred_check_branch
    %13 = sbr.rel (0) target = $region13
  $region12: #{_lambda_.6} parent=0 // pred_region
    _
  $region13: #{_lambda_.6} parent=0 // pred_fallthru
    _
  %v15 = vld [vmem:[%s0] sm:$0xff]
  %v16 = vld [vmem:[%s0 + $0x8] sm:$0xf]
  %v17 = vld [vmem:[%s0 + $0xc] sm:$0xff]
  %v18 = vld [vmem:[%s0 + $0x14] sm:$0xf]
  %v19 = vld [vmem:[%s0 + $0x18] sm:$0xff]
  %v20 = vld [vmem:[%s0 + $0x20] sm:$0xf]
  %v21 = vld [vmem:[%s0 + $0x24] sm:$0xff]
  %v22 = vld [vmem:[%s0 + $0x2c] sm:$0xf]
  %v23 = vld [vmem:[%s0 + $0x30] sm:$0xff]
  %v24 = vld [vmem:[%s0 + $0x38] sm:$0xf]
  %v25 = vld [vmem:[%s0 + $0x3c] sm:$0xff]
  %v26 = vld [vmem:[%s0 + $0x44] sm:$0xf]
  %v27 = vld [vmem:[%s0 + $0x48] sm:$0xff]
  %v28 = vld [vmem:[%s0 + $0x50] sm:$0xf]
  %v29 = vld [vmem:[%s0 + $0x54] sm:$0xff]
  %v30 = vld [vmem:[%s0 + $0x5c] sm:$0xf]
  %v31 = vld [vmem:[%s0 + $0x60] sm:$0xff]
  %v32 = vld [vmem:[%s0 + $0x68] sm:$0xf]
  %v33 = vld [vmem:[%s0 + $0x6c] sm:$0xff]
  %v34 = vld [vmem:[%s0 + $0x74] sm:$0xf]
  %v35 = vld [vmem:[%s0 + $0x78] sm:$0xff]
  %v36 = vld [vmem:[%s0 + $0x80] sm:$0xf]
  %v37 = vld [vmem:[%s0 + $0x84] sm:$0xff]
  %v38 = vld [vmem:[%s0 + $0x8c] sm:$0xf]
  %v39 = vld [vmem:[%s0 + $0x90] sm:$0xff]
  %v40 = vld [vmem:[%s0 + $0x98] sm:$0xf]
  %v41 = vld [vmem:[%s0 + $0x9c] sm:$0xff]
  %v42 = vld [vmem:[%s0 + $0xa4] sm:$0xf]
  %v43 = vld [vmem:[%s0 + $0xa8] sm:$0xff]
  %v44 = vld [vmem:[%s0 + $0xb0] sm:$0xf]
  %v45 = vld [vmem:[%s0 + $0xb4] sm:$0xff]
  %v46 = vld [vmem:[%s0 + $0xbc] sm:$0xf]
  %v47 = vld [vmem:[%s1] sm:$0xf]
  %v48 = vld [vmem:[%s1 + $0x4] sm:$0xf]
  %v49 = vld [vmem:[%s1 + $0x8] sm:$0xf]
  %v50 = vld [vmem:[%s1 + $0xc] sm:$0xf]
  %v51 = vld [vmem:[%s1 + $0x10] sm:$0xf]
  %v52 = vld [vmem:[%s1 + $0x14] sm:$0xf]
  %v53 = vld [vmem:[%s1 + $0x18] sm:$0xf]
  %v54 = vld [vmem:[%s1 + $0x1c] sm:$0xf]
  %v55 = vld [vmem:[%s1 + $0x20] sm:$0xf]
  %v56 = vld [vmem:[%s1 + $0x24] sm:$0xf]
  %v57 = vld [vmem:[%s1 + $0x28] sm:$0xf]
  %v58 = vld [vmem:[%s1 + $0x2c] sm:$0xf]
  %v59 = vld [vmem:[%s1 + $0x30] sm:$0xf]
  %v60 = vld [vmem:[%s1 + $0x34] sm:$0xf]
  %v61 = vld [vmem:[%s1 + $0x38] sm:$0xf]
  %v62 = vld [vmem:[%s1 + $0x3c] sm:$0xf]
  %v63 = vld [vmem:[%s1 + $0x40] sm:$0xf]
  %v64 = vld [vmem:[%s1 + $0x44] sm:$0xf]
  %v65 = vld [vmem:[%s1 + $0x48] sm:$0xf]
  %v66 = vld [vmem:[%s1 + $0x4c] sm:$0xf]
  %v67 = vld [vmem:[%s1 + $0x50] sm:$0xf]
  %v68 = vld [vmem:[%s1 + $0x54] sm:$0xf]
  %v69 = vld [vmem:[%s1 + $0x58] sm:$0xf]
  %v70 = vld [vmem:[%s1 + $0x5c] sm:$0xf]
  %v71 = vld [vmem:[%s1 + $0x60] sm:$0xf]
  %v72 = vld [vmem:[%s1 + $0x64] sm:$0xf]
  %v73 = vld [vmem:[%s1 + $0x68] sm:$0xf]
  %v74 = vld [vmem:[%s1 + $0x6c] sm:$0xf]
  %v75 = vld [vmem:[%s1 + $0x70] sm:$0xf]
  %v76 = vld [vmem:[%s1 + $0x74] sm:$0xf]
  %v77 = vld [vmem:[%s1 + $0x78] sm:$0xf]
  %v78 = vld [vmem:[%s1 + $0x7c] sm:$0xf]
  %v79 = vld [vmem:[%s1 + $0x80] sm:$0xf]
  %v80 = vld [vmem:[%s1 + $0x84] sm:$0xf]
  %v81 = vld [vmem:[%s1 + $0x88] sm:$0xf]
  %v82 = vld [vmem:[%s1 + $0x8c] sm:$0xf]
  %v83 = vld [vmem:[%s1 + $0x90] sm:$0xf]
  %v84 = vld [vmem:[%s1 + $0x94] sm:$0xf]
  %v85 = vld [vmem:[%s1 + $0x98] sm:$0xf]
  %v86 = vld [vmem:[%s1 + $0x9c] sm:$0xf]
  %v87 = vld [vmem:[%s1 + $0xa0] sm:$0xf]
  %v88 = vld [vmem:[%s1 + $0xa4] sm:$0xf]
  %v89 = vld [vmem:[%s1 + $0xa8] sm:$0xf]
  %v90 = vld [vmem:[%s1 + $0xac] sm:$0xf]
  %v91 = vld [vmem:[%s1 + $0xb0] sm:$0xf]
  %v92 = vld [vmem:[%s1 + $0xb4] sm:$0xf]
  %v93 = vld [vmem:[%s1 + $0xb8] sm:$0xf]
  %v94 = vld [vmem:[%s1 + $0xbc] sm:$0xf]
  %v95 = vld [vmem:[%s2] sm:$0x1]
  %v97 = vlaneseq
  %v98 = vshrl.u32 %v97, 7
  %v99 = vsub.s32 0, %v98
  %v100 = vrot.slane %v95, %v99
  %v134 = vunpack.c.l.b16 %v15
  %v135 = vunpack.c.h.b16 %v15
  %v136 = vunpack.c.l.b16 %v16
  %v137 = vunpack.c.l.b16 %v17
  %v138 = vunpack.c.h.b16 %v17
  %v139 = vunpack.c.l.b16 %v18
  %v140 = vunpack.c.l.b16 %v19
  %v141 = vunpack.c.h.b16 %v19
  %v142 = vunpack.c.l.b16 %v20
  %v143 = vunpack.c.l.b16 %v21
  %v144 = vunpack.c.h.b16 %v21
  %v145 = vunpack.c.l.b16 %v22
  %v146 = vunpack.c.l.b16 %v23
  %v147 = vunpack.c.h.b16 %v23
  %v148 = vunpack.c.l.b16 %v24
  %v149 = vunpack.c.l.b16 %v25
  %v150 = vunpack.c.h.b16 %v25
  %v151 = vunpack.c.l.b16 %v26
  %v152 = vunpack.c.l.b16 %v27
  %v153 = vunpack.c.h.b16 %v27
  %v154 = vunpack.c.l.b16 %v28
  %v155 = vunpack.c.l.b16 %v29
  %v156 = vunpack.c.h.b16 %v29
  %v157 = vunpack.c.l.b16 %v30
  %v158 = vunpack.c.l.b16 %v31
  %v159 = vunpack.c.h.b16 %v31
  %v160 = vunpack.c.l.b16 %v32
  %v161 = vunpack.c.l.b16 %v33
  %v162 = vunpack.c.h.b16 %v33
  %v163 = vunpack.c.l.b16 %v34
  %v164 = vunpack.c.l.b16 %v35
  %v165 = vunpack.c.h.b16 %v35
  %v166 = vunpack.c.l.b16 %v36
  %v167 = vunpack.c.l.b16 %v37
  %v168 = vunpack.c.h.b16 %v37
  %v169 = vunpack.c.l.b16 %v38
  %v170 = vunpack.c.l.b16 %v39
  %v171 = vunpack.c.h.b16 %v39
  %v172 = vunpack.c.l.b16 %v40
  %v173 = vunpack.c.l.b16 %v41
  %v174 = vunpack.c.h.b16 %v41
  %v175 = vunpack.c.l.b16 %v42
  %v176 = vunpack.c.l.b16 %v43
  %v177 = vunpack.c.h.b16 %v43
  %v178 = vunpack.c.l.b16 %v44
  %v179 = vunpack.c.l.b16 %v45
  %v180 = vunpack.c.h.b16 %v45
  %v181 = vunpack.c.l.b16 %v46
  %v182 = vpack.c.b16 %v137, %v134
  %v183 = vpack.c.b16 %v138, %v135
  %v184 = vpack.c.b16 %v139, %v136
  %v185 = vpack.c.b16 %v143, %v140
  %v186 = vpack.c.b16 %v144, %v141
  %v187 = vpack.c.b16 %v145, %v142
  %v188 = vpack.c.b16 %v149, %v146
  %v189 = vpack.c.b16 %v150, %v147
  %v190 = vpack.c.b16 %v151, %v148
  %v191 = vpack.c.b16 %v155, %v152
  %v192 = vpack.c.b16 %v156, %v153
  %v193 = vpack.c.b16 %v157, %v154
  %v194 = vpack.c.b16 %v161, %v158
  %v195 = vpack.c.b16 %v162, %v159
  %v196 = vpack.c.b16 %v163, %v160
  %v197 = vpack.c.b16 %v167, %v164
  %v198 = vpack.c.b16 %v168, %v165
  %v199 = vpack.c.b16 %v169, %v166
  %v200 = vpack.c.b16 %v173, %v170
  %v201 = vpack.c.b16 %v174, %v171
  %v202 = vpack.c.b16 %v175, %v172
  %v203 = vpack.c.b16 %v179, %v176
  %v204 = vpack.c.b16 %v180, %v177
  %v205 = vpack.c.b16 %v181, %v178
  %v278 = vunpack.c.l.b16 %v47
  %v279 = vunpack.c.l.b16 %v48
  %v280 = vunpack.c.l.b16 %v49
  %v281 = vunpack.c.l.b16 %v50
  %v282 = vunpack.c.l.b16 %v51
  %v283 = vunpack.c.l.b16 %v52
  %v284 = vunpack.c.l.b16 %v53
  %v285 = vunpack.c.l.b16 %v54
  %v286 = vunpack.c.l.b16 %v55
  %v287 = vunpack.c.l.b16 %v56
  %v288 = vunpack.c.l.b16 %v57
  %v289 = vunpack.c.l.b16 %v58
  %v290 = vunpack.c.l.b16 %v59
  %v291 = vunpack.c.l.b16 %v60
  %v292 = vunpack.c.l.b16 %v61
  %v293 = vunpack.c.l.b16 %v62
  %v294 = vunpack.c.l.b16 %v63
  %v295 = vunpack.c.l.b16 %v64
  %v296 = vunpack.c.l.b16 %v65
  %v297 = vunpack.c.l.b16 %v66
  %v298 = vunpack.c.l.b16 %v67
  %v299 = vunpack.c.l.b16 %v68
  %v300 = vunpack.c.l.b16 %v69
  %v301 = vunpack.c.l.b16 %v70
  %v302 = vunpack.c.l.b16 %v71
  %v303 = vunpack.c.l.b16 %v72
  %v304 = vunpack.c.l.b16 %v73
  %v305 = vunpack.c.l.b16 %v74
  %v306 = vunpack.c.l.b16 %v75
  %v307 = vunpack.c.l.b16 %v76
  %v308 = vunpack.c.l.b16 %v77
  %v309 = vunpack.c.l.b16 %v78
  %v310 = vunpack.c.l.b16 %v79
  %v311 = vunpack.c.l.b16 %v80
  %v312 = vunpack.c.l.b16 %v81
  %v313 = vunpack.c.l.b16 %v82
  %v314 = vunpack.c.l.b16 %v83
  %v315 = vunpack.c.l.b16 %v84
  %v316 = vunpack.c.l.b16 %v85
  %v317 = vunpack.c.l.b16 %v86
  %v318 = vunpack.c.l.b16 %v87
  %v319 = vunpack.c.l.b16 %v88
  %v320 = vunpack.c.l.b16 %v89
  %v321 = vunpack.c.l.b16 %v90
  %v322 = vunpack.c.l.b16 %v91
  %v323 = vunpack.c.l.b16 %v92
  %v324 = vunpack.c.l.b16 %v93
  %v325 = vunpack.c.l.b16 %v94
  %v326 = vpack.c.b16 %v279, %v278
  %v327 = vpack.c.b16 %v281, %v280
  %v328 = vpack.c.b16 %v283, %v282
  %v329 = vpack.c.b16 %v285, %v284
  %v330 = vpack.c.b16 %v287, %v286
  %v331 = vpack.c.b16 %v289, %v288
  %v332 = vpack.c.b16 %v291, %v290
  %v333 = vpack.c.b16 %v293, %v292
  %v334 = vpack.c.b16 %v295, %v294
  %v335 = vpack.c.b16 %v297, %v296
  %v336 = vpack.c.b16 %v299, %v298
  %v337 = vpack.c.b16 %v301, %v300
  %v338 = vpack.c.b16 %v303, %v302
  %v339 = vpack.c.b16 %v305, %v304
  %v340 = vpack.c.b16 %v307, %v306
  %v341 = vpack.c.b16 %v309, %v308
  %v342 = vpack.c.b16 %v311, %v310
  %v343 = vpack.c.b16 %v313, %v312
  %v344 = vpack.c.b16 %v315, %v314
  %v345 = vpack.c.b16 %v317, %v316
  %v346 = vpack.c.b16 %v319, %v318
  %v347 = vpack.c.b16 %v321, %v320
  %v348 = vpack.c.b16 %v323, %v322
  %v349 = vpack.c.b16 %v325, %v324
  %374 = vmatprep.subr.bf16.mxu0 0
  %375 = vmatpush1.bf16.msra.mxu0 %v326
  %376 = vmatprep.subr.bf16.mxu0 0
  %377 = vmatpush1.bf16.msra.mxu0 %v327
  %378 = vmatprep.subr.bf16.mxu0 0
  %379 = vmatpush1.bf16.msra.mxu0 %v328
  %380 = vmatprep.subr.bf16.mxu0 0
  %381 = vmatpush1.bf16.msra.mxu0 %v329
  %382 = vmatprep.subr.bf16.mxu0 0
  %383 = vmatpush1.bf16.msra.mxu0 %v330
  %384 = vmatprep.subr.bf16.mxu0 0
  %385 = vmatpush1.bf16.msra.mxu0 %v331
  %386 = vmatprep.subr.bf16.mxu0 0
  %387 = vmatpush1.bf16.msra.mxu0 %v332
  %388 = vmatprep.subr.bf16.mxu0 0
  %389 = vmatpush1.bf16.msra.mxu0 %v333
  %390 = vmatprep.subr.bf16.mxu0 0
  %391 = vmatpush1.bf16.msra.mxu0 %v334
  %392 = vmatprep.subr.bf16.mxu0 0
  %393 = vmatpush1.bf16.msra.mxu0 %v335
  %394 = vmatprep.subr.bf16.mxu0 0
  %395 = vmatpush1.bf16.msra.mxu0 %v336
  %396 = vmatprep.subr.bf16.mxu0 0
  %397 = vmatpush1.bf16.msra.mxu0 %v337
  %398 = vmatprep.subr.bf16.mxu0 0
  %399 = vmatpush1.bf16.msra.mxu0 %v338
  %400 = vmatprep.subr.bf16.mxu0 0
  %401 = vmatpush1.bf16.msra.mxu0 %v339
  %402 = vmatprep.subr.bf16.mxu0 0
  %403 = vmatpush1.bf16.msra.mxu0 %v340
  %404 = vmatprep.subr.bf16.mxu0 0
  %405 = vmatpush1.bf16.msra.mxu0 %v341
  %406 = vmatprep.mubr.bf16.mxu0 %v183
  %407 = vmatmul.mubr.bf16.gmra.mrb[0].mxu0 %v182
  %v408 = vpop.f32.mrb[0].mxu0
  %v409 = vadd.f32 %v100, %v408
  %v410 = vpop.f32.mrb[0].mxu0
  %v411 = vpop.f32.mrb[0].mxu0
  %v412 = vadd.f32 %v100, %v411
  %v413 = vpop.f32.mrb[0].mxu0
  %414 = vmatprep.mubr.bf16.mxu0 %v186
  %415 = vmatmul.mubr.bf16.gmra.mrb[0].mxu0 %v185
  %v416 = vpop.f32.mrb[0].mxu0
  %v417 = vadd.f32 %v100, %v416
  %v418 = vpop.f32.mrb[0].mxu0
  %v419 = vpop.f32.mrb[0].mxu0
  %v420 = vadd.f32 %v100, %v419
  %v421 = vpop.f32.mrb[0].mxu0
  %422 = vmatprep.mubr.bf16.mxu0 %v189
  %423 = vmatmul.mubr.bf16.gmra.mrb[0].mxu0 %v188
  %v424 = vpop.f32.mrb[0].mxu0
  %v425 = vadd.f32 %v100, %v424
  %v426 = vpop.f32.mrb[0].mxu0
  %v427 = vpop.f32.mrb[0].mxu0
  %v428 = vadd.f32 %v100, %v427
  %v429 = vpop.f32.mrb[0].mxu0
  %430 = vmatprep.mubr.bf16.mxu0 %v192
  %431 = vmatmul.mubr.bf16.gmra.mrb[0].mxu0 %v191
  %v432 = vpop.f32.mrb[0].mxu0
  %v433 = vadd.f32 %v100, %v432
  %v434 = vpop.f32.mrb[0].mxu0
  %v435 = vpop.f32.mrb[0].mxu0
  %v436 = vadd.f32 %v100, %v435
  %v437 = vpop.f32.mrb[0].mxu0
  %438 = vmatprep.mubr.bf16.mxu0 %v195
  %439 = vmatmul.mubr.bf16.gmra.mrb[0].mxu0 %v194
  %v440 = vpop.f32.mrb[0].mxu0
  %v441 = vadd.f32 %v100, %v440
  %v442 = vpop.f32.mrb[0].mxu0
  %v443 = vpop.f32.mrb[0].mxu0
  %v444 = vadd.f32 %v100, %v443
  %v445 = vpop.f32.mrb[0].mxu0
  %446 = vmatprep.mubr.bf16.mxu0 %v198
  %447 = vmatmul.mubr.bf16.gmra.mrb[0].mxu0 %v197
  %v448 = vpop.f32.mrb[0].mxu0
  %v449 = vadd.f32 %v100, %v448
  %v450 = vpop.f32.mrb[0].mxu0
  %v451 = vpop.f32.mrb[0].mxu0
  %v452 = vadd.f32 %v100, %v451
  %v453 = vpop.f32.mrb[0].mxu0
  %454 = vmatprep.mubr.bf16.mxu0 %v201
  %455 = vmatmul.mubr.bf16.gmra.mrb[0].mxu0 %v200
  %v456 = vpop.f32.mrb[0].mxu0
  %v457 = vadd.f32 %v100, %v456
  %v458 = vpop.f32.mrb[0].mxu0
  %v459 = vpop.f32.mrb[0].mxu0
  %v460 = vadd.f32 %v100, %v459
  %v461 = vpop.f32.mrb[0].mxu0
  %462 = vmatprep.mubr.bf16.mxu0 %v204
  %463 = vmatmul.mubr.bf16.gmra.mrb[0].mxu0 %v203
  %v464 = vpop.f32.mrb[0].mxu0
  %v465 = vadd.f32 %v100, %v464
  %v466 = vpop.f32.mrb[0].mxu0
  %v467 = vpop.f32.mrb[0].mxu0
  %v468 = vadd.f32 %v100, %v467
  %v469 = vpop.f32.mrb[0].mxu0
  %470 = vdwg.mxu0
  %471 = vmatprep.subr.bf16.mxu0 0
  %472 = vmatpush1.bf16.msra.mxu0 %v342
  %473 = vmatprep.subr.bf16.mxu0 0
  %474 = vmatpush1.bf16.msra.mxu0 %v343
  %475 = vmatprep.subr.bf16.mxu0 0
  %476 = vmatpush1.bf16.msra.mxu0 %v344
  %477 = vmatprep.subr.bf16.mxu0 0
  %478 = vmatpush1.bf16.msra.mxu0 %v345
  %479 = vmatprep.subr.bf16.mxu0 0
  %480 = vmatpush1.bf16.msra.mxu0 %v346
  %481 = vmatprep.subr.bf16.mxu0 0
  %482 = vmatpush1.bf16.msra.mxu0 %v347
  %483 = vmatprep.subr.bf16.mxu0 0
  %484 = vmatpush1.bf16.msra.mxu0 %v348
  %485 = vmatprep.subr.bf16.mxu0 0
  %486 = vmatpush1.bf16.msra.mxu0 %v349
  %487 = vmatprep.subr.bf16.mxu0 0
  %488 = vmatpush1.bf16.msra.mxu0 0
  %489 = vmatprep.subr.bf16.mxu0 0
  %490 = vmatpush1.bf16.msra.mxu0 0
  %491 = vmatprep.subr.bf16.mxu0 0
  %492 = vmatpush1.bf16.msra.mxu0 0
  %493 = vmatprep.subr.bf16.mxu0 0
  %494 = vmatpush1.bf16.msra.mxu0 0
  %495 = vmatprep.subr.bf16.mxu0 0
  %496 = vmatpush1.bf16.msra.mxu0 0
  %497 = vmatprep.subr.bf16.mxu0 0
  %498 = vmatpush1.bf16.msra.mxu0 0
  %499 = vmatprep.subr.bf16.mxu0 0
  %500 = vmatpush1.bf16.msra.mxu0 0
  %501 = vmatprep.subr.bf16.mxu0 0
  %502 = vmatpush1.bf16.msra.mxu0 0
  %503 = vmatprep.mubr.bf16.mxu0 0
  %504 = vmatmul.mubr.bf16.gmra.mrb[0].mxu0 %v184
  %v505 = vpop.f32.mrb[0].mxu0
  %v506 = vadd.f32 %v409, %v505
  %v507 = vpop.f32.mrb[0].mxu0
  %v508 = vpop.f32.mrb[0].mxu0
  %v509 = vadd.f32 %v412, %v508
  %v510 = vpop.f32.mrb[0].mxu0
  %511 = vmatprep.mubr.bf16.mxu0 0
  %512 = vmatmul.mubr.bf16.gmra.mrb[0].mxu0 %v187
  %v513 = vpop.f32.mrb[0].mxu0
  %v514 = vadd.f32 %v417, %v513
  %v515 = vpop.f32.mrb[0].mxu0
  %v516 = vpop.f32.mrb[0].mxu0
  %v517 = vadd.f32 %v420, %v516
  %v518 = vpop.f32.mrb[0].mxu0
  %519 = vmatprep.mubr.bf16.mxu0 0
  %520 = vmatmul.mubr.bf16.gmra.mrb[0].mxu0 %v190
  %v521 = vpop.f32.mrb[0].mxu0
  %v522 = vadd.f32 %v425, %v521
  %v523 = vpop.f32.mrb[0].mxu0
  %v524 = vpop.f32.mrb[0].mxu0
  %v525 = vadd.f32 %v428, %v524
  %v526 = vpop.f32.mrb[0].mxu0
  %527 = vmatprep.mubr.bf16.mxu0 0
  %528 = vmatmul.mubr.bf16.gmra.mrb[0].mxu0 %v193
  %v529 = vpop.f32.mrb[0].mxu0
  %v530 = vadd.f32 %v433, %v529
  %v531 = vpop.f32.mrb[0].mxu0
  %v532 = vpop.f32.mrb[0].mxu0
  %v533 = vadd.f32 %v436, %v532
  %v534 = vpop.f32.mrb[0].mxu0
  %535 = vmatprep.mubr.bf16.mxu0 0
  %536 = vmatmul.mubr.bf16.gmra.mrb[0].mxu0 %v196
  %v537 = vpop.f32.mrb[0].mxu0
  %v538 = vadd.f32 %v441, %v537
  %v539 = vpop.f32.mrb[0].mxu0
  %v540 = vpop.f32.mrb[0].mxu0
  %v541 = vadd.f32 %v444, %v540
  %v542 = vpop.f32.mrb[0].mxu0
  %543 = vmatprep.mubr.bf16.mxu0 0
  %544 = vmatmul.mubr.bf16.gmra.mrb[0].mxu0 %v199
  %v545 = vpop.f32.mrb[0].mxu0
  %v546 = vadd.f32 %v449, %v545
  %v547 = vpop.f32.mrb[0].mxu0
  %v548 = vpop.f32.mrb[0].mxu0
  %v549 = vadd.f32 %v452, %v548
  %v550 = vpop.f32.mrb[0].mxu0
  %551 = vmatprep.mubr.bf16.mxu0 0
  %552 = vmatmul.mubr.bf16.gmra.mrb[0].mxu0 %v202
  %v553 = vpop.f32.mrb[0].mxu0
  %v554 = vadd.f32 %v457, %v553
  %v555 = vpop.f32.mrb[0].mxu0
  %v556 = vpop.f32.mrb[0].mxu0
  %v557 = vadd.f32 %v460, %v556
  %v558 = vpop.f32.mrb[0].mxu0
  %559 = vmatprep.mubr.bf16.mxu0 0
  %560 = vmatmul.mubr.bf16.gmra.mrb[0].mxu0 %v205
  %v561 = vpop.f32.mrb[0].mxu0
  %v562 = vadd.f32 %v465, %v561
  %v563 = vpop.f32.mrb[0].mxu0
  %v564 = vpop.f32.mrb[0].mxu0
  %v565 = vadd.f32 %v468, %v564
  %v566 = vpop.f32.mrb[0].mxu0
  %567 = vdwg.mxu0
  %v568 = vmax.f32 %v506, 0.0
  %v569 = vmax.f32 %v509, 0.0
  %v570 = vmax.f32 %v514, 0.0
  %v571 = vmax.f32 %v517, 0.0
  %v572 = vmax.f32 %v522, 0.0
  %v573 = vmax.f32 %v525, 0.0
  %v574 = vmax.f32 %v530, 0.0
  %v575 = vmax.f32 %v533, 0.0
  %v576 = vmax.f32 %v538, 0.0
  %v577 = vmax.f32 %v541, 0.0
  %v578 = vmax.f32 %v546, 0.0
  %v579 = vmax.f32 %v549, 0.0
  %v580 = vmax.f32 %v554, 0.0
  %v581 = vmax.f32 %v557, 0.0
  %v582 = vmax.f32 %v562, 0.0
  %v583 = vmax.f32 %v565, 0.0
  %v584 = vpack.c.bf16 %v569, %v568
  %v585 = vpack.c.bf16 %v571, %v570
  %v586 = vpack.c.bf16 %v573, %v572
  %v587 = vpack.c.bf16 %v575, %v574
  %v588 = vpack.c.bf16 %v577, %v576
  %v589 = vpack.c.bf16 %v579, %v578
  %v590 = vpack.c.bf16 %v581, %v580
  %v591 = vpack.c.bf16 %v583, %v582
  %v600 = vunpack.c.l.b16 %v584
  %v601 = vunpack.c.h.b16 %v584
  %v602 = vunpack.c.l.b16 %v585
  %v603 = vunpack.c.h.b16 %v585
  %v604 = vunpack.c.l.b16 %v586
  %v605 = vunpack.c.h.b16 %v586
  %v606 = vunpack.c.l.b16 %v587
  %v607 = vunpack.c.h.b16 %v587
  %v608 = vunpack.c.l.b16 %v588
  %v609 = vunpack.c.h.b16 %v588
  %v610 = vunpack.c.l.b16 %v589
  %v611 = vunpack.c.h.b16 %v589
  %v612 = vunpack.c.l.b16 %v590
  %v613 = vunpack.c.h.b16 %v590
  %v614 = vunpack.c.l.b16 %v591
  %v615 = vunpack.c.h.b16 %v591
  %v616 = vpack.c.b16 %v600, %v600
  %v617 = vpack.c.b16 %v601, %v601
  %v618 = vpack.c.b16 %v602, %v602
  %v619 = vpack.c.b16 %v603, %v603
  %v620 = vpack.c.b16 %v604, %v604
  %v621 = vpack.c.b16 %v605, %v605
  %v622 = vpack.c.b16 %v606, %v606
  %v623 = vpack.c.b16 %v607, %v607
  %v624 = vpack.c.b16 %v608, %v608
  %v625 = vpack.c.b16 %v609, %v609
  %v626 = vpack.c.b16 %v610, %v610
  %v627 = vpack.c.b16 %v611, %v611
  %v628 = vpack.c.b16 %v612, %v612
  %v629 = vpack.c.b16 %v613, %v613
  %v630 = vpack.c.b16 %v614, %v614
  %v631 = vpack.c.b16 %v615, %v615
  %648 = vst [vmem:[%s3] sm:$0xf] %v616
  %649 = vst [vmem:[%s3 + $0x4] sm:$0xf] %v617
  %650 = vst [vmem:[%s3 + $0x8] sm:$0xf] %v618
  %651 = vst [vmem:[%s3 + $0xc] sm:$0xf] %v619
  %652 = vst [vmem:[%s3 + $0x10] sm:$0xf] %v620
  %653 = vst [vmem:[%s3 + $0x14] sm:$0xf] %v621
  %654 = vst [vmem:[%s3 + $0x18] sm:$0xf] %v622
  %655 = vst [vmem:[%s3 + $0x1c] sm:$0xf] %v623
  %656 = vst [vmem:[%s3 + $0x20] sm:$0xf] %v624
  %657 = vst [vmem:[%s3 + $0x24] sm:$0xf] %v625
  %658 = vst [vmem:[%s3 + $0x28] sm:$0xf] %v626
  %659 = vst [vmem:[%s3 + $0x2c] sm:$0xf] %v627
  %660 = vst [vmem:[%s3 + $0x30] sm:$0xf] %v628
  %661 = vst [vmem:[%s3 + $0x34] sm:$0xf] %v629
  %662 = vst [vmem:[%s3 + $0x38] sm:$0xf] %v630
  %663 = vst [vmem:[%s3 + $0x3c] sm:$0xf] %v631
  // Predicated region
  $region14: #{_lambda_.6} parent=0 // pred_check
    _
  $region15: #{_lambda_.6} parent=0 // pred_check_branch
    %665 = sbr.rel (0) target = $region17
  $region16: #{_lambda_.6} parent=0 // pred_region
    _
  $region17: #{_lambda_.6} parent=0 // pred_fallthru
    _
  // Predicated region
  $region18: #{_lambda_.6} parent=0 // pred_check
    _
  $region19: #{_lambda_.6} parent=0 // pred_check_branch
    %667 = sbr.rel (0) target = $region21
  $region20: #{_lambda_.6} parent=0 // pred_region
    _
  $region21: #{_lambda_.6} parent=0 // pred_fallthru
    _

// kernel: _lambda_.7
$region0: #{_lambda_.7}
  #allocation0 [shape = 'u32[]', space=smem, size = 0x4, offset = 0x4, fixed_abs, tag = 'smem constant byte address 0x4 - core index']
  #allocation1 [shape = 'u32[144,128]{1,0:T(1,128)}', space=vmem, size = 0x12000, scoped, tag = 'internal scratch']
  #allocation2 [shape = 'bf16[64,576]{1,0:T(16,128)(2,1)}', space=vmem, size = 0x14000, scoped, tag = 'scratch operand']
  %s0 = inlined_call_operand.vmem [shape: bf16[2,10,10,128], index: 0, kind: input, shape index: {}]
  %s1 = inlined_call_operand.vmem [shape: bf16[576,80], index: 1, kind: input, shape index: {}]
  %s2 = inlined_call_operand.vmem [shape: f32[1,80], index: 2, kind: input, shape index: {}]
  %s3 = inlined_call_operand.vmem [shape: bf16[2,8,8,80], index: 3, kind: output, shape index: {}]
  %s4 = sld [smem:[#allocation0]]
  $region45: #{_lambda_.7} parent=0
    _
  %s6 = ssub.s32 1, %s4
  %s7 = scalar_select 0, %s6, %s4
  loop: start=0, step=1, limit=4
  $region2: #{_lambda_.7} parent=0 // loop_pre_header
    _
  $region3: #{_lambda_.7} parent=0 // loop_header
    %s9 = sphi 0, %s13
    %p10 = scmp.ge.s32.totalorder %s9, 4
    %s19 = sphi 0, %s21
    %s22 = sphi 0, %s19
    %s23 = sphi 0, %s22
    %s39 = sphi 0, %s23
    %s43 = sphi 0, %s43
    %s45 = sphi 0, %s43
    %s46 = sphi 0, %s45
    %s60 = sphi 0, %s46
    %s64 = sphi 0, %s64
    %s66 = sphi 0, %s64
    %s67 = sphi 0, %s66
    %s81 = sphi 0, %s67
    %s87 = sphi 0, %s89
    %s90 = sphi 0, %s87
    %s91 = sphi 0, %s90
    %s107 = sphi 0, %s91
  $region4: #{_lambda_.7} parent=0 // loop_header_branch
    %12 = sbr.rel (%p10) target = $region8
  $region5: #{_lambda_.7} parent=0 // loop_body
    %s14 = ssub.s32 %s9, 1
    %s15 = ssub.s32 %s9, 2
    %s16 = sadd.s32 %s9, 1
    %s17 = ssub.s32 %s9, %s16
    %p18 = scmp.eq.s32.totalorder %s17, 0
    %s20 = sadd.s32 %s19, 1
    %s21 = scalar_select %p18, %s19, %s20
    %p24 = pneg %p18
    %p25 = scmp.eq.s32.totalorder %s9, 1
    %p26 = por %p24, %p25
    %p27 = scmp.ne.s32.totalorder %s19, %s22
    %p28 = scmp.eq.s32.totalorder %s9, 0
    %p29 = por %p27, %p28
    %p30 = scmp.ne.s32.totalorder %s19, %s22
    %p31 = scmp.eq.s32.totalorder %s14, 1
    %p32 = por %p30, %p31
    %p33 = scmp.ne.s32.totalorder %s22, %s23
    %p34 = scmp.eq.s32.totalorder %s14, 0
    %p35 = por %p33, %p34
    %p36 = scmp.ne.s32.totalorder %s22, %s23
    %p37 = scmp.eq.s32.totalorder %s15, 1
    %p38 = por %p36, %p37
    %p40 = scmp.ne.s32.totalorder %s23, %s39
    %p41 = scmp.eq.s32.totalorder %s15, 0
    %p42 = por %p40, %p41
    %s44 = sadd.s32 %s43, 1
    %p47 = scmp.eq.s32.totalorder %s9, 1
    %p48 = scmp.ne.s32.totalorder %s43, %s45
    %p49 = scmp.eq.s32.totalorder %s9, 0
    %p50 = por %p48, %p49
    %p51 = scmp.ne.s32.totalorder %s43, %s45
    %p52 = scmp.eq.s32.totalorder %s14, 1
    %p53 = por %p51, %p52
    %p54 = scmp.ne.s32.totalorder %s45, %s46
    %p55 = scmp.eq.s32.totalorder %s14, 0
    %p56 = por %p54, %p55
    %p57 = scmp.ne.s32.totalorder %s45, %s46
    %p58 = scmp.eq.s32.totalorder %s15, 1
    %p59 = por %p57, %p58
    %p61 = scmp.ne.s32.totalorder %s46, %s60
    %p62 = scmp.eq.s32.totalorder %s15, 0
    %p63 = por %p61, %p62
    %s65 = sadd.s32 %s64, 1
    %p68 = scmp.eq.s32.totalorder %s9, 1
    %p69 = scmp.ne.s32.totalorder %s64, %s66
    %p70 = scmp.eq.s32.totalorder %s9, 0
    %p71 = por %p69, %p70
    %p72 = scmp.ne.s32.totalorder %s64, %s66
    %p73 = scmp.eq.s32.totalorder %s14, 1
    %p74 = por %p72, %p73
    %p75 = scmp.ne.s32.totalorder %s66, %s67
    %p76 = scmp.eq.s32.totalorder %s14, 0
    %p77 = por %p75, %p76
    %p78 = scmp.ne.s32.totalorder %s66, %s67
    %p79 = scmp.eq.s32.totalorder %s15, 1
    %p80 = por %p78, %p79
    %p82 = scmp.ne.s32.totalorder %s67, %s81
    %p83 = scmp.eq.s32.totalorder %s15, 0
    %p84 = por %p82, %p83
    %s85 = ssub.s32 %s9, %s16
    %p86 = scmp.eq.s32.totalorder %s85, 0
    %s88 = sadd.s32 %s87, 1
    %s89 = scalar_select %p86, %s87, %s88
    %p92 = pneg %p86
    %p93 = scmp.eq.s32.totalorder %s9, 1
    %p94 = por %p92, %p93
    %p95 = scmp.ne.s32.totalorder %s87, %s90
    %p96 = scmp.eq.s32.totalorder %s9, 0
    %p97 = por %p95, %p96
    %p98 = scmp.ne.s32.totalorder %s87, %s90
    %p99 = scmp.eq.s32.totalorder %s14, 1
    %p100 = por %p98, %p99
    %p101 = scmp.ne.s32.totalorder %s90, %s91
    %p102 = scmp.eq.s32.totalorder %s14, 0
    %p103 = por %p101, %p102
    %p104 = scmp.ne.s32.totalorder %s90, %s91
    %p105 = scmp.eq.s32.totalorder %s15, 1
    %p106 = por %p104, %p105
    %p108 = scmp.ne.s32.totalorder %s91, %s107
    %p109 = scmp.eq.s32.totalorder %s15, 0
    %p110 = por %p108, %p109
    %p111 = scmp.le.s32.totalorder 1, %s9
    %p112 = scmp.lt.s32.totalorder %s9, 3
    %p113 = pnand %p111, %p112
    %p114 = pneg %p113
    // Predicated region
    $region9: #{_lambda_.7} parent=5 // pred_check
      _
    $region10: #{_lambda_.7} parent=5 // pred_check_branch
      %116 = sbr.rel (%p113) target = $region12
    $region11: #{_lambda_.7} parent=5 // pred_region
      %s117 = ssub.s32 %s9, 1
      // Predicated region
      $region13: #{_lambda_.7} parent=11 // pred_check
        %p118 = pneg %p56
      $region14: #{_lambda_.7} parent=11 // pred_check_branch
        %120 = sbr.rel (%p118) target = $region16
      $region15: #{_lambda_.7} parent=11 // pred_region
        _
      $region16: #{_lambda_.7} parent=11 // pred_fallthru
        _
      // Predicated region
      $region17: #{_lambda_.7} parent=11 // pred_check
        %p121 = pneg %p77
      $region18: #{_lambda_.7} parent=11 // pred_check_branch
        %123 = sbr.rel (%p121) target = $region20
      $region19: #{_lambda_.7} parent=11 // pred_region
        _
      $region20: #{_lambda_.7} parent=11 // pred_fallthru
        _
    $region12: #{_lambda_.7} parent=5 // pred_fallthru
      _
    %p124 = scmp.lt.s32.totalorder %s9, 2
    // Predicated region
    $region21: #{_lambda_.7} parent=5 // pred_check
      %p125 = pneg %p124
    $region22: #{_lambda_.7} parent=5 // pred_check_branch
      %127 = sbr.rel (%p125) target = $region24
    $region23: #{_lambda_.7} parent=5 // pred_region
      // Predicated region
      $region25: #{_lambda_.7} parent=23 // pred_check
        %p128 = pneg %p29
      $region26: #{_lambda_.7} parent=23 // pred_check_branch
        %130 = sbr.rel (%p128) target = $region28
      $region27: #{_lambda_.7} parent=23 // pred_region
        %p131 = scmp.lt.s32.totalorder %s9, 1
        %s132 = scalar_select %p131, %s9, 1
        %s133 = smul.addr %s132, 20
        %s134 = smul.addr %s133, 4
        %s135 = scalar_lea.vmem %s0, %s134
      $region28: #{_lambda_.7} parent=23 // pred_fallthru
        _
    $region24: #{_lambda_.7} parent=5 // pred_fallthru
      _
    %p136 = scmp.le.s32.totalorder 1, %s9
    %p137 = scmp.lt.s32.totalorder %s9, 3
    %p138 = pnand %p136, %p137
    %p139 = pneg %p138
    // Predicated region
    $region29: #{_lambda_.7} parent=5 // pred_check
      _
    $region30: #{_lambda_.7} parent=5 // pred_check_branch
      %141 = sbr.rel (%p138) target = $region32
    $region31: #{_lambda_.7} parent=5 // pred_region
      %s142 = ssub.s32 %s9, 1
      %p143 = scmp.lt.s32.totalorder %s14, 1
      %s144 = scalar_select %p143, %s14, 1
      %s145 = smul.addr %s144, 20
      %s146 = smul.addr %s145, 4
      %s147 = scalar_lea.vmem %s0, %s146
      %p148 = pneg %p35
      %p149 = pneg %p32
      %p150 = pneg %p56
      %p151 = pneg %p53
      %p152 = pneg %p77
      %p153 = pneg %p74
      %p154 = pneg %p103
      %p155 = pneg %p100
      %p156 = scmp.lt.s32.totalorder %s14, 1
      %s157 = scalar_select %p156, %s14, 1
      %s158 = smul.addr %s157, 8
      %s159 = smul.addr %s158, 4
      %s160 = scalar_lea.vmem %s3, %s159
      %p161 = scmp.lt.s32.totalorder %s14, 1
      %s162 = scalar_select %p161, %s14, 1
      %s163 = smul.addr %s162, 20
      %s164 = smul.addr %s163, 4
      %s165 = scalar_lea.vmem %s0, %s164
      %p166 = scmp.lt.s32.totalorder %s14, 1
      %s167 = scalar_select %p166, %s14, 1
      %s168 = smul.addr %s167, 8
      %s169 = smul.addr %s168, 4
      %s170 = scalar_lea.vmem %s3, %s169
      %v172 = vld [vmem:[%s165] sm:$0xf]
      %v173 = vld [vmem:[%s165 + $0x8] sm:$0xf]
      %v174 = vld [vmem:[%s165 + $0x10] sm:$0xf]
      %v175 = vld [vmem:[%s165 + $0x18] sm:$0xf]
      %v176 = vld [vmem:[%s165 + $0x20] sm:$0xf]
      %v177 = vld [vmem:[%s165 + $0x28] sm:$0xf]
      %v178 = vld [vmem:[%s165 + $0x30] sm:$0xf]
      %v179 = vld [vmem:[%s165 + $0x38] sm:$0xf]
      %v188 = vunpack.c.l.b16 %v172
      %v189 = vunpack.c.l.b16 %v173
      %v190 = vunpack.c.l.b16 %v174
      %v191 = vunpack.c.l.b16 %v175
      %v192 = vunpack.c.l.b16 %v176
      %v193 = vunpack.c.l.b16 %v177
      %v194 = vunpack.c.l.b16 %v178
      %v195 = vunpack.c.l.b16 %v179
      %v196 = vpack.c.b16 %v189, %v188
      %v197 = vpack.c.b16 %v191, %v190
      %v198 = vpack.c.b16 %v193, %v192
      %v199 = vpack.c.b16 %v195, %v194
      %vm204 = vcmask 523264
      %205 = vst.msk [vmem:[#allocation2] sm:$0xff] %vm204, %v196
      %206 = vst.msk [vmem:[#allocation2 + $0x28] sm:$0xff] %vm204, %v197
      %207 = vst.msk [vmem:[#allocation2 + $0x50] sm:$0xff] %vm204, %v198
      %208 = vst.msk [vmem:[#allocation2 + $0x78] sm:$0xff] %vm204, %v199
      %v209 = vld [vmem:[%s165] sm:$0xf]
      %v210 = vld [vmem:[%s165 + $0x4] sm:$0x1]
      %v211 = vld [vmem:[%s165 + $0x8] sm:$0xf]
      %v212 = vld [vmem:[%s165 + $0xc] sm:$0x1]
      %v213 = vld [vmem:[%s165 + $0x10] sm:$0xf]
      %v214 = vld [vmem:[%s165 + $0x14] sm:$0x1]
      %v215 = vld [vmem:[%s165 + $0x18] sm:$0xf]
      %v216 = vld [vmem:[%s165 + $0x1c] sm:$0x1]
      %v217 = vld [vmem:[%s165 + $0x20] sm:$0xf]
      %v218 = vld [vmem:[%s165 + $0x24] sm:$0x1]
      %v219 = vld [vmem:[%s165 + $0x28] sm:$0xf]
      %v220 = vld [vmem:[%s165 + $0x2c] sm:$0x1]
      %v221 = vld [vmem:[%s165 + $0x30] sm:$0xf]
      %v222 = vld [vmem:[%s165 + $0x34] sm:$0x1]
      %v223 = vld [vmem:[%s165 + $0x38] sm:$0xf]
      %v224 = vld [vmem:[%s165 + $0x3c] sm:$0x1]
      %vm225 = vsmask.f32 3328
      %vm226 = vsmask.f32 7440
      %vm227 = vmor %vm225, %vm226
      %v229 = vshrl.u32 %v209, 16
      %v231 = vrot.slane %v229, 4
      %v232 = vshll.u32 %v209, 16
      %v234 = vrot.slane %v232, 5
      %v235 = vor.u32 %v231, %v234
      %v236 = vrot.slane %v235, 4
      %v238 = vshll.u32 %v210, 16
      %v240 = vrot.slane %v238, 5
      %v241 = vsel %vm227, %v236, %v240
      %v243 = vshrl.u32 %v211, 16
      %v245 = vrot.slane %v243, 4
      %v246 = vshll.u32 %v211, 16
      %v248 = vrot.slane %v246, 5
      %v249 = vor.u32 %v245, %v248
      %v250 = vrot.slane %v249, 4
      %v252 = vshll.u32 %v212, 16
      %v254 = vrot.slane %v252, 5
      %v255 = vsel %vm227, %v250, %v254
      %v257 = vshrl.u32 %v213, 16
      %v259 = vrot.slane %v257, 4
      %v260 = vshll.u32 %v213, 16
      %v262 = vrot.slane %v260, 5
      %v263 = vor.u32 %v259, %v262
      %v264 = vrot.slane %v263, 4
      %v266 = vshll.u32 %v214, 16
      %v268 = vrot.slane %v266, 5
      %v269 = vsel %vm227, %v264, %v268
      %v271 = vshrl.u32 %v215, 16
      %v273 = vrot.slane %v271, 4
      %v274 = vshll.u32 %v215, 16
      %v276 = vrot.slane %v274, 5
      %v277 = vor.u32 %v273, %v276
      %v278 = vrot.slane %v277, 4
      %v280 = vshll.u32 %v216, 16
      %v282 = vrot.slane %v280, 5
      %v283 = vsel %vm227, %v278, %v282
      %v285 = vshrl.u32 %v217, 16
      %v287 = vrot.slane %v285, 4
      %v288 = vshll.u32 %v217, 16
      %v290 = vrot.slane %v288, 5
      %v291 = vor.u32 %v287, %v290
      %v292 = vrot.slane %v291, 4
      %v294 = vshll.u32 %v218, 16
      %v296 = vrot.slane %v294, 5
      %v297 = vsel %vm227, %v292, %v296
      %v299 = vshrl.u32 %v219, 16
      %v301 = vrot.slane %v299, 4
      %v302 = vshll.u32 %v219, 16
      %v304 = vrot.slane %v302, 5
      %v305 = vor.u32 %v301, %v304
      %v306 = vrot.slane %v305, 4
      %v308 = vshll.u32 %v220, 16
      %v310 = vrot.slane %v308, 5
      %v311 = vsel %vm227, %v306, %v310
      %v313 = vshrl.u32 %v221, 16
      %v315 = vrot.slane %v313, 4
      %v316 = vshll.u32 %v221, 16
      %v318 = vrot.slane %v316, 5
      %v319 = vor.u32 %v315, %v318
      %v320 = vrot.slane %v319, 4
      %v322 = vshll.u32 %v222, 16
      %v324 = vrot.slane %v322, 5
      %v325 = vsel %vm227, %v320, %v324
      %v327 = vshrl.u32 %v223, 16
      %v329 = vrot.slane %v327, 4
      %v330 = vshll.u32 %v223, 16
      %v332 = vrot.slane %v330, 5
      %v333 = vor.u32 %v329, %v332
      %v334 = vrot.slane %v333, 4
      %v336 = vshll.u32 %v224, 16
      %v338 = vrot.slane %v336, 5
      %v339 = vsel %vm227, %v334, %v338
      %v340 = vunpack.c.l.b16 %v241
      %v341 = vunpack.c.l.b16 %v255
      %v342 = vunpack.c.l.b16 %v269
      %v343 = vunpack.c.l.b16 %v283
      %v344 = vunpack.c.l.b16 %v297
      %v345 = vunpack.c.l.b16 %v311
      %v346 = vunpack.c.l.b16 %v325
      %v347 = vunpack.c.l.b16 %v339
      %v348 = vpack.c.b16 %v341, %v340
      %v349 = vpack.c.b16 %v343, %v342
      %v350 = vpack.c.b16 %v345, %v344
      %v351 = vpack.c.b16 %v347, %v346
      %352 = vrot.lane.b32.xlu0 %v348, 64
      %v353 = vpop.permute.xlu0 %352
      %354 = vrot.lane.b32.xlu0 %v349, 64
      %v355 = vpop.permute.xlu0 %354
      %356 = vrot.lane.b32.xlu0 %v350, 64
      %v357 = vpop.permute.xlu0 %356
      %358 = vrot.lane.b32.xlu0 %v351, 64
      %v359 = vpop.permute.xlu0 %358
      %vm364 = vcmask 1048064
      %365 = vst.msk [vmem:[#allocation2] sm:$0xff] %vm364, %v353
      %366 = vst.msk [vmem:[#allocation2 + $0x28] sm:$0xff] %vm364, %v355
      %367 = vst.msk [vmem:[#allocation2 + $0x50] sm:$0xff] %vm364, %v357
      %368 = vst.msk [vmem:[#allocation2 + $0x78] sm:$0xff] %vm364, %v359
      %v369 = vld [vmem:[%s165] sm:$0xe]
      %v370 = vld [vmem:[%s165 + $0x4] sm:$0x1]
      %v371 = vld [vmem:[%s165 + $0x8] sm:$0xe]
      %v372 = vld [vmem:[%s165 + $0xc] sm:$0x1]
      %v373 = vld [vmem:[%s165 + $0x10] sm:$0xe]
      %v374 = vld [vmem:[%s165 + $0x14] sm:$0x1]
      %v375 = vld [vmem:[%s165 + $0x18] sm:$0xe]
      %v376 = vld [vmem:[%s165 + $0x1c] sm:$0x1]
      %v377 = vld [vmem:[%s165 + $0x20] sm:$0xe]
      %v378 = vld [vmem:[%s165 + $0x24] sm:$0x1]
      %v379 = vld [vmem:[%s165 + $0x28] sm:$0xe]
      %v380 = vld [vmem:[%s165 + $0x2c] sm:$0x1]
      %v381 = vld [vmem:[%s165 + $0x30] sm:$0xe]
      %v382 = vld [vmem:[%s165 + $0x34] sm:$0x1]
      %v383 = vld [vmem:[%s165 + $0x38] sm:$0xe]
      %v384 = vld [vmem:[%s165 + $0x3c] sm:$0x1]
      %vm401 = vcmask 1042432
      %vm402 = vcmask 1046532
      %vm403 = vmor %vm401, %vm402
      %v404 = vrot.slane %v369, 5
      %v405 = vrot.slane %v404, 4
      %v406 = vrot.slane %v370, 5
      %v407 = vsel %vm403, %v405, %v406
      %v408 = vrot.slane %v371, 5
      %v409 = vrot.slane %v408, 4
      %v410 = vrot.slane %v372, 5
      %v411 = vsel %vm403, %v409, %v410
      %v412 = vrot.slane %v373, 5
      %v413 = vrot.slane %v412, 4
      %v414 = vrot.slane %v374, 5
      %v415 = vsel %vm403, %v413, %v414
      %v416 = vrot.slane %v375, 5
      %v417 = vrot.slane %v416, 4
      %v418 = vrot.slane %v376, 5
      %v419 = vsel %vm403, %v417, %v418
      %v420 = vrot.slane %v377, 5
      %v421 = vrot.slane %v420, 4
      %v422 = vrot.slane %v378, 5
      %v423 = vsel %vm403, %v421, %v422
      %v424 = vrot.slane %v379, 5
      %v425 = vrot.slane %v424, 4
      %v426 = vrot.slane %v380, 5
      %v427 = vsel %vm403, %v425, %v426
      %v428 = vrot.slane %v381, 5
      %v429 = vrot.slane %v428, 4
      %v430 = vrot.slane %v382, 5
      %v431 = vsel %vm403, %v429, %v430
      %v432 = vrot.slane %v383, 5
      %v433 = vrot.slane %v432, 4
      %v434 = vrot.slane %v384, 5
      %v435 = vsel %vm403, %v433, %v434
      %v436 = vunpack.c.l.b16 %v407
      %v437 = vunpack.c.l.b16 %v411
      %v438 = vunpack.c.l.b16 %v415
      %v439 = vunpack.c.l.b16 %v419
      %v440 = vunpack.c.l.b16 %v423
      %v441 = vunpack.c.l.b16 %v427
      %v442 = vunpack.c.l.b16 %v431
      %v443 = vunpack.c.l.b16 %v435
      %v444 = vpack.c.b16 %v437, %v436
      %v445 = vpack.c.b16 %v439, %v438
      %v446 = vpack.c.b16 %v441, %v440
      %v447 = vpack.c.b16 %v443, %v442
      %452 = vst.msk [vmem:[#allocation2 + $0x8] sm:$0xff] %vm204, %v444
      %453 = vst.msk [vmem:[#allocation2 + $0x30] sm:$0xff] %vm204, %v445
      %454 = vst.msk [vmem:[#allocation2 + $0x58] sm:$0xff] %vm204, %v446
      %455 = vst.msk [vmem:[#allocation2 + $0x80] sm:$0xff] %vm204, %v447
      %s456 = scalar_lea.vmem %s165, 8
      %v457 = vld [vmem:[%s456] sm:$0xf]
      %v458 = vld [vmem:[%s456 + $0x8] sm:$0xf]
      %v459 = vld [vmem:[%s456 + $0x10] sm:$0xf]
      %v460 = vld [vmem:[%s456 + $0x18] sm:$0xf]
      %v461 = vld [vmem:[%s456 + $0x20] sm:$0xf]
      %v462 = vld [vmem:[%s456 + $0x28] sm:$0xf]
      %v463 = vld [vmem:[%s456 + $0x30] sm:$0xf]
      %v464 = vld [vmem:[%s456 + $0x38] sm:$0xf]
      %v473 = vunpack.c.l.b16 %v457
      %v474 = vunpack.c.l.b16 %v458
      %v475 = vunpack.c.l.b16 %v459
      %v476 = vunpack.c.l.b16 %v460
      %v477 = vunpack.c.l.b16 %v461
      %v478 = vunpack.c.l.b16 %v462
      %v479 = vunpack.c.l.b16 %v463
      %v480 = vunpack.c.l.b16 %v464
      %v481 = vpack.c.b16 %v474, %v473
      %v482 = vpack.c.b16 %v476, %v475
      %v483 = vpack.c.b16 %v478, %v477
      %v484 = vpack.c.b16 %v480, %v479
      %485 = vrot.lane.b32.xlu0 %v481, 64
      %v486 = vpop.permute.xlu0 %485
      %487 = vrot.lane.b32.xlu0 %v482, 64
      %v488 = vpop.permute.xlu0 %487
      %489 = vrot.lane.b32.xlu0 %v483, 64
      %v490 = vpop.permute.xlu0 %489
      %491 = vrot.lane.b32.xlu0 %v484, 64
      %v492 = vpop.permute.xlu0 %491
      %497 = vst.msk [vmem:[#allocation2 + $0x8] sm:$0xff] %vm364, %v486
      %498 = vst.msk [vmem:[#allocation2 + $0x30] sm:$0xff] %vm364, %v488
      %499 = vst.msk [vmem:[#allocation2 + $0x58] sm:$0xff] %vm364, %v490
      %500 = vst.msk [vmem:[#allocation2 + $0x80] sm:$0xff] %vm364, %v492
      %v501 = vld [vmem:[%s456] sm:$0xf]
      %v502 = vld [vmem:[%s456 + $0x4] sm:$0x1]
      %v503 = vld [vmem:[%s456 + $0x8] sm:$0xf]
      %v504 = vld [vmem:[%s456 + $0xc] sm:$0x1]
      %v505 = vld [vmem:[%s456 + $0x10] sm:$0xf]
      %v506 = vld [vmem:[%s456 + $0x14] sm:$0x1]
      %v507 = vld [vmem:[%s456 + $0x18] sm:$0xf]
      %v508 = vld [vmem:[%s456 + $0x1c] sm:$0x1]
      %v509 = vld [vmem:[%s456 + $0x20] sm:$0xf]
      %v510 = vld [vmem:[%s456 + $0x24] sm:$0x1]
      %v511 = vld [vmem:[%s456 + $0x28] sm:$0xf]
      %v512 = vld [vmem:[%s456 + $0x2c] sm:$0x1]
      %v513 = vld [vmem:[%s456 + $0x30] sm:$0xf]
      %v514 = vld [vmem:[%s456 + $0x34] sm:$0x1]
      %v515 = vld [vmem:[%s456 + $0x38] sm:$0xf]
      %v516 = vld [vmem:[%s456 + $0x3c] sm:$0x1]
      %v518 = vshrl.u32 %v501, 16
      %v520 = vrot.slane %v518, 4
      %v521 = vshll.u32 %v501, 16
      %v523 = vrot.slane %v521, 5
      %v524 = vor.u32 %v520, %v523
      %v525 = vrot.slane %v524, 4
      %v527 = vshll.u32 %v502, 16
      %v529 = vrot.slane %v527, 5
      %v530 = vsel %vm227, %v525, %v529
      %v532 = vshrl.u32 %v503, 16
      %v534 = vrot.slane %v532, 4
      %v535 = vshll.u32 %v503, 16
      %v537 = vrot.slane %v535, 5
      %v538 = vor.u32 %v534, %v537
      %v539 = vrot.slane %v538, 4
      %v541 = vshll.u32 %v504, 16
      %v543 = vrot.slane %v541, 5
      %v544 = vsel %vm227, %v539, %v543
      %v546 = vshrl.u32 %v505, 16
      %v548 = vrot.slane %v546, 4
      %v549 = vshll.u32 %v505, 16
      %v551 = vrot.slane %v549, 5
      %v552 = vor.u32 %v548, %v551
      %v553 = vrot.slane %v552, 4
      %v555 = vshll.u32 %v506, 16
      %v557 = vrot.slane %v555, 5
      %v558 = vsel %vm227, %v553, %v557
      %v560 = vshrl.u32 %v507, 16
      %v562 = vrot.slane %v560, 4
      %v563 = vshll.u32 %v507, 16
      %v565 = vrot.slane %v563, 5
      %v566 = vor.u32 %v562, %v565
      %v567 = vrot.slane %v566, 4
      %v569 = vshll.u32 %v508, 16
      %v571 = vrot.slane %v569, 5
      %v572 = vsel %vm227, %v567, %v571
      %v574 = vshrl.u32 %v509, 16
      %v576 = vrot.slane %v574, 4
      %v577 = vshll.u32 %v509, 16
      %v579 = vrot.slane %v577, 5
      %v580 = vor.u32 %v576, %v579
      %v581 = vrot.slane %v580, 4
      %v583 = vshll.u32 %v510, 16
      %v585 = vrot.slane %v583, 5
      %v586 = vsel %vm227, %v581, %v585
      %v588 = vshrl.u32 %v511, 16
      %v590 = vrot.slane %v588, 4
      %v591 = vshll.u32 %v511, 16
      %v593 = vrot.slane %v591, 5
      %v594 = vor.u32 %v590, %v593
      %v595 = vrot.slane %v594, 4
      %v597 = vshll.u32 %v512, 16
      %v599 = vrot.slane %v597, 5
      %v600 = vsel %vm227, %v595, %v599
      %v602 = vshrl.u32 %v513, 16
      %v604 = vrot.slane %v602, 4
      %v605 = vshll.u32 %v513, 16
      %v607 = vrot.slane %v605, 5
      %v608 = vor.u32 %v604, %v607
      %v609 = vrot.slane %v608, 4
      %v611 = vshll.u32 %v514, 16
      %v613 = vrot.slane %v611, 5
      %v614 = vsel %vm227, %v609, %v613
      %v616 = vshrl.u32 %v515, 16
      %v618 = vrot.slane %v616, 4
      %v619 = vshll.u32 %v515, 16
      %v621 = vrot.slane %v619, 5
      %v622 = vor.u32 %v618, %v621
      %v623 = vrot.slane %v622, 4
      %v625 = vshll.u32 %v516, 16
      %v627 = vrot.slane %v625, 5
      %v628 = vsel %vm227, %v623, %v627
      %v629 = vunpack.c.l.b16 %v530
      %v630 = vunpack.c.l.b16 %v544
      %v631 = vunpack.c.l.b16 %v558
      %v632 = vunpack.c.l.b16 %v572
      %v633 = vunpack.c.l.b16 %v586
      %v634 = vunpack.c.l.b16 %v600
      %v635 = vunpack.c.l.b16 %v614
      %v636 = vunpack.c.l.b16 %v628
      %v637 = vpack.c.b16 %v630, %v629
      %v638 = vpack.c.b16 %v632, %v631
      %v639 = vpack.c.b16 %v634, %v633
      %v640 = vpack.c.b16 %v636, %v635
      %645 = vst.msk [vmem:[#allocation2 + $0x10] sm:$0xff] %vm204, %v637
      %646 = vst.msk [vmem:[#allocation2 + $0x38] sm:$0xff] %vm204, %v638
      %647 = vst.msk [vmem:[#allocation2 + $0x60] sm:$0xff] %vm204, %v639
      %648 = vst.msk [vmem:[#allocation2 + $0x88] sm:$0xff] %vm204, %v640
      %v649 = vld [vmem:[%s456] sm:$0xe]
      %v650 = vld [vmem:[%s456 + $0x4] sm:$0x1]
      %v651 = vld [vmem:[%s456 + $0x8] sm:$0xe]
      %v652 = vld [vmem:[%s456 + $0xc] sm:$0x1]
      %v653 = vld [vmem:[%s456 + $0x10] sm:$0xe]
      %v654 = vld [vmem:[%s456 + $0x14] sm:$0x1]
      %v655 = vld [vmem:[%s456 + $0x18] sm:$0xe]
      %v656 = vld [vmem:[%s456 + $0x1c] sm:$0x1]
      %v657 = vld [vmem:[%s456 + $0x20] sm:$0xe]
      %v658 = vld [vmem:[%s456 + $0x24] sm:$0x1]
      %v659 = vld [vmem:[%s456 + $0x28] sm:$0xe]
      %v660 = vld [vmem:[%s456 + $0x2c] sm:$0x1]
      %v661 = vld [vmem:[%s456 + $0x30] sm:$0xe]
      %v662 = vld [vmem:[%s456 + $0x34] sm:$0x1]
      %v663 = vld [vmem:[%s456 + $0x38] sm:$0xe]
      %v664 = vld [vmem:[%s456 + $0x3c] sm:$0x1]
      %v681 = vrot.slane %v649, 5
      %v682 = vrot.slane %v681, 4
      %v683 = vrot.slane %v650, 5
      %v684 = vsel %vm403, %v682, %v683
      %v685 = vrot.slane %v651, 5
      %v686 = vrot.slane %v685, 4
      %v687 = vrot.slane %v652, 5
      %v688 = vsel %vm403, %v686, %v687
      %v689 = vrot.slane %v653, 5
      %v690 = vrot.slane %v689, 4
      %v691 = vrot.slane %v654, 5
      %v692 = vsel %vm403, %v690, %v691
      %v693 = vrot.slane %v655, 5
      %v694 = vrot.slane %v693, 4
      %v695 = vrot.slane %v656, 5
      %v696 = vsel %vm403, %v694, %v695
      %v697 = vrot.slane %v657, 5
      %v698 = vrot.slane %v697, 4
      %v699 = vrot.slane %v658, 5
      %v700 = vsel %vm403, %v698, %v699
      %v701 = vrot.slane %v659, 5
      %v702 = vrot.slane %v701, 4
      %v703 = vrot.slane %v660, 5
      %v704 = vsel %vm403, %v702, %v703
      %v705 = vrot.slane %v661, 5
      %v706 = vrot.slane %v705, 4
      %v707 = vrot.slane %v662, 5
      %v708 = vsel %vm403, %v706, %v707
      %v709 = vrot.slane %v663, 5
      %v710 = vrot.slane %v709, 4
      %v711 = vrot.slane %v664, 5
      %v712 = vsel %vm403, %v710, %v711
      %v713 = vunpack.c.l.b16 %v684
      %v714 = vunpack.c.l.b16 %v688
      %v715 = vunpack.c.l.b16 %v692
      %v716 = vunpack.c.l.b16 %v696
      %v717 = vunpack.c.l.b16 %v700
      %v718 = vunpack.c.l.b16 %v704
      %v719 = vunpack.c.l.b16 %v708
      %v720 = vunpack.c.l.b16 %v712
      %v721 = vpack.c.b16 %v714, %v713
      %v722 = vpack.c.b16 %v716, %v715
      %v723 = vpack.c.b16 %v718, %v717
      %v724 = vpack.c.b16 %v720, %v719
      %725 = vrot.lane.b32.xlu0 %v721, 64
      %v726 = vpop.permute.xlu0 %725
      %727 = vrot.lane.b32.xlu0 %v722, 64
      %v728 = vpop.permute.xlu0 %727
      %729 = vrot.lane.b32.xlu0 %v723, 64
      %v730 = vpop.permute.xlu0 %729
      %731 = vrot.lane.b32.xlu0 %v724, 64
      %v732 = vpop.permute.xlu0 %731
      %737 = vst.msk [vmem:[#allocation2 + $0x10] sm:$0xff] %vm364, %v726
      %738 = vst.msk [vmem:[#allocation2 + $0x38] sm:$0xff] %vm364, %v728
      %739 = vst.msk [vmem:[#allocation2 + $0x60] sm:$0xff] %vm364, %v730
      %740 = vst.msk [vmem:[#allocation2 + $0x88] sm:$0xff] %vm364, %v732
      %s741 = scalar_lea.vmem %s165, 16
      %v742 = vld [vmem:[%s741] sm:$0xf]
      %v743 = vld [vmem:[%s741 + $0x8] sm:$0xf]
      %v744 = vld [vmem:[%s741 + $0x10] sm:$0xf]
      %v745 = vld [vmem:[%s741 + $0x18] sm:$0xf]
      %v746 = vld [vmem:[%s741 + $0x20] sm:$0xf]
      %v747 = vld [vmem:[%s741 + $0x28] sm:$0xf]
      %v748 = vld [vmem:[%s741 + $0x30] sm:$0xf]
      %v749 = vld [vmem:[%s741 + $0x38] sm:$0xf]
      %v758 = vunpack.c.l.b16 %v742
      %v759 = vunpack.c.l.b16 %v743
      %v760 = vunpack.c.l.b16 %v744
      %v761 = vunpack.c.l.b16 %v745
      %v762 = vunpack.c.l.b16 %v746
      %v763 = vunpack.c.l.b16 %v747
      %v764 = vunpack.c.l.b16 %v748
      %v765 = vunpack.c.l.b16 %v749
      %v766 = vpack.c.b16 %v759, %v758
      %v767 = vpack.c.b16 %v761, %v760
      %v768 = vpack.c.b16 %v763, %v762
      %v769 = vpack.c.b16 %v765, %v764
      %774 = vst.msk [vmem:[#allocation2 + $0x18] sm:$0xff] %vm204, %v766
      %775 = vst.msk [vmem:[#allocation2 + $0x40] sm:$0xff] %vm204, %v767
      %776 = vst.msk [vmem:[#allocation2 + $0x68] sm:$0xff] %vm204, %v768
      %777 = vst.msk [vmem:[#allocation2 + $0x90] sm:$0xff] %vm204, %v769
      %v778 = vld [vmem:[%s741] sm:$0xf]
      %v779 = vld [vmem:[%s741 + $0x4] sm:$0x1]
      %v780 = vld [vmem:[%s741 + $0x8] sm:$0xf]
      %v781 = vld [vmem:[%s741 + $0xc] sm:$0x1]
      %v782 = vld [vmem:[%s741 + $0x10] sm:$0xf]
      %v783 = vld [vmem:[%s741 + $0x14] sm:$0x1]
      %v784 = vld [vmem:[%s741 + $0x18] sm:$0xf]
      %v785 = vld [vmem:[%s741 + $0x1c] sm:$0x1]
      %v786 = vld [vmem:[%s741 + $0x20] sm:$0xf]
      %v787 = vld [vmem:[%s741 + $0x24] sm:$0x1]
      %v788 = vld [vmem:[%s741 + $0x28] sm:$0xf]
      %v789 = vld [vmem:[%s741 + $0x2c] sm:$0x1]
      %v790 = vld [vmem:[%s741 + $0x30] sm:$0xf]
      %v791 = vld [vmem:[%s741 + $0x34] sm:$0x1]
      %v792 = vld [vmem:[%s741 + $0x38] sm:$0xf]
      %v793 = vld [vmem:[%s741 + $0x3c] sm:$0x1]
      %v795 = vshrl.u32 %v778, 16
      %v797 = vrot.slane %v795, 4
      %v798 = vshll.u32 %v778, 16
      %v800 = vrot.slane %v798, 5
      %v801 = vor.u32 %v797, %v800
      %v802 = vrot.slane %v801, 4
      %v804 = vshll.u32 %v779, 16
      %v806 = vrot.slane %v804, 5
      %v807 = vsel %vm227, %v802, %v806
      %v809 = vshrl.u32 %v780, 16
      %v811 = vrot.slane %v809, 4
      %v812 = vshll.u32 %v780, 16
      %v814 = vrot.slane %v812, 5
      %v815 = vor.u32 %v811, %v814
      %v816 = vrot.slane %v815, 4
      %v818 = vshll.u32 %v781, 16
      %v820 = vrot.slane %v818, 5
      %v821 = vsel %vm227, %v816, %v820
      %v823 = vshrl.u32 %v782, 16
      %v825 = vrot.slane %v823, 4
      %v826 = vshll.u32 %v782, 16
      %v828 = vrot.slane %v826, 5
      %v829 = vor.u32 %v825, %v828
      %v830 = vrot.slane %v829, 4
      %v832 = vshll.u32 %v783, 16
      %v834 = vrot.slane %v832, 5
      %v835 = vsel %vm227, %v830, %v834
      %v837 = vshrl.u32 %v784, 16
      %v839 = vrot.slane %v837, 4
      %v840 = vshll.u32 %v784, 16
      %v842 = vrot.slane %v840, 5
      %v843 = vor.u32 %v839, %v842
      %v844 = vrot.slane %v843, 4
      %v846 = vshll.u32 %v785, 16
      %v848 = vrot.slane %v846, 5
      %v849 = vsel %vm227, %v844, %v848
      %v851 = vshrl.u32 %v786, 16
      %v853 = vrot.slane %v851, 4
      %v854 = vshll.u32 %v786, 16
      %v856 = vrot.slane %v854, 5
      %v857 = vor.u32 %v853, %v856
      %v858 = vrot.slane %v857, 4
      %v860 = vshll.u32 %v787, 16
      %v862 = vrot.slane %v860, 5
      %v863 = vsel %vm227, %v858, %v862
      %v865 = vshrl.u32 %v788, 16
      %v867 = vrot.slane %v865, 4
      %v868 = vshll.u32 %v788, 16
      %v870 = vrot.slane %v868, 5
      %v871 = vor.u32 %v867, %v870
      %v872 = vrot.slane %v871, 4
      %v874 = vshll.u32 %v789, 16
      %v876 = vrot.slane %v874, 5
      %v877 = vsel %vm227, %v872, %v876
      %v879 = vshrl.u32 %v790, 16
      %v881 = vrot.slane %v879, 4
      %v882 = vshll.u32 %v790, 16
      %v884 = vrot.slane %v882, 5
      %v885 = vor.u32 %v881, %v884
      %v886 = vrot.slane %v885, 4
      %v888 = vshll.u32 %v791, 16
      %v890 = vrot.slane %v888, 5
      %v891 = vsel %vm227, %v886, %v890
      %v893 = vshrl.u32 %v792, 16
      %v895 = vrot.slane %v893, 4
      %v896 = vshll.u32 %v792, 16
      %v898 = vrot.slane %v896, 5
      %v899 = vor.u32 %v895, %v898
      %v900 = vrot.slane %v899, 4
      %v902 = vshll.u32 %v793, 16
      %v904 = vrot.slane %v902, 5
      %v905 = vsel %vm227, %v900, %v904
      %v906 = vunpack.c.l.b16 %v807
      %v907 = vunpack.c.l.b16 %v821
      %v908 = vunpack.c.l.b16 %v835
      %v909 = vunpack.c.l.b16 %v849
      %v910 = vunpack.c.l.b16 %v863
      %v911 = vunpack.c.l.b16 %v877
      %v912 = vunpack.c.l.b16 %v891
      %v913 = vunpack.c.l.b16 %v905
      %v914 = vpack.c.b16 %v907, %v906
      %v915 = vpack.c.b16 %v909, %v908
      %v916 = vpack.c.b16 %v911, %v910
      %v917 = vpack.c.b16 %v913, %v912
      %918 = vrot.lane.b32.xlu0 %v914, 64
      %v919 = vpop.permute.xlu0 %918
      %920 = vrot.lane.b32.xlu0 %v915, 64
      %v921 = vpop.permute.xlu0 %920
      %922 = vrot.lane.b32.xlu0 %v916, 64
      %v923 = vpop.permute.xlu0 %922
      %924 = vrot.lane.b32.xlu0 %v917, 64
      %v925 = vpop.permute.xlu0 %924
      %930 = vst.msk [vmem:[#allocation2 + $0x18] sm:$0xff] %vm364, %v919
      %931 = vst.msk [vmem:[#allocation2 + $0x40] sm:$0xff] %vm364, %v921
      %932 = vst.msk [vmem:[#allocation2 + $0x68] sm:$0xff] %vm364, %v923
      %933 = vst.msk [vmem:[#allocation2 + $0x90] sm:$0xff] %vm364, %v925
      %v934 = vld [vmem:[%s741] sm:$0xe]
      %v935 = vld [vmem:[%s741 + $0x4] sm:$0x1]
      %v936 = vld [vmem:[%s741 + $0x8] sm:$0xe]
      %v937 = vld [vmem:[%s741 + $0xc] sm:$0x1]
      %v938 = vld [vmem:[%s741 + $0x10] sm:$0xe]
      %v939 = vld [vmem:[%s741 + $0x14] sm:$0x1]
      %v940 = vld [vmem:[%s741 + $0x18] sm:$0xe]
      %v941 = vld [vmem:[%s741 + $0x1c] sm:$0x1]
      %v942 = vld [vmem:[%s741 + $0x20] sm:$0xe]
      %v943 = vld [vmem:[%s741 + $0x24] sm:$0x1]
      %v944 = vld [vmem:[%s741 + $0x28] sm:$0xe]
      %v945 = vld [vmem:[%s741 + $0x2c] sm:$0x1]
      %v946 = vld [vmem:[%s741 + $0x30] sm:$0xe]
      %v947 = vld [vmem:[%s741 + $0x34] sm:$0x1]
      %v948 = vld [vmem:[%s741 + $0x38] sm:$0xe]
      %v949 = vld [vmem:[%s741 + $0x3c] sm:$0x1]
      %v966 = vrot.slane %v934, 5
      %v967 = vrot.slane %v966, 4
      %v968 = vrot.slane %v935, 5
      %v969 = vsel %vm403, %v967, %v968
      %v970 = vrot.slane %v936, 5
      %v971 = vrot.slane %v970, 4
      %v972 = vrot.slane %v937, 5
      %v973 = vsel %vm403, %v971, %v972
      %v974 = vrot.slane %v938, 5
      %v975 = vrot.slane %v974, 4
      %v976 = vrot.slane %v939, 5
      %v977 = vsel %vm403, %v975, %v976
      %v978 = vrot.slane %v940, 5
      %v979 = vrot.slane %v978, 4
      %v980 = vrot.slane %v941, 5
      %v981 = vsel %vm403, %v979, %v980
      %v982 = vrot.slane %v942, 5
      %v983 = vrot.slane %v982, 4
      %v984 = vrot.slane %v943, 5
      %v985 = vsel %vm403, %v983, %v984
      %v986 = vrot.slane %v944, 5
      %v987 = vrot.slane %v986, 4
      %v988 = vrot.slane %v945, 5
      %v989 = vsel %vm403, %v987, %v988
      %v990 = vrot.slane %v946, 5
      %v991 = vrot.slane %v990, 4
      %v992 = vrot.slane %v947, 5
      %v993 = vsel %vm403, %v991, %v992
      %v994 = vrot.slane %v948, 5
      %v995 = vrot.slane %v994, 4
      %v996 = vrot.slane %v949, 5
      %v997 = vsel %vm403, %v995, %v996
      %v998 = vunpack.c.l.b16 %v969
      %v999 = vunpack.c.l.b16 %v973
      %v1000 = vunpack.c.l.b16 %v977
      %v1001 = vunpack.c.l.b16 %v981
      %v1002 = vunpack.c.l.b16 %v985
      %v1003 = vunpack.c.l.b16 %v989
      %v1004 = vunpack.c.l.b16 %v993
      %v1005 = vunpack.c.l.b16 %v997
      %v1006 = vpack.c.b16 %v999, %v998
      %v1007 = vpack.c.b16 %v1001, %v1000
      %v1008 = vpack.c.b16 %v1003, %v1002
      %v1009 = vpack.c.b16 %v1005, %v1004
      %1014 = vst.msk [vmem:[#allocation2 + $0x20] sm:$0xff] %vm204, %v1006
      %1015 = vst.msk [vmem:[#allocation2 + $0x48] sm:$0xff] %vm204, %v1007
      %1016 = vst.msk [vmem:[#allocation2 + $0x70] sm:$0xff] %vm204, %v1008
      %1017 = vst.msk [vmem:[#allocation2 + $0x98] sm:$0xff] %vm204, %v1009
      %v1018 = vld [vmem:[#allocation2] sm:$0xff]
      %v1019 = vld [vmem:[#allocation2 + $0x8] sm:$0xff]
      %v1020 = vld [vmem:[#allocation2 + $0x10] sm:$0xff]
      %v1021 = vld [vmem:[#allocation2 + $0x18] sm:$0xff]
      %v1022 = vld [vmem:[#allocation2 + $0x20] sm:$0xff]
      %v1023 = vld [vmem:[#allocation2 + $0x28] sm:$0xff]
      %v1024 = vld [vmem:[#allocation2 + $0x30] sm:$0xff]
      %v1025 = vld [vmem:[#allocation2 + $0x38] sm:$0xff]
      %v1026 = vld [vmem:[#allocation2 + $0x40] sm:$0xff]
      %v1027 = vld [vmem:[#allocation2 + $0x48] sm:$0xff]
      %v1028 = vld [vmem:[#allocation2 + $0x50] sm:$0xff]
      %v1029 = vld [vmem:[#allocation2 + $0x58] sm:$0xff]
      %v1030 = vld [vmem:[#allocation2 + $0x60] sm:$0xff]
      %v1031 = vld [vmem:[#allocation2 + $0x68] sm:$0xff]
      %v1032 = vld [vmem:[#allocation2 + $0x70] sm:$0xff]
      %v1033 = vld [vmem:[#allocation2 + $0x78] sm:$0xff]
      %v1034 = vld [vmem:[#allocation2 + $0x80] sm:$0xff]
      %v1035 = vld [vmem:[#allocation2 + $0x88] sm:$0xff]
      %v1036 = vld [vmem:[#allocation2 + $0x90] sm:$0xff]
      %v1037 = vld [vmem:[#allocation2 + $0x98] sm:$0xff]
      %v1038 = vld [vmem:[%s1] sm:$0xf]
      %v1039 = vld [vmem:[%s1 + $0x4] sm:$0xf]
      %v1040 = vld [vmem:[%s1 + $0x8] sm:$0xf]
      %v1041 = vld [vmem:[%s1 + $0xc] sm:$0xf]
      %v1042 = vld [vmem:[%s1 + $0x10] sm:$0xf]
      %v1043 = vld [vmem:[%s1 + $0x14] sm:$0xf]
      %v1044 = vld [vmem:[%s1 + $0x18] sm:$0xf]
      %v1045 = vld [vmem:[%s1 + $0x1c] sm:$0xf]
      %v1046 = vld [vmem:[%s1 + $0x20] sm:$0xf]
      %v1047 = vld [vmem:[%s1 + $0x24] sm:$0xf]
      %v1048 = vld [vmem:[%s1 + $0x28] sm:$0xf]
      %v1049 = vld [vmem:[%s1 + $0x2c] sm:$0xf]
      %v1050 = vld [vmem:[%s1 + $0x30] sm:$0xf]
      %v1051 = vld [vmem:[%s1 + $0x34] sm:$0xf]
      %v1052 = vld [vmem:[%s1 + $0x38] sm:$0xf]
      %v1053 = vld [vmem:[%s1 + $0x3c] sm:$0xf]
      %v1054 = vld [vmem:[%s1 + $0x40] sm:$0xf]
      %v1055 = vld [vmem:[%s1 + $0x44] sm:$0xf]
      %v1056 = vld [vmem:[%s1 + $0x48] sm:$0xf]
      %v1057 = vld [vmem:[%s1 + $0x4c] sm:$0xf]
      %v1058 = vld [vmem:[%s1 + $0x50] sm:$0xf]
      %v1059 = vld [vmem:[%s1 + $0x54] sm:$0xf]
      %v1060 = vld [vmem:[%s1 + $0x58] sm:$0xf]
      %v1061 = vld [vmem:[%s1 + $0x5c] sm:$0xf]
      %v1062 = vld [vmem:[%s1 + $0x60] sm:$0xf]
      %v1063 = vld [vmem:[%s1 + $0x64] sm:$0xf]
      %v1064 = vld [vmem:[%s1 + $0x68] sm:$0xf]
      %v1065 = vld [vmem:[%s1 + $0x6c] sm:$0xf]
      %v1066 = vld [vmem:[%s1 + $0x70] sm:$0xf]
      %v1067 = vld [vmem:[%s1 + $0x74] sm:$0xf]
      %v1068 = vld [vmem:[%s1 + $0x78] sm:$0xf]
      %v1069 = vld [vmem:[%s1 + $0x7c] sm:$0xf]
      %v1070 = vld [vmem:[%s1 + $0x80] sm:$0xf]
      %v1071 = vld [vmem:[%s1 + $0x84] sm:$0xf]
      %v1072 = vld [vmem:[%s1 + $0x88] sm:$0xf]
      %v1073 = vld [vmem:[%s1 + $0x8c] sm:$0xf]
      %v1074 = vld [vmem:[%s1 + $0x90] sm:$0xf]
      %v1075 = vld [vmem:[%s1 + $0x94] sm:$0xf]
      %v1076 = vld [vmem:[%s1 + $0x98] sm:$0xf]
      %v1077 = vld [vmem:[%s1 + $0x9c] sm:$0xf]
      %v1078 = vld [vmem:[%s1 + $0xa0] sm:$0xf]
      %v1079 = vld [vmem:[%s1 + $0xa4] sm:$0xf]
      %v1080 = vld [vmem:[%s1 + $0xa8] sm:$0xf]
      %v1081 = vld [vmem:[%s1 + $0xac] sm:$0xf]
      %v1082 = vld [vmem:[%s1 + $0xb0] sm:$0xf]
      %v1083 = vld [vmem:[%s1 + $0xb4] sm:$0xf]
      %v1084 = vld [vmem:[%s1 + $0xb8] sm:$0xf]
      %v1085 = vld [vmem:[%s1 + $0xbc] sm:$0xf]
      %v1086 = vld [vmem:[%s1 + $0xc0] sm:$0xf]
      %v1087 = vld [vmem:[%s1 + $0xc4] sm:$0xf]
      %v1088 = vld [vmem:[%s1 + $0xc8] sm:$0xf]
      %v1089 = vld [vmem:[%s1 + $0xcc] sm:$0xf]
      %v1090 = vld [vmem:[%s1 + $0xd0] sm:$0xf]
      %v1091 = vld [vmem:[%s1 + $0xd4] sm:$0xf]
      %v1092 = vld [vmem:[%s1 + $0xd8] sm:$0xf]
      %v1093 = vld [vmem:[%s1 + $0xdc] sm:$0xf]
      %v1094 = vld [vmem:[%s1 + $0xe0] sm:$0xf]
      %v1095 = vld [vmem:[%s1 + $0xe4] sm:$0xf]
      %v1096 = vld [vmem:[%s1 + $0xe8] sm:$0xf]
      %v1097 = vld [vmem:[%s1 + $0xec] sm:$0xf]
      %v1098 = vld [vmem:[%s1 + $0xf0] sm:$0xf]
      %v1099 = vld [vmem:[%s1 + $0xf4] sm:$0xf]
      %v1100 = vld [vmem:[%s1 + $0xf8] sm:$0xf]
      %v1101 = vld [vmem:[%s1 + $0xfc] sm:$0xf]
      %v1102 = vld [vmem:[%s1 + $0x100] sm:$0xf]
      %v1103 = vld [vmem:[%s1 + $0x104] sm:$0xf]
      %v1104 = vld [vmem:[%s1 + $0x108] sm:$0xf]
      %v1105 = vld [vmem:[%s1 + $0x10c] sm:$0xf]
      %v1106 = vld [vmem:[%s1 + $0x110] sm:$0xf]
      %v1107 = vld [vmem:[%s1 + $0x114] sm:$0xf]
      %v1108 = vld [vmem:[%s1 + $0x118] sm:$0xf]
      %v1109 = vld [vmem:[%s1 + $0x11c] sm:$0xf]
      %v1110 = vld [vmem:[%s2] sm:$0x1]
      %v1112 = vlaneseq
      %v1113 = vshrl.u32 %v1112, 7
      %v1114 = vsub.s32 0, %v1113
      %v1115 = vrot.slane %v1110, %v1114
      %v1189 = vunpack.c.l.b16 %v1038
      %v1190 = vunpack.c.l.b16 %v1039
      %v1191 = vunpack.c.l.b16 %v1040
      %v1192 = vunpack.c.l.b16 %v1041
      %v1193 = vunpack.c.l.b16 %v1042
      %v1194 = vunpack.c.l.b16 %v1043
      %v1195 = vunpack.c.l.b16 %v1044
      %v1196 = vunpack.c.l.b16 %v1045
      %v1197 = vunpack.c.l.b16 %v1046
      %v1198 = vunpack.c.l.b16 %v1047
      %v1199 = vunpack.c.l.b16 %v1048
      %v1200 = vunpack.c.l.b16 %v1049
      %v1201 = vunpack.c.l.b16 %v1050
      %v1202 = vunpack.c.l.b16 %v1051
      %v1203 = vunpack.c.l.b16 %v1052
      %v1204 = vunpack.c.l.b16 %v1053
      %v1205 = vunpack.c.l.b16 %v1054
      %v1206 = vunpack.c.l.b16 %v1055
      %v1207 = vunpack.c.l.b16 %v1056
      %v1208 = vunpack.c.l.b16 %v1057
      %v1209 = vunpack.c.l.b16 %v1058
      %v1210 = vunpack.c.l.b16 %v1059
      %v1211 = vunpack.c.l.b16 %v1060
      %v1212 = vunpack.c.l.b16 %v1061
      %v1213 = vunpack.c.l.b16 %v1062
      %v1214 = vunpack.c.l.b16 %v1063
      %v1215 = vunpack.c.l.b16 %v1064
      %v1216 = vunpack.c.l.b16 %v1065
      %v1217 = vunpack.c.l.b16 %v1066
      %v1218 = vunpack.c.l.b16 %v1067
      %v1219 = vunpack.c.l.b16 %v1068
      %v1220 = vunpack.c.l.b16 %v1069
      %v1221 = vunpack.c.l.b16 %v1070
      %v1222 = vunpack.c.l.b16 %v1071
      %v1223 = vunpack.c.l.b16 %v1072
      %v1224 = vunpack.c.l.b16 %v1073
      %v1225 = vunpack.c.l.b16 %v1074
      %v1226 = vunpack.c.l.b16 %v1075
      %v1227 = vunpack.c.l.b16 %v1076
      %v1228 = vunpack.c.l.b16 %v1077
      %v1229 = vunpack.c.l.b16 %v1078
      %v1230 = vunpack.c.l.b16 %v1079
      %v1231 = vunpack.c.l.b16 %v1080
      %v1232 = vunpack.c.l.b16 %v1081
      %v1233 = vunpack.c.l.b16 %v1082
      %v1234 = vunpack.c.l.b16 %v1083
      %v1235 = vunpack.c.l.b16 %v1084
      %v1236 = vunpack.c.l.b16 %v1085
      %v1237 = vunpack.c.l.b16 %v1086
      %v1238 = vunpack.c.l.b16 %v1087
      %v1239 = vunpack.c.l.b16 %v1088
      %v1240 = vunpack.c.l.b16 %v1089
      %v1241 = vunpack.c.l.b16 %v1090
      %v1242 = vunpack.c.l.b16 %v1091
      %v1243 = vunpack.c.l.b16 %v1092
      %v1244 = vunpack.c.l.b16 %v1093
      %v1245 = vunpack.c.l.b16 %v1094
      %v1246 = vunpack.c.l.b16 %v1095
      %v1247 = vunpack.c.l.b16 %v1096
      %v1248 = vunpack.c.l.b16 %v1097
      %v1249 = vunpack.c.l.b16 %v1098
      %v1250 = vunpack.c.l.b16 %v1099
      %v1251 = vunpack.c.l.b16 %v1100
      %v1252 = vunpack.c.l.b16 %v1101
      %v1253 = vunpack.c.l.b16 %v1102
      %v1254 = vunpack.c.l.b16 %v1103
      %v1255 = vunpack.c.l.b16 %v1104
      %v1256 = vunpack.c.l.b16 %v1105
      %v1257 = vunpack.c.l.b16 %v1106
      %v1258 = vunpack.c.l.b16 %v1107
      %v1259 = vunpack.c.l.b16 %v1108
      %v1260 = vunpack.c.l.b16 %v1109
      %v1261 = vpack.c.b16 %v1190, %v1189
      %v1262 = vpack.c.b16 %v1192, %v1191
      %v1263 = vpack.c.b16 %v1194, %v1193
      %v1264 = vpack.c.b16 %v1196, %v1195
      %v1265 = vpack.c.b16 %v1198, %v1197
      %v1266 = vpack.c.b16 %v1200, %v1199
      %v1267 = vpack.c.b16 %v1202, %v1201
      %v1268 = vpack.c.b16 %v1204, %v1203
      %v1269 = vpack.c.b16 %v1206, %v1205
      %v1270 = vpack.c.b16 %v1208, %v1207
      %v1271 = vpack.c.b16 %v1210, %v1209
      %v1272 = vpack.c.b16 %v1212, %v1211
      %v1273 = vpack.c.b16 %v1214, %v1213
      %v1274 = vpack.c.b16 %v1216, %v1215
      %v1275 = vpack.c.b16 %v1218, %v1217
      %v1276 = vpack.c.b16 %v1220, %v1219
      %v1277 = vpack.c.b16 %v1222, %v1221
      %v1278 = vpack.c.b16 %v1224, %v1223
      %v1279 = vpack.c.b16 %v1226, %v1225
      %v1280 = vpack.c.b16 %v1228, %v1227
      %v1281 = vpack.c.b16 %v1230, %v1229
      %v1282 = vpack.c.b16 %v1232, %v1231
      %v1283 = vpack.c.b16 %v1234, %v1233
      %v1284 = vpack.c.b16 %v1236, %v1235
      %v1285 = vpack.c.b16 %v1238, %v1237
      %v1286 = vpack.c.b16 %v1240, %v1239
      %v1287 = vpack.c.b16 %v1242, %v1241
      %v1288 = vpack.c.b16 %v1244, %v1243
      %v1289 = vpack.c.b16 %v1246, %v1245
      %v1290 = vpack.c.b16 %v1248, %v1247
      %v1291 = vpack.c.b16 %v1250, %v1249
      %v1292 = vpack.c.b16 %v1252, %v1251
      %v1293 = vpack.c.b16 %v1254, %v1253
      %v1294 = vpack.c.b16 %v1256, %v1255
      %v1295 = vpack.c.b16 %v1258, %v1257
      %v1296 = vpack.c.b16 %v1260, %v1259
      %v1334 = vsel %vm204, %v1022, 0
      %v1337 = vsel %vm204, %v1027, 0
      %v1340 = vsel %vm204, %v1032, 0
      %v1343 = vsel %vm204, %v1037, 0
      %1345 = vmatprep.subr.bf16.mxu0 0
      %1346 = vmatpush1.bf16.msra.mxu0 %v1261
      %1347 = vmatprep.subr.bf16.mxu0 0
      %1348 = vmatpush1.bf16.msra.mxu0 %v1262
      %1349 = vmatprep.subr.bf16.mxu0 0
      %1350 = vmatpush1.bf16.msra.mxu0 %v1263
      %1351 = vmatprep.subr.bf16.mxu0 0
      %1352 = vmatpush1.bf16.msra.mxu0 %v1264
      %1353 = vmatprep.subr.bf16.mxu0 0
      %1354 = vmatpush1.bf16.msra.mxu0 %v1265
      %1355 = vmatprep.subr.bf16.mxu0 0
      %1356 = vmatpush1.bf16.msra.mxu0 %v1266
      %1357 = vmatprep.subr.bf16.mxu0 0
      %1358 = vmatpush1.bf16.msra.mxu0 %v1267
      %1359 = vmatprep.subr.bf16.mxu0 0
      %1360 = vmatpush1.bf16.msra.mxu0 %v1268
      %1361 = vmatprep.subr.bf16.mxu0 0
      %1362 = vmatpush1.bf16.msra.mxu0 %v1269
      %1363 = vmatprep.subr.bf16.mxu0 0
      %1364 = vmatpush1.bf16.msra.mxu0 %v1270
      %1365 = vmatprep.subr.bf16.mxu0 0
      %1366 = vmatpush1.bf16.msra.mxu0 %v1271
      %1367 = vmatprep.subr.bf16.mxu0 0
      %1368 = vmatpush1.bf16.msra.mxu0 %v1272
      %1369 = vmatprep.subr.bf16.mxu0 0
      %1370 = vmatpush1.bf16.msra.mxu0 %v1273
      %1371 = vmatprep.subr.bf16.mxu0 0
      %1372 = vmatpush1.bf16.msra.mxu0 %v1274
      %1373 = vmatprep.subr.bf16.mxu0 0
      %1374 = vmatpush1.bf16.msra.mxu0 %v1275
      %1375 = vmatprep.subr.bf16.mxu0 0
      %1376 = vmatpush1.bf16.msra.mxu0 %v1276
      %1377 = vmatprep.mubr.bf16.mxu0 %v1019
      %1378 = vmatmul.mubr.bf16.gmra.mrb[0].mxu0 %v1018
      %v1379 = vpop.f32.mrb[0].mxu0
      %v1380 = vadd.f32 %v1115, %v1379
      %v1381 = vpop.f32.mrb[0].mxu0
      %v1382 = vpop.f32.mrb[0].mxu0
      %v1383 = vadd.f32 %v1115, %v1382
      %v1384 = vpop.f32.mrb[0].mxu0
      %1385 = vmatprep.mubr.bf16.mxu0 %v1024
      %1386 = vmatmul.mubr.bf16.gmra.mrb[0].mxu0 %v1023
      %v1387 = vpop.f32.mrb[0].mxu0
      %v1388 = vadd.f32 %v1115, %v1387
      %v1389 = vpop.f32.mrb[0].mxu0
      %v1390 = vpop.f32.mrb[0].mxu0
      %v1391 = vadd.f32 %v1115, %v1390
      %v1392 = vpop.f32.mrb[0].mxu0
      %1393 = vmatprep.mubr.bf16.mxu0 %v1029
      %1394 = vmatmul.mubr.bf16.gmra.mrb[0].mxu0 %v1028
      %v1395 = vpop.f32.mrb[0].mxu0
      %v1396 = vadd.f32 %v1115, %v1395
      %v1397 = vpop.f32.mrb[0].mxu0
      %v1398 = vpop.f32.mrb[0].mxu0
      %v1399 = vadd.f32 %v1115, %v1398
      %v1400 = vpop.f32.mrb[0].mxu0
      %1401 = vmatprep.mubr.bf16.mxu0 %v1034
      %1402 = vmatmul.mubr.bf16.gmra.mrb[0].mxu0 %v1033
      %v1403 = vpop.f32.mrb[0].mxu0
      %v1404 = vadd.f32 %v1115, %v1403
      %v1405 = vpop.f32.mrb[0].mxu0
      %v1406 = vpop.f32.mrb[0].mxu0
      %v1407 = vadd.f32 %v1115, %v1406
      %v1408 = vpop.f32.mrb[0].mxu0
      %1409 = vdwg.mxu0
      %1410 = vmatprep.subr.bf16.mxu0 0
      %1411 = vmatpush1.bf16.msra.mxu0 %v1277
      %1412 = vmatprep.subr.bf16.mxu0 0
      %1413 = vmatpush1.bf16.msra.mxu0 %v1278
      %1414 = vmatprep.subr.bf16.mxu0 0
      %1415 = vmatpush1.bf16.msra.mxu0 %v1279
      %1416 = vmatprep.subr.bf16.mxu0 0
      %1417 = vmatpush1.bf16.msra.mxu0 %v1280
      %1418 = vmatprep.subr.bf16.mxu0 0
      %1419 = vmatpush1.bf16.msra.mxu0 %v1281
      %1420 = vmatprep.subr.bf16.mxu0 0
      %1421 = vmatpush1.bf16.msra.mxu0 %v1282
      %1422 = vmatprep.subr.bf16.mxu0 0
      %1423 = vmatpush1.bf16.msra.mxu0 %v1283
      %1424 = vmatprep.subr.bf16.mxu0 0
      %1425 = vmatpush1.bf16.msra.mxu0 %v1284
      %1426 = vmatprep.subr.bf16.mxu0 0
      %1427 = vmatpush1.bf16.msra.mxu0 %v1285
      %1428 = vmatprep.subr.bf16.mxu0 0
      %1429 = vmatpush1.bf16.msra.mxu0 %v1286
      %1430 = vmatprep.subr.bf16.mxu0 0
      %1431 = vmatpush1.bf16.msra.mxu0 %v1287
      %1432 = vmatprep.subr.bf16.mxu0 0
      %1433 = vmatpush1.bf16.msra.mxu0 %v1288
      %1434 = vmatprep.subr.bf16.mxu0 0
      %1435 = vmatpush1.bf16.msra.mxu0 %v1289
      %1436 = vmatprep.subr.bf16.mxu0 0
      %1437 = vmatpush1.bf16.msra.mxu0 %v1290
      %1438 = vmatprep.subr.bf16.mxu0 0
      %1439 = vmatpush1.bf16.msra.mxu0 %v1291
      %1440 = vmatprep.subr.bf16.mxu0 0
      %1441 = vmatpush1.bf16.msra.mxu0 %v1292
      %1442 = vmatprep.mubr.bf16.mxu0 %v1021
      %1443 = vmatmul.mubr.bf16.gmra.mrb[0].mxu0 %v1020
      %v1444 = vpop.f32.mrb[0].mxu0
      %v1445 = vadd.f32 %v1380, %v1444
      %v1446 = vpop.f32.mrb[0].mxu0
      %v1447 = vpop.f32.mrb[0].mxu0
      %v1448 = vadd.f32 %v1383, %v1447
      %v1449 = vpop.f32.mrb[0].mxu0
      %1450 = vmatprep.mubr.bf16.mxu0 %v1026
      %1451 = vmatmul.mubr.bf16.gmra.mrb[0].mxu0 %v1025
      %v1452 = vpop.f32.mrb[0].mxu0
      %v1453 = vadd.f32 %v1388, %v1452
      %v1454 = vpop.f32.mrb[0].mxu0
      %v1455 = vpop.f32.mrb[0].mxu0
      %v1456 = vadd.f32 %v1391, %v1455
      %v1457 = vpop.f32.mrb[0].mxu0
      %1458 = vmatprep.mubr.bf16.mxu0 %v1031
      %1459 = vmatmul.mubr.bf16.gmra.mrb[0].mxu0 %v1030
      %v1460 = vpop.f32.mrb[0].mxu0
      %v1461 = vadd.f32 %v1396, %v1460
      %v1462 = vpop.f32.mrb[0].mxu0
      %v1463 = vpop.f32.mrb[0].mxu0
      %v1464 = vadd.f32 %v1399, %v1463
      %v1465 = vpop.f32.mrb[0].mxu0
      %1466 = vmatprep.mubr.bf16.mxu0 %v1036
      %1467 = vmatmul.mubr.bf16.gmra.mrb[0].mxu0 %v1035
      %v1468 = vpop.f32.mrb[0].mxu0
      %v1469 = vadd.f32 %v1404, %v1468
      %v1470 = vpop.f32.mrb[0].mxu0
      %v1471 = vpop.f32.mrb[0].mxu0
      %v1472 = vadd.f32 %v1407, %v1471
      %v1473 = vpop.f32.mrb[0].mxu0
      %1474 = vdwg.mxu0
      %1475 = vmatprep.subr.bf16.mxu0 0
      %1476 = vmatpush1.bf16.msra.mxu0 %v1293
      %1477 = vmatprep.subr.bf16.mxu0 0
      %1478 = vmatpush1.bf16.msra.mxu0 %v1294
      %1479 = vmatprep.subr.bf16.mxu0 0
      %1480 = vmatpush1.bf16.msra.mxu0 %v1295
      %1481 = vmatprep.subr.bf16.mxu0 0
      %1482 = vmatpush1.bf16.msra.mxu0 %v1296
      %1483 = vmatprep.subr.bf16.mxu0 0
      %1484 = vmatpush1.bf16.msra.mxu0 0
      %1485 = vmatprep.subr.bf16.mxu0 0
      %1486 = vmatpush1.bf16.msra.mxu0 0
      %1487 = vmatprep.subr.bf16.mxu0 0
      %1488 = vmatpush1.bf16.msra.mxu0 0
      %1489 = vmatprep.subr.bf16.mxu0 0
      %1490 = vmatpush1.bf16.msra.mxu0 0
      %1491 = vmatprep.subr.bf16.mxu0 0
      %1492 = vmatpush1.bf16.msra.mxu0 0
      %1493 = vmatprep.subr.bf16.mxu0 0
      %1494 = vmatpush1.bf16.msra.mxu0 0
      %1495 = vmatprep.subr.bf16.mxu0 0
      %1496 = vmatpush1.bf16.msra.mxu0 0
      %1497 = vmatprep.subr.bf16.mxu0 0
      %1498 = vmatpush1.bf16.msra.mxu0 0
      %1499 = vmatprep.subr.bf16.mxu0 0
      %1500 = vmatpush1.bf16.msra.mxu0 0
      %1501 = vmatprep.subr.bf16.mxu0 0
      %1502 = vmatpush1.bf16.msra.mxu0 0
      %1503 = vmatprep.subr.bf16.mxu0 0
      %1504 = vmatpush1.bf16.msra.mxu0 0
      %1505 = vmatprep.subr.bf16.mxu0 0
      %1506 = vmatpush1.bf16.msra.mxu0 0
      %1507 = vmatprep.mubr.bf16.mxu0 0
      %1508 = vmatmul.mubr.bf16.gmra.mrb[0].mxu0 %v1334
      %v1509 = vpop.f32.mrb[0].mxu0
      %v1510 = vadd.f32 %v1445, %v1509
      %v1511 = vpop.f32.mrb[0].mxu0
      %v1512 = vpop.f32.mrb[0].mxu0
      %v1513 = vadd.f32 %v1448, %v1512
      %v1514 = vpop.f32.mrb[0].mxu0
      %1515 = vmatprep.mubr.bf16.mxu0 0
      %1516 = vmatmul.mubr.bf16.gmra.mrb[0].mxu0 %v1337
      %v1517 = vpop.f32.mrb[0].mxu0
      %v1518 = vadd.f32 %v1453, %v1517
      %v1519 = vpop.f32.mrb[0].mxu0
      %v1520 = vpop.f32.mrb[0].mxu0
      %v1521 = vadd.f32 %v1456, %v1520
      %v1522 = vpop.f32.mrb[0].mxu0
      %1523 = vmatprep.mubr.bf16.mxu0 0
      %1524 = vmatmul.mubr.bf16.gmra.mrb[0].mxu0 %v1340
      %v1525 = vpop.f32.mrb[0].mxu0
      %v1526 = vadd.f32 %v1461, %v1525
      %v1527 = vpop.f32.mrb[0].mxu0
      %v1528 = vpop.f32.mrb[0].mxu0
      %v1529 = vadd.f32 %v1464, %v1528
      %v1530 = vpop.f32.mrb[0].mxu0
      %1531 = vmatprep.mubr.bf16.mxu0 0
      %1532 = vmatmul.mubr.bf16.gmra.mrb[0].mxu0 %v1343
      %v1533 = vpop.f32.mrb[0].mxu0
      %v1534 = vadd.f32 %v1469, %v1533
      %v1535 = vpop.f32.mrb[0].mxu0
      %v1536 = vpop.f32.mrb[0].mxu0
      %v1537 = vadd.f32 %v1472, %v1536
      %v1538 = vpop.f32.mrb[0].mxu0
      %1539 = vdwg.mxu0
      %v1540 = vmax.f32 %v1510, 0.0
      %v1541 = vmax.f32 %v1513, 0.0
      %v1542 = vmax.f32 %v1518, 0.0
      %v1543 = vmax.f32 %v1521, 0.0
      %v1544 = vmax.f32 %v1526, 0.0
      %v1545 = vmax.f32 %v1529, 0.0
      %v1546 = vmax.f32 %v1534, 0.0
      %v1547 = vmax.f32 %v1537, 0.0
      %v1548 = vpack.c.bf16 %v1540, %v1540
      %v1549 = vpack.c.bf16 %v1541, %v1541
      %v1550 = vpack.c.bf16 %v1542, %v1542
      %v1551 = vpack.c.bf16 %v1543, %v1543
      %v1552 = vpack.c.bf16 %v1544, %v1544
      %v1553 = vpack.c.bf16 %v1545, %v1545
      %v1554 = vpack.c.bf16 %v1546, %v1546
      %v1555 = vpack.c.bf16 %v1547, %v1547
      %vm1556 = vcmask 650240
      %1557 = vst.msk [vmem:[%s170] sm:$0xf] %vm1556, %v1548
      %1558 = vst.msk [vmem:[%s170 + $0x4] sm:$0xf] %vm1556, %v1549
      %1559 = vst.msk [vmem:[%s170 + $0x8] sm:$0xf] %vm1556, %v1550
      %1560 = vst.msk [vmem:[%s170 + $0xc] sm:$0xf] %vm1556, %v1551
      %1561 = vst.msk [vmem:[%s170 + $0x10] sm:$0xf] %vm1556, %v1552
      %1562 = vst.msk [vmem:[%s170 + $0x14] sm:$0xf] %vm1556, %v1553
      %1563 = vst.msk [vmem:[%s170 + $0x18] sm:$0xf] %vm1556, %v1554
      %1564 = vst.msk [vmem:[%s170 + $0x1c] sm:$0xf] %vm1556, %v1555
      %p1565 = scmp.lt.s32.totalorder %s14, 1
      %s1566 = scalar_select %p1565, %s14, 1
      %s1567 = smul.addr %s1566, 8
      %s1568 = smul.addr %s1567, 4
      %s1569 = scalar_lea.vmem %s3, %s1568
      // Predicated region
      $region33: #{_lambda_.7} parent=31 // pred_check
        %p1570 = pneg %p100
      $region34: #{_lambda_.7} parent=31 // pred_check_branch
        %1572 = sbr.rel (%p1570) target = $region36
      $region35: #{_lambda_.7} parent=31 // pred_region
        _
      $region36: #{_lambda_.7} parent=31 // pred_fallthru
        _
    $region32: #{_lambda_.7} parent=5 // pred_fallthru
      _
    %p1573 = scmp.le.s32.totalorder 2, %s9
    // Predicated region
    $region37: #{_lambda_.7} parent=5 // pred_check
      %p1574 = pneg %p1573
    $region38: #{_lambda_.7} parent=5 // pred_check_branch
      %1576 = sbr.rel (%p1574) target = $region40
    $region39: #{_lambda_.7} parent=5 // pred_region
      %s1577 = ssub.s32 %s9, 2
      // Predicated region
      $region41: #{_lambda_.7} parent=39 // pred_check
        %p1578 = pneg %p106
      $region42: #{_lambda_.7} parent=39 // pred_check_branch
        %1580 = sbr.rel (%p1578) target = $region44
      $region43: #{_lambda_.7} parent=39 // pred_region
        %p1581 = scmp.lt.s32.totalorder %s15, 1
        %s1582 = scalar_select %p1581, %s15, 1
        %s1583 = smul.addr %s1582, 8
        %s1584 = smul.addr %s1583, 4
        %s1585 = scalar_lea.vmem %s3, %s1584
      $region44: #{_lambda_.7} parent=39 // pred_fallthru
        _
    $region40: #{_lambda_.7} parent=5 // pred_fallthru
      _
  $region6: #{_lambda_.7} parent=0 // loop_footer
    %s13 = sadd.s32 1, %s9
  $region7: #{_lambda_.7} parent=0 // loop_footer_branch
    %8 = sbr.rel target = $region3
  $region8: #{_lambda_.7} parent=0 // loop_exit
    _

// kernel: _lambda_.10
$region0: #{_lambda_.10}
  #allocation0 [shape = 'u32[]', space=smem, size = 0x4, offset = 0x4, fixed_abs, tag = 'smem constant byte address 0x4 - core index']
  #allocation1 [shape = 'u32[144,128]{1,0:T(1,128)}', space=vmem, size = 0x12000, scoped, tag = 'internal scratch']
  #allocation2 [shape = 'f32[1,1,384]{2,1,0:T(1,128)}', space=vmem, size = 0x600, scoped, tag = 'scratch operand']
  #allocation3 [shape = 'f32[1,1,384]{2,1,0:T(1,128)}', space=vmem, size = 0x600, scoped, tag = 'scratch operand']
  %s0 = inlined_call_operand.vmem [shape: bf16[2,64,384], index: 0, kind: input, shape index: {}]
  %s1 = inlined_call_operand.vmem [shape: f32[384,32], index: 1, kind: input, shape index: {}]
  %s2 = inlined_call_operand.vmem [shape: f32[1,32], index: 2, kind: input, shape index: {}]
  %s3 = inlined_call_operand.vmem [shape: f32[32,384], index: 3, kind: input, shape index: {}]
  %s4 = inlined_call_operand.vmem [shape: f32[1,384], index: 4, kind: input, shape index: {}]
  %s5 = inlined_call_operand.vmem [shape: f32[2,1,384], index: 5, kind: output, shape index: {}]
  %s6 = sld [smem:[#allocation0]]
  $region61: #{_lambda_.10} parent=0
    _
  %s8 = ssub.s32 1, %s6
  %s9 = scalar_select 0, %s8, %s6
  loop: start=0, step=1, limit=4
  $region2: #{_lambda_.10} parent=0 // loop_pre_header
    _
  $region3: #{_lambda_.10} parent=0 // loop_header
    %s11 = sphi 0, %s15
    %p12 = scmp.ge.s32.totalorder %s11, 4
    %s18 = sphi 0, %s30
    %s19 = sphi 0, %s26
    %s20 = sphi 0, %s18
    %s21 = sphi 0, %s19
    %s22 = sphi 0, %s20
    %s23 = sphi 0, %s21
    %s35 = sphi 0, %s37
    %s38 = sphi 0, %s35
    %s39 = sphi 0, %s38
    %s55 = sphi 0, %s39
    %s59 = sphi 0, %s59
    %s61 = sphi 0, %s59
    %s62 = sphi 0, %s61
    %s76 = sphi 0, %s62
    %s80 = sphi 0, %s80
    %s82 = sphi 0, %s80
    %s83 = sphi 0, %s82
    %s97 = sphi 0, %s83
    %s101 = sphi 0, %s101
    %s103 = sphi 0, %s101
    %s104 = sphi 0, %s103
    %s118 = sphi 0, %s104
    %s122 = sphi 0, %s122
    %s124 = sphi 0, %s122
    %s125 = sphi 0, %s124
    %s139 = sphi 0, %s125
    %s145 = sphi 0, %s147
    %s148 = sphi 0, %s145
    %s149 = sphi 0, %s148
    %s165 = sphi 0, %s149
  $region4: #{_lambda_.10} parent=0 // loop_header_branch
    %14 = sbr.rel (%p12) target = $region8
  $region5: #{_lambda_.10} parent=0 // loop_body
    %s16 = ssub.s32 %s11, 1
    %s17 = ssub.s32 %s11, 2
    %s24 = sadd.s32 1, %s19
    %p25 = scmp.ge.s32.totalorder %s24, 1
    %s26 = scalar_select %p25, 0, %s24
    %s27 = sadd.s32 1, %s18
    %s28 = scalar_select %p25, %s27, %s18
    %p29 = scmp.ge.s32.totalorder %s28, 2
    %s30 = scalar_select %p29, 0, %s28
    %s31 = ssub.s32 %s18, %s30
    %s32 = ssub.s32 %s19, %s26
    %s33 = sor.u32 %s31, %s32
    %p34 = scmp.eq.s32.totalorder %s33, 0
    %s36 = sadd.s32 %s35, 1
    %s37 = scalar_select %p34, %s35, %s36
    %p40 = pneg %p34
    %p41 = scmp.eq.s32.totalorder %s11, 1
    %p42 = por %p40, %p41
    %p43 = scmp.ne.s32.totalorder %s35, %s38
    %p44 = scmp.eq.s32.totalorder %s11, 0
    %p45 = por %p43, %p44
    %p46 = scmp.ne.s32.totalorder %s35, %s38
    %p47 = scmp.eq.s32.totalorder %s16, 1
    %p48 = por %p46, %p47
    %p49 = scmp.ne.s32.totalorder %s38, %s39
    %p50 = scmp.eq.s32.totalorder %s16, 0
    %p51 = por %p49, %p50
    %p52 = scmp.ne.s32.totalorder %s38, %s39
    %p53 = scmp.eq.s32.totalorder %s17, 1
    %p54 = por %p52, %p53
    %p56 = scmp.ne.s32.totalorder %s39, %s55
    %p57 = scmp.eq.s32.totalorder %s17, 0
    %p58 = por %p56, %p57
    %s60 = sadd.s32 %s59, 1
    %p63 = scmp.eq.s32.totalorder %s11, 1
    %p64 = scmp.ne.s32.totalorder %s59, %s61
    %p65 = scmp.eq.s32.totalorder %s11, 0
    %p66 = por %p64, %p65
    %p67 = scmp.ne.s32.totalorder %s59, %s61
    %p68 = scmp.eq.s32.totalorder %s16, 1
    %p69 = por %p67, %p68
    %p70 = scmp.ne.s32.totalorder %s61, %s62
    %p71 = scmp.eq.s32.totalorder %s16, 0
    %p72 = por %p70, %p71
    %p73 = scmp.ne.s32.totalorder %s61, %s62
    %p74 = scmp.eq.s32.totalorder %s17, 1
    %p75 = por %p73, %p74
    %p77 = scmp.ne.s32.totalorder %s62, %s76
    %p78 = scmp.eq.s32.totalorder %s17, 0
    %p79 = por %p77, %p78
    %s81 = sadd.s32 %s80, 1
    %p84 = scmp.eq.s32.totalorder %s11, 1
    %p85 = scmp.ne.s32.totalorder %s80, %s82
    %p86 = scmp.eq.s32.totalorder %s11, 0
    %p87 = por %p85, %p86
    %p88 = scmp.ne.s32.totalorder %s80, %s82
    %p89 = scmp.eq.s32.totalorder %s16, 1
    %p90 = por %p88, %p89
    %p91 = scmp.ne.s32.totalorder %s82, %s83
    %p92 = scmp.eq.s32.totalorder %s16, 0
    %p93 = por %p91, %p92
    %p94 = scmp.ne.s32.totalorder %s82, %s83
    %p95 = scmp.eq.s32.totalorder %s17, 1
    %p96 = por %p94, %p95
    %p98 = scmp.ne.s32.totalorder %s83, %s97
    %p99 = scmp.eq.s32.totalorder %s17, 0
    %p100 = por %p98, %p99
    %s102 = sadd.s32 %s101, 1
    %p105 = scmp.eq.s32.totalorder %s11, 1
    %p106 = scmp.ne.s32.totalorder %s101, %s103
    %p107 = scmp.eq.s32.totalorder %s11, 0
    %p108 = por %p106, %p107
    %p109 = scmp.ne.s32.totalorder %s101, %s103
    %p110 = scmp.eq.s32.totalorder %s16, 1
    %p111 = por %p109, %p110
    %p112 = scmp.ne.s32.totalorder %s103, %s104
    %p113 = scmp.eq.s32.totalorder %s16, 0
    %p114 = por %p112, %p113
    %p115 = scmp.ne.s32.totalorder %s103, %s104
    %p116 = scmp.eq.s32.totalorder %s17, 1
    %p117 = por %p115, %p116
    %p119 = scmp.ne.s32.totalorder %s104, %s118
    %p120 = scmp.eq.s32.totalorder %s17, 0
    %p121 = por %p119, %p120
    %s123 = sadd.s32 %s122, 1
    %p126 = scmp.eq.s32.totalorder %s11, 1
    %p127 = scmp.ne.s32.totalorder %s122, %s124
    %p128 = scmp.eq.s32.totalorder %s11, 0
    %p129 = por %p127, %p128
    %p130 = scmp.ne.s32.totalorder %s122, %s124
    %p131 = scmp.eq.s32.totalorder %s16, 1
    %p132 = por %p130, %p131
    %p133 = scmp.ne.s32.totalorder %s124, %s125
    %p134 = scmp.eq.s32.totalorder %s16, 0
    %p135 = por %p133, %p134
    %p136 = scmp.ne.s32.totalorder %s124, %s125
    %p137 = scmp.eq.s32.totalorder %s17, 1
    %p138 = por %p136, %p137
    %p140 = scmp.ne.s32.totalorder %s125, %s139
    %p141 = scmp.eq.s32.totalorder %s17, 0
    %p142 = por %p140, %p141
    %s143 = ssub.s32 %s18, %s30
    %p144 = scmp.eq.s32.totalorder %s143, 0
    %s146 = sadd.s32 %s145, 1
    %s147 = scalar_select %p144, %s145, %s146
    %p150 = pneg %p144
    %p151 = scmp.eq.s32.totalorder %s11, 1
    %p152 = por %p150, %p151
    %p153 = scmp.ne.s32.totalorder %s145, %s148
    %p154 = scmp.eq.s32.totalorder %s11, 0
    %p155 = por %p153, %p154
    %p156 = scmp.ne.s32.totalorder %s145, %s148
    %p157 = scmp.eq.s32.totalorder %s16, 1
    %p158 = por %p156, %p157
    %p159 = scmp.ne.s32.totalorder %s148, %s149
    %p160 = scmp.eq.s32.totalorder %s16, 0
    %p161 = por %p159, %p160
    %p162 = scmp.ne.s32.totalorder %s148, %s149
    %p163 = scmp.eq.s32.totalorder %s17, 1
    %p164 = por %p162, %p163
    %p166 = scmp.ne.s32.totalorder %s149, %s165
    %p167 = scmp.eq.s32.totalorder %s17, 0
    %p168 = por %p166, %p167
    %p169 = scmp.le.s32.totalorder 1, %s11
    %p170 = scmp.lt.s32.totalorder %s11, 3
    %p171 = pnand %p169, %p170
    %p172 = pneg %p171
    // Predicated region
    $region9: #{_lambda_.10} parent=5 // pred_check
      _
    $region10: #{_lambda_.10} parent=5 // pred_check_branch
      %174 = sbr.rel (%p171) target = $region12
    $region11: #{_lambda_.10} parent=5 // pred_region
      %s175 = ssub.s32 %s11, 1
      // Predicated region
      $region13: #{_lambda_.10} parent=11 // pred_check
        %p176 = pneg %p72
      $region14: #{_lambda_.10} parent=11 // pred_check_branch
        %178 = sbr.rel (%p176) target = $region16
      $region15: #{_lambda_.10} parent=11 // pred_region
        _
      $region16: #{_lambda_.10} parent=11 // pred_fallthru
        _
      // Predicated region
      $region17: #{_lambda_.10} parent=11 // pred_check
        %p179 = pneg %p93
      $region18: #{_lambda_.10} parent=11 // pred_check_branch
        %181 = sbr.rel (%p179) target = $region20
      $region19: #{_lambda_.10} parent=11 // pred_region
        _
      $region20: #{_lambda_.10} parent=11 // pred_fallthru
        _
      // Predicated region
      $region21: #{_lambda_.10} parent=11 // pred_check
        %p182 = pneg %p114
      $region22: #{_lambda_.10} parent=11 // pred_check_branch
        %184 = sbr.rel (%p182) target = $region24
      $region23: #{_lambda_.10} parent=11 // pred_region
        _
      $region24: #{_lambda_.10} parent=11 // pred_fallthru
        _
      // Predicated region
      $region25: #{_lambda_.10} parent=11 // pred_check
        %p185 = pneg %p135
      $region26: #{_lambda_.10} parent=11 // pred_check_branch
        %187 = sbr.rel (%p185) target = $region28
      $region27: #{_lambda_.10} parent=11 // pred_region
        _
      $region28: #{_lambda_.10} parent=11 // pred_fallthru
        _
    $region12: #{_lambda_.10} parent=5 // pred_fallthru
      _
    %p188 = scmp.lt.s32.totalorder %s11, 2
    // Predicated region
    $region29: #{_lambda_.10} parent=5 // pred_check
      %p189 = pneg %p188
    $region30: #{_lambda_.10} parent=5 // pred_check_branch
      %191 = sbr.rel (%p189) target = $region32
    $region31: #{_lambda_.10} parent=5 // pred_region
      // Predicated region
      $region33: #{_lambda_.10} parent=31 // pred_check
        %p192 = pneg %p45
      $region34: #{_lambda_.10} parent=31 // pred_check_branch
        %194 = sbr.rel (%p192) target = $region36
      $region35: #{_lambda_.10} parent=31 // pred_region
        %s195 = smul.u32 8, %s19
        %p196 = scmp.lt.s32.totalorder %s18, 1
        %s197 = scalar_select %p196, %s18, 1
        %p198 = scmp.lt.s32.totalorder %s195, 7
        %s199 = scalar_select %p198, %s195, 7
        %s200 = smul.addr %s199, 3
        %s201 = smul.addr %s197, 24
        %s202 = sadd.s32 %s200, %s201
        %s203 = smul.addr %s202, 4
        %s204 = scalar_lea.vmem %s0, %s203
        %s205 = smul.u32 8, %s19
      $region36: #{_lambda_.10} parent=31 // pred_fallthru
        _
    $region32: #{_lambda_.10} parent=5 // pred_fallthru
      _
    %p206 = scmp.le.s32.totalorder 1, %s11
    %p207 = scmp.lt.s32.totalorder %s11, 3
    %p208 = pnand %p206, %p207
    %p209 = pneg %p208
    // Predicated region
    $region37: #{_lambda_.10} parent=5 // pred_check
      _
    $region38: #{_lambda_.10} parent=5 // pred_check_branch
      %211 = sbr.rel (%p208) target = $region40
    $region39: #{_lambda_.10} parent=5 // pred_region
      %s212 = ssub.s32 %s11, 1
      %s213 = smul.u32 8, %s21
      %p214 = scmp.lt.s32.totalorder %s20, 1
      %s215 = scalar_select %p214, %s20, 1
      %p216 = scmp.lt.s32.totalorder %s213, 7
      %s217 = scalar_select %p216, %s213, 7
      %s218 = smul.addr %s217, 3
      %s219 = smul.addr %s215, 24
      %s220 = sadd.s32 %s218, %s219
      %s221 = smul.addr %s220, 4
      %s222 = scalar_lea.vmem %s0, %s221
      %p223 = pneg %p51
      %p224 = pneg %p48
      %p225 = pneg %p72
      %p226 = pneg %p69
      %p227 = pneg %p93
      %p228 = pneg %p90
      %p229 = pneg %p114
      %p230 = pneg %p111
      %p231 = pneg %p135
      %p232 = pneg %p132
      %p233 = pneg %p161
      %p234 = pneg %p158
      %p235 = scmp.lt.s32.totalorder %s20, 1
      %s236 = scalar_select %p235, %s20, 1
      %s237 = smul.addr %s236, 3
      %s238 = scalar_lea.vmem %s5, %s237
      %s239 = smul.u32 8, %s21
      %p240 = scmp.lt.s32.totalorder %s20, 1
      %s241 = scalar_select %p240, %s20, 1
      %p242 = scmp.lt.s32.totalorder %s239, 7
      %s243 = scalar_select %p242, %s239, 7
      %s244 = smul.addr %s243, 3
      %s245 = smul.addr %s241, 24
      %s246 = sadd.s32 %s244, %s245
      %s247 = smul.addr %s246, 4
      %s248 = scalar_lea.vmem %s0, %s247
      %s249 = smul.u32 8, %s21
      %p250 = scmp.lt.s32.totalorder %s20, 1
      %s251 = scalar_select %p250, %s20, 1
      %s252 = smul.addr %s251, 3
      %s253 = scalar_lea.vmem %s5, %s252
      %p254 = scmp.eq.s32.totalorder %s21, 0
      // Predicated region
      $region41: #{_lambda_.10} parent=39 // pred_check
        %p255 = pneg %p254
      $region42: #{_lambda_.10} parent=39 // pred_check_branch
        %257 = sbr.rel (%p255) target = $region44
      $region43: #{_lambda_.10} parent=39 // pred_region
        %v258 = vlaneseq
        %vm259 = vcmp.ge.s32.totalorder %v258, 0
        %vm260 = vcmp.lt.s32.totalorder %v258, 384
        %vm261 = vmand %vm259, %vm260
        %262 = vst.msk [vmem:[#allocation2] sm:$0x7] %vm261, 0.0
        %263 = vst.msk [vmem:[#allocation3] sm:$0x7] %vm261, -inf
      $region44: #{_lambda_.10} parent=39 // pred_fallthru
        _
      %v264 = vld [vmem:[%s248] sm:$0xff]
      %v265 = vld [vmem:[%s248 + $0x8] sm:$0xf]
      %v266 = vld [vmem:[%s248 + $0xc] sm:$0xff]
      %v267 = vld [vmem:[%s248 + $0x14] sm:$0xf]
      %v268 = vld [vmem:[%s248 + $0x18] sm:$0xff]
      %v269 = vld [vmem:[%s248 + $0x20] sm:$0xf]
      %v270 = vld [vmem:[%s248 + $0x24] sm:$0xff]
      %v271 = vld [vmem:[%s248 + $0x2c] sm:$0xf]
      %v272 = vld [vmem:[%s248 + $0x30] sm:$0xff]
      %v273 = vld [vmem:[%s248 + $0x38] sm:$0xf]
      %v274 = vld [vmem:[%s248 + $0x3c] sm:$0xff]
      %v275 = vld [vmem:[%s248 + $0x44] sm:$0xf]
      %v276 = vld [vmem:[%s248 + $0x48] sm:$0xff]
      %v277 = vld [vmem:[%s248 + $0x50] sm:$0xf]
      %v278 = vld [vmem:[%s248 + $0x54] sm:$0xff]
      %v279 = vld [vmem:[%s248 + $0x5c] sm:$0xf]
      %v280 = vunpack.c.l.bf16 %v264
      %v281 = vunpack.c.h.bf16 %v264
      %v282 = vunpack.c.l.bf16 %v265
      %v283 = vunpack.c.l.bf16 %v266
      %v284 = vunpack.c.h.bf16 %v266
      %v285 = vunpack.c.l.bf16 %v267
      %v286 = vunpack.c.l.bf16 %v268
      %v287 = vunpack.c.h.bf16 %v268
      %v288 = vunpack.c.l.bf16 %v269
      %v289 = vunpack.c.l.bf16 %v270
      %v290 = vunpack.c.h.bf16 %v270
      %v291 = vunpack.c.l.bf16 %v271
      %v292 = vunpack.c.l.bf16 %v272
      %v293 = vunpack.c.h.bf16 %v272
      %v294 = vunpack.c.l.bf16 %v273
      %v295 = vunpack.c.l.bf16 %v274
      %v296 = vunpack.c.h.bf16 %v274
      %v297 = vunpack.c.l.bf16 %v275
      %v298 = vunpack.c.l.bf16 %v276
      %v299 = vunpack.c.h.bf16 %v276
      %v300 = vunpack.c.l.bf16 %v277
      %v301 = vunpack.c.l.bf16 %v278
      %v302 = vunpack.c.h.bf16 %v278
      %v303 = vunpack.c.l.bf16 %v279
      %v304 = vld [vmem:[#allocation2] sm:$0x7]
      %v305 = vadd.f32 %v280, %v283
      %v306 = vadd.f32 %v305, %v286
      %v307 = vadd.f32 %v306, %v289
      %v308 = vadd.f32 %v307, %v292
      %v309 = vadd.f32 %v308, %v295
      %v310 = vadd.f32 %v309, %v298
      %v311 = vadd.f32 %v310, %v301
      %v312 = vrot.slane %v311, 4
      %v313 = vadd.f32 %v311, %v312
      %v314 = vrot.slane %v313, 2
      %v315 = vadd.f32 %v313, %v314
      %v316 = vrot.slane %v315, 1
      %v317 = vadd.f32 %v315, %v316
      %v318 = vadd.f32 %v281, %v284
      %v319 = vadd.f32 %v318, %v287
      %v320 = vadd.f32 %v319, %v290
      %v321 = vadd.f32 %v320, %v293
      %v322 = vadd.f32 %v321, %v296
      %v323 = vadd.f32 %v322, %v299
      %v324 = vadd.f32 %v323, %v302
      %v325 = vrot.slane %v324, 4
      %v326 = vadd.f32 %v324, %v325
      %v327 = vrot.slane %v326, 2
      %v328 = vadd.f32 %v326, %v327
      %v329 = vrot.slane %v328, 1
      %v330 = vadd.f32 %v328, %v329
      %v331 = vadd.f32 %v282, %v285
      %v332 = vadd.f32 %v331, %v288
      %v333 = vadd.f32 %v332, %v291
      %v334 = vadd.f32 %v333, %v294
      %v335 = vadd.f32 %v334, %v297
      %v336 = vadd.f32 %v335, %v300
      %v337 = vadd.f32 %v336, %v303
      %v338 = vrot.slane %v337, 4
      %v339 = vadd.f32 %v337, %v338
      %v340 = vrot.slane %v339, 2
      %v341 = vadd.f32 %v339, %v340
      %v342 = vrot.slane %v341, 1
      %v343 = vadd.f32 %v341, %v342
      %v347 = vcombine.low %v317, %v330
      %v349 = vunpack.c.l.s4 1966171168
      %v350 = vunpack.c.0.s8 %v349
      %v351 = vlaneseq
      %v352 = vshrl.u32 %v351, 7
      %v353 = vsub.s32 %v350, %v352
      %v354 = vrot.slane %v347, %v353
      %v356 = vunpack.c.l.s4 1966171168
      %v357 = vunpack.c.0.s8 %v356
      %v358 = vlaneseq
      %v359 = vshrl.u32 %v358, 7
      %v360 = vsub.s32 %v357, %v359
      %v361 = vrot.slane %v343, %v360
      %v362 = vcombine.low %v354, %v361
      %v364 = vunpack.c.l.s4 1966171168
      %v365 = vunpack.c.0.s8 %v364
      %v366 = vlaneseq
      %v367 = vshrl.u32 %v366, 7
      %v368 = vsub.s32 %v365, %v367
      %v369 = vrot.slane %v362, %v368
      %v371 = vadd.f32 %v304, %v369
      %v372 = vlaneseq
      %vm373 = vcmp.ge.s32.totalorder %v372, 0
      %vm374 = vcmp.lt.s32.totalorder %v372, 384
      %vm375 = vmand %vm373, %vm374
      %376 = vst.msk [vmem:[#allocation2] sm:$0x7] %vm375, %v371
      %v377 = vld [vmem:[#allocation3] sm:$0x7]
      %v378 = vmax.f32 %v280, %v286
      %v379 = vmax.f32 %v283, %v289
      %v380 = vmax.f32 %v378, %v292
      %v381 = vmax.f32 %v379, %v295
      %v382 = vmax.f32 %v380, %v298
      %v383 = vmax.f32 %v381, %v301
      %v384 = vmax.f32 %v382, %v383
      %v385 = vrot.slane %v384, 4
      %v386 = vmax.f32 %v384, %v385
      %v387 = vrot.slane %v386, 2
      %v388 = vmax.f32 %v386, %v387
      %v389 = vrot.slane %v388, 1
      %v390 = vmax.f32 %v388, %v389
      %v391 = vmax.f32 %v281, %v287
      %v392 = vmax.f32 %v284, %v290
      %v393 = vmax.f32 %v391, %v293
      %v394 = vmax.f32 %v392, %v296
      %v395 = vmax.f32 %v393, %v299
      %v396 = vmax.f32 %v394, %v302
      %v397 = vmax.f32 %v395, %v396
      %v398 = vrot.slane %v397, 4
      %v399 = vmax.f32 %v397, %v398
      %v400 = vrot.slane %v399, 2
      %v401 = vmax.f32 %v399, %v400
      %v402 = vrot.slane %v401, 1
      %v403 = vmax.f32 %v401, %v402
      %v404 = vmax.f32 %v282, %v288
      %v405 = vmax.f32 %v285, %v291
      %v406 = vmax.f32 %v404, %v294
      %v407 = vmax.f32 %v405, %v297
      %v408 = vmax.f32 %v406, %v300
      %v409 = vmax.f32 %v407, %v303
      %v410 = vmax.f32 %v408, %v409
      %v411 = vrot.slane %v410, 4
      %v412 = vmax.f32 %v410, %v411
      %v413 = vrot.slane %v412, 2
      %v414 = vmax.f32 %v412, %v413
      %v415 = vrot.slane %v414, 1
      %v416 = vmax.f32 %v414, %v415
      %v420 = vcombine.low %v390, %v403
      %v422 = vunpack.c.l.s4 1966171168
      %v423 = vunpack.c.0.s8 %v422
      %v424 = vlaneseq
      %v425 = vshrl.u32 %v424, 7
      %v426 = vsub.s32 %v423, %v425
      %v427 = vrot.slane %v420, %v426
      %v429 = vunpack.c.l.s4 1966171168
      %v430 = vunpack.c.0.s8 %v429
      %v431 = vlaneseq
      %v432 = vshrl.u32 %v431, 7
      %v433 = vsub.s32 %v430, %v432
      %v434 = vrot.slane %v416, %v433
      %v435 = vcombine.low %v427, %v434
      %v437 = vunpack.c.l.s4 1966171168
      %v438 = vunpack.c.0.s8 %v437
      %v439 = vlaneseq
      %v440 = vshrl.u32 %v439, 7
      %v441 = vsub.s32 %v438, %v440
      %v442 = vrot.slane %v435, %v441
      %v444 = vmax.f32 %v377, %v442
      %445 = vst.msk [vmem:[#allocation3] sm:$0x7] %vm375, %v444
      // Predicated region
      $region45: #{_lambda_.10} parent=39 // pred_check
        %p446 = pneg %p254
      $region46: #{_lambda_.10} parent=39 // pred_check_branch
        %448 = sbr.rel (%p446) target = $region48
      $region47: #{_lambda_.10} parent=39 // pred_region
        %v449 = vld [vmem:[#allocation2] sm:$0x7]
        %v450 = vmul.f32 %v449, 0.015625
        %v451 = vld [vmem:[#allocation3] sm:$0x7]
        %v452 = vld [vmem:[%s1] sm:$0xff]
        %v453 = vld [vmem:[%s1 + $0x8] sm:$0xff]
        %v454 = vld [vmem:[%s1 + $0x10] sm:$0xff]
        %v455 = vld [vmem:[%s1 + $0x18] sm:$0xff]
        %v456 = vld [vmem:[%s1 + $0x20] sm:$0xff]
        %v457 = vld [vmem:[%s1 + $0x28] sm:$0xff]
        %v458 = vld [vmem:[%s1 + $0x30] sm:$0xff]
        %v459 = vld [vmem:[%s1 + $0x38] sm:$0xff]
        %v460 = vld [vmem:[%s1 + $0x40] sm:$0xff]
        %v461 = vld [vmem:[%s1 + $0x48] sm:$0xff]
        %v462 = vld [vmem:[%s1 + $0x50] sm:$0xff]
        %v463 = vld [vmem:[%s1 + $0x58] sm:$0xff]
        %v464 = vld [vmem:[%s1 + $0x60] sm:$0xff]
        %v465 = vld [vmem:[%s1 + $0x68] sm:$0xff]
        %v466 = vld [vmem:[%s1 + $0x70] sm:$0xff]
        %v467 = vld [vmem:[%s1 + $0x78] sm:$0xff]
        %v468 = vld [vmem:[%s1 + $0x80] sm:$0xff]
        %v469 = vld [vmem:[%s1 + $0x88] sm:$0xff]
        %v470 = vld [vmem:[%s1 + $0x90] sm:$0xff]
        %v471 = vld [vmem:[%s1 + $0x98] sm:$0xff]
        %v472 = vld [vmem:[%s1 + $0xa0] sm:$0xff]
        %v473 = vld [vmem:[%s1 + $0xa8] sm:$0xff]
        %v474 = vld [vmem:[%s1 + $0xb0] sm:$0xff]
        %v475 = vld [vmem:[%s1 + $0xb8] sm:$0xff]
        %v476 = vld [vmem:[%s1 + $0xc0] sm:$0xff]
        %v477 = vld [vmem:[%s1 + $0xc8] sm:$0xff]
        %v478 = vld [vmem:[%s1 + $0xd0] sm:$0xff]
        %v479 = vld [vmem:[%s1 + $0xd8] sm:$0xff]
        %v480 = vld [vmem:[%s1 + $0xe0] sm:$0xff]
        %v481 = vld [vmem:[%s1 + $0xe8] sm:$0xff]
        %v482 = vld [vmem:[%s1 + $0xf0] sm:$0xff]
        %v483 = vld [vmem:[%s1 + $0xf8] sm:$0xff]
        %v484 = vld [vmem:[%s1 + $0x100] sm:$0xff]
        %v485 = vld [vmem:[%s1 + $0x108] sm:$0xff]
        %v486 = vld [vmem:[%s1 + $0x110] sm:$0xff]
        %v487 = vld [vmem:[%s1 + $0x118] sm:$0xff]
        %v488 = vld [vmem:[%s1 + $0x120] sm:$0xff]
        %v489 = vld [vmem:[%s1 + $0x128] sm:$0xff]
        %v490 = vld [vmem:[%s1 + $0x130] sm:$0xff]
        %v491 = vld [vmem:[%s1 + $0x138] sm:$0xff]
        %v492 = vld [vmem:[%s1 + $0x140] sm:$0xff]
        %v493 = vld [vmem:[%s1 + $0x148] sm:$0xff]
        %v494 = vld [vmem:[%s1 + $0x150] sm:$0xff]
        %v495 = vld [vmem:[%s1 + $0x158] sm:$0xff]
        %v496 = vld [vmem:[%s1 + $0x160] sm:$0xff]
        %v497 = vld [vmem:[%s1 + $0x168] sm:$0xff]
        %v498 = vld [vmem:[%s1 + $0x170] sm:$0xff]
        %v499 = vld [vmem:[%s1 + $0x178] sm:$0xff]
        %v500 = vld [vmem:[%s2] sm:$0x1]
        %v502 = vlaneseq
        %v503 = vshrl.u32 %v502, 7
        %v504 = vsub.s32 0, %v503
        %v505 = vrot.slane %v450, %v504
        %v506 = vlaneseq
        %v507 = vshrl.u32 %v506, 7
        %v508 = vsub.s32 1, %v507
        %v509 = vrot.slane %v450, %v508
        %v510 = vlaneseq
        %v511 = vshrl.u32 %v510, 7
        %v512 = vsub.s32 2, %v511
        %v513 = vrot.slane %v450, %v512
        %517 = vmatprep.subr.mxu0 0.0
        %518 = vmatpush1.msra.mxu0 %v452
        %519 = vmatprep.subr.mxu0 0.0
        %520 = vmatpush1.msra.mxu0 %v453
        %521 = vmatprep.subr.mxu0 0.0
        %522 = vmatpush1.msra.mxu0 %v454
        %523 = vmatprep.subr.mxu0 0.0
        %524 = vmatpush1.msra.mxu0 %v455
        %525 = vmatprep.subr.mxu0 0.0
        %526 = vmatpush1.msra.mxu0 %v456
        %527 = vmatprep.subr.mxu0 0.0
        %528 = vmatpush1.msra.mxu0 %v457
        %529 = vmatprep.subr.mxu0 0.0
        %530 = vmatpush1.msra.mxu0 %v458
        %531 = vmatprep.subr.mxu0 0.0
        %532 = vmatpush1.msra.mxu0 %v459
        %533 = vmatprep.subr.mxu0 0.0
        %534 = vmatpush1.msra.mxu0 %v460
        %535 = vmatprep.subr.mxu0 0.0
        %536 = vmatpush1.msra.mxu0 %v461
        %537 = vmatprep.subr.mxu0 0.0
        %538 = vmatpush1.msra.mxu0 %v462
        %539 = vmatprep.subr.mxu0 0.0
        %540 = vmatpush1.msra.mxu0 %v463
        %541 = vmatprep.subr.mxu0 0.0
        %542 = vmatpush1.msra.mxu0 %v464
        %543 = vmatprep.subr.mxu0 0.0
        %544 = vmatpush1.msra.mxu0 %v465
        %545 = vmatprep.subr.mxu0 0.0
        %546 = vmatpush1.msra.mxu0 %v466
        %547 = vmatprep.subr.mxu0 0.0
        %548 = vmatpush1.msra.mxu0 %v467
        %549 = vmatprep.subr.mxu0 0.0
        %550 = vmatpush1.msra.mxu0 %v468
        %551 = vmatprep.subr.mxu0 0.0
        %552 = vmatpush1.msra.mxu0 %v469
        %553 = vmatprep.subr.mxu0 0.0
        %554 = vmatpush1.msra.mxu0 %v470
        %555 = vmatprep.subr.mxu0 0.0
        %556 = vmatpush1.msra.mxu0 %v471
        %557 = vmatprep.subr.mxu0 0.0
        %558 = vmatpush1.msra.mxu0 %v472
        %559 = vmatprep.subr.mxu0 0.0
        %560 = vmatpush1.msra.mxu0 %v473
        %561 = vmatprep.subr.mxu0 0.0
        %562 = vmatpush1.msra.mxu0 %v474
        %563 = vmatprep.subr.mxu0 0.0
        %564 = vmatpush1.msra.mxu0 %v475
        %565 = vmatprep.subr.mxu0 0.0
        %566 = vmatpush1.msra.mxu0 %v476
        %567 = vmatprep.subr.mxu0 0.0
        %568 = vmatpush1.msra.mxu0 %v477
        %569 = vmatprep.subr.mxu0 0.0
        %570 = vmatpush1.msra.mxu0 %v478
        %571 = vmatprep.subr.mxu0 0.0
        %572 = vmatpush1.msra.mxu0 %v479
        %573 = vmatprep.subr.mxu0 0.0
        %574 = vmatpush1.msra.mxu0 %v480
        %575 = vmatprep.subr.mxu0 0.0
        %576 = vmatpush1.msra.mxu0 %v481
        %577 = vmatprep.subr.mxu0 0.0
        %578 = vmatpush1.msra.mxu0 %v482
        %579 = vmatprep.subr.mxu0 0.0
        %580 = vmatpush1.msra.mxu0 %v483
        %581 = vmatprep.mubr.f32.mxu0 %v509
        %582 = vmatmul.mubr.f32.gmra.mrb[0].mxu0 %v505
        %v583 = vpop.f32.mrb[0].mxu0
        %v584 = vadd.f32 %v500, %v583
        %v585 = vpop.f32.mrb[0].mxu0
        %586 = vdwg.mxu0
        %587 = vmatprep.subr.mxu0 0.0
        %588 = vmatpush1.msra.mxu0 %v484
        %589 = vmatprep.subr.mxu0 0.0
        %590 = vmatpush1.msra.mxu0 %v485
        %591 = vmatprep.subr.mxu0 0.0
        %592 = vmatpush1.msra.mxu0 %v486
        %593 = vmatprep.subr.mxu0 0.0
        %594 = vmatpush1.msra.mxu0 %v487
        %595 = vmatprep.subr.mxu0 0.0
        %596 = vmatpush1.msra.mxu0 %v488
        %597 = vmatprep.subr.mxu0 0.0
        %598 = vmatpush1.msra.mxu0 %v489
        %599 = vmatprep.subr.mxu0 0.0
        %600 = vmatpush1.msra.mxu0 %v490
        %601 = vmatprep.subr.mxu0 0.0
        %602 = vmatpush1.msra.mxu0 %v491
        %603 = vmatprep.subr.mxu0 0.0
        %604 = vmatpush1.msra.mxu0 %v492
        %605 = vmatprep.subr.mxu0 0.0
        %606 = vmatpush1.msra.mxu0 %v493
        %607 = vmatprep.subr.mxu0 0.0
        %608 = vmatpush1.msra.mxu0 %v494
        %609 = vmatprep.subr.mxu0 0.0
        %610 = vmatpush1.msra.mxu0 %v495
        %611 = vmatprep.subr.mxu0 0.0
        %612 = vmatpush1.msra.mxu0 %v496
        %613 = vmatprep.subr.mxu0 0.0
        %614 = vmatpush1.msra.mxu0 %v497
        %615 = vmatprep.subr.mxu0 0.0
        %616 = vmatpush1.msra.mxu0 %v498
        %617 = vmatprep.subr.mxu0 0.0
        %618 = vmatpush1.msra.mxu0 %v499
        %619 = vmatprep.subr.mxu0 0.0
        %620 = vmatpush1.msra.mxu0 0.0
        %621 = vmatprep.subr.mxu0 0.0
        %622 = vmatpush1.msra.mxu0 0.0
        %623 = vmatprep.subr.mxu0 0.0
        %624 = vmatpush1.msra.mxu0 0.0
        %625 = vmatprep.subr.mxu0 0.0
        %626 = vmatpush1.msra.mxu0 0.0
        %627 = vmatprep.subr.mxu0 0.0
        %628 = vmatpush1.msra.mxu0 0.0
        %629 = vmatprep.subr.mxu0 0.0
        %630 = vmatpush1.msra.mxu0 0.0
        %631 = vmatprep.subr.mxu0 0.0
        %632 = vmatpush1.msra.mxu0 0.0
        %633 = vmatprep.subr.mxu0 0.0
        %634 = vmatpush1.msra.mxu0 0.0
        %635 = vmatprep.subr.mxu0 0.0
        %636 = vmatpush1.msra.mxu0 0.0
        %637 = vmatprep.subr.mxu0 0.0
        %638 = vmatpush1.msra.mxu0 0.0
        %639 = vmatprep.subr.mxu0 0.0
        %640 = vmatpush1.msra.mxu0 0.0
        %641 = vmatprep.subr.mxu0 0.0
        %642 = vmatpush1.msra.mxu0 0.0
        %643 = vmatprep.subr.mxu0 0.0
        %644 = vmatpush1.msra.mxu0 0.0
        %645 = vmatprep.subr.mxu0 0.0
        %646 = vmatpush1.msra.mxu0 0.0
        %647 = vmatprep.subr.mxu0 0.0
        %648 = vmatpush1.msra.mxu0 0.0
        %649 = vmatprep.subr.mxu0 0.0
        %650 = vmatpush1.msra.mxu0 0.0
        %651 = vmatprep.mubr.f32.mxu0 0.0
        %652 = vmatmul.mubr.f32.gmra.mrb[0].mxu0 %v513
        %v653 = vpop.f32.mrb[0].mxu0
        %v654 = vadd.f32 %v584, %v653
        %v655 = vpop.f32.mrb[0].mxu0
        %656 = vdwg.mxu0
        %v657 = vmax.f32 %v654, 0.0
        %v658 = vld [vmem:[%s3] sm:$0xff]
        %v659 = vld [vmem:[%s3 + $0x8] sm:$0xff]
        %v660 = vld [vmem:[%s3 + $0x10] sm:$0xff]
        %v661 = vld [vmem:[%s3 + $0x18] sm:$0xff]
        %v662 = vld [vmem:[%s3 + $0x20] sm:$0xff]
        %v663 = vld [vmem:[%s3 + $0x28] sm:$0xff]
        %v664 = vld [vmem:[%s3 + $0x30] sm:$0xff]
        %v665 = vld [vmem:[%s3 + $0x38] sm:$0xff]
        %v666 = vld [vmem:[%s3 + $0x40] sm:$0xff]
        %v667 = vld [vmem:[%s3 + $0x48] sm:$0xff]
        %v668 = vld [vmem:[%s3 + $0x50] sm:$0xff]
        %v669 = vld [vmem:[%s3 + $0x58] sm:$0xff]
        %v670 = vld [vmem:[%s4] sm:$0x7]
        %v672 = vlaneseq
        %v673 = vshrl.u32 %v672, 7
        %v674 = vsub.s32 0, %v673
        %v675 = vrot.slane %v670, %v674
        %v676 = vlaneseq
        %v677 = vshrl.u32 %v676, 7
        %v678 = vsub.s32 1, %v677
        %v679 = vrot.slane %v670, %v678
        %v680 = vlaneseq
        %v681 = vshrl.u32 %v680, 7
        %v682 = vsub.s32 2, %v681
        %v683 = vrot.slane %v670, %v682
        %vm687 = vcmask 261120
        %v689 = vsel %vm687, %v657, 0
        %691 = vmatprep.subr.mxu0 %v659
        %692 = vmatpush1.msra.mxu0 %v658
        %693 = vmatprep.subr.mxu0 %v662
        %694 = vmatpush1.msra.mxu0 %v661
        %695 = vmatprep.subr.mxu0 %v665
        %696 = vmatpush1.msra.mxu0 %v664
        %697 = vmatprep.subr.mxu0 %v668
        %698 = vmatpush1.msra.mxu0 %v667
        %699 = vmatprep.subr.mxu0 0.0
        %700 = vmatpush1.msra.mxu0 0.0
        %701 = vmatprep.subr.mxu0 0.0
        %702 = vmatpush1.msra.mxu0 0.0
        %703 = vmatprep.subr.mxu0 0.0
        %704 = vmatpush1.msra.mxu0 0.0
        %705 = vmatprep.subr.mxu0 0.0
        %706 = vmatpush1.msra.mxu0 0.0
        %707 = vmatprep.subr.mxu0 0.0
        %708 = vmatpush1.msra.mxu0 0.0
        %709 = vmatprep.subr.mxu0 0.0
        %710 = vmatpush1.msra.mxu0 0.0
        %711 = vmatprep.subr.mxu0 0.0
        %712 = vmatpush1.msra.mxu0 0.0
        %713 = vmatprep.subr.mxu0 0.0
        %714 = vmatpush1.msra.mxu0 0.0
        %715 = vmatprep.subr.mxu0 0.0
        %716 = vmatpush1.msra.mxu0 0.0
        %717 = vmatprep.subr.mxu0 0.0
        %718 = vmatpush1.msra.mxu0 0.0
        %719 = vmatprep.subr.mxu0 0.0
        %720 = vmatpush1.msra.mxu0 0.0
        %721 = vmatprep.subr.mxu0 0.0
        %722 = vmatpush1.msra.mxu0 0.0
        %723 = vmatprep.subr.mxu0 0.0
        %724 = vmatpush1.msra.mxu0 0.0
        %725 = vmatprep.subr.mxu0 0.0
        %726 = vmatpush1.msra.mxu0 0.0
        %727 = vmatprep.subr.mxu0 0.0
        %728 = vmatpush1.msra.mxu0 0.0
        %729 = vmatprep.subr.mxu0 0.0
        %730 = vmatpush1.msra.mxu0 0.0
        %731 = vmatprep.subr.mxu0 0.0
        %732 = vmatpush1.msra.mxu0 0.0
        %733 = vmatprep.subr.mxu0 0.0
        %734 = vmatpush1.msra.mxu0 0.0
        %735 = vmatprep.subr.mxu0 0.0
        %736 = vmatpush1.msra.mxu0 0.0
        %737 = vmatprep.subr.mxu0 0.0
        %738 = vmatpush1.msra.mxu0 0.0
        %739 = vmatprep.subr.mxu0 0.0
        %740 = vmatpush1.msra.mxu0 0.0
        %741 = vmatprep.subr.mxu0 0.0
        %742 = vmatpush1.msra.mxu0 0.0
        %743 = vmatprep.subr.mxu0 0.0
        %744 = vmatpush1.msra.mxu0 0.0
        %745 = vmatprep.subr.mxu0 0.0
        %746 = vmatpush1.msra.mxu0 0.0
        %747 = vmatprep.subr.mxu0 0.0
        %748 = vmatpush1.msra.mxu0 0.0
        %749 = vmatprep.subr.mxu0 0.0
        %750 = vmatpush1.msra.mxu0 0.0
        %751 = vmatprep.subr.mxu0 0.0
        %752 = vmatpush1.msra.mxu0 0.0
        %753 = vmatprep.subr.mxu0 0.0
        %754 = vmatpush1.msra.mxu0 0.0
        %755 = vmatprep.mubr.f32.mxu0 0.0
        %756 = vmatmul.mubr.f32.gmra.mrb[0].mxu0 %v689
        %v757 = vpop.f32.mrb[0].mxu0
        %v758 = vadd.f32 %v675, %v757
        %v759 = vpop.f32.mrb[0].mxu0
        %v760 = vadd.f32 %v679, %v759
        %761 = vdwg.mxu0
        %762 = vmatprep.subr.mxu0 0.0
        %763 = vmatpush1.msra.mxu0 %v660
        %764 = vmatprep.subr.mxu0 0.0
        %765 = vmatpush1.msra.mxu0 %v663
        %766 = vmatprep.subr.mxu0 0.0
        %767 = vmatpush1.msra.mxu0 %v666
        %768 = vmatprep.subr.mxu0 0.0
        %769 = vmatpush1.msra.mxu0 %v669
        %770 = vmatprep.subr.mxu0 0.0
        %771 = vmatpush1.msra.mxu0 0.0
        %772 = vmatprep.subr.mxu0 0.0
        %773 = vmatpush1.msra.mxu0 0.0
        %774 = vmatprep.subr.mxu0 0.0
        %775 = vmatpush1.msra.mxu0 0.0
        %776 = vmatprep.subr.mxu0 0.0
        %777 = vmatpush1.msra.mxu0 0.0
        %778 = vmatprep.subr.mxu0 0.0
        %779 = vmatpush1.msra.mxu0 0.0
        %780 = vmatprep.subr.mxu0 0.0
        %781 = vmatpush1.msra.mxu0 0.0
        %782 = vmatprep.subr.mxu0 0.0
        %783 = vmatpush1.msra.mxu0 0.0
        %784 = vmatprep.subr.mxu0 0.0
        %785 = vmatpush1.msra.mxu0 0.0
        %786 = vmatprep.subr.mxu0 0.0
        %787 = vmatpush1.msra.mxu0 0.0
        %788 = vmatprep.subr.mxu0 0.0
        %789 = vmatpush1.msra.mxu0 0.0
        %790 = vmatprep.subr.mxu0 0.0
        %791 = vmatpush1.msra.mxu0 0.0
        %792 = vmatprep.subr.mxu0 0.0
        %793 = vmatpush1.msra.mxu0 0.0
        %794 = vmatprep.subr.mxu0 0.0
        %795 = vmatpush1.msra.mxu0 0.0
        %796 = vmatprep.subr.mxu0 0.0
        %797 = vmatpush1.msra.mxu0 0.0
        %798 = vmatprep.subr.mxu0 0.0
        %799 = vmatpush1.msra.mxu0 0.0
        %800 = vmatprep.subr.mxu0 0.0
        %801 = vmatpush1.msra.mxu0 0.0
        %802 = vmatprep.subr.mxu0 0.0
        %803 = vmatpush1.msra.mxu0 0.0
        %804 = vmatprep.subr.mxu0 0.0
        %805 = vmatpush1.msra.mxu0 0.0
        %806 = vmatprep.subr.mxu0 0.0
        %807 = vmatpush1.msra.mxu0 0.0
        %808 = vmatprep.subr.mxu0 0.0
        %809 = vmatpush1.msra.mxu0 0.0
        %810 = vmatprep.subr.mxu0 0.0
        %811 = vmatpush1.msra.mxu0 0.0
        %812 = vmatprep.subr.mxu0 0.0
        %813 = vmatpush1.msra.mxu0 0.0
        %814 = vmatprep.subr.mxu0 0.0
        %815 = vmatpush1.msra.mxu0 0.0
        %816 = vmatprep.subr.mxu0 0.0
        %817 = vmatpush1.msra.mxu0 0.0
        %818 = vmatprep.subr.mxu0 0.0
        %819 = vmatpush1.msra.mxu0 0.0
        %820 = vmatprep.subr.mxu0 0.0
        %821 = vmatpush1.msra.mxu0 0.0
        %822 = vmatprep.subr.mxu0 0.0
        %823 = vmatpush1.msra.mxu0 0.0
        %824 = vmatprep.subr.mxu0 0.0
        %825 = vmatpush1.msra.mxu0 0.0
        %826 = vmatprep.mubr.f32.mxu0 0.0
        %827 = vmatmul.mubr.f32.gmra.mrb[0].mxu0 %v689
        %v828 = vpop.f32.mrb[0].mxu0
        %v829 = vadd.f32 %v683, %v828
        %v830 = vpop.f32.mrb[0].mxu0
        %831 = vdwg.mxu0
        %v833 = vlaneseq
        %v834 = vshrl.u32 %v833, 7
        %v835 = vsub.s32 0, %v834
        %v836 = vrot.slane %v451, %v835
        %v837 = vlaneseq
        %v838 = vshrl.u32 %v837, 7
        %v839 = vsub.s32 1, %v838
        %v840 = vrot.slane %v451, %v839
        %v841 = vlaneseq
        %v842 = vshrl.u32 %v841, 7
        %v843 = vsub.s32 2, %v842
        %v844 = vrot.slane %v451, %v843
        %848 = vmatprep.subr.mxu0 0.0
        %849 = vmatpush1.msra.mxu0 %v452
        %850 = vmatprep.subr.mxu0 0.0
        %851 = vmatpush1.msra.mxu0 %v453
        %852 = vmatprep.subr.mxu0 0.0
        %853 = vmatpush1.msra.mxu0 %v454
        %854 = vmatprep.subr.mxu0 0.0
        %855 = vmatpush1.msra.mxu0 %v455
        %856 = vmatprep.subr.mxu0 0.0
        %857 = vmatpush1.msra.mxu0 %v456
        %858 = vmatprep.subr.mxu0 0.0
        %859 = vmatpush1.msra.mxu0 %v457
        %860 = vmatprep.subr.mxu0 0.0
        %861 = vmatpush1.msra.mxu0 %v458
        %862 = vmatprep.subr.mxu0 0.0
        %863 = vmatpush1.msra.mxu0 %v459
        %864 = vmatprep.subr.mxu0 0.0
        %865 = vmatpush1.msra.mxu0 %v460
        %866 = vmatprep.subr.mxu0 0.0
        %867 = vmatpush1.msra.mxu0 %v461
        %868 = vmatprep.subr.mxu0 0.0
        %869 = vmatpush1.msra.mxu0 %v462
        %870 = vmatprep.subr.mxu0 0.0
        %871 = vmatpush1.msra.mxu0 %v463
        %872 = vmatprep.subr.mxu0 0.0
        %873 = vmatpush1.msra.mxu0 %v464
        %874 = vmatprep.subr.mxu0 0.0
        %875 = vmatpush1.msra.mxu0 %v465
        %876 = vmatprep.subr.mxu0 0.0
        %877 = vmatpush1.msra.mxu0 %v466
        %878 = vmatprep.subr.mxu0 0.0
        %879 = vmatpush1.msra.mxu0 %v467
        %880 = vmatprep.subr.mxu0 0.0
        %881 = vmatpush1.msra.mxu0 %v468
        %882 = vmatprep.subr.mxu0 0.0
        %883 = vmatpush1.msra.mxu0 %v469
        %884 = vmatprep.subr.mxu0 0.0
        %885 = vmatpush1.msra.mxu0 %v470
        %886 = vmatprep.subr.mxu0 0.0
        %887 = vmatpush1.msra.mxu0 %v471
        %888 = vmatprep.subr.mxu0 0.0
        %889 = vmatpush1.msra.mxu0 %v472
        %890 = vmatprep.subr.mxu0 0.0
        %891 = vmatpush1.msra.mxu0 %v473
        %892 = vmatprep.subr.mxu0 0.0
        %893 = vmatpush1.msra.mxu0 %v474
        %894 = vmatprep.subr.mxu0 0.0
        %895 = vmatpush1.msra.mxu0 %v475
        %896 = vmatprep.subr.mxu0 0.0
        %897 = vmatpush1.msra.mxu0 %v476
        %898 = vmatprep.subr.mxu0 0.0
        %899 = vmatpush1.msra.mxu0 %v477
        %900 = vmatprep.subr.mxu0 0.0
        %901 = vmatpush1.msra.mxu0 %v478
        %902 = vmatprep.subr.mxu0 0.0
        %903 = vmatpush1.msra.mxu0 %v479
        %904 = vmatprep.subr.mxu0 0.0
        %905 = vmatpush1.msra.mxu0 %v480
        %906 = vmatprep.subr.mxu0 0.0
        %907 = vmatpush1.msra.mxu0 %v481
        %908 = vmatprep.subr.mxu0 0.0
        %909 = vmatpush1.msra.mxu0 %v482
        %910 = vmatprep.subr.mxu0 0.0
        %911 = vmatpush1.msra.mxu0 %v483
        %912 = vmatprep.mubr.f32.mxu0 %v840
        %913 = vmatmul.mubr.f32.gmra.mrb[0].mxu0 %v836
        %v914 = vpop.f32.mrb[0].mxu0
        %v915 = vadd.f32 %v500, %v914
        %v916 = vpop.f32.mrb[0].mxu0
        %917 = vdwg.mxu0
        %918 = vmatprep.subr.mxu0 0.0
        %919 = vmatpush1.msra.mxu0 %v484
        %920 = vmatprep.subr.mxu0 0.0
        %921 = vmatpush1.msra.mxu0 %v485
        %922 = vmatprep.subr.mxu0 0.0
        %923 = vmatpush1.msra.mxu0 %v486
        %924 = vmatprep.subr.mxu0 0.0
        %925 = vmatpush1.msra.mxu0 %v487
        %926 = vmatprep.subr.mxu0 0.0
        %927 = vmatpush1.msra.mxu0 %v488
        %928 = vmatprep.subr.mxu0 0.0
        %929 = vmatpush1.msra.mxu0 %v489
        %930 = vmatprep.subr.mxu0 0.0
        %931 = vmatpush1.msra.mxu0 %v490
        %932 = vmatprep.subr.mxu0 0.0
        %933 = vmatpush1.msra.mxu0 %v491
        %934 = vmatprep.subr.mxu0 0.0
        %935 = vmatpush1.msra.mxu0 %v492
        %936 = vmatprep.subr.mxu0 0.0
        %937 = vmatpush1.msra.mxu0 %v493
        %938 = vmatprep.subr.mxu0 0.0
        %939 = vmatpush1.msra.mxu0 %v494
        %940 = vmatprep.subr.mxu0 0.0
        %941 = vmatpush1.msra.mxu0 %v495
        %942 = vmatprep.subr.mxu0 0.0
        %943 = vmatpush1.msra.mxu0 %v496
        %944 = vmatprep.subr.mxu0 0.0
        %945 = vmatpush1.msra.mxu0 %v497
        %946 = vmatprep.subr.mxu0 0.0
        %947 = vmatpush1.msra.mxu0 %v498
        %948 = vmatprep.subr.mxu0 0.0
        %949 = vmatpush1.msra.mxu0 %v499
        %950 = vmatprep.subr.mxu0 0.0
        %951 = vmatpush1.msra.mxu0 0.0
        %952 = vmatprep.subr.mxu0 0.0
        %953 = vmatpush1.msra.mxu0 0.0
        %954 = vmatprep.subr.mxu0 0.0
        %955 = vmatpush1.msra.mxu0 0.0
        %956 = vmatprep.subr.mxu0 0.0
        %957 = vmatpush1.msra.mxu0 0.0
        %958 = vmatprep.subr.mxu0 0.0
        %959 = vmatpush1.msra.mxu0 0.0
        %960 = vmatprep.subr.mxu0 0.0
        %961 = vmatpush1.msra.mxu0 0.0
        %962 = vmatprep.subr.mxu0 0.0
        %963 = vmatpush1.msra.mxu0 0.0
        %964 = vmatprep.subr.mxu0 0.0
        %965 = vmatpush1.msra.mxu0 0.0
        %966 = vmatprep.subr.mxu0 0.0
        %967 = vmatpush1.msra.mxu0 0.0
        %968 = vmatprep.subr.mxu0 0.0
        %969 = vmatpush1.msra.mxu0 0.0
        %970 = vmatprep.subr.mxu0 0.0
        %971 = vmatpush1.msra.mxu0 0.0
        %972 = vmatprep.subr.mxu0 0.0
        %973 = vmatpush1.msra.mxu0 0.0
        %974 = vmatprep.subr.mxu0 0.0
        %975 = vmatpush1.msra.mxu0 0.0
        %976 = vmatprep.subr.mxu0 0.0
        %977 = vmatpush1.msra.mxu0 0.0
        %978 = vmatprep.subr.mxu0 0.0
        %979 = vmatpush1.msra.mxu0 0.0
        %980 = vmatprep.subr.mxu0 0.0
        %981 = vmatpush1.msra.mxu0 0.0
        %982 = vmatprep.mubr.f32.mxu0 0.0
        %983 = vmatmul.mubr.f32.gmra.mrb[0].mxu0 %v844
        %v984 = vpop.f32.mrb[0].mxu0
        %v985 = vadd.f32 %v915, %v984
        %v986 = vpop.f32.mrb[0].mxu0
        %987 = vdwg.mxu0
        %v988 = vmax.f32 %v985, 0.0
        %v990 = vsel %vm687, %v988, 0
        %992 = vmatprep.subr.mxu0 %v659
        %993 = vmatpush1.msra.mxu0 %v658
        %994 = vmatprep.subr.mxu0 %v662
        %995 = vmatpush1.msra.mxu0 %v661
        %996 = vmatprep.subr.mxu0 %v665
        %997 = vmatpush1.msra.mxu0 %v664
        %998 = vmatprep.subr.mxu0 %v668
        %999 = vmatpush1.msra.mxu0 %v667
        %1000 = vmatprep.subr.mxu0 0.0
        %1001 = vmatpush1.msra.mxu0 0.0
        %1002 = vmatprep.subr.mxu0 0.0
        %1003 = vmatpush1.msra.mxu0 0.0
        %1004 = vmatprep.subr.mxu0 0.0
        %1005 = vmatpush1.msra.mxu0 0.0
        %1006 = vmatprep.subr.mxu0 0.0
        %1007 = vmatpush1.msra.mxu0 0.0
        %1008 = vmatprep.subr.mxu0 0.0
        %1009 = vmatpush1.msra.mxu0 0.0
        %1010 = vmatprep.subr.mxu0 0.0
        %1011 = vmatpush1.msra.mxu0 0.0
        %1012 = vmatprep.subr.mxu0 0.0
        %1013 = vmatpush1.msra.mxu0 0.0
        %1014 = vmatprep.subr.mxu0 0.0
        %1015 = vmatpush1.msra.mxu0 0.0
        %1016 = vmatprep.subr.mxu0 0.0
        %1017 = vmatpush1.msra.mxu0 0.0
        %1018 = vmatprep.subr.mxu0 0.0
        %1019 = vmatpush1.msra.mxu0 0.0
        %1020 = vmatprep.subr.mxu0 0.0
        %1021 = vmatpush1.msra.mxu0 0.0
        %1022 = vmatprep.subr.mxu0 0.0
        %1023 = vmatpush1.msra.mxu0 0.0
        %1024 = vmatprep.subr.mxu0 0.0
        %1025 = vmatpush1.msra.mxu0 0.0
        %1026 = vmatprep.subr.mxu0 0.0
        %1027 = vmatpush1.msra.mxu0 0.0
        %1028 = vmatprep.subr.mxu0 0.0
        %1029 = vmatpush1.msra.mxu0 0.0
        %1030 = vmatprep.subr.mxu0 0.0
        %1031 = vmatpush1.msra.mxu0 0.0
        %1032 = vmatprep.subr.mxu0 0.0
        %1033 = vmatpush1.msra.mxu0 0.0
        %1034 = vmatprep.subr.mxu0 0.0
        %1035 = vmatpush1.msra.mxu0 0.0
        %1036 = vmatprep.subr.mxu0 0.0
        %1037 = vmatpush1.msra.mxu0 0.0
        %1038 = vmatprep.subr.mxu0 0.0
        %1039 = vmatpush1.msra.mxu0 0.0
        %1040 = vmatprep.subr.mxu0 0.0
        %1041 = vmatpush1.msra.mxu0 0.0
        %1042 = vmatprep.subr.mxu0 0.0
        %1043 = vmatpush1.msra.mxu0 0.0
        %1044 = vmatprep.subr.mxu0 0.0
        %1045 = vmatpush1.msra.mxu0 0.0
        %1046 = vmatprep.subr.mxu0 0.0
        %1047 = vmatpush1.msra.mxu0 0.0
        %1048 = vmatprep.subr.mxu0 0.0
        %1049 = vmatpush1.msra.mxu0 0.0
        %1050 = vmatprep.subr.mxu0 0.0
        %1051 = vmatpush1.msra.mxu0 0.0
        %1052 = vmatprep.subr.mxu0 0.0
        %1053 = vmatpush1.msra.mxu0 0.0
        %1054 = vmatprep.subr.mxu0 0.0
        %1055 = vmatpush1.msra.mxu0 0.0
        %1056 = vmatprep.mubr.f32.mxu0 0.0
        %1057 = vmatmul.mubr.f32.gmra.mrb[0].mxu0 %v990
        %v1058 = vpop.f32.mrb[0].mxu0
        %v1059 = vadd.f32 %v675, %v1058
        %v1060 = vpop.f32.mrb[0].mxu0
        %v1061 = vadd.f32 %v679, %v1060
        %1062 = vdwg.mxu0
        %1063 = vmatprep.subr.mxu0 0.0
        %1064 = vmatpush1.msra.mxu0 %v660
        %1065 = vmatprep.subr.mxu0 0.0
        %1066 = vmatpush1.msra.mxu0 %v663
        %1067 = vmatprep.subr.mxu0 0.0
        %1068 = vmatpush1.msra.mxu0 %v666
        %1069 = vmatprep.subr.mxu0 0.0
        %1070 = vmatpush1.msra.mxu0 %v669
        %1071 = vmatprep.subr.mxu0 0.0
        %1072 = vmatpush1.msra.mxu0 0.0
        %1073 = vmatprep.subr.mxu0 0.0
        %1074 = vmatpush1.msra.mxu0 0.0
        %1075 = vmatprep.subr.mxu0 0.0
        %1076 = vmatpush1.msra.mxu0 0.0
        %1077 = vmatprep.subr.mxu0 0.0
        %1078 = vmatpush1.msra.mxu0 0.0
        %1079 = vmatprep.subr.mxu0 0.0
        %1080 = vmatpush1.msra.mxu0 0.0
        %1081 = vmatprep.subr.mxu0 0.0
        %1082 = vmatpush1.msra.mxu0 0.0
        %1083 = vmatprep.subr.mxu0 0.0
        %1084 = vmatpush1.msra.mxu0 0.0
        %1085 = vmatprep.subr.mxu0 0.0
        %1086 = vmatpush1.msra.mxu0 0.0
        %1087 = vmatprep.subr.mxu0 0.0
        %1088 = vmatpush1.msra.mxu0 0.0
        %1089 = vmatprep.subr.mxu0 0.0
        %1090 = vmatpush1.msra.mxu0 0.0
        %1091 = vmatprep.subr.mxu0 0.0
        %1092 = vmatpush1.msra.mxu0 0.0
        %1093 = vmatprep.subr.mxu0 0.0
        %1094 = vmatpush1.msra.mxu0 0.0
        %1095 = vmatprep.subr.mxu0 0.0
        %1096 = vmatpush1.msra.mxu0 0.0
        %1097 = vmatprep.subr.mxu0 0.0
        %1098 = vmatpush1.msra.mxu0 0.0
        %1099 = vmatprep.subr.mxu0 0.0
        %1100 = vmatpush1.msra.mxu0 0.0
        %1101 = vmatprep.subr.mxu0 0.0
        %1102 = vmatpush1.msra.mxu0 0.0
        %1103 = vmatprep.subr.mxu0 0.0
        %1104 = vmatpush1.msra.mxu0 0.0
        %1105 = vmatprep.subr.mxu0 0.0
        %1106 = vmatpush1.msra.mxu0 0.0
        %1107 = vmatprep.subr.mxu0 0.0
        %1108 = vmatpush1.msra.mxu0 0.0
        %1109 = vmatprep.subr.mxu0 0.0
        %1110 = vmatpush1.msra.mxu0 0.0
        %1111 = vmatprep.subr.mxu0 0.0
        %1112 = vmatpush1.msra.mxu0 0.0
        %1113 = vmatprep.subr.mxu0 0.0
        %1114 = vmatpush1.msra.mxu0 0.0
        %1115 = vmatprep.subr.mxu0 0.0
        %1116 = vmatpush1.msra.mxu0 0.0
        %1117 = vmatprep.subr.mxu0 0.0
        %1118 = vmatpush1.msra.mxu0 0.0
        %1119 = vmatprep.subr.mxu0 0.0
        %1120 = vmatpush1.msra.mxu0 0.0
        %1121 = vmatprep.subr.mxu0 0.0
        %1122 = vmatpush1.msra.mxu0 0.0
        %1123 = vmatprep.subr.mxu0 0.0
        %1124 = vmatpush1.msra.mxu0 0.0
        %1125 = vmatprep.subr.mxu0 0.0
        %1126 = vmatpush1.msra.mxu0 0.0
        %1127 = vmatprep.mubr.f32.mxu0 0.0
        %1128 = vmatmul.mubr.f32.gmra.mrb[0].mxu0 %v990
        %v1129 = vpop.f32.mrb[0].mxu0
        %v1130 = vadd.f32 %v683, %v1129
        %v1131 = vpop.f32.mrb[0].mxu0
        %1132 = vdwg.mxu0
        %v1133 = vadd.f32 %v758, %v1059
        %v1134 = vadd.f32 %v760, %v1061
        %v1135 = vadd.f32 %v829, %v1130
        %v1136 = vxor.u32 %v1133, 2147483648
        %v1137 = vxor.u32 %v1134, 2147483648
        %v1138 = vxor.u32 %v1135, 2147483648
        %v1139 = vmul.f32 %v1136, 1.442695
        %v1140 = vpow.pop %v1139
        %v1141 = vmul.f32 %v1137, 1.442695
        %v1142 = vpow.pop %v1141
        %v1143 = vmul.f32 %v1138, 1.442695
        %v1144 = vpow.pop %v1143
        %v1145 = vadd.f32 %v1140, 1.0
        %v1146 = vadd.f32 %v1142, 1.0
        %v1147 = vadd.f32 %v1144, 1.0
        %v1148 = vrcp.pop %v1145
        %v1149 = vmul.f32 1.0, %v1148
        %v1150 = vrcp.pop %v1146
        %v1151 = vmul.f32 1.0, %v1150
        %v1152 = vrcp.pop %v1147
        %v1153 = vmul.f32 1.0, %v1152
        %v1157 = vcombine.low %v1149, %v1151
        %v1159 = vunpack.c.l.s4 1966171168
        %v1160 = vunpack.c.0.s8 %v1159
        %v1161 = vlaneseq
        %v1162 = vshrl.u32 %v1161, 7
        %v1163 = vsub.s32 %v1160, %v1162
        %v1164 = vrot.slane %v1157, %v1163
        %v1166 = vunpack.c.l.s4 1966171168
        %v1167 = vunpack.c.0.s8 %v1166
        %v1168 = vlaneseq
        %v1169 = vshrl.u32 %v1168, 7
        %v1170 = vsub.s32 %v1167, %v1169
        %v1171 = vrot.slane %v1153, %v1170
        %v1172 = vcombine.low %v1164, %v1171
        %v1174 = vunpack.c.l.s4 1966171168
        %v1175 = vunpack.c.0.s8 %v1174
        %v1176 = vlaneseq
        %v1177 = vshrl.u32 %v1176, 7
        %v1178 = vsub.s32 %v1175, %v1177
        %v1179 = vrot.slane %v1172, %v1178
        %1181 = vst.msk [vmem:[%s253] sm:$0x7] %vm375, %v1179
      $region48: #{_lambda_.10} parent=39 // pred_fallthru
        _
      %p1182 = scmp.lt.s32.totalorder %s20, 1
      %s1183 = scalar_select %p1182, %s20, 1
      %s1184 = smul.addr %s1183, 3
      %s1185 = scalar_lea.vmem %s5, %s1184
      // Predicated region
      $region49: #{_lambda_.10} parent=39 // pred_check
        %p1186 = pneg %p158
      $region50: #{_lambda_.10} parent=39 // pred_check_branch
        %1188 = sbr.rel (%p1186) target = $region52
      $region51: #{_lambda_.10} parent=39 // pred_region
        _
      $region52: #{_lambda_.10} parent=39 // pred_fallthru
        _
    $region40: #{_lambda_.10} parent=5 // pred_fallthru
      _
    %p1189 = scmp.le.s32.totalorder 2, %s11
    // Predicated region
    $region53: #{_lambda_.10} parent=5 // pred_check
      %p1190 = pneg %p1189
    $region54: #{_lambda_.10} parent=5 // pred_check_branch
      %1192 = sbr.rel (%p1190) target = $region56
    $region55: #{_lambda_.10} parent=5 // pred_region
      %s1193 = ssub.s32 %s11, 2
      // Predicated region
      $region57: #{_lambda_.10} parent=55 // pred_check
        %p1194 = pneg %p164
      $region58: #{_lambda_.10} parent=55 // pred_check_branch
        %1196 = sbr.rel (%p1194) target = $region60
      $region59: #{_lambda_.10} parent=55 // pred_region
        %p1197 = scmp.lt.s32.totalorder %s22, 1
        %s1198 = scalar_select %p1197, %s22, 1
        %s1199 = smul.addr %s1198, 3
        %s1200 = scalar_lea.vmem %s5, %s1199
      $region60: #{_lambda_.10} parent=55 // pred_fallthru
        _
    $region56: #{_lambda_.10} parent=5 // pred_fallthru
      _
  $region6: #{_lambda_.10} parent=0 // loop_footer
    %s15 = sadd.s32 1, %s11
  $region7: #{_lambda_.10} parent=0 // loop_footer_branch
    %10 = sbr.rel target = $region3
  $region8: #{_lambda_.10} parent=0 // loop_exit
    _

// kernel: _lambda_.9
$region0: #{_lambda_.9}
  #allocation0 [shape = 'u32[]', space=smem, size = 0x4, offset = 0x4, fixed_abs, tag = 'smem constant byte address 0x4 - core index']
  #allocation1 [shape = 'u32[144,128]{1,0:T(1,128)}', space=vmem, size = 0x12000, scoped, tag = 'internal scratch']
  #allocation2 [shape = 'bf16[128,128]{1,0:T(16,128)(2,1)}', space=vmem, size = 0x8000, scoped, tag = 'scratch operand']
  %s0 = inlined_call_operand.vmem [shape: bf16[128,128], index: 0, kind: input, shape index: {}]
  %s1 = inlined_call_operand.vmem [shape: bf16[128,80], index: 1, kind: input, shape index: {}]
  %s2 = inlined_call_operand.vmem [shape: bf16[128,64], index: 2, kind: input, shape index: {}]
  %s3 = inlined_call_operand.vmem [shape: bf16[128,384], index: 3, kind: input, shape index: {}]
  %s4 = inlined_call_operand.vmem [shape: f32[1,384], index: 4, kind: input, shape index: {}]
  %s5 = inlined_call_operand.vmem [shape: bf16[128,384], index: 5, kind: output, shape index: {}]
  %s6 = sld [smem:[#allocation0]]
  $region30: #{_lambda_.9} parent=0
    _
  %s8 = ssub.s32 1, %s6
  %s9 = scalar_select 0, %s8, %s6
  // Predicated region
  $region2: #{_lambda_.9} parent=0 // pred_check
    _
  $region3: #{_lambda_.9} parent=0 // pred_check_branch
    %11 = sbr.rel (0) target = $region5
  $region4: #{_lambda_.9} parent=0 // pred_region
    _
  $region5: #{_lambda_.9} parent=0 // pred_fallthru
    _
  // Predicated region
  $region6: #{_lambda_.9} parent=0 // pred_check
    _
  $region7: #{_lambda_.9} parent=0 // pred_check_branch
    %13 = sbr.rel (0) target = $region9
  $region8: #{_lambda_.9} parent=0 // pred_region
    _
  $region9: #{_lambda_.9} parent=0 // pred_fallthru
    _
  // Predicated region
  $region10: #{_lambda_.9} parent=0 // pred_check
    _
  $region11: #{_lambda_.9} parent=0 // pred_check_branch
    %15 = sbr.rel (0) target = $region13
  $region12: #{_lambda_.9} parent=0 // pred_region
    _
  $region13: #{_lambda_.9} parent=0 // pred_fallthru
    _
  // Predicated region
  $region14: #{_lambda_.9} parent=0 // pred_check
    _
  $region15: #{_lambda_.9} parent=0 // pred_check_branch
    %17 = sbr.rel (0) target = $region17
  $region16: #{_lambda_.9} parent=0 // pred_region
    _
  $region17: #{_lambda_.9} parent=0 // pred_fallthru
    _
  // Predicated region
  $region18: #{_lambda_.9} parent=0 // pred_check
    _
  $region19: #{_lambda_.9} parent=0 // pred_check_branch
    %19 = sbr.rel (0) target = $region21
  $region20: #{_lambda_.9} parent=0 // pred_region
    _
  $region21: #{_lambda_.9} parent=0 // pred_fallthru
    _
  %v21 = vld [vmem:[%s2] sm:$0xf]
  %v22 = vld [vmem:[%s2 + $0x4] sm:$0xf]
  %v23 = vld [vmem:[%s2 + $0x8] sm:$0xf]
  %v24 = vld [vmem:[%s2 + $0xc] sm:$0xf]
  %v25 = vld [vmem:[%s2 + $0x10] sm:$0xf]
  %v26 = vld [vmem:[%s2 + $0x14] sm:$0xf]
  %v27 = vld [vmem:[%s2 + $0x18] sm:$0xf]
  %v28 = vld [vmem:[%s2 + $0x1c] sm:$0xf]
  %v29 = vld [vmem:[%s2 + $0x20] sm:$0xf]
  %v30 = vld [vmem:[%s2 + $0x24] sm:$0xf]
  %v31 = vld [vmem:[%s2 + $0x28] sm:$0xf]
  %v32 = vld [vmem:[%s2 + $0x2c] sm:$0xf]
  %v33 = vld [vmem:[%s2 + $0x30] sm:$0xf]
  %v34 = vld [vmem:[%s2 + $0x34] sm:$0xf]
  %v35 = vld [vmem:[%s2 + $0x38] sm:$0xf]
  %v36 = vld [vmem:[%s2 + $0x3c] sm:$0xf]
  %v53 = vunpack.c.l.b16 %v21
  %v54 = vunpack.c.l.b16 %v22
  %v55 = vunpack.c.l.b16 %v23
  %v56 = vunpack.c.l.b16 %v24
  %v57 = vunpack.c.l.b16 %v25
  %v58 = vunpack.c.l.b16 %v26
  %v59 = vunpack.c.l.b16 %v27
  %v60 = vunpack.c.l.b16 %v28
  %v61 = vunpack.c.l.b16 %v29
  %v62 = vunpack.c.l.b16 %v30
  %v63 = vunpack.c.l.b16 %v31
  %v64 = vunpack.c.l.b16 %v32
  %v65 = vunpack.c.l.b16 %v33
  %v66 = vunpack.c.l.b16 %v34
  %v67 = vunpack.c.l.b16 %v35
  %v68 = vunpack.c.l.b16 %v36
  %v69 = vpack.c.b16 %v54, %v53
  %v70 = vpack.c.b16 %v56, %v55
  %v71 = vpack.c.b16 %v58, %v57
  %v72 = vpack.c.b16 %v60, %v59
  %v73 = vpack.c.b16 %v62, %v61
  %v74 = vpack.c.b16 %v64, %v63
  %v75 = vpack.c.b16 %v66, %v65
  %v76 = vpack.c.b16 %v68, %v67
  %vm85 = vcmask 523264
  %86 = vst.msk [vmem:[#allocation2] sm:$0xff] %vm85, %v69
  %87 = vst.msk [vmem:[#allocation2 + $0x8] sm:$0xff] %vm85, %v70
  %88 = vst.msk [vmem:[#allocation2 + $0x10] sm:$0xff] %vm85, %v71
  %89 = vst.msk [vmem:[#allocation2 + $0x18] sm:$0xff] %vm85, %v72
  %90 = vst.msk [vmem:[#allocation2 + $0x20] sm:$0xff] %vm85, %v73
  %91 = vst.msk [vmem:[#allocation2 + $0x28] sm:$0xff] %vm85, %v74
  %92 = vst.msk [vmem:[#allocation2 + $0x30] sm:$0xff] %vm85, %v75
  %93 = vst.msk [vmem:[#allocation2 + $0x38] sm:$0xff] %vm85, %v76
  %v94 = vld [vmem:[%s1] sm:$0xf]
  %v95 = vld [vmem:[%s1 + $0x4] sm:$0xf]
  %v96 = vld [vmem:[%s1 + $0x8] sm:$0xf]
  %v97 = vld [vmem:[%s1 + $0xc] sm:$0xf]
  %v98 = vld [vmem:[%s1 + $0x10] sm:$0xf]
  %v99 = vld [vmem:[%s1 + $0x14] sm:$0xf]
  %v100 = vld [vmem:[%s1 + $0x18] sm:$0xf]
  %v101 = vld [vmem:[%s1 + $0x1c] sm:$0xf]
  %v102 = vld [vmem:[%s1 + $0x20] sm:$0xf]
  %v103 = vld [vmem:[%s1 + $0x24] sm:$0xf]
  %v104 = vld [vmem:[%s1 + $0x28] sm:$0xf]
  %v105 = vld [vmem:[%s1 + $0x2c] sm:$0xf]
  %v106 = vld [vmem:[%s1 + $0x30] sm:$0xf]
  %v107 = vld [vmem:[%s1 + $0x34] sm:$0xf]
  %v108 = vld [vmem:[%s1 + $0x38] sm:$0xf]
  %v109 = vld [vmem:[%s1 + $0x3c] sm:$0xf]
  %v126 = vunpack.c.l.b16 %v94
  %v127 = vunpack.c.l.b16 %v95
  %v128 = vunpack.c.l.b16 %v96
  %v129 = vunpack.c.l.b16 %v97
  %v130 = vunpack.c.l.b16 %v98
  %v131 = vunpack.c.l.b16 %v99
  %v132 = vunpack.c.l.b16 %v100
  %v133 = vunpack.c.l.b16 %v101
  %v134 = vunpack.c.l.b16 %v102
  %v135 = vunpack.c.l.b16 %v103
  %v136 = vunpack.c.l.b16 %v104
  %v137 = vunpack.c.l.b16 %v105
  %v138 = vunpack.c.l.b16 %v106
  %v139 = vunpack.c.l.b16 %v107
  %v140 = vunpack.c.l.b16 %v108
  %v141 = vunpack.c.l.b16 %v109
  %v142 = vpack.c.b16 %v127, %v126
  %v143 = vpack.c.b16 %v129, %v128
  %v144 = vpack.c.b16 %v131, %v130
  %v145 = vpack.c.b16 %v133, %v132
  %v146 = vpack.c.b16 %v135, %v134
  %v147 = vpack.c.b16 %v137, %v136
  %v148 = vpack.c.b16 %v139, %v138
  %v149 = vpack.c.b16 %v141, %v140
  %150 = vrot.lane.b32.xlu0 %v142, 16
  %v151 = vpop.permute.xlu0 %150
  %152 = vrot.lane.b32.xlu0 %v143, 16
  %v153 = vpop.permute.xlu0 %152
  %154 = vrot.lane.b32.xlu0 %v144, 16
  %v155 = vpop.permute.xlu0 %154
  %156 = vrot.lane.b32.xlu0 %v145, 16
  %v157 = vpop.permute.xlu0 %156
  %158 = vrot.lane.b32.xlu0 %v146, 16
  %v159 = vpop.permute.xlu0 %158
  %160 = vrot.lane.b32.xlu0 %v147, 16
  %v161 = vpop.permute.xlu0 %160
  %162 = vrot.lane.b32.xlu0 %v148, 16
  %v163 = vpop.permute.xlu0 %162
  %164 = vrot.lane.b32.xlu0 %v149, 16
  %v165 = vpop.permute.xlu0 %164
  %vm174 = vcmask 785920
  %175 = vst.msk [vmem:[#allocation2] sm:$0xff] %vm174, %v151
  %176 = vst.msk [vmem:[#allocation2 + $0x8] sm:$0xff] %vm174, %v153
  %177 = vst.msk [vmem:[#allocation2 + $0x10] sm:$0xff] %vm174, %v155
  %178 = vst.msk [vmem:[#allocation2 + $0x18] sm:$0xff] %vm174, %v157
  %179 = vst.msk [vmem:[#allocation2 + $0x20] sm:$0xff] %vm174, %v159
  %180 = vst.msk [vmem:[#allocation2 + $0x28] sm:$0xff] %vm174, %v161
  %181 = vst.msk [vmem:[#allocation2 + $0x30] sm:$0xff] %vm174, %v163
  %182 = vst.msk [vmem:[#allocation2 + $0x38] sm:$0xff] %vm174, %v165
  %v183 = vld [vmem:[%s0] sm:$0xf]
  %v184 = vld [vmem:[%s0 + $0x4] sm:$0xf]
  %v185 = vld [vmem:[%s0 + $0x8] sm:$0xf]
  %v186 = vld [vmem:[%s0 + $0xc] sm:$0xf]
  %v187 = vld [vmem:[%s0 + $0x10] sm:$0xf]
  %v188 = vld [vmem:[%s0 + $0x14] sm:$0xf]
  %v189 = vld [vmem:[%s0 + $0x18] sm:$0xf]
  %v190 = vld [vmem:[%s0 + $0x1c] sm:$0xf]
  %v191 = vld [vmem:[%s0 + $0x20] sm:$0xf]
  %v192 = vld [vmem:[%s0 + $0x24] sm:$0xf]
  %v193 = vld [vmem:[%s0 + $0x28] sm:$0xf]
  %v194 = vld [vmem:[%s0 + $0x2c] sm:$0xf]
  %v195 = vld [vmem:[%s0 + $0x30] sm:$0xf]
  %v196 = vld [vmem:[%s0 + $0x34] sm:$0xf]
  %v197 = vld [vmem:[%s0 + $0x38] sm:$0xf]
  %v198 = vld [vmem:[%s0 + $0x3c] sm:$0xf]
  %v215 = vunpack.c.l.b16 %v183
  %v216 = vunpack.c.l.b16 %v184
  %v217 = vunpack.c.l.b16 %v185
  %v218 = vunpack.c.l.b16 %v186
  %v219 = vunpack.c.l.b16 %v187
  %v220 = vunpack.c.l.b16 %v188
  %v221 = vunpack.c.l.b16 %v189
  %v222 = vunpack.c.l.b16 %v190
  %v223 = vunpack.c.l.b16 %v191
  %v224 = vunpack.c.l.b16 %v192
  %v225 = vunpack.c.l.b16 %v193
  %v226 = vunpack.c.l.b16 %v194
  %v227 = vunpack.c.l.b16 %v195
  %v228 = vunpack.c.l.b16 %v196
  %v229 = vunpack.c.l.b16 %v197
  %v230 = vunpack.c.l.b16 %v198
  %v231 = vpack.c.b16 %v216, %v215
  %v232 = vpack.c.b16 %v218, %v217
  %v233 = vpack.c.b16 %v220, %v219
  %v234 = vpack.c.b16 %v222, %v221
  %v235 = vpack.c.b16 %v224, %v223
  %v236 = vpack.c.b16 %v226, %v225
  %v237 = vpack.c.b16 %v228, %v227
  %v238 = vpack.c.b16 %v230, %v229
  %239 = vrot.lane.b32.xlu0 %v231, 32
  %v240 = vpop.permute.xlu0 %239
  %241 = vrot.lane.b32.xlu0 %v232, 32
  %v242 = vpop.permute.xlu0 %241
  %243 = vrot.lane.b32.xlu0 %v233, 32
  %v244 = vpop.permute.xlu0 %243
  %245 = vrot.lane.b32.xlu0 %v234, 32
  %v246 = vpop.permute.xlu0 %245
  %247 = vrot.lane.b32.xlu0 %v235, 32
  %v248 = vpop.permute.xlu0 %247
  %249 = vrot.lane.b32.xlu0 %v236, 32
  %v250 = vpop.permute.xlu0 %249
  %251 = vrot.lane.b32.xlu0 %v237, 32
  %v252 = vpop.permute.xlu0 %251
  %253 = vrot.lane.b32.xlu0 %v238, 32
  %v254 = vpop.permute.xlu0 %253
  %vm263 = vcmask 1048320
  %264 = vst.msk [vmem:[#allocation2] sm:$0xff] %vm263, %v240
  %265 = vst.msk [vmem:[#allocation2 + $0x8] sm:$0xff] %vm263, %v242
  %266 = vst.msk [vmem:[#allocation2 + $0x10] sm:$0xff] %vm263, %v244
  %267 = vst.msk [vmem:[#allocation2 + $0x18] sm:$0xff] %vm263, %v246
  %268 = vst.msk [vmem:[#allocation2 + $0x20] sm:$0xff] %vm263, %v248
  %269 = vst.msk [vmem:[#allocation2 + $0x28] sm:$0xff] %vm263, %v250
  %270 = vst.msk [vmem:[#allocation2 + $0x30] sm:$0xff] %vm263, %v252
  %271 = vst.msk [vmem:[#allocation2 + $0x38] sm:$0xff] %vm263, %v254
  %v272 = vld [vmem:[#allocation2] sm:$0xff]
  %v273 = vld [vmem:[#allocation2 + $0x8] sm:$0xff]
  %v274 = vld [vmem:[#allocation2 + $0x10] sm:$0xff]
  %v275 = vld [vmem:[#allocation2 + $0x18] sm:$0xff]
  %v276 = vld [vmem:[#allocation2 + $0x20] sm:$0xff]
  %v277 = vld [vmem:[#allocation2 + $0x28] sm:$0xff]
  %v278 = vld [vmem:[#allocation2 + $0x30] sm:$0xff]
  %v279 = vld [vmem:[#allocation2 + $0x38] sm:$0xff]
  %v280 = vld [vmem:[%s3] sm:$0xff]
  %v281 = vld [vmem:[%s3 + $0x8] sm:$0xf]
  %v282 = vld [vmem:[%s3 + $0xc] sm:$0xff]
  %v283 = vld [vmem:[%s3 + $0x14] sm:$0xf]
  %v284 = vld [vmem:[%s3 + $0x18] sm:$0xff]
  %v285 = vld [vmem:[%s3 + $0x20] sm:$0xf]
  %v286 = vld [vmem:[%s3 + $0x24] sm:$0xff]
  %v287 = vld [vmem:[%s3 + $0x2c] sm:$0xf]
  %v288 = vld [vmem:[%s3 + $0x30] sm:$0xff]
  %v289 = vld [vmem:[%s3 + $0x38] sm:$0xf]
  %v290 = vld [vmem:[%s3 + $0x3c] sm:$0xff]
  %v291 = vld [vmem:[%s3 + $0x44] sm:$0xf]
  %v292 = vld [vmem:[%s3 + $0x48] sm:$0xff]
  %v293 = vld [vmem:[%s3 + $0x50] sm:$0xf]
  %v294 = vld [vmem:[%s3 + $0x54] sm:$0xff]
  %v295 = vld [vmem:[%s3 + $0x5c] sm:$0xf]
  %v296 = vld [vmem:[%s3 + $0x60] sm:$0xff]
  %v297 = vld [vmem:[%s3 + $0x68] sm:$0xf]
  %v298 = vld [vmem:[%s3 + $0x6c] sm:$0xff]
  %v299 = vld [vmem:[%s3 + $0x74] sm:$0xf]
  %v300 = vld [vmem:[%s3 + $0x78] sm:$0xff]
  %v301 = vld [vmem:[%s3 + $0x80] sm:$0xf]
  %v302 = vld [vmem:[%s3 + $0x84] sm:$0xff]
  %v303 = vld [vmem:[%s3 + $0x8c] sm:$0xf]
  %v304 = vld [vmem:[%s3 + $0x90] sm:$0xff]
  %v305 = vld [vmem:[%s3 + $0x98] sm:$0xf]
  %v306 = vld [vmem:[%s3 + $0x9c] sm:$0xff]
  %v307 = vld [vmem:[%s3 + $0xa4] sm:$0xf]
  %v308 = vld [vmem:[%s3 + $0xa8] sm:$0xff]
  %v309 = vld [vmem:[%s3 + $0xb0] sm:$0xf]
  %v310 = vld [vmem:[%s3 + $0xb4] sm:$0xff]
  %v311 = vld [vmem:[%s3 + $0xbc] sm:$0xf]
  %v312 = vld [vmem:[%s4] sm:$0x7]
  %v314 = vlaneseq
  %v315 = vshrl.u32 %v314, 7
  %v316 = vsub.s32 0, %v315
  %v317 = vrot.slane %v312, %v316
  %v318 = vlaneseq
  %v319 = vshrl.u32 %v318, 7
  %v320 = vsub.s32 1, %v319
  %v321 = vrot.slane %v312, %v320
  %v322 = vlaneseq
  %v323 = vshrl.u32 %v322, 7
  %v324 = vsub.s32 2, %v323
  %v325 = vrot.slane %v312, %v324
  %v361 = vunpack.c.l.b16 %v280
  %v362 = vunpack.c.h.b16 %v280
  %v363 = vunpack.c.l.b16 %v281
  %v364 = vunpack.c.l.b16 %v282
  %v365 = vunpack.c.h.b16 %v282
  %v366 = vunpack.c.l.b16 %v283
  %v367 = vunpack.c.l.b16 %v284
  %v368 = vunpack.c.h.b16 %v284
  %v369 = vunpack.c.l.b16 %v285
  %v370 = vunpack.c.l.b16 %v286
  %v371 = vunpack.c.h.b16 %v286
  %v372 = vunpack.c.l.b16 %v287
  %v373 = vunpack.c.l.b16 %v288
  %v374 = vunpack.c.h.b16 %v288
  %v375 = vunpack.c.l.b16 %v289
  %v376 = vunpack.c.l.b16 %v290
  %v377 = vunpack.c.h.b16 %v290
  %v378 = vunpack.c.l.b16 %v291
  %v379 = vunpack.c.l.b16 %v292
  %v380 = vunpack.c.h.b16 %v292
  %v381 = vunpack.c.l.b16 %v293
  %v382 = vunpack.c.l.b16 %v294
  %v383 = vunpack.c.h.b16 %v294
  %v384 = vunpack.c.l.b16 %v295
  %v385 = vunpack.c.l.b16 %v296
  %v386 = vunpack.c.h.b16 %v296
  %v387 = vunpack.c.l.b16 %v297
  %v388 = vunpack.c.l.b16 %v298
  %v389 = vunpack.c.h.b16 %v298
  %v390 = vunpack.c.l.b16 %v299
  %v391 = vunpack.c.l.b16 %v300
  %v392 = vunpack.c.h.b16 %v300
  %v393 = vunpack.c.l.b16 %v301
  %v394 = vunpack.c.l.b16 %v302
  %v395 = vunpack.c.h.b16 %v302
  %v396 = vunpack.c.l.b16 %v303
  %v397 = vunpack.c.l.b16 %v304
  %v398 = vunpack.c.h.b16 %v304
  %v399 = vunpack.c.l.b16 %v305
  %v400 = vunpack.c.l.b16 %v306
  %v401 = vunpack.c.h.b16 %v306
  %v402 = vunpack.c.l.b16 %v307
  %v403 = vunpack.c.l.b16 %v308
  %v404 = vunpack.c.h.b16 %v308
  %v405 = vunpack.c.l.b16 %v309
  %v406 = vunpack.c.l.b16 %v310
  %v407 = vunpack.c.h.b16 %v310
  %v408 = vunpack.c.l.b16 %v311
  %v409 = vpack.c.b16 %v364, %v361
  %v410 = vpack.c.b16 %v365, %v362
  %v411 = vpack.c.b16 %v366, %v363
  %v412 = vpack.c.b16 %v370, %v367
  %v413 = vpack.c.b16 %v371, %v368
  %v414 = vpack.c.b16 %v372, %v369
  %v415 = vpack.c.b16 %v376, %v373
  %v416 = vpack.c.b16 %v377, %v374
  %v417 = vpack.c.b16 %v378, %v375
  %v418 = vpack.c.b16 %v382, %v379
  %v419 = vpack.c.b16 %v383, %v380
  %v420 = vpack.c.b16 %v384, %v381
  %v421 = vpack.c.b16 %v388, %v385
  %v422 = vpack.c.b16 %v389, %v386
  %v423 = vpack.c.b16 %v390, %v387
  %v424 = vpack.c.b16 %v394, %v391
  %v425 = vpack.c.b16 %v395, %v392
  %v426 = vpack.c.b16 %v396, %v393
  %v427 = vpack.c.b16 %v400, %v397
  %v428 = vpack.c.b16 %v401, %v398
  %v429 = vpack.c.b16 %v402, %v399
  %v430 = vpack.c.b16 %v406, %v403
  %v431 = vpack.c.b16 %v407, %v404
  %v432 = vpack.c.b16 %v408, %v405
  %457 = vmatprep.subr.bf16.mxu0 %v410
  %458 = vmatpush1.bf16.msra.mxu0 %v409
  %459 = vmatprep.subr.bf16.mxu0 %v413
  %460 = vmatpush1.bf16.msra.mxu0 %v412
  %461 = vmatprep.subr.bf16.mxu0 %v416
  %462 = vmatpush1.bf16.msra.mxu0 %v415
  %463 = vmatprep.subr.bf16.mxu0 %v419
  %464 = vmatpush1.bf16.msra.mxu0 %v418
  %465 = vmatprep.subr.bf16.mxu0 %v422
  %466 = vmatpush1.bf16.msra.mxu0 %v421
  %467 = vmatprep.subr.bf16.mxu0 %v425
  %468 = vmatpush1.bf16.msra.mxu0 %v424
  %469 = vmatprep.subr.bf16.mxu0 %v428
  %470 = vmatpush1.bf16.msra.mxu0 %v427
  %471 = vmatprep.subr.bf16.mxu0 %v431
  %472 = vmatpush1.bf16.msra.mxu0 %v430
  %473 = vmatprep.subr.bf16.mxu0 0
  %474 = vmatpush1.bf16.msra.mxu0 0
  %475 = vmatprep.subr.bf16.mxu0 0
  %476 = vmatpush1.bf16.msra.mxu0 0
  %477 = vmatprep.subr.bf16.mxu0 0
  %478 = vmatpush1.bf16.msra.mxu0 0
  %479 = vmatprep.subr.bf16.mxu0 0
  %480 = vmatpush1.bf16.msra.mxu0 0
  %481 = vmatprep.subr.bf16.mxu0 0
  %482 = vmatpush1.bf16.msra.mxu0 0
  %483 = vmatprep.subr.bf16.mxu0 0
  %484 = vmatpush1.bf16.msra.mxu0 0
  %485 = vmatprep.subr.bf16.mxu0 0
  %486 = vmatpush1.bf16.msra.mxu0 0
  %487 = vmatprep.subr.bf16.mxu0 0
  %488 = vmatpush1.bf16.msra.mxu0 0
  %489 = vmatprep.mubr.bf16.mxu0 0
  %490 = vmatmul.mubr.bf16.gmra.mrb[0].mxu0 %v272
  %v491 = vpop.f32.mrb[0].mxu0
  %v492 = vadd.f32 %v317, %v491
  %v493 = vpop.f32.mrb[0].mxu0
  %v494 = vadd.f32 %v321, %v493
  %v495 = vpop.f32.mrb[0].mxu0
  %v496 = vadd.f32 %v317, %v495
  %v497 = vpop.f32.mrb[0].mxu0
  %v498 = vadd.f32 %v321, %v497
  %499 = vmatprep.mubr.bf16.mxu0 0
  %500 = vmatmul.mubr.bf16.gmra.mrb[0].mxu0 %v273
  %v501 = vpop.f32.mrb[0].mxu0
  %v502 = vadd.f32 %v317, %v501
  %v503 = vpop.f32.mrb[0].mxu0
  %v504 = vadd.f32 %v321, %v503
  %v505 = vpop.f32.mrb[0].mxu0
  %v506 = vadd.f32 %v317, %v505
  %v507 = vpop.f32.mrb[0].mxu0
  %v508 = vadd.f32 %v321, %v507
  %509 = vmatprep.mubr.bf16.mxu0 0
  %510 = vmatmul.mubr.bf16.gmra.mrb[0].mxu0 %v274
  %v511 = vpop.f32.mrb[0].mxu0
  %v512 = vadd.f32 %v317, %v511
  %v513 = vpop.f32.mrb[0].mxu0
  %v514 = vadd.f32 %v321, %v513
  %v515 = vpop.f32.mrb[0].mxu0
  %v516 = vadd.f32 %v317, %v515
  %v517 = vpop.f32.mrb[0].mxu0
  %v518 = vadd.f32 %v321, %v517
  %519 = vmatprep.mubr.bf16.mxu0 0
  %520 = vmatmul.mubr.bf16.gmra.mrb[0].mxu0 %v275
  %v521 = vpop.f32.mrb[0].mxu0
  %v522 = vadd.f32 %v317, %v521
  %v523 = vpop.f32.mrb[0].mxu0
  %v524 = vadd.f32 %v321, %v523
  %v525 = vpop.f32.mrb[0].mxu0
  %v526 = vadd.f32 %v317, %v525
  %v527 = vpop.f32.mrb[0].mxu0
  %v528 = vadd.f32 %v321, %v527
  %529 = vmatprep.mubr.bf16.mxu0 0
  %530 = vmatmul.mubr.bf16.gmra.mrb[0].mxu0 %v276
  %v531 = vpop.f32.mrb[0].mxu0
  %v532 = vadd.f32 %v317, %v531
  %v533 = vpop.f32.mrb[0].mxu0
  %v534 = vadd.f32 %v321, %v533
  %v535 = vpop.f32.mrb[0].mxu0
  %v536 = vadd.f32 %v317, %v535
  %v537 = vpop.f32.mrb[0].mxu0
  %v538 = vadd.f32 %v321, %v537
  %539 = vmatprep.mubr.bf16.mxu0 0
  %540 = vmatmul.mubr.bf16.gmra.mrb[0].mxu0 %v277
  %v541 = vpop.f32.mrb[0].mxu0
  %v542 = vadd.f32 %v317, %v541
  %v543 = vpop.f32.mrb[0].mxu0
  %v544 = vadd.f32 %v321, %v543
  %v545 = vpop.f32.mrb[0].mxu0
  %v546 = vadd.f32 %v317, %v545
  %v547 = vpop.f32.mrb[0].mxu0
  %v548 = vadd.f32 %v321, %v547
  %549 = vmatprep.mubr.bf16.mxu0 0
  %550 = vmatmul.mubr.bf16.gmra.mrb[0].mxu0 %v278
  %v551 = vpop.f32.mrb[0].mxu0
  %v552 = vadd.f32 %v317, %v551
  %v553 = vpop.f32.mrb[0].mxu0
  %v554 = vadd.f32 %v321, %v553
  %v555 = vpop.f32.mrb[0].mxu0
  %v556 = vadd.f32 %v317, %v555
  %v557 = vpop.f32.mrb[0].mxu0
  %v558 = vadd.f32 %v321, %v557
  %559 = vmatprep.mubr.bf16.mxu0 0
  %560 = vmatmul.mubr.bf16.gmra.mrb[0].mxu0 %v279
  %v561 = vpop.f32.mrb[0].mxu0
  %v562 = vadd.f32 %v317, %v561
  %v563 = vpop.f32.mrb[0].mxu0
  %v564 = vadd.f32 %v321, %v563
  %v565 = vpop.f32.mrb[0].mxu0
  %v566 = vadd.f32 %v317, %v565
  %v567 = vpop.f32.mrb[0].mxu0
  %v568 = vadd.f32 %v321, %v567
  %569 = vdwg.mxu0
  %570 = vmatprep.subr.bf16.mxu0 0
  %571 = vmatpush1.bf16.msra.mxu0 %v411
  %572 = vmatprep.subr.bf16.mxu0 0
  %573 = vmatpush1.bf16.msra.mxu0 %v414
  %574 = vmatprep.subr.bf16.mxu0 0
  %575 = vmatpush1.bf16.msra.mxu0 %v417
  %576 = vmatprep.subr.bf16.mxu0 0
  %577 = vmatpush1.bf16.msra.mxu0 %v420
  %578 = vmatprep.subr.bf16.mxu0 0
  %579 = vmatpush1.bf16.msra.mxu0 %v423
  %580 = vmatprep.subr.bf16.mxu0 0
  %581 = vmatpush1.bf16.msra.mxu0 %v426
  %582 = vmatprep.subr.bf16.mxu0 0
  %583 = vmatpush1.bf16.msra.mxu0 %v429
  %584 = vmatprep.subr.bf16.mxu0 0
  %585 = vmatpush1.bf16.msra.mxu0 %v432
  %586 = vmatprep.subr.bf16.mxu0 0
  %587 = vmatpush1.bf16.msra.mxu0 0
  %588 = vmatprep.subr.bf16.mxu0 0
  %589 = vmatpush1.bf16.msra.mxu0 0
  %590 = vmatprep.subr.bf16.mxu0 0
  %591 = vmatpush1.bf16.msra.mxu0 0
  %592 = vmatprep.subr.bf16.mxu0 0
  %593 = vmatpush1.bf16.msra.mxu0 0
  %594 = vmatprep.subr.bf16.mxu0 0
  %595 = vmatpush1.bf16.msra.mxu0 0
  %596 = vmatprep.subr.bf16.mxu0 0
  %597 = vmatpush1.bf16.msra.mxu0 0
  %598 = vmatprep.subr.bf16.mxu0 0
  %599 = vmatpush1.bf16.msra.mxu0 0
  %600 = vmatprep.subr.bf16.mxu0 0
  %601 = vmatpush1.bf16.msra.mxu0 0
  %602 = vmatprep.mubr.bf16.mxu0 0
  %603 = vmatmul.mubr.bf16.gmra.mrb[0].mxu0 %v272
  %v604 = vpop.f32.mrb[0].mxu0
  %v605 = vadd.f32 %v325, %v604
  %v606 = vpop.f32.mrb[0].mxu0
  %v607 = vpop.f32.mrb[0].mxu0
  %v608 = vadd.f32 %v325, %v607
  %v609 = vpop.f32.mrb[0].mxu0
  %610 = vmatprep.mubr.bf16.mxu0 0
  %611 = vmatmul.mubr.bf16.gmra.mrb[0].mxu0 %v273
  %v612 = vpop.f32.mrb[0].mxu0
  %v613 = vadd.f32 %v325, %v612
  %v614 = vpop.f32.mrb[0].mxu0
  %v615 = vpop.f32.mrb[0].mxu0
  %v616 = vadd.f32 %v325, %v615
  %v617 = vpop.f32.mrb[0].mxu0
  %618 = vmatprep.mubr.bf16.mxu0 0
  %619 = vmatmul.mubr.bf16.gmra.mrb[0].mxu0 %v274
  %v620 = vpop.f32.mrb[0].mxu0
  %v621 = vadd.f32 %v325, %v620
  %v622 = vpop.f32.mrb[0].mxu0
  %v623 = vpop.f32.mrb[0].mxu0
  %v624 = vadd.f32 %v325, %v623
  %v625 = vpop.f32.mrb[0].mxu0
  %626 = vmatprep.mubr.bf16.mxu0 0
  %627 = vmatmul.mubr.bf16.gmra.mrb[0].mxu0 %v275
  %v628 = vpop.f32.mrb[0].mxu0
  %v629 = vadd.f32 %v325, %v628
  %v630 = vpop.f32.mrb[0].mxu0
  %v631 = vpop.f32.mrb[0].mxu0
  %v632 = vadd.f32 %v325, %v631
  %v633 = vpop.f32.mrb[0].mxu0
  %634 = vmatprep.mubr.bf16.mxu0 0
  %635 = vmatmul.mubr.bf16.gmra.mrb[0].mxu0 %v276
  %v636 = vpop.f32.mrb[0].mxu0
  %v637 = vadd.f32 %v325, %v636
  %v638 = vpop.f32.mrb[0].mxu0
  %v639 = vpop.f32.mrb[0].mxu0
  %v640 = vadd.f32 %v325, %v639
  %v641 = vpop.f32.mrb[0].mxu0
  %642 = vmatprep.mubr.bf16.mxu0 0
  %643 = vmatmul.mubr.bf16.gmra.mrb[0].mxu0 %v277
  %v644 = vpop.f32.mrb[0].mxu0
  %v645 = vadd.f32 %v325, %v644
  %v646 = vpop.f32.mrb[0].mxu0
  %v647 = vpop.f32.mrb[0].mxu0
  %v648 = vadd.f32 %v325, %v647
  %v649 = vpop.f32.mrb[0].mxu0
  %650 = vmatprep.mubr.bf16.mxu0 0
  %651 = vmatmul.mubr.bf16.gmra.mrb[0].mxu0 %v278
  %v652 = vpop.f32.mrb[0].mxu0
  %v653 = vadd.f32 %v325, %v652
  %v654 = vpop.f32.mrb[0].mxu0
  %v655 = vpop.f32.mrb[0].mxu0
  %v656 = vadd.f32 %v325, %v655
  %v657 = vpop.f32.mrb[0].mxu0
  %658 = vmatprep.mubr.bf16.mxu0 0
  %659 = vmatmul.mubr.bf16.gmra.mrb[0].mxu0 %v279
  %v660 = vpop.f32.mrb[0].mxu0
  %v661 = vadd.f32 %v325, %v660
  %v662 = vpop.f32.mrb[0].mxu0
  %v663 = vpop.f32.mrb[0].mxu0
  %v664 = vadd.f32 %v325, %v663
  %v665 = vpop.f32.mrb[0].mxu0
  %666 = vdwg.mxu0
  %v667 = vpack.c.bf16 %v496, %v492
  %v668 = vpack.c.bf16 %v498, %v494
  %v669 = vpack.c.bf16 %v608, %v605
  %v670 = vpack.c.bf16 %v506, %v502
  %v671 = vpack.c.bf16 %v508, %v504
  %v672 = vpack.c.bf16 %v616, %v613
  %v673 = vpack.c.bf16 %v516, %v512
  %v674 = vpack.c.bf16 %v518, %v514
  %v675 = vpack.c.bf16 %v624, %v621
  %v676 = vpack.c.bf16 %v526, %v522
  %v677 = vpack.c.bf16 %v528, %v524
  %v678 = vpack.c.bf16 %v632, %v629
  %v679 = vpack.c.bf16 %v536, %v532
  %v680 = vpack.c.bf16 %v538, %v534
  %v681 = vpack.c.bf16 %v640, %v637
  %v682 = vpack.c.bf16 %v546, %v542
  %v683 = vpack.c.bf16 %v548, %v544
  %v684 = vpack.c.bf16 %v648, %v645
  %v685 = vpack.c.bf16 %v556, %v552
  %v686 = vpack.c.bf16 %v558, %v554
  %v687 = vpack.c.bf16 %v656, %v653
  %v688 = vpack.c.bf16 %v566, %v562
  %v689 = vpack.c.bf16 %v568, %v564
  %v690 = vpack.c.bf16 %v664, %v661
  %v715 = vunpack.c.l.b16 %v667
  %v716 = vunpack.c.l.b16 %v668
  %v717 = vunpack.c.l.b16 %v669
  %v718 = vunpack.c.h.b16 %v667
  %v719 = vunpack.c.h.b16 %v668
  %v720 = vunpack.c.h.b16 %v669
  %v721 = vunpack.c.l.b16 %v670
  %v722 = vunpack.c.l.b16 %v671
  %v723 = vunpack.c.l.b16 %v672
  %v724 = vunpack.c.h.b16 %v670
  %v725 = vunpack.c.h.b16 %v671
  %v726 = vunpack.c.h.b16 %v672
  %v727 = vunpack.c.l.b16 %v673
  %v728 = vunpack.c.l.b16 %v674
  %v729 = vunpack.c.l.b16 %v675
  %v730 = vunpack.c.h.b16 %v673
  %v731 = vunpack.c.h.b16 %v674
  %v732 = vunpack.c.h.b16 %v675
  %v733 = vunpack.c.l.b16 %v676
  %v734 = vunpack.c.l.b16 %v677
  %v735 = vunpack.c.l.b16 %v678
  %v736 = vunpack.c.h.b16 %v676
  %v737 = vunpack.c.h.b16 %v677
  %v738 = vunpack.c.h.b16 %v678
  %v739 = vunpack.c.l.b16 %v679
  %v740 = vunpack.c.l.b16 %v680
  %v741 = vunpack.c.l.b16 %v681
  %v742 = vunpack.c.h.b16 %v679
  %v743 = vunpack.c.h.b16 %v680
  %v744 = vunpack.c.h.b16 %v681
  %v745 = vunpack.c.l.b16 %v682
  %v746 = vunpack.c.l.b16 %v683
  %v747 = vunpack.c.l.b16 %v684
  %v748 = vunpack.c.h.b16 %v682
  %v749 = vunpack.c.h.b16 %v683
  %v750 = vunpack.c.h.b16 %v684
  %v751 = vunpack.c.l.b16 %v685
  %v752 = vunpack.c.l.b16 %v686
  %v753 = vunpack.c.l.b16 %v687
  %v754 = vunpack.c.h.b16 %v685
  %v755 = vunpack.c.h.b16 %v686
  %v756 = vunpack.c.h.b16 %v687
  %v757 = vunpack.c.l.b16 %v688
  %v758 = vunpack.c.l.b16 %v689
  %v759 = vunpack.c.l.b16 %v690
  %v760 = vunpack.c.h.b16 %v688
  %v761 = vunpack.c.h.b16 %v689
  %v762 = vunpack.c.h.b16 %v690
  %v763 = vpack.c.b16 %v716, %v715
  %v764 = vpack.c.b16 %v717, %v717
  %v765 = vpack.c.b16 %v719, %v718
  %v766 = vpack.c.b16 %v720, %v720
  %v767 = vpack.c.b16 %v722, %v721
  %v768 = vpack.c.b16 %v723, %v723
  %v769 = vpack.c.b16 %v725, %v724
  %v770 = vpack.c.b16 %v726, %v726
  %v771 = vpack.c.b16 %v728, %v727
  %v772 = vpack.c.b16 %v729, %v729
  %v773 = vpack.c.b16 %v731, %v730
  %v774 = vpack.c.b16 %v732, %v732
  %v775 = vpack.c.b16 %v734, %v733
  %v776 = vpack.c.b16 %v735, %v735
  %v777 = vpack.c.b16 %v737, %v736
  %v778 = vpack.c.b16 %v738, %v738
  %v779 = vpack.c.b16 %v740, %v739
  %v780 = vpack.c.b16 %v741, %v741
  %v781 = vpack.c.b16 %v743, %v742
  %v782 = vpack.c.b16 %v744, %v744
  %v783 = vpack.c.b16 %v746, %v745
  %v784 = vpack.c.b16 %v747, %v747
  %v785 = vpack.c.b16 %v749, %v748
  %v786 = vpack.c.b16 %v750, %v750
  %v787 = vpack.c.b16 %v752, %v751
  %v788 = vpack.c.b16 %v753, %v753
  %v789 = vpack.c.b16 %v755, %v754
  %v790 = vpack.c.b16 %v756, %v756
  %v791 = vpack.c.b16 %v758, %v757
  %v792 = vpack.c.b16 %v759, %v759
  %v793 = vpack.c.b16 %v761, %v760
  %v794 = vpack.c.b16 %v762, %v762
  %827 = vst [vmem:[%s5] sm:$0xff] %v763
  %828 = vst [vmem:[%s5 + $0x8] sm:$0xf] %v764
  %829 = vst [vmem:[%s5 + $0xc] sm:$0xff] %v765
  %830 = vst [vmem:[%s5 + $0x14] sm:$0xf] %v766
  %831 = vst [vmem:[%s5 + $0x18] sm:$0xff] %v767
  %832 = vst [vmem:[%s5 + $0x20] sm:$0xf] %v768
  %833 = vst [vmem:[%s5 + $0x24] sm:$0xff] %v769
  %834 = vst [vmem:[%s5 + $0x2c] sm:$0xf] %v770
  %835 = vst [vmem:[%s5 + $0x30] sm:$0xff] %v771
  %836 = vst [vmem:[%s5 + $0x38] sm:$0xf] %v772
  %837 = vst [vmem:[%s5 + $0x3c] sm:$0xff] %v773
  %838 = vst [vmem:[%s5 + $0x44] sm:$0xf] %v774
  %839 = vst [vmem:[%s5 + $0x48] sm:$0xff] %v775
  %840 = vst [vmem:[%s5 + $0x50] sm:$0xf] %v776
  %841 = vst [vmem:[%s5 + $0x54] sm:$0xff] %v777
  %842 = vst [vmem:[%s5 + $0x5c] sm:$0xf] %v778
  %843 = vst [vmem:[%s5 + $0x60] sm:$0xff] %v779
  %844 = vst [vmem:[%s5 + $0x68] sm:$0xf] %v780
  %845 = vst [vmem:[%s5 + $0x6c] sm:$0xff] %v781
  %846 = vst [vmem:[%s5 + $0x74] sm:$0xf] %v782
  %847 = vst [vmem:[%s5 + $0x78] sm:$0xff] %v783
  %848 = vst [vmem:[%s5 + $0x80] sm:$0xf] %v784
  %849 = vst [vmem:[%s5 + $0x84] sm:$0xff] %v785
  %850 = vst [vmem:[%s5 + $0x8c] sm:$0xf] %v786
  %851 = vst [vmem:[%s5 + $0x90] sm:$0xff] %v787
  %852 = vst [vmem:[%s5 + $0x98] sm:$0xf] %v788
  %853 = vst [vmem:[%s5 + $0x9c] sm:$0xff] %v789
  %854 = vst [vmem:[%s5 + $0xa4] sm:$0xf] %v790
  %855 = vst [vmem:[%s5 + $0xa8] sm:$0xff] %v791
  %856 = vst [vmem:[%s5 + $0xb0] sm:$0xf] %v792
  %857 = vst [vmem:[%s5 + $0xb4] sm:$0xff] %v793
  %858 = vst [vmem:[%s5 + $0xbc] sm:$0xf] %v794
  // Predicated region
  $region22: #{_lambda_.9} parent=0 // pred_check
    _
  $region23: #{_lambda_.9} parent=0 // pred_check_branch
    %860 = sbr.rel (0) target = $region25
  $region24: #{_lambda_.9} parent=0 // pred_region
    _
  $region25: #{_lambda_.9} parent=0 // pred_fallthru
    _
  // Predicated region
  $region26: #{_lambda_.9} parent=0 // pred_check
    _
  $region27: #{_lambda_.9} parent=0 // pred_check_branch
    %862 = sbr.rel (0) target = $region29
  $region28: #{_lambda_.9} parent=0 // pred_region
    _
  $region29: #{_lambda_.9} parent=0 // pred_fallthru
    _

// kernel: _lambda_.8
$region0: #{_lambda_.8}
  #allocation0 [shape = 'u32[]', space=smem, size = 0x4, offset = 0x4, fixed_abs, tag = 'smem constant byte address 0x4 - core index']
  #allocation1 [shape = 'u32[144,128]{1,0:T(1,128)}', space=vmem, size = 0x12000, scoped, tag = 'internal scratch']
  #allocation2 [shape = 'bf16[64,432]{1,0:T(16,128)(2,1)}', space=vmem, size = 0x10000, scoped, tag = 'scratch operand']
  %s0 = inlined_call_operand.vmem [shape: bf16[2,10,10,80], index: 0, kind: input, shape index: {}]
  %s1 = inlined_call_operand.vmem [shape: bf16[432,64], index: 1, kind: input, shape index: {}]
  %s2 = inlined_call_operand.vmem [shape: f32[1,64], index: 2, kind: input, shape index: {}]
  %s3 = inlined_call_operand.vmem [shape: bf16[2,8,8,64], index: 3, kind: output, shape index: {}]
  %s4 = sld [smem:[#allocation0]]
  $region45: #{_lambda_.8} parent=0
    _
  %s6 = ssub.s32 1, %s4
  %s7 = scalar_select 0, %s6, %s4
  loop: start=0, step=1, limit=4
  $region2: #{_lambda_.8} parent=0 // loop_pre_header
    _
  $region3: #{_lambda_.8} parent=0 // loop_header
    %s9 = sphi 0, %s13
    %p10 = scmp.ge.s32.totalorder %s9, 4
    %s19 = sphi 0, %s21
    %s22 = sphi 0, %s19
    %s23 = sphi 0, %s22
    %s39 = sphi 0, %s23
    %s43 = sphi 0, %s43
    %s45 = sphi 0, %s43
    %s46 = sphi 0, %s45
    %s60 = sphi 0, %s46
    %s64 = sphi 0, %s64
    %s66 = sphi 0, %s64
    %s67 = sphi 0, %s66
    %s81 = sphi 0, %s67
    %s87 = sphi 0, %s89
    %s90 = sphi 0, %s87
    %s91 = sphi 0, %s90
    %s107 = sphi 0, %s91
  $region4: #{_lambda_.8} parent=0 // loop_header_branch
    %12 = sbr.rel (%p10) target = $region8
  $region5: #{_lambda_.8} parent=0 // loop_body
    %s14 = ssub.s32 %s9, 1
    %s15 = ssub.s32 %s9, 2
    %s16 = sadd.s32 %s9, 1
    %s17 = ssub.s32 %s9, %s16
    %p18 = scmp.eq.s32.totalorder %s17, 0
    %s20 = sadd.s32 %s19, 1
    %s21 = scalar_select %p18, %s19, %s20
    %p24 = pneg %p18
    %p25 = scmp.eq.s32.totalorder %s9, 1
    %p26 = por %p24, %p25
    %p27 = scmp.ne.s32.totalorder %s19, %s22
    %p28 = scmp.eq.s32.totalorder %s9, 0
    %p29 = por %p27, %p28
    %p30 = scmp.ne.s32.totalorder %s19, %s22
    %p31 = scmp.eq.s32.totalorder %s14, 1
    %p32 = por %p30, %p31
    %p33 = scmp.ne.s32.totalorder %s22, %s23
    %p34 = scmp.eq.s32.totalorder %s14, 0
    %p35 = por %p33, %p34
    %p36 = scmp.ne.s32.totalorder %s22, %s23
    %p37 = scmp.eq.s32.totalorder %s15, 1
    %p38 = por %p36, %p37
    %p40 = scmp.ne.s32.totalorder %s23, %s39
    %p41 = scmp.eq.s32.totalorder %s15, 0
    %p42 = por %p40, %p41
    %s44 = sadd.s32 %s43, 1
    %p47 = scmp.eq.s32.totalorder %s9, 1
    %p48 = scmp.ne.s32.totalorder %s43, %s45
    %p49 = scmp.eq.s32.totalorder %s9, 0
    %p50 = por %p48, %p49
    %p51 = scmp.ne.s32.totalorder %s43, %s45
    %p52 = scmp.eq.s32.totalorder %s14, 1
    %p53 = por %p51, %p52
    %p54 = scmp.ne.s32.totalorder %s45, %s46
    %p55 = scmp.eq.s32.totalorder %s14, 0
    %p56 = por %p54, %p55
    %p57 = scmp.ne.s32.totalorder %s45, %s46
    %p58 = scmp.eq.s32.totalorder %s15, 1
    %p59 = por %p57, %p58
    %p61 = scmp.ne.s32.totalorder %s46, %s60
    %p62 = scmp.eq.s32.totalorder %s15, 0
    %p63 = por %p61, %p62
    %s65 = sadd.s32 %s64, 1
    %p68 = scmp.eq.s32.totalorder %s9, 1
    %p69 = scmp.ne.s32.totalorder %s64, %s66
    %p70 = scmp.eq.s32.totalorder %s9, 0
    %p71 = por %p69, %p70
    %p72 = scmp.ne.s32.totalorder %s64, %s66
    %p73 = scmp.eq.s32.totalorder %s14, 1
    %p74 = por %p72, %p73
    %p75 = scmp.ne.s32.totalorder %s66, %s67
    %p76 = scmp.eq.s32.totalorder %s14, 0
    %p77 = por %p75, %p76
    %p78 = scmp.ne.s32.totalorder %s66, %s67
    %p79 = scmp.eq.s32.totalorder %s15, 1
    %p80 = por %p78, %p79
    %p82 = scmp.ne.s32.totalorder %s67, %s81
    %p83 = scmp.eq.s32.totalorder %s15, 0
    %p84 = por %p82, %p83
    %s85 = ssub.s32 %s9, %s16
    %p86 = scmp.eq.s32.totalorder %s85, 0
    %s88 = sadd.s32 %s87, 1
    %s89 = scalar_select %p86, %s87, %s88
    %p92 = pneg %p86
    %p93 = scmp.eq.s32.totalorder %s9, 1
    %p94 = por %p92, %p93
    %p95 = scmp.ne.s32.totalorder %s87, %s90
    %p96 = scmp.eq.s32.totalorder %s9, 0
    %p97 = por %p95, %p96
    %p98 = scmp.ne.s32.totalorder %s87, %s90
    %p99 = scmp.eq.s32.totalorder %s14, 1
    %p100 = por %p98, %p99
    %p101 = scmp.ne.s32.totalorder %s90, %s91
    %p102 = scmp.eq.s32.totalorder %s14, 0
    %p103 = por %p101, %p102
    %p104 = scmp.ne.s32.totalorder %s90, %s91
    %p105 = scmp.eq.s32.totalorder %s15, 1
    %p106 = por %p104, %p105
    %p108 = scmp.ne.s32.totalorder %s91, %s107
    %p109 = scmp.eq.s32.totalorder %s15, 0
    %p110 = por %p108, %p109
    %p111 = scmp.le.s32.totalorder 1, %s9
    %p112 = scmp.lt.s32.totalorder %s9, 3
    %p113 = pnand %p111, %p112
    %p114 = pneg %p113
    // Predicated region
    $region9: #{_lambda_.8} parent=5 // pred_check
      _
    $region10: #{_lambda_.8} parent=5 // pred_check_branch
      %116 = sbr.rel (%p113) target = $region12
    $region11: #{_lambda_.8} parent=5 // pred_region
      %s117 = ssub.s32 %s9, 1
      // Predicated region
      $region13: #{_lambda_.8} parent=11 // pred_check
        %p118 = pneg %p56
      $region14: #{_lambda_.8} parent=11 // pred_check_branch
        %120 = sbr.rel (%p118) target = $region16
      $region15: #{_lambda_.8} parent=11 // pred_region
        _
      $region16: #{_lambda_.8} parent=11 // pred_fallthru
        _
      // Predicated region
      $region17: #{_lambda_.8} parent=11 // pred_check
        %p121 = pneg %p77
      $region18: #{_lambda_.8} parent=11 // pred_check_branch
        %123 = sbr.rel (%p121) target = $region20
      $region19: #{_lambda_.8} parent=11 // pred_region
        _
      $region20: #{_lambda_.8} parent=11 // pred_fallthru
        _
    $region12: #{_lambda_.8} parent=5 // pred_fallthru
      _
    %p124 = scmp.lt.s32.totalorder %s9, 2
    // Predicated region
    $region21: #{_lambda_.8} parent=5 // pred_check
      %p125 = pneg %p124
    $region22: #{_lambda_.8} parent=5 // pred_check_branch
      %127 = sbr.rel (%p125) target = $region24
    $region23: #{_lambda_.8} parent=5 // pred_region
      // Predicated region
      $region25: #{_lambda_.8} parent=23 // pred_check
        %p128 = pneg %p29
      $region26: #{_lambda_.8} parent=23 // pred_check_branch
        %130 = sbr.rel (%p128) target = $region28
      $region27: #{_lambda_.8} parent=23 // pred_region
        %p131 = scmp.lt.s32.totalorder %s9, 1
        %s132 = scalar_select %p131, %s9, 1
        %s133 = smul.addr %s132, 20
        %s134 = smul.addr %s133, 4
        %s135 = scalar_lea.vmem %s0, %s134
      $region28: #{_lambda_.8} parent=23 // pred_fallthru
        _
    $region24: #{_lambda_.8} parent=5 // pred_fallthru
      _
    %p136 = scmp.le.s32.totalorder 1, %s9
    %p137 = scmp.lt.s32.totalorder %s9, 3
    %p138 = pnand %p136, %p137
    %p139 = pneg %p138
    // Predicated region
    $region29: #{_lambda_.8} parent=5 // pred_check
      _
    $region30: #{_lambda_.8} parent=5 // pred_check_branch
      %141 = sbr.rel (%p138) target = $region32
    $region31: #{_lambda_.8} parent=5 // pred_region
      %s142 = ssub.s32 %s9, 1
      %p143 = scmp.lt.s32.totalorder %s14, 1
      %s144 = scalar_select %p143, %s14, 1
      %s145 = smul.addr %s144, 20
      %s146 = smul.addr %s145, 4
      %s147 = scalar_lea.vmem %s0, %s146
      %p148 = pneg %p35
      %p149 = pneg %p32
      %p150 = pneg %p56
      %p151 = pneg %p53
      %p152 = pneg %p77
      %p153 = pneg %p74
      %p154 = pneg %p103
      %p155 = pneg %p100
      %p156 = scmp.lt.s32.totalorder %s14, 1
      %s157 = scalar_select %p156, %s14, 1
      %s158 = smul.addr %s157, 8
      %s159 = smul.addr %s158, 4
      %s160 = scalar_lea.vmem %s3, %s159
      %p161 = scmp.lt.s32.totalorder %s14, 1
      %s162 = scalar_select %p161, %s14, 1
      %s163 = smul.addr %s162, 20
      %s164 = smul.addr %s163, 4
      %s165 = scalar_lea.vmem %s0, %s164
      %p166 = scmp.lt.s32.totalorder %s14, 1
      %s167 = scalar_select %p166, %s14, 1
      %s168 = smul.addr %s167, 8
      %s169 = smul.addr %s168, 4
      %s170 = scalar_lea.vmem %s3, %s169
      %v172 = vld [vmem:[%s165] sm:$0xf]
      %v173 = vld [vmem:[%s165 + $0x8] sm:$0xf]
      %v174 = vld [vmem:[%s165 + $0x10] sm:$0xf]
      %v175 = vld [vmem:[%s165 + $0x18] sm:$0xf]
      %v176 = vld [vmem:[%s165 + $0x20] sm:$0xf]
      %v177 = vld [vmem:[%s165 + $0x28] sm:$0xf]
      %v178 = vld [vmem:[%s165 + $0x30] sm:$0xf]
      %v179 = vld [vmem:[%s165 + $0x38] sm:$0xf]
      %v188 = vunpack.c.l.b16 %v172
      %v189 = vunpack.c.l.b16 %v173
      %v190 = vunpack.c.l.b16 %v174
      %v191 = vunpack.c.l.b16 %v175
      %v192 = vunpack.c.l.b16 %v176
      %v193 = vunpack.c.l.b16 %v177
      %v194 = vunpack.c.l.b16 %v178
      %v195 = vunpack.c.l.b16 %v179
      %v196 = vpack.c.b16 %v189, %v188
      %v197 = vpack.c.b16 %v191, %v190
      %v198 = vpack.c.b16 %v193, %v192
      %v199 = vpack.c.b16 %v195, %v194
      %vm204 = vcmask 392192
      %205 = vst.msk [vmem:[#allocation2] sm:$0xff] %vm204, %v196
      %206 = vst.msk [vmem:[#allocation2 + $0x20] sm:$0xff] %vm204, %v197
      %207 = vst.msk [vmem:[#allocation2 + $0x40] sm:$0xff] %vm204, %v198
      %208 = vst.msk [vmem:[#allocation2 + $0x60] sm:$0xff] %vm204, %v199
      %v209 = vld [vmem:[%s165] sm:$0xf]
      %v210 = vld [vmem:[%s165 + $0x4] sm:$0x1]
      %v211 = vld [vmem:[%s165 + $0x8] sm:$0xf]
      %v212 = vld [vmem:[%s165 + $0xc] sm:$0x1]
      %v213 = vld [vmem:[%s165 + $0x10] sm:$0xf]
      %v214 = vld [vmem:[%s165 + $0x14] sm:$0x1]
      %v215 = vld [vmem:[%s165 + $0x18] sm:$0xf]
      %v216 = vld [vmem:[%s165 + $0x1c] sm:$0x1]
      %v217 = vld [vmem:[%s165 + $0x20] sm:$0xf]
      %v218 = vld [vmem:[%s165 + $0x24] sm:$0x1]
      %v219 = vld [vmem:[%s165 + $0x28] sm:$0xf]
      %v220 = vld [vmem:[%s165 + $0x2c] sm:$0x1]
      %v221 = vld [vmem:[%s165 + $0x30] sm:$0xf]
      %v222 = vld [vmem:[%s165 + $0x34] sm:$0x1]
      %v223 = vld [vmem:[%s165 + $0x38] sm:$0xf]
      %v224 = vld [vmem:[%s165 + $0x3c] sm:$0x1]
      %vm225 = vsmask.f32 3328
      %vm226 = vsmask.f32 7440
      %vm227 = vmor %vm225, %vm226
      %v229 = vshrl.u32 %v209, 16
      %v231 = vrot.slane %v229, 4
      %v232 = vshll.u32 %v209, 16
      %v234 = vrot.slane %v232, 5
      %v235 = vor.u32 %v231, %v234
      %v236 = vrot.slane %v235, 4
      %v238 = vshll.u32 %v210, 16
      %v240 = vrot.slane %v238, 5
      %v241 = vsel %vm227, %v236, %v240
      %v243 = vshrl.u32 %v211, 16
      %v245 = vrot.slane %v243, 4
      %v246 = vshll.u32 %v211, 16
      %v248 = vrot.slane %v246, 5
      %v249 = vor.u32 %v245, %v248
      %v250 = vrot.slane %v249, 4
      %v252 = vshll.u32 %v212, 16
      %v254 = vrot.slane %v252, 5
      %v255 = vsel %vm227, %v250, %v254
      %v257 = vshrl.u32 %v213, 16
      %v259 = vrot.slane %v257, 4
      %v260 = vshll.u32 %v213, 16
      %v262 = vrot.slane %v260, 5
      %v263 = vor.u32 %v259, %v262
      %v264 = vrot.slane %v263, 4
      %v266 = vshll.u32 %v214, 16
      %v268 = vrot.slane %v266, 5
      %v269 = vsel %vm227, %v264, %v268
      %v271 = vshrl.u32 %v215, 16
      %v273 = vrot.slane %v271, 4
      %v274 = vshll.u32 %v215, 16
      %v276 = vrot.slane %v274, 5
      %v277 = vor.u32 %v273, %v276
      %v278 = vrot.slane %v277, 4
      %v280 = vshll.u32 %v216, 16
      %v282 = vrot.slane %v280, 5
      %v283 = vsel %vm227, %v278, %v282
      %v285 = vshrl.u32 %v217, 16
      %v287 = vrot.slane %v285, 4
      %v288 = vshll.u32 %v217, 16
      %v290 = vrot.slane %v288, 5
      %v291 = vor.u32 %v287, %v290
      %v292 = vrot.slane %v291, 4
      %v294 = vshll.u32 %v218, 16
      %v296 = vrot.slane %v294, 5
      %v297 = vsel %vm227, %v292, %v296
      %v299 = vshrl.u32 %v219, 16
      %v301 = vrot.slane %v299, 4
      %v302 = vshll.u32 %v219, 16
      %v304 = vrot.slane %v302, 5
      %v305 = vor.u32 %v301, %v304
      %v306 = vrot.slane %v305, 4
      %v308 = vshll.u32 %v220, 16
      %v310 = vrot.slane %v308, 5
      %v311 = vsel %vm227, %v306, %v310
      %v313 = vshrl.u32 %v221, 16
      %v315 = vrot.slane %v313, 4
      %v316 = vshll.u32 %v221, 16
      %v318 = vrot.slane %v316, 5
      %v319 = vor.u32 %v315, %v318
      %v320 = vrot.slane %v319, 4
      %v322 = vshll.u32 %v222, 16
      %v324 = vrot.slane %v322, 5
      %v325 = vsel %vm227, %v320, %v324
      %v327 = vshrl.u32 %v223, 16
      %v329 = vrot.slane %v327, 4
      %v330 = vshll.u32 %v223, 16
      %v332 = vrot.slane %v330, 5
      %v333 = vor.u32 %v329, %v332
      %v334 = vrot.slane %v333, 4
      %v336 = vshll.u32 %v224, 16
      %v338 = vrot.slane %v336, 5
      %v339 = vsel %vm227, %v334, %v338
      %v340 = vunpack.c.l.b16 %v241
      %v341 = vunpack.c.l.b16 %v255
      %v342 = vunpack.c.l.b16 %v269
      %v343 = vunpack.c.l.b16 %v283
      %v344 = vunpack.c.l.b16 %v297
      %v345 = vunpack.c.l.b16 %v311
      %v346 = vunpack.c.l.b16 %v325
      %v347 = vunpack.c.l.b16 %v339
      %v348 = vpack.c.b16 %v341, %v340
      %v349 = vpack.c.b16 %v343, %v342
      %v350 = vpack.c.b16 %v345, %v344
      %v351 = vpack.c.b16 %v347, %v346
      %352 = vrot.lane.b32.xlu0 %v348, 48
      %v353 = vpop.permute.xlu0 %352
      %354 = vrot.lane.b32.xlu0 %v349, 48
      %v355 = vpop.permute.xlu0 %354
      %356 = vrot.lane.b32.xlu0 %v350, 48
      %v357 = vpop.permute.xlu0 %356
      %358 = vrot.lane.b32.xlu0 %v351, 48
      %v359 = vpop.permute.xlu0 %358
      %vm364 = vcmask 785792
      %365 = vst.msk [vmem:[#allocation2] sm:$0xff] %vm364, %v353
      %366 = vst.msk [vmem:[#allocation2 + $0x20] sm:$0xff] %vm364, %v355
      %367 = vst.msk [vmem:[#allocation2 + $0x40] sm:$0xff] %vm364, %v357
      %368 = vst.msk [vmem:[#allocation2 + $0x60] sm:$0xff] %vm364, %v359
      %v369 = vld [vmem:[%s165] sm:$0xe]
      %v370 = vld [vmem:[%s165 + $0x4] sm:$0x1]
      %v371 = vld [vmem:[%s165 + $0x8] sm:$0xe]
      %v372 = vld [vmem:[%s165 + $0xc] sm:$0x1]
      %v373 = vld [vmem:[%s165 + $0x10] sm:$0xe]
      %v374 = vld [vmem:[%s165 + $0x14] sm:$0x1]
      %v375 = vld [vmem:[%s165 + $0x18] sm:$0xe]
      %v376 = vld [vmem:[%s165 + $0x1c] sm:$0x1]
      %v377 = vld [vmem:[%s165 + $0x20] sm:$0xe]
      %v378 = vld [vmem:[%s165 + $0x24] sm:$0x1]
      %v379 = vld [vmem:[%s165 + $0x28] sm:$0xe]
      %v380 = vld [vmem:[%s165 + $0x2c] sm:$0x1]
      %v381 = vld [vmem:[%s165 + $0x30] sm:$0xe]
      %v382 = vld [vmem:[%s165 + $0x34] sm:$0x1]
      %v383 = vld [vmem:[%s165 + $0x38] sm:$0xe]
      %v384 = vld [vmem:[%s165 + $0x3c] sm:$0x1]
      %vm401 = vcmask 1042432
      %vm402 = vcmask 1046532
      %vm403 = vmor %vm401, %vm402
      %v404 = vrot.slane %v369, 5
      %v405 = vrot.slane %v404, 4
      %v406 = vrot.slane %v370, 5
      %v407 = vsel %vm403, %v405, %v406
      %v408 = vrot.slane %v371, 5
      %v409 = vrot.slane %v408, 4
      %v410 = vrot.slane %v372, 5
      %v411 = vsel %vm403, %v409, %v410
      %v412 = vrot.slane %v373, 5
      %v413 = vrot.slane %v412, 4
      %v414 = vrot.slane %v374, 5
      %v415 = vsel %vm403, %v413, %v414
      %v416 = vrot.slane %v375, 5
      %v417 = vrot.slane %v416, 4
      %v418 = vrot.slane %v376, 5
      %v419 = vsel %vm403, %v417, %v418
      %v420 = vrot.slane %v377, 5
      %v421 = vrot.slane %v420, 4
      %v422 = vrot.slane %v378, 5
      %v423 = vsel %vm403, %v421, %v422
      %v424 = vrot.slane %v379, 5
      %v425 = vrot.slane %v424, 4
      %v426 = vrot.slane %v380, 5
      %v427 = vsel %vm403, %v425, %v426
      %v428 = vrot.slane %v381, 5
      %v429 = vrot.slane %v428, 4
      %v430 = vrot.slane %v382, 5
      %v431 = vsel %vm403, %v429, %v430
      %v432 = vrot.slane %v383, 5
      %v433 = vrot.slane %v432, 4
      %v434 = vrot.slane %v384, 5
      %v435 = vsel %vm403, %v433, %v434
      %v436 = vunpack.c.l.b16 %v407
      %v437 = vunpack.c.l.b16 %v411
      %v438 = vunpack.c.l.b16 %v415
      %v439 = vunpack.c.l.b16 %v419
      %v440 = vunpack.c.l.b16 %v423
      %v441 = vunpack.c.l.b16 %v427
      %v442 = vunpack.c.l.b16 %v431
      %v443 = vunpack.c.l.b16 %v435
      %v444 = vpack.c.b16 %v437, %v436
      %v445 = vpack.c.b16 %v439, %v438
      %v446 = vpack.c.b16 %v441, %v440
      %v447 = vpack.c.b16 %v443, %v442
      %448 = vrot.lane.b32.xlu0 %v444, 96
      %v449 = vpop.permute.xlu0 %448
      %450 = vrot.lane.b32.xlu0 %v445, 96
      %v451 = vpop.permute.xlu0 %450
      %452 = vrot.lane.b32.xlu0 %v446, 96
      %v453 = vpop.permute.xlu0 %452
      %454 = vrot.lane.b32.xlu0 %v447, 96
      %v455 = vpop.permute.xlu0 %454
      %vm460 = vcmask 1048320
      %461 = vst.msk [vmem:[#allocation2] sm:$0xff] %vm460, %v449
      %vm462 = vcmask 130048
      %463 = vst.msk [vmem:[#allocation2 + $0x8] sm:$0xff] %vm462, %v449
      %464 = vst.msk [vmem:[#allocation2 + $0x20] sm:$0xff] %vm460, %v451
      %465 = vst.msk [vmem:[#allocation2 + $0x28] sm:$0xff] %vm462, %v451
      %466 = vst.msk [vmem:[#allocation2 + $0x40] sm:$0xff] %vm460, %v453
      %467 = vst.msk [vmem:[#allocation2 + $0x48] sm:$0xff] %vm462, %v453
      %468 = vst.msk [vmem:[#allocation2 + $0x60] sm:$0xff] %vm460, %v455
      %469 = vst.msk [vmem:[#allocation2 + $0x68] sm:$0xff] %vm462, %v455
      %s470 = scalar_lea.vmem %s165, 8
      %v471 = vld [vmem:[%s470] sm:$0xf]
      %v472 = vld [vmem:[%s470 + $0x8] sm:$0xf]
      %v473 = vld [vmem:[%s470 + $0x10] sm:$0xf]
      %v474 = vld [vmem:[%s470 + $0x18] sm:$0xf]
      %v475 = vld [vmem:[%s470 + $0x20] sm:$0xf]
      %v476 = vld [vmem:[%s470 + $0x28] sm:$0xf]
      %v477 = vld [vmem:[%s470 + $0x30] sm:$0xf]
      %v478 = vld [vmem:[%s470 + $0x38] sm:$0xf]
      %v487 = vunpack.c.l.b16 %v471
      %v488 = vunpack.c.l.b16 %v472
      %v489 = vunpack.c.l.b16 %v473
      %v490 = vunpack.c.l.b16 %v474
      %v491 = vunpack.c.l.b16 %v475
      %v492 = vunpack.c.l.b16 %v476
      %v493 = vunpack.c.l.b16 %v477
      %v494 = vunpack.c.l.b16 %v478
      %v495 = vpack.c.b16 %v488, %v487
      %v496 = vpack.c.b16 %v490, %v489
      %v497 = vpack.c.b16 %v492, %v491
      %v498 = vpack.c.b16 %v494, %v493
      %499 = vrot.lane.b32.xlu0 %v495, 16
      %v500 = vpop.permute.xlu0 %499
      %501 = vrot.lane.b32.xlu0 %v496, 16
      %v502 = vpop.permute.xlu0 %501
      %503 = vrot.lane.b32.xlu0 %v497, 16
      %v504 = vpop.permute.xlu0 %503
      %505 = vrot.lane.b32.xlu0 %v498, 16
      %v506 = vpop.permute.xlu0 %505
      %vm511 = vcmask 523392
      %512 = vst.msk [vmem:[#allocation2 + $0x8] sm:$0xff] %vm511, %v500
      %513 = vst.msk [vmem:[#allocation2 + $0x28] sm:$0xff] %vm511, %v502
      %514 = vst.msk [vmem:[#allocation2 + $0x48] sm:$0xff] %vm511, %v504
      %515 = vst.msk [vmem:[#allocation2 + $0x68] sm:$0xff] %vm511, %v506
      %v516 = vld [vmem:[%s470] sm:$0xf]
      %v517 = vld [vmem:[%s470 + $0x4] sm:$0x1]
      %v518 = vld [vmem:[%s470 + $0x8] sm:$0xf]
      %v519 = vld [vmem:[%s470 + $0xc] sm:$0x1]
      %v520 = vld [vmem:[%s470 + $0x10] sm:$0xf]
      %v521 = vld [vmem:[%s470 + $0x14] sm:$0x1]
      %v522 = vld [vmem:[%s470 + $0x18] sm:$0xf]
      %v523 = vld [vmem:[%s470 + $0x1c] sm:$0x1]
      %v524 = vld [vmem:[%s470 + $0x20] sm:$0xf]
      %v525 = vld [vmem:[%s470 + $0x24] sm:$0x1]
      %v526 = vld [vmem:[%s470 + $0x28] sm:$0xf]
      %v527 = vld [vmem:[%s470 + $0x2c] sm:$0x1]
      %v528 = vld [vmem:[%s470 + $0x30] sm:$0xf]
      %v529 = vld [vmem:[%s470 + $0x34] sm:$0x1]
      %v530 = vld [vmem:[%s470 + $0x38] sm:$0xf]
      %v531 = vld [vmem:[%s470 + $0x3c] sm:$0x1]
      %v533 = vshrl.u32 %v516, 16
      %v535 = vrot.slane %v533, 4
      %v536 = vshll.u32 %v516, 16
      %v538 = vrot.slane %v536, 5
      %v539 = vor.u32 %v535, %v538
      %v540 = vrot.slane %v539, 4
      %v542 = vshll.u32 %v517, 16
      %v544 = vrot.slane %v542, 5
      %v545 = vsel %vm227, %v540, %v544
      %v547 = vshrl.u32 %v518, 16
      %v549 = vrot.slane %v547, 4
      %v550 = vshll.u32 %v518, 16
      %v552 = vrot.slane %v550, 5
      %v553 = vor.u32 %v549, %v552
      %v554 = vrot.slane %v553, 4
      %v556 = vshll.u32 %v519, 16
      %v558 = vrot.slane %v556, 5
      %v559 = vsel %vm227, %v554, %v558
      %v561 = vshrl.u32 %v520, 16
      %v563 = vrot.slane %v561, 4
      %v564 = vshll.u32 %v520, 16
      %v566 = vrot.slane %v564, 5
      %v567 = vor.u32 %v563, %v566
      %v568 = vrot.slane %v567, 4
      %v570 = vshll.u32 %v521, 16
      %v572 = vrot.slane %v570, 5
      %v573 = vsel %vm227, %v568, %v572
      %v575 = vshrl.u32 %v522, 16
      %v577 = vrot.slane %v575, 4
      %v578 = vshll.u32 %v522, 16
      %v580 = vrot.slane %v578, 5
      %v581 = vor.u32 %v577, %v580
      %v582 = vrot.slane %v581, 4
      %v584 = vshll.u32 %v523, 16
      %v586 = vrot.slane %v584, 5
      %v587 = vsel %vm227, %v582, %v586
      %v589 = vshrl.u32 %v524, 16
      %v591 = vrot.slane %v589, 4
      %v592 = vshll.u32 %v524, 16
      %v594 = vrot.slane %v592, 5
      %v595 = vor.u32 %v591, %v594
      %v596 = vrot.slane %v595, 4
      %v598 = vshll.u32 %v525, 16
      %v600 = vrot.slane %v598, 5
      %v601 = vsel %vm227, %v596, %v600
      %v603 = vshrl.u32 %v526, 16
      %v605 = vrot.slane %v603, 4
      %v606 = vshll.u32 %v526, 16
      %v608 = vrot.slane %v606, 5
      %v609 = vor.u32 %v605, %v608
      %v610 = vrot.slane %v609, 4
      %v612 = vshll.u32 %v527, 16
      %v614 = vrot.slane %v612, 5
      %v615 = vsel %vm227, %v610, %v614
      %v617 = vshrl.u32 %v528, 16
      %v619 = vrot.slane %v617, 4
      %v620 = vshll.u32 %v528, 16
      %v622 = vrot.slane %v620, 5
      %v623 = vor.u32 %v619, %v622
      %v624 = vrot.slane %v623, 4
      %v626 = vshll.u32 %v529, 16
      %v628 = vrot.slane %v626, 5
      %v629 = vsel %vm227, %v624, %v628
      %v631 = vshrl.u32 %v530, 16
      %v633 = vrot.slane %v631, 4
      %v634 = vshll.u32 %v530, 16
      %v636 = vrot.slane %v634, 5
      %v637 = vor.u32 %v633, %v636
      %v638 = vrot.slane %v637, 4
      %v640 = vshll.u32 %v531, 16
      %v642 = vrot.slane %v640, 5
      %v643 = vsel %vm227, %v638, %v642
      %v644 = vunpack.c.l.b16 %v545
      %v645 = vunpack.c.l.b16 %v559
      %v646 = vunpack.c.l.b16 %v573
      %v647 = vunpack.c.l.b16 %v587
      %v648 = vunpack.c.l.b16 %v601
      %v649 = vunpack.c.l.b16 %v615
      %v650 = vunpack.c.l.b16 %v629
      %v651 = vunpack.c.l.b16 %v643
      %v652 = vpack.c.b16 %v645, %v644
      %v653 = vpack.c.b16 %v647, %v646
      %v654 = vpack.c.b16 %v649, %v648
      %v655 = vpack.c.b16 %v651, %v650
      %656 = vrot.lane.b32.xlu0 %v652, 64
      %v657 = vpop.permute.xlu0 %656
      %658 = vrot.lane.b32.xlu0 %v653, 64
      %v659 = vpop.permute.xlu0 %658
      %660 = vrot.lane.b32.xlu0 %v654, 64
      %v661 = vpop.permute.xlu0 %660
      %662 = vrot.lane.b32.xlu0 %v655, 64
      %v663 = vpop.permute.xlu0 %662
      %vm668 = vcmask 916992
      %669 = vst.msk [vmem:[#allocation2 + $0x8] sm:$0xff] %vm668, %v657
      %670 = vst.msk [vmem:[#allocation2 + $0x28] sm:$0xff] %vm668, %v659
      %671 = vst.msk [vmem:[#allocation2 + $0x48] sm:$0xff] %vm668, %v661
      %672 = vst.msk [vmem:[#allocation2 + $0x68] sm:$0xff] %vm668, %v663
      %v673 = vld [vmem:[%s470] sm:$0xe]
      %v674 = vld [vmem:[%s470 + $0x4] sm:$0x1]
      %v675 = vld [vmem:[%s470 + $0x8] sm:$0xe]
      %v676 = vld [vmem:[%s470 + $0xc] sm:$0x1]
      %v677 = vld [vmem:[%s470 + $0x10] sm:$0xe]
      %v678 = vld [vmem:[%s470 + $0x14] sm:$0x1]
      %v679 = vld [vmem:[%s470 + $0x18] sm:$0xe]
      %v680 = vld [vmem:[%s470 + $0x1c] sm:$0x1]
      %v681 = vld [vmem:[%s470 + $0x20] sm:$0xe]
      %v682 = vld [vmem:[%s470 + $0x24] sm:$0x1]
      %v683 = vld [vmem:[%s470 + $0x28] sm:$0xe]
      %v684 = vld [vmem:[%s470 + $0x2c] sm:$0x1]
      %v685 = vld [vmem:[%s470 + $0x30] sm:$0xe]
      %v686 = vld [vmem:[%s470 + $0x34] sm:$0x1]
      %v687 = vld [vmem:[%s470 + $0x38] sm:$0xe]
      %v688 = vld [vmem:[%s470 + $0x3c] sm:$0x1]
      %v705 = vrot.slane %v673, 5
      %v706 = vrot.slane %v705, 4
      %v707 = vrot.slane %v674, 5
      %v708 = vsel %vm403, %v706, %v707
      %v709 = vrot.slane %v675, 5
      %v710 = vrot.slane %v709, 4
      %v711 = vrot.slane %v676, 5
      %v712 = vsel %vm403, %v710, %v711
      %v713 = vrot.slane %v677, 5
      %v714 = vrot.slane %v713, 4
      %v715 = vrot.slane %v678, 5
      %v716 = vsel %vm403, %v714, %v715
      %v717 = vrot.slane %v679, 5
      %v718 = vrot.slane %v717, 4
      %v719 = vrot.slane %v680, 5
      %v720 = vsel %vm403, %v718, %v719
      %v721 = vrot.slane %v681, 5
      %v722 = vrot.slane %v721, 4
      %v723 = vrot.slane %v682, 5
      %v724 = vsel %vm403, %v722, %v723
      %v725 = vrot.slane %v683, 5
      %v726 = vrot.slane %v725, 4
      %v727 = vrot.slane %v684, 5
      %v728 = vsel %vm403, %v726, %v727
      %v729 = vrot.slane %v685, 5
      %v730 = vrot.slane %v729, 4
      %v731 = vrot.slane %v686, 5
      %v732 = vsel %vm403, %v730, %v731
      %v733 = vrot.slane %v687, 5
      %v734 = vrot.slane %v733, 4
      %v735 = vrot.slane %v688, 5
      %v736 = vsel %vm403, %v734, %v735
      %v737 = vunpack.c.l.b16 %v708
      %v738 = vunpack.c.l.b16 %v712
      %v739 = vunpack.c.l.b16 %v716
      %v740 = vunpack.c.l.b16 %v720
      %v741 = vunpack.c.l.b16 %v724
      %v742 = vunpack.c.l.b16 %v728
      %v743 = vunpack.c.l.b16 %v732
      %v744 = vunpack.c.l.b16 %v736
      %v745 = vpack.c.b16 %v738, %v737
      %v746 = vpack.c.b16 %v740, %v739
      %v747 = vpack.c.b16 %v742, %v741
      %v748 = vpack.c.b16 %v744, %v743
      %749 = vrot.lane.b32.xlu0 %v745, 112
      %v750 = vpop.permute.xlu0 %749
      %751 = vrot.lane.b32.xlu0 %v746, 112
      %v752 = vpop.permute.xlu0 %751
      %753 = vrot.lane.b32.xlu0 %v747, 112
      %v754 = vpop.permute.xlu0 %753
      %755 = vrot.lane.b32.xlu0 %v748, 112
      %v756 = vpop.permute.xlu0 %755
      %vm761 = vcmask 1048448
      %762 = vst.msk [vmem:[#allocation2 + $0x8] sm:$0xff] %vm761, %v750
      %vm763 = vcmask 261120
      %764 = vst.msk [vmem:[#allocation2 + $0x10] sm:$0xff] %vm763, %v750
      %765 = vst.msk [vmem:[#allocation2 + $0x28] sm:$0xff] %vm761, %v752
      %766 = vst.msk [vmem:[#allocation2 + $0x30] sm:$0xff] %vm763, %v752
      %767 = vst.msk [vmem:[#allocation2 + $0x48] sm:$0xff] %vm761, %v754
      %768 = vst.msk [vmem:[#allocation2 + $0x50] sm:$0xff] %vm763, %v754
      %769 = vst.msk [vmem:[#allocation2 + $0x68] sm:$0xff] %vm761, %v756
      %770 = vst.msk [vmem:[#allocation2 + $0x70] sm:$0xff] %vm763, %v756
      %s771 = scalar_lea.vmem %s165, 16
      %v772 = vld [vmem:[%s771] sm:$0xf]
      %v773 = vld [vmem:[%s771 + $0x8] sm:$0xf]
      %v774 = vld [vmem:[%s771 + $0x10] sm:$0xf]
      %v775 = vld [vmem:[%s771 + $0x18] sm:$0xf]
      %v776 = vld [vmem:[%s771 + $0x20] sm:$0xf]
      %v777 = vld [vmem:[%s771 + $0x28] sm:$0xf]
      %v778 = vld [vmem:[%s771 + $0x30] sm:$0xf]
      %v779 = vld [vmem:[%s771 + $0x38] sm:$0xf]
      %v788 = vunpack.c.l.b16 %v772
      %v789 = vunpack.c.l.b16 %v773
      %v790 = vunpack.c.l.b16 %v774
      %v791 = vunpack.c.l.b16 %v775
      %v792 = vunpack.c.l.b16 %v776
      %v793 = vunpack.c.l.b16 %v777
      %v794 = vunpack.c.l.b16 %v778
      %v795 = vunpack.c.l.b16 %v779
      %v796 = vpack.c.b16 %v789, %v788
      %v797 = vpack.c.b16 %v791, %v790
      %v798 = vpack.c.b16 %v793, %v792
      %v799 = vpack.c.b16 %v795, %v794
      %800 = vrot.lane.b32.xlu0 %v796, 32
      %v801 = vpop.permute.xlu0 %800
      %802 = vrot.lane.b32.xlu0 %v797, 32
      %v803 = vpop.permute.xlu0 %802
      %804 = vrot.lane.b32.xlu0 %v798, 32
      %v805 = vpop.permute.xlu0 %804
      %806 = vrot.lane.b32.xlu0 %v799, 32
      %v807 = vpop.permute.xlu0 %806
      %vm812 = vcmask 654592
      %813 = vst.msk [vmem:[#allocation2 + $0x10] sm:$0xff] %vm812, %v801
      %814 = vst.msk [vmem:[#allocation2 + $0x30] sm:$0xff] %vm812, %v803
      %815 = vst.msk [vmem:[#allocation2 + $0x50] sm:$0xff] %vm812, %v805
      %816 = vst.msk [vmem:[#allocation2 + $0x70] sm:$0xff] %vm812, %v807
      %v817 = vld [vmem:[%s771] sm:$0xf]
      %v818 = vld [vmem:[%s771 + $0x4] sm:$0x1]
      %v819 = vld [vmem:[%s771 + $0x8] sm:$0xf]
      %v820 = vld [vmem:[%s771 + $0xc] sm:$0x1]
      %v821 = vld [vmem:[%s771 + $0x10] sm:$0xf]
      %v822 = vld [vmem:[%s771 + $0x14] sm:$0x1]
      %v823 = vld [vmem:[%s771 + $0x18] sm:$0xf]
      %v824 = vld [vmem:[%s771 + $0x1c] sm:$0x1]
      %v825 = vld [vmem:[%s771 + $0x20] sm:$0xf]
      %v826 = vld [vmem:[%s771 + $0x24] sm:$0x1]
      %v827 = vld [vmem:[%s771 + $0x28] sm:$0xf]
      %v828 = vld [vmem:[%s771 + $0x2c] sm:$0x1]
      %v829 = vld [vmem:[%s771 + $0x30] sm:$0xf]
      %v830 = vld [vmem:[%s771 + $0x34] sm:$0x1]
      %v831 = vld [vmem:[%s771 + $0x38] sm:$0xf]
      %v832 = vld [vmem:[%s771 + $0x3c] sm:$0x1]
      %v834 = vshrl.u32 %v817, 16
      %v836 = vrot.slane %v834, 4
      %v837 = vshll.u32 %v817, 16
      %v839 = vrot.slane %v837, 5
      %v840 = vor.u32 %v836, %v839
      %v841 = vrot.slane %v840, 4
      %v843 = vshll.u32 %v818, 16
      %v845 = vrot.slane %v843, 5
      %v846 = vsel %vm227, %v841, %v845
      %v848 = vshrl.u32 %v819, 16
      %v850 = vrot.slane %v848, 4
      %v851 = vshll.u32 %v819, 16
      %v853 = vrot.slane %v851, 5
      %v854 = vor.u32 %v850, %v853
      %v855 = vrot.slane %v854, 4
      %v857 = vshll.u32 %v820, 16
      %v859 = vrot.slane %v857, 5
      %v860 = vsel %vm227, %v855, %v859
      %v862 = vshrl.u32 %v821, 16
      %v864 = vrot.slane %v862, 4
      %v865 = vshll.u32 %v821, 16
      %v867 = vrot.slane %v865, 5
      %v868 = vor.u32 %v864, %v867
      %v869 = vrot.slane %v868, 4
      %v871 = vshll.u32 %v822, 16
      %v873 = vrot.slane %v871, 5
      %v874 = vsel %vm227, %v869, %v873
      %v876 = vshrl.u32 %v823, 16
      %v878 = vrot.slane %v876, 4
      %v879 = vshll.u32 %v823, 16
      %v881 = vrot.slane %v879, 5
      %v882 = vor.u32 %v878, %v881
      %v883 = vrot.slane %v882, 4
      %v885 = vshll.u32 %v824, 16
      %v887 = vrot.slane %v885, 5
      %v888 = vsel %vm227, %v883, %v887
      %v890 = vshrl.u32 %v825, 16
      %v892 = vrot.slane %v890, 4
      %v893 = vshll.u32 %v825, 16
      %v895 = vrot.slane %v893, 5
      %v896 = vor.u32 %v892, %v895
      %v897 = vrot.slane %v896, 4
      %v899 = vshll.u32 %v826, 16
      %v901 = vrot.slane %v899, 5
      %v902 = vsel %vm227, %v897, %v901
      %v904 = vshrl.u32 %v827, 16
      %v906 = vrot.slane %v904, 4
      %v907 = vshll.u32 %v827, 16
      %v909 = vrot.slane %v907, 5
      %v910 = vor.u32 %v906, %v909
      %v911 = vrot.slane %v910, 4
      %v913 = vshll.u32 %v828, 16
      %v915 = vrot.slane %v913, 5
      %v916 = vsel %vm227, %v911, %v915
      %v918 = vshrl.u32 %v829, 16
      %v920 = vrot.slane %v918, 4
      %v921 = vshll.u32 %v829, 16
      %v923 = vrot.slane %v921, 5
      %v924 = vor.u32 %v920, %v923
      %v925 = vrot.slane %v924, 4
      %v927 = vshll.u32 %v830, 16
      %v929 = vrot.slane %v927, 5
      %v930 = vsel %vm227, %v925, %v929
      %v932 = vshrl.u32 %v831, 16
      %v934 = vrot.slane %v932, 4
      %v935 = vshll.u32 %v831, 16
      %v937 = vrot.slane %v935, 5
      %v938 = vor.u32 %v934, %v937
      %v939 = vrot.slane %v938, 4
      %v941 = vshll.u32 %v832, 16
      %v943 = vrot.slane %v941, 5
      %v944 = vsel %vm227, %v939, %v943
      %v945 = vunpack.c.l.b16 %v846
      %v946 = vunpack.c.l.b16 %v860
      %v947 = vunpack.c.l.b16 %v874
      %v948 = vunpack.c.l.b16 %v888
      %v949 = vunpack.c.l.b16 %v902
      %v950 = vunpack.c.l.b16 %v916
      %v951 = vunpack.c.l.b16 %v930
      %v952 = vunpack.c.l.b16 %v944
      %v953 = vpack.c.b16 %v946, %v945
      %v954 = vpack.c.b16 %v948, %v947
      %v955 = vpack.c.b16 %v950, %v949
      %v956 = vpack.c.b16 %v952, %v951
      %957 = vrot.lane.b32.xlu0 %v953, 80
      %v958 = vpop.permute.xlu0 %957
      %959 = vrot.lane.b32.xlu0 %v954, 80
      %v960 = vpop.permute.xlu0 %959
      %961 = vrot.lane.b32.xlu0 %v955, 80
      %v962 = vpop.permute.xlu0 %961
      %963 = vrot.lane.b32.xlu0 %v956, 80
      %v964 = vpop.permute.xlu0 %963
      %vm969 = vcmask 1048192
      %970 = vst.msk [vmem:[#allocation2 + $0x10] sm:$0xff] %vm969, %v958
      %971 = vst.msk [vmem:[#allocation2 + $0x30] sm:$0xff] %vm969, %v960
      %972 = vst.msk [vmem:[#allocation2 + $0x50] sm:$0xff] %vm969, %v962
      %973 = vst.msk [vmem:[#allocation2 + $0x70] sm:$0xff] %vm969, %v964
      %v974 = vld [vmem:[%s771] sm:$0xe]
      %v975 = vld [vmem:[%s771 + $0x4] sm:$0x1]
      %v976 = vld [vmem:[%s771 + $0x8] sm:$0xe]
      %v977 = vld [vmem:[%s771 + $0xc] sm:$0x1]
      %v978 = vld [vmem:[%s771 + $0x10] sm:$0xe]
      %v979 = vld [vmem:[%s771 + $0x14] sm:$0x1]
      %v980 = vld [vmem:[%s771 + $0x18] sm:$0xe]
      %v981 = vld [vmem:[%s771 + $0x1c] sm:$0x1]
      %v982 = vld [vmem:[%s771 + $0x20] sm:$0xe]
      %v983 = vld [vmem:[%s771 + $0x24] sm:$0x1]
      %v984 = vld [vmem:[%s771 + $0x28] sm:$0xe]
      %v985 = vld [vmem:[%s771 + $0x2c] sm:$0x1]
      %v986 = vld [vmem:[%s771 + $0x30] sm:$0xe]
      %v987 = vld [vmem:[%s771 + $0x34] sm:$0x1]
      %v988 = vld [vmem:[%s771 + $0x38] sm:$0xe]
      %v989 = vld [vmem:[%s771 + $0x3c] sm:$0x1]
      %v1006 = vrot.slane %v974, 5
      %v1007 = vrot.slane %v1006, 4
      %v1008 = vrot.slane %v975, 5
      %v1009 = vsel %vm403, %v1007, %v1008
      %v1010 = vrot.slane %v976, 5
      %v1011 = vrot.slane %v1010, 4
      %v1012 = vrot.slane %v977, 5
      %v1013 = vsel %vm403, %v1011, %v1012
      %v1014 = vrot.slane %v978, 5
      %v1015 = vrot.slane %v1014, 4
      %v1016 = vrot.slane %v979, 5
      %v1017 = vsel %vm403, %v1015, %v1016
      %v1018 = vrot.slane %v980, 5
      %v1019 = vrot.slane %v1018, 4
      %v1020 = vrot.slane %v981, 5
      %v1021 = vsel %vm403, %v1019, %v1020
      %v1022 = vrot.slane %v982, 5
      %v1023 = vrot.slane %v1022, 4
      %v1024 = vrot.slane %v983, 5
      %v1025 = vsel %vm403, %v1023, %v1024
      %v1026 = vrot.slane %v984, 5
      %v1027 = vrot.slane %v1026, 4
      %v1028 = vrot.slane %v985, 5
      %v1029 = vsel %vm403, %v1027, %v1028
      %v1030 = vrot.slane %v986, 5
      %v1031 = vrot.slane %v1030, 4
      %v1032 = vrot.slane %v987, 5
      %v1033 = vsel %vm403, %v1031, %v1032
      %v1034 = vrot.slane %v988, 5
      %v1035 = vrot.slane %v1034, 4
      %v1036 = vrot.slane %v989, 5
      %v1037 = vsel %vm403, %v1035, %v1036
      %v1038 = vunpack.c.l.b16 %v1009
      %v1039 = vunpack.c.l.b16 %v1013
      %v1040 = vunpack.c.l.b16 %v1017
      %v1041 = vunpack.c.l.b16 %v1021
      %v1042 = vunpack.c.l.b16 %v1025
      %v1043 = vunpack.c.l.b16 %v1029
      %v1044 = vunpack.c.l.b16 %v1033
      %v1045 = vunpack.c.l.b16 %v1037
      %v1046 = vpack.c.b16 %v1039, %v1038
      %v1047 = vpack.c.b16 %v1041, %v1040
      %v1048 = vpack.c.b16 %v1043, %v1042
      %v1049 = vpack.c.b16 %v1045, %v1044
      %1054 = vst.msk [vmem:[#allocation2 + $0x18] sm:$0xff] %vm204, %v1046
      %1055 = vst.msk [vmem:[#allocation2 + $0x38] sm:$0xff] %vm204, %v1047
      %1056 = vst.msk [vmem:[#allocation2 + $0x58] sm:$0xff] %vm204, %v1048
      %1057 = vst.msk [vmem:[#allocation2 + $0x78] sm:$0xff] %vm204, %v1049
      %v1058 = vld [vmem:[#allocation2] sm:$0xff]
      %v1059 = vld [vmem:[#allocation2 + $0x8] sm:$0xff]
      %v1060 = vld [vmem:[#allocation2 + $0x10] sm:$0xff]
      %v1061 = vld [vmem:[#allocation2 + $0x18] sm:$0xff]
      %v1062 = vld [vmem:[#allocation2 + $0x20] sm:$0xff]
      %v1063 = vld [vmem:[#allocation2 + $0x28] sm:$0xff]
      %v1064 = vld [vmem:[#allocation2 + $0x30] sm:$0xff]
      %v1065 = vld [vmem:[#allocation2 + $0x38] sm:$0xff]
      %v1066 = vld [vmem:[#allocation2 + $0x40] sm:$0xff]
      %v1067 = vld [vmem:[#allocation2 + $0x48] sm:$0xff]
      %v1068 = vld [vmem:[#allocation2 + $0x50] sm:$0xff]
      %v1069 = vld [vmem:[#allocation2 + $0x58] sm:$0xff]
      %v1070 = vld [vmem:[#allocation2 + $0x60] sm:$0xff]
      %v1071 = vld [vmem:[#allocation2 + $0x68] sm:$0xff]
      %v1072 = vld [vmem:[#allocation2 + $0x70] sm:$0xff]
      %v1073 = vld [vmem:[#allocation2 + $0x78] sm:$0xff]
      %v1074 = vld [vmem:[%s1] sm:$0xf]
      %v1075 = vld [vmem:[%s1 + $0x4] sm:$0xf]
      %v1076 = vld [vmem:[%s1 + $0x8] sm:$0xf]
      %v1077 = vld [vmem:[%s1 + $0xc] sm:$0xf]
      %v1078 = vld [vmem:[%s1 + $0x10] sm:$0xf]
      %v1079 = vld [vmem:[%s1 + $0x14] sm:$0xf]
      %v1080 = vld [vmem:[%s1 + $0x18] sm:$0xf]
      %v1081 = vld [vmem:[%s1 + $0x1c] sm:$0xf]
      %v1082 = vld [vmem:[%s1 + $0x20] sm:$0xf]
      %v1083 = vld [vmem:[%s1 + $0x24] sm:$0xf]
      %v1084 = vld [vmem:[%s1 + $0x28] sm:$0xf]
      %v1085 = vld [vmem:[%s1 + $0x2c] sm:$0xf]
      %v1086 = vld [vmem:[%s1 + $0x30] sm:$0xf]
      %v1087 = vld [vmem:[%s1 + $0x34] sm:$0xf]
      %v1088 = vld [vmem:[%s1 + $0x38] sm:$0xf]
      %v1089 = vld [vmem:[%s1 + $0x3c] sm:$0xf]
      %v1090 = vld [vmem:[%s1 + $0x40] sm:$0xf]
      %v1091 = vld [vmem:[%s1 + $0x44] sm:$0xf]
      %v1092 = vld [vmem:[%s1 + $0x48] sm:$0xf]
      %v1093 = vld [vmem:[%s1 + $0x4c] sm:$0xf]
      %v1094 = vld [vmem:[%s1 + $0x50] sm:$0xf]
      %v1095 = vld [vmem:[%s1 + $0x54] sm:$0xf]
      %v1096 = vld [vmem:[%s1 + $0x58] sm:$0xf]
      %v1097 = vld [vmem:[%s1 + $0x5c] sm:$0xf]
      %v1098 = vld [vmem:[%s1 + $0x60] sm:$0xf]
      %v1099 = vld [vmem:[%s1 + $0x64] sm:$0xf]
      %v1100 = vld [vmem:[%s1 + $0x68] sm:$0xf]
      %v1101 = vld [vmem:[%s1 + $0x6c] sm:$0xf]
      %v1102 = vld [vmem:[%s1 + $0x70] sm:$0xf]
      %v1103 = vld [vmem:[%s1 + $0x74] sm:$0xf]
      %v1104 = vld [vmem:[%s1 + $0x78] sm:$0xf]
      %v1105 = vld [vmem:[%s1 + $0x7c] sm:$0xf]
      %v1106 = vld [vmem:[%s1 + $0x80] sm:$0xf]
      %v1107 = vld [vmem:[%s1 + $0x84] sm:$0xf]
      %v1108 = vld [vmem:[%s1 + $0x88] sm:$0xf]
      %v1109 = vld [vmem:[%s1 + $0x8c] sm:$0xf]
      %v1110 = vld [vmem:[%s1 + $0x90] sm:$0xf]
      %v1111 = vld [vmem:[%s1 + $0x94] sm:$0xf]
      %v1112 = vld [vmem:[%s1 + $0x98] sm:$0xf]
      %v1113 = vld [vmem:[%s1 + $0x9c] sm:$0xf]
      %v1114 = vld [vmem:[%s1 + $0xa0] sm:$0xf]
      %v1115 = vld [vmem:[%s1 + $0xa4] sm:$0xf]
      %v1116 = vld [vmem:[%s1 + $0xa8] sm:$0xf]
      %v1117 = vld [vmem:[%s1 + $0xac] sm:$0xf]
      %v1118 = vld [vmem:[%s1 + $0xb0] sm:$0xf]
      %v1119 = vld [vmem:[%s1 + $0xb4] sm:$0xf]
      %v1120 = vld [vmem:[%s1 + $0xb8] sm:$0xf]
      %v1121 = vld [vmem:[%s1 + $0xbc] sm:$0xf]
      %v1122 = vld [vmem:[%s1 + $0xc0] sm:$0xf]
      %v1123 = vld [vmem:[%s1 + $0xc4] sm:$0xf]
      %v1124 = vld [vmem:[%s1 + $0xc8] sm:$0xf]
      %v1125 = vld [vmem:[%s1 + $0xcc] sm:$0xf]
      %v1126 = vld [vmem:[%s1 + $0xd0] sm:$0xf]
      %v1127 = vld [vmem:[%s1 + $0xd4] sm:$0xf]
      %v1128 = vld [vmem:[%s2] sm:$0x1]
      %v1130 = vlaneseq
      %v1131 = vshrl.u32 %v1130, 7
      %v1132 = vsub.s32 0, %v1131
      %v1133 = vrot.slane %v1128, %v1132
      %v1189 = vunpack.c.l.b16 %v1074
      %v1190 = vunpack.c.l.b16 %v1075
      %v1191 = vunpack.c.l.b16 %v1076
      %v1192 = vunpack.c.l.b16 %v1077
      %v1193 = vunpack.c.l.b16 %v1078
      %v1194 = vunpack.c.l.b16 %v1079
      %v1195 = vunpack.c.l.b16 %v1080
      %v1196 = vunpack.c.l.b16 %v1081
      %v1197 = vunpack.c.l.b16 %v1082
      %v1198 = vunpack.c.l.b16 %v1083
      %v1199 = vunpack.c.l.b16 %v1084
      %v1200 = vunpack.c.l.b16 %v1085
      %v1201 = vunpack.c.l.b16 %v1086
      %v1202 = vunpack.c.l.b16 %v1087
      %v1203 = vunpack.c.l.b16 %v1088
      %v1204 = vunpack.c.l.b16 %v1089
      %v1205 = vunpack.c.l.b16 %v1090
      %v1206 = vunpack.c.l.b16 %v1091
      %v1207 = vunpack.c.l.b16 %v1092
      %v1208 = vunpack.c.l.b16 %v1093
      %v1209 = vunpack.c.l.b16 %v1094
      %v1210 = vunpack.c.l.b16 %v1095
      %v1211 = vunpack.c.l.b16 %v1096
      %v1212 = vunpack.c.l.b16 %v1097
      %v1213 = vunpack.c.l.b16 %v1098
      %v1214 = vunpack.c.l.b16 %v1099
      %v1215 = vunpack.c.l.b16 %v1100
      %v1216 = vunpack.c.l.b16 %v1101
      %v1217 = vunpack.c.l.b16 %v1102
      %v1218 = vunpack.c.l.b16 %v1103
      %v1219 = vunpack.c.l.b16 %v1104
      %v1220 = vunpack.c.l.b16 %v1105
      %v1221 = vunpack.c.l.b16 %v1106
      %v1222 = vunpack.c.l.b16 %v1107
      %v1223 = vunpack.c.l.b16 %v1108
      %v1224 = vunpack.c.l.b16 %v1109
      %v1225 = vunpack.c.l.b16 %v1110
      %v1226 = vunpack.c.l.b16 %v1111
      %v1227 = vunpack.c.l.b16 %v1112
      %v1228 = vunpack.c.l.b16 %v1113
      %v1229 = vunpack.c.l.b16 %v1114
      %v1230 = vunpack.c.l.b16 %v1115
      %v1231 = vunpack.c.l.b16 %v1116
      %v1232 = vunpack.c.l.b16 %v1117
      %v1233 = vunpack.c.l.b16 %v1118
      %v1234 = vunpack.c.l.b16 %v1119
      %v1235 = vunpack.c.l.b16 %v1120
      %v1236 = vunpack.c.l.b16 %v1121
      %v1237 = vunpack.c.l.b16 %v1122
      %v1238 = vunpack.c.l.b16 %v1123
      %v1239 = vunpack.c.l.b16 %v1124
      %v1240 = vunpack.c.l.b16 %v1125
      %v1241 = vunpack.c.l.b16 %v1126
      %v1242 = vunpack.c.l.b16 %v1127
      %v1243 = vpack.c.b16 %v1190, %v1189
      %v1244 = vpack.c.b16 %v1192, %v1191
      %v1245 = vpack.c.b16 %v1194, %v1193
      %v1246 = vpack.c.b16 %v1196, %v1195
      %v1247 = vpack.c.b16 %v1198, %v1197
      %v1248 = vpack.c.b16 %v1200, %v1199
      %v1249 = vpack.c.b16 %v1202, %v1201
      %v1250 = vpack.c.b16 %v1204, %v1203
      %v1251 = vpack.c.b16 %v1206, %v1205
      %v1252 = vpack.c.b16 %v1208, %v1207
      %v1253 = vpack.c.b16 %v1210, %v1209
      %v1254 = vpack.c.b16 %v1212, %v1211
      %v1255 = vpack.c.b16 %v1214, %v1213
      %v1256 = vpack.c.b16 %v1216, %v1215
      %v1257 = vpack.c.b16 %v1218, %v1217
      %v1258 = vpack.c.b16 %v1220, %v1219
      %v1259 = vpack.c.b16 %v1222, %v1221
      %v1260 = vpack.c.b16 %v1224, %v1223
      %v1261 = vpack.c.b16 %v1226, %v1225
      %v1262 = vpack.c.b16 %v1228, %v1227
      %v1263 = vpack.c.b16 %v1230, %v1229
      %v1264 = vpack.c.b16 %v1232, %v1231
      %v1265 = vpack.c.b16 %v1234, %v1233
      %v1266 = vpack.c.b16 %v1236, %v1235
      %v1267 = vpack.c.b16 %v1238, %v1237
      %v1268 = vpack.c.b16 %v1240, %v1239
      %v1269 = vpack.c.b16 %v1242, %v1241
      %v1298 = vsel %vm204, %v1061, 0
      %v1301 = vsel %vm204, %v1065, 0
      %v1304 = vsel %vm204, %v1069, 0
      %v1307 = vsel %vm204, %v1073, 0
      %1309 = vmatprep.subr.bf16.mxu0 0
      %1310 = vmatpush1.bf16.msra.mxu0 %v1243
      %1311 = vmatprep.subr.bf16.mxu0 0
      %1312 = vmatpush1.bf16.msra.mxu0 %v1244
      %1313 = vmatprep.subr.bf16.mxu0 0
      %1314 = vmatpush1.bf16.msra.mxu0 %v1245
      %1315 = vmatprep.subr.bf16.mxu0 0
      %1316 = vmatpush1.bf16.msra.mxu0 %v1246
      %1317 = vmatprep.subr.bf16.mxu0 0
      %1318 = vmatpush1.bf16.msra.mxu0 %v1247
      %1319 = vmatprep.subr.bf16.mxu0 0
      %1320 = vmatpush1.bf16.msra.mxu0 %v1248
      %1321 = vmatprep.subr.bf16.mxu0 0
      %1322 = vmatpush1.bf16.msra.mxu0 %v1249
      %1323 = vmatprep.subr.bf16.mxu0 0
      %1324 = vmatpush1.bf16.msra.mxu0 %v1250
      %1325 = vmatprep.subr.bf16.mxu0 0
      %1326 = vmatpush1.bf16.msra.mxu0 %v1251
      %1327 = vmatprep.subr.bf16.mxu0 0
      %1328 = vmatpush1.bf16.msra.mxu0 %v1252
      %1329 = vmatprep.subr.bf16.mxu0 0
      %1330 = vmatpush1.bf16.msra.mxu0 %v1253
      %1331 = vmatprep.subr.bf16.mxu0 0
      %1332 = vmatpush1.bf16.msra.mxu0 %v1254
      %1333 = vmatprep.subr.bf16.mxu0 0
      %1334 = vmatpush1.bf16.msra.mxu0 %v1255
      %1335 = vmatprep.subr.bf16.mxu0 0
      %1336 = vmatpush1.bf16.msra.mxu0 %v1256
      %1337 = vmatprep.subr.bf16.mxu0 0
      %1338 = vmatpush1.bf16.msra.mxu0 %v1257
      %1339 = vmatprep.subr.bf16.mxu0 0
      %1340 = vmatpush1.bf16.msra.mxu0 %v1258
      %1341 = vmatprep.mubr.bf16.mxu0 %v1059
      %1342 = vmatmul.mubr.bf16.gmra.mrb[0].mxu0 %v1058
      %v1343 = vpop.f32.mrb[0].mxu0
      %v1344 = vadd.f32 %v1133, %v1343
      %v1345 = vpop.f32.mrb[0].mxu0
      %v1346 = vpop.f32.mrb[0].mxu0
      %v1347 = vadd.f32 %v1133, %v1346
      %v1348 = vpop.f32.mrb[0].mxu0
      %1349 = vmatprep.mubr.bf16.mxu0 %v1063
      %1350 = vmatmul.mubr.bf16.gmra.mrb[0].mxu0 %v1062
      %v1351 = vpop.f32.mrb[0].mxu0
      %v1352 = vadd.f32 %v1133, %v1351
      %v1353 = vpop.f32.mrb[0].mxu0
      %v1354 = vpop.f32.mrb[0].mxu0
      %v1355 = vadd.f32 %v1133, %v1354
      %v1356 = vpop.f32.mrb[0].mxu0
      %1357 = vmatprep.mubr.bf16.mxu0 %v1067
      %1358 = vmatmul.mubr.bf16.gmra.mrb[0].mxu0 %v1066
      %v1359 = vpop.f32.mrb[0].mxu0
      %v1360 = vadd.f32 %v1133, %v1359
      %v1361 = vpop.f32.mrb[0].mxu0
      %v1362 = vpop.f32.mrb[0].mxu0
      %v1363 = vadd.f32 %v1133, %v1362
      %v1364 = vpop.f32.mrb[0].mxu0
      %1365 = vmatprep.mubr.bf16.mxu0 %v1071
      %1366 = vmatmul.mubr.bf16.gmra.mrb[0].mxu0 %v1070
      %v1367 = vpop.f32.mrb[0].mxu0
      %v1368 = vadd.f32 %v1133, %v1367
      %v1369 = vpop.f32.mrb[0].mxu0
      %v1370 = vpop.f32.mrb[0].mxu0
      %v1371 = vadd.f32 %v1133, %v1370
      %v1372 = vpop.f32.mrb[0].mxu0
      %1373 = vdwg.mxu0
      %1374 = vmatprep.subr.bf16.mxu0 0
      %1375 = vmatpush1.bf16.msra.mxu0 %v1259
      %1376 = vmatprep.subr.bf16.mxu0 0
      %1377 = vmatpush1.bf16.msra.mxu0 %v1260
      %1378 = vmatprep.subr.bf16.mxu0 0
      %1379 = vmatpush1.bf16.msra.mxu0 %v1261
      %1380 = vmatprep.subr.bf16.mxu0 0
      %1381 = vmatpush1.bf16.msra.mxu0 %v1262
      %1382 = vmatprep.subr.bf16.mxu0 0
      %1383 = vmatpush1.bf16.msra.mxu0 %v1263
      %1384 = vmatprep.subr.bf16.mxu0 0
      %1385 = vmatpush1.bf16.msra.mxu0 %v1264
      %1386 = vmatprep.subr.bf16.mxu0 0
      %1387 = vmatpush1.bf16.msra.mxu0 %v1265
      %1388 = vmatprep.subr.bf16.mxu0 0
      %1389 = vmatpush1.bf16.msra.mxu0 %v1266
      %1390 = vmatprep.subr.bf16.mxu0 0
      %1391 = vmatpush1.bf16.msra.mxu0 %v1267
      %1392 = vmatprep.subr.bf16.mxu0 0
      %1393 = vmatpush1.bf16.msra.mxu0 %v1268
      %1394 = vmatprep.subr.bf16.mxu0 0
      %1395 = vmatpush1.bf16.msra.mxu0 %v1269
      %1396 = vmatprep.subr.bf16.mxu0 0
      %1397 = vmatpush1.bf16.msra.mxu0 0
      %1398 = vmatprep.subr.bf16.mxu0 0
      %1399 = vmatpush1.bf16.msra.mxu0 0
      %1400 = vmatprep.subr.bf16.mxu0 0
      %1401 = vmatpush1.bf16.msra.mxu0 0
      %1402 = vmatprep.subr.bf16.mxu0 0
      %1403 = vmatpush1.bf16.msra.mxu0 0
      %1404 = vmatprep.subr.bf16.mxu0 0
      %1405 = vmatpush1.bf16.msra.mxu0 0
      %1406 = vmatprep.mubr.bf16.mxu0 %v1298
      %1407 = vmatmul.mubr.bf16.gmra.mrb[0].mxu0 %v1060
      %v1408 = vpop.f32.mrb[0].mxu0
      %v1409 = vadd.f32 %v1344, %v1408
      %v1410 = vpop.f32.mrb[0].mxu0
      %v1411 = vpop.f32.mrb[0].mxu0
      %v1412 = vadd.f32 %v1347, %v1411
      %v1413 = vpop.f32.mrb[0].mxu0
      %1414 = vmatprep.mubr.bf16.mxu0 %v1301
      %1415 = vmatmul.mubr.bf16.gmra.mrb[0].mxu0 %v1064
      %v1416 = vpop.f32.mrb[0].mxu0
      %v1417 = vadd.f32 %v1352, %v1416
      %v1418 = vpop.f32.mrb[0].mxu0
      %v1419 = vpop.f32.mrb[0].mxu0
      %v1420 = vadd.f32 %v1355, %v1419
      %v1421 = vpop.f32.mrb[0].mxu0
      %1422 = vmatprep.mubr.bf16.mxu0 %v1304
      %1423 = vmatmul.mubr.bf16.gmra.mrb[0].mxu0 %v1068
      %v1424 = vpop.f32.mrb[0].mxu0
      %v1425 = vadd.f32 %v1360, %v1424
      %v1426 = vpop.f32.mrb[0].mxu0
      %v1427 = vpop.f32.mrb[0].mxu0
      %v1428 = vadd.f32 %v1363, %v1427
      %v1429 = vpop.f32.mrb[0].mxu0
      %1430 = vmatprep.mubr.bf16.mxu0 %v1307
      %1431 = vmatmul.mubr.bf16.gmra.mrb[0].mxu0 %v1072
      %v1432 = vpop.f32.mrb[0].mxu0
      %v1433 = vadd.f32 %v1368, %v1432
      %v1434 = vpop.f32.mrb[0].mxu0
      %v1435 = vpop.f32.mrb[0].mxu0
      %v1436 = vadd.f32 %v1371, %v1435
      %v1437 = vpop.f32.mrb[0].mxu0
      %1438 = vdwg.mxu0
      %v1439 = vmax.f32 %v1409, 0.0
      %v1440 = vmax.f32 %v1412, 0.0
      %v1441 = vmax.f32 %v1417, 0.0
      %v1442 = vmax.f32 %v1420, 0.0
      %v1443 = vmax.f32 %v1425, 0.0
      %v1444 = vmax.f32 %v1428, 0.0
      %v1445 = vmax.f32 %v1433, 0.0
      %v1446 = vmax.f32 %v1436, 0.0
      %v1447 = vpack.c.bf16 %v1439, %v1439
      %v1448 = vpack.c.bf16 %v1440, %v1440
      %v1449 = vpack.c.bf16 %v1441, %v1441
      %v1450 = vpack.c.bf16 %v1442, %v1442
      %v1451 = vpack.c.bf16 %v1443, %v1443
      %v1452 = vpack.c.bf16 %v1444, %v1444
      %v1453 = vpack.c.bf16 %v1445, %v1445
      %v1454 = vpack.c.bf16 %v1446, %v1446
      %vm1455 = vcmask 519168
      %1456 = vst.msk [vmem:[%s170] sm:$0xf] %vm1455, %v1447
      %1457 = vst.msk [vmem:[%s170 + $0x4] sm:$0xf] %vm1455, %v1448
      %1458 = vst.msk [vmem:[%s170 + $0x8] sm:$0xf] %vm1455, %v1449
      %1459 = vst.msk [vmem:[%s170 + $0xc] sm:$0xf] %vm1455, %v1450
      %1460 = vst.msk [vmem:[%s170 + $0x10] sm:$0xf] %vm1455, %v1451
      %1461 = vst.msk [vmem:[%s170 + $0x14] sm:$0xf] %vm1455, %v1452
      %1462 = vst.msk [vmem:[%s170 + $0x18] sm:$0xf] %vm1455, %v1453
      %1463 = vst.msk [vmem:[%s170 + $0x1c] sm:$0xf] %vm1455, %v1454
      %p1464 = scmp.lt.s32.totalorder %s14, 1
      %s1465 = scalar_select %p1464, %s14, 1
      %s1466 = smul.addr %s1465, 8
      %s1467 = smul.addr %s1466, 4
      %s1468 = scalar_lea.vmem %s3, %s1467
      // Predicated region
      $region33: #{_lambda_.8} parent=31 // pred_check
        %p1469 = pneg %p100
      $region34: #{_lambda_.8} parent=31 // pred_check_branch
        %1471 = sbr.rel (%p1469) target = $region36
      $region35: #{_lambda_.8} parent=31 // pred_region
        _
      $region36: #{_lambda_.8} parent=31 // pred_fallthru
        _
    $region32: #{_lambda_.8} parent=5 // pred_fallthru
      _
    %p1472 = scmp.le.s32.totalorder 2, %s9
    // Predicated region
    $region37: #{_lambda_.8} parent=5 // pred_check
      %p1473 = pneg %p1472
    $region38: #{_lambda_.8} parent=5 // pred_check_branch
      %1475 = sbr.rel (%p1473) target = $region40
    $region39: #{_lambda_.8} parent=5 // pred_region
      %s1476 = ssub.s32 %s9, 2
      // Predicated region
      $region41: #{_lambda_.8} parent=39 // pred_check
        %p1477 = pneg %p106
      $region42: #{_lambda_.8} parent=39 // pred_check_branch
        %1479 = sbr.rel (%p1477) target = $region44
      $region43: #{_lambda_.8} parent=39 // pred_region
        %p1480 = scmp.lt.s32.totalorder %s15, 1
        %s1481 = scalar_select %p1480, %s15, 1
        %s1482 = smul.addr %s1481, 8
        %s1483 = smul.addr %s1482, 4
        %s1484 = scalar_lea.vmem %s3, %s1483
      $region44: #{_lambda_.8} parent=39 // pred_fallthru
        _
    $region40: #{_lambda_.8} parent=5 // pred_fallthru
      _
  $region6: #{_lambda_.8} parent=0 // loop_footer
    %s13 = sadd.s32 1, %s9
  $region7: #{_lambda_.8} parent=0 // loop_footer_branch
    %8 = sbr.rel target = $region3
  $region8: #{_lambda_.8} parent=0 // loop_exit
    _

// kernel: _lambda_.11
$region0: #{_lambda_.11}
  #allocation0 [shape = 'u32[]', space=smem, size = 0x4, offset = 0x4, fixed_abs, tag = 'smem constant byte address 0x4 - core index']
  #allocation1 [shape = 'u32[144,128]{1,0:T(1,128)}', space=vmem, size = 0x12000, scoped, tag = 'internal scratch']
  %s0 = inlined_call_operand.vmem [shape: f32[99], index: 0, kind: input, shape index: {}]
  %s1 = inlined_call_operand.vmem [shape: bf16[2,8,8,384], index: 1, kind: input, shape index: {}]
  %s2 = inlined_call_operand.vmem [shape: bf16[2,8,8,384], index: 2, kind: input, shape index: {}]
  %s3 = inlined_call_operand.vmem [shape: f32[2,1,384], index: 3, kind: input, shape index: {}]
  %s4 = inlined_call_operand.hbm [shape: f32[2,8,8,384], index: 4, kind: output, shape index: {}]
  %s5 = sld [smem:[#allocation0]]
  $region53: #{_lambda_.11} parent=0
    _
  %s7 = ssub.s32 1, %s5
  %s8 = scalar_select 0, %s7, %s5
  $region1: #{_lambda_.11} parent=0
    #allocation2 [shape = 'u8[512]{0}', space=smem, size = 0x200, scoped, tag = 'input window, operand 0, single buffered']
    #allocation3 [shape = 's32[2]{0}', space=sflag, size = 0x8, scoped, tag = 'scoped memory for _lambda_.11']
    #allocation4 [shape = 's32[2]{0}', space=sflag, size = 0x8, scoped, tag = 'scoped memory for _lambda_.11']
    #allocation5 [shape = 'u8[196608]{0}', space=vmem, size = 0x30000, scoped, tag = 'output window, operand 0']
    %9 = vsyncpa [#allocation4], 0
    %10 = vsyncpa [#allocation3], 0
    %s11 = scalar_lea.sflag [#allocation3], 1
    %12 = vsyncpa %s11, 0
    loop: start=0, step=1, limit=4
    $region2: #{_lambda_.11} parent=1 // loop_pre_header
      _
    $region3: #{_lambda_.11} parent=1 // loop_header
      %s14 = sphi 0, %s18
      %p15 = scmp.ge.s32.totalorder %s14, 4
      %s22 = sphi 0, %s22
      %s24 = sphi 0, %s22
      %s25 = sphi 0, %s24
      %s39 = sphi 0, %s25
      %s45 = sphi 0, %s47
      %s48 = sphi 0, %s45
      %s49 = sphi 0, %s48
      %s65 = sphi 0, %s49
      %s71 = sphi 0, %s73
      %s74 = sphi 0, %s71
      %s75 = sphi 0, %s74
      %s91 = sphi 0, %s75
      %s97 = sphi 0, %s99
      %s100 = sphi 0, %s97
      %s101 = sphi 0, %s100
      %s117 = sphi 0, %s101
      %s123 = sphi 0, %s125
      %s126 = sphi 0, %s123
      %s127 = sphi 0, %s126
      %s143 = sphi 0, %s127
    $region4: #{_lambda_.11} parent=1 // loop_header_branch
      %17 = sbr.rel (%p15) target = $region8
    $region5: #{_lambda_.11} parent=1 // loop_body
      %s19 = ssub.s32 %s14, 1
      %s20 = ssub.s32 %s14, 2
      %s21 = sadd.s32 %s14, 1
      %s23 = sadd.s32 %s22, 1
      %p26 = scmp.eq.s32.totalorder %s14, 1
      %p27 = scmp.ne.s32.totalorder %s22, %s24
      %p28 = scmp.eq.s32.totalorder %s14, 0
      %p29 = por %p27, %p28
      %p30 = scmp.ne.s32.totalorder %s22, %s24
      %p31 = scmp.eq.s32.totalorder %s19, 1
      %p32 = por %p30, %p31
      %p33 = scmp.ne.s32.totalorder %s24, %s25
      %p34 = scmp.eq.s32.totalorder %s19, 0
      %p35 = por %p33, %p34
      %p36 = scmp.ne.s32.totalorder %s24, %s25
      %p37 = scmp.eq.s32.totalorder %s20, 1
      %p38 = por %p36, %p37
      %p40 = scmp.ne.s32.totalorder %s25, %s39
      %p41 = scmp.eq.s32.totalorder %s20, 0
      %p42 = por %p40, %p41
      %s43 = ssub.s32 %s14, %s21
      %p44 = scmp.eq.s32.totalorder %s43, 0
      %s46 = sadd.s32 %s45, 1
      %s47 = scalar_select %p44, %s45, %s46
      %p50 = pneg %p44
      %p51 = scmp.eq.s32.totalorder %s14, 1
      %p52 = por %p50, %p51
      %p53 = scmp.ne.s32.totalorder %s45, %s48
      %p54 = scmp.eq.s32.totalorder %s14, 0
      %p55 = por %p53, %p54
      %p56 = scmp.ne.s32.totalorder %s45, %s48
      %p57 = scmp.eq.s32.totalorder %s19, 1
      %p58 = por %p56, %p57
      %p59 = scmp.ne.s32.totalorder %s48, %s49
      %p60 = scmp.eq.s32.totalorder %s19, 0
      %p61 = por %p59, %p60
      %p62 = scmp.ne.s32.totalorder %s48, %s49
      %p63 = scmp.eq.s32.totalorder %s20, 1
      %p64 = por %p62, %p63
      %p66 = scmp.ne.s32.totalorder %s49, %s65
      %p67 = scmp.eq.s32.totalorder %s20, 0
      %p68 = por %p66, %p67
      %s69 = ssub.s32 %s14, %s21
      %p70 = scmp.eq.s32.totalorder %s69, 0
      %s72 = sadd.s32 %s71, 1
      %s73 = scalar_select %p70, %s71, %s72
      %p76 = pneg %p70
      %p77 = scmp.eq.s32.totalorder %s14, 1
      %p78 = por %p76, %p77
      %p79 = scmp.ne.s32.totalorder %s71, %s74
      %p80 = scmp.eq.s32.totalorder %s14, 0
      %p81 = por %p79, %p80
      %p82 = scmp.ne.s32.totalorder %s71, %s74
      %p83 = scmp.eq.s32.totalorder %s19, 1
      %p84 = por %p82, %p83
      %p85 = scmp.ne.s32.totalorder %s74, %s75
      %p86 = scmp.eq.s32.totalorder %s19, 0
      %p87 = por %p85, %p86
      %p88 = scmp.ne.s32.totalorder %s74, %s75
      %p89 = scmp.eq.s32.totalorder %s20, 1
      %p90 = por %p88, %p89
      %p92 = scmp.ne.s32.totalorder %s75, %s91
      %p93 = scmp.eq.s32.totalorder %s20, 0
      %p94 = por %p92, %p93
      %s95 = ssub.s32 %s14, %s21
      %p96 = scmp.eq.s32.totalorder %s95, 0
      %s98 = sadd.s32 %s97, 1
      %s99 = scalar_select %p96, %s97, %s98
      %p102 = pneg %p96
      %p103 = scmp.eq.s32.totalorder %s14, 1
      %p104 = por %p102, %p103
      %p105 = scmp.ne.s32.totalorder %s97, %s100
      %p106 = scmp.eq.s32.totalorder %s14, 0
      %p107 = por %p105, %p106
      %p108 = scmp.ne.s32.totalorder %s97, %s100
      %p109 = scmp.eq.s32.totalorder %s19, 1
      %p110 = por %p108, %p109
      %p111 = scmp.ne.s32.totalorder %s100, %s101
      %p112 = scmp.eq.s32.totalorder %s19, 0
      %p113 = por %p111, %p112
      %p114 = scmp.ne.s32.totalorder %s100, %s101
      %p115 = scmp.eq.s32.totalorder %s20, 1
      %p116 = por %p114, %p115
      %p118 = scmp.ne.s32.totalorder %s101, %s117
      %p119 = scmp.eq.s32.totalorder %s20, 0
      %p120 = por %p118, %p119
      %s121 = ssub.s32 %s14, %s21
      %p122 = scmp.eq.s32.totalorder %s121, 0
      %s124 = sadd.s32 %s123, 1
      %s125 = scalar_select %p122, %s123, %s124
      %p128 = pneg %p122
      %p129 = scmp.eq.s32.totalorder %s14, 1
      %p130 = por %p128, %p129
      %p131 = scmp.ne.s32.totalorder %s123, %s126
      %p132 = scmp.eq.s32.totalorder %s14, 0
      %p133 = por %p131, %p132
      %p134 = scmp.ne.s32.totalorder %s123, %s126
      %p135 = scmp.eq.s32.totalorder %s19, 1
      %p136 = por %p134, %p135
      %p137 = scmp.ne.s32.totalorder %s126, %s127
      %p138 = scmp.eq.s32.totalorder %s19, 0
      %p139 = por %p137, %p138
      %p140 = scmp.ne.s32.totalorder %s126, %s127
      %p141 = scmp.eq.s32.totalorder %s20, 1
      %p142 = por %p140, %p141
      %p144 = scmp.ne.s32.totalorder %s127, %s143
      %p145 = scmp.eq.s32.totalorder %s20, 0
      %p146 = por %p144, %p145
      %p147 = scmp.le.s32.totalorder 1, %s14
      %p148 = scmp.lt.s32.totalorder %s14, 3
      %p149 = pnand %p147, %p148
      %p150 = pneg %p149
      // Predicated region
      $region9: #{_lambda_.11} parent=5 // pred_check
        _
      $region10: #{_lambda_.11} parent=5 // pred_check_branch
        %152 = sbr.rel (%p149) target = $region12
      $region11: #{_lambda_.11} parent=5 // pred_region
        %s153 = ssub.s32 %s14, 1
        // Predicated region
        $region13: #{_lambda_.11} parent=11 // pred_check
          %p154 = pneg %p35
        $region14: #{_lambda_.11} parent=11 // pred_check_branch
          %156 = sbr.rel (%p154) target = $region16
        $region15: #{_lambda_.11} parent=11 // pred_region
          %s158 = ssub.s32 16, 16
          %159 = vsyncadd [#allocation4], %s158
          %s161 = sshll.u32 %s0, 4
          %s162 = int_to_ptr.vmem [resolvable:$true] %s161
          %164 = dma.vmem_to_smem %s162, 16, [#allocation2], [#allocation4]
        $region16: #{_lambda_.11} parent=11 // pred_fallthru
          _
      $region12: #{_lambda_.11} parent=5 // pred_fallthru
        _
      %p165 = scmp.lt.s32.totalorder %s14, 2
      // Predicated region
      $region17: #{_lambda_.11} parent=5 // pred_check
        %p166 = pneg %p165
      $region18: #{_lambda_.11} parent=5 // pred_check_branch
        %168 = sbr.rel (%p166) target = $region20
      $region19: #{_lambda_.11} parent=5 // pred_region
        // Predicated region
        $region21: #{_lambda_.11} parent=19 // pred_check
          %p169 = pneg %p55
        $region22: #{_lambda_.11} parent=19 // pred_check_branch
          %171 = sbr.rel (%p169) target = $region24
        $region23: #{_lambda_.11} parent=19 // pred_region
          %p172 = scmp.lt.s32.totalorder %s14, 1
          %s173 = scalar_select %p172, %s14, 1
          %s174 = smul.addr %s173, 24
          %s175 = smul.addr %s174, 4
          %s176 = scalar_lea.vmem %s1, %s175
        $region24: #{_lambda_.11} parent=19 // pred_fallthru
          _
        // Predicated region
        $region25: #{_lambda_.11} parent=19 // pred_check
          %p177 = pneg %p81
        $region26: #{_lambda_.11} parent=19 // pred_check_branch
          %179 = sbr.rel (%p177) target = $region28
        $region27: #{_lambda_.11} parent=19 // pred_region
          %p180 = scmp.lt.s32.totalorder %s14, 1
          %s181 = scalar_select %p180, %s14, 1
          %s182 = smul.addr %s181, 24
          %s183 = smul.addr %s182, 4
          %s184 = scalar_lea.vmem %s2, %s183
        $region28: #{_lambda_.11} parent=19 // pred_fallthru
          _
        // Predicated region
        $region29: #{_lambda_.11} parent=19 // pred_check
          %p185 = pneg %p107
        $region30: #{_lambda_.11} parent=19 // pred_check_branch
          %187 = sbr.rel (%p185) target = $region32
        $region31: #{_lambda_.11} parent=19 // pred_region
          %p188 = scmp.lt.s32.totalorder %s14, 1
          %s189 = scalar_select %p188, %s14, 1
          %s190 = smul.addr %s189, 3
          %s191 = scalar_lea.vmem %s3, %s190
        $region32: #{_lambda_.11} parent=19 // pred_fallthru
          _
      $region20: #{_lambda_.11} parent=5 // pred_fallthru
        _
      %p192 = scmp.le.s32.totalorder 1, %s14
      %p193 = scmp.lt.s32.totalorder %s14, 3
      %p194 = pnand %p192, %p193
      %p195 = pneg %p194
      // Predicated region
      $region33: #{_lambda_.11} parent=5 // pred_check
        _
      $region34: #{_lambda_.11} parent=5 // pred_check_branch
        %197 = sbr.rel (%p194) target = $region36
      $region35: #{_lambda_.11} parent=5 // pred_region
        %s198 = ssub.s32 %s14, 1
        // Predicated region
        $region37: #{_lambda_.11} parent=35 // pred_check
          %p199 = pneg %p35
        $region38: #{_lambda_.11} parent=35 // pred_check_branch
          %201 = sbr.rel (%p199) target = $region40
        $region39: #{_lambda_.11} parent=35 // pred_region
          %202 = dma.done [#allocation4], 16
        $region40: #{_lambda_.11} parent=35 // pred_fallthru
          _
        %203 = sfence
        %p204 = pneg %p35
        %p205 = pneg %p32
        %p206 = scmp.lt.s32.totalorder %s19, 1
        %s207 = scalar_select %p206, %s19, 1
        %s208 = smul.addr %s207, 24
        %s209 = smul.addr %s208, 4
        %s210 = scalar_lea.vmem %s1, %s209
        %p211 = pneg %p61
        %p212 = pneg %p58
        %p213 = scmp.lt.s32.totalorder %s19, 1
        %s214 = scalar_select %p213, %s19, 1
        %s215 = smul.addr %s214, 24
        %s216 = smul.addr %s215, 4
        %s217 = scalar_lea.vmem %s2, %s216
        %p218 = pneg %p87
        %p219 = pneg %p84
        %p220 = scmp.lt.s32.totalorder %s19, 1
        %s221 = scalar_select %p220, %s19, 1
        %s222 = smul.addr %s221, 3
        %s223 = scalar_lea.vmem %s3, %s222
        %p224 = pneg %p113
        %p225 = pneg %p110
        %p226 = pneg %p139
        %p227 = pneg %p136
        %s228 = sand.u32 %s126, 1
        %s229 = scalar_lea.sflag [#allocation3], %s228
        %s230 = sand.u32 %s126, 1
        %s231 = smul.addr %s230, 192
        %s232 = scalar_lea.vmem [#allocation5], %s231
        %p233 = scmp.lt.s32.totalorder %s19, 1
        %s234 = scalar_select %p233, %s19, 1
        %s235 = smul.addr %s234, 24
        %s236 = smul.addr %s235, 4
        %s237 = scalar_lea.vmem %s1, %s236
        %p238 = scmp.lt.s32.totalorder %s19, 1
        %s239 = scalar_select %p238, %s19, 1
        %s240 = smul.addr %s239, 24
        %s241 = smul.addr %s240, 4
        %s242 = scalar_lea.vmem %s2, %s241
        %p243 = scmp.lt.s32.totalorder %s19, 1
        %s244 = scalar_select %p243, %s19, 1
        %s245 = smul.addr %s244, 3
        %s246 = scalar_lea.vmem %s3, %s245
        %v247 = vld [vmem:[%s242] sm:$0xff]
        %v248 = vld [vmem:[%s242 + $0x8] sm:$0xf]
        %v249 = vld [vmem:[%s242 + $0xc] sm:$0xff]
        %v250 = vld [vmem:[%s242 + $0x14] sm:$0xf]
        %v251 = vld [vmem:[%s242 + $0x18] sm:$0xff]
        %v252 = vld [vmem:[%s242 + $0x20] sm:$0xf]
        %v253 = vld [vmem:[%s242 + $0x24] sm:$0xff]
        %v254 = vld [vmem:[%s242 + $0x2c] sm:$0xf]
        %v255 = vld [vmem:[%s242 + $0x30] sm:$0xff]
        %v256 = vld [vmem:[%s242 + $0x38] sm:$0xf]
        %v257 = vld [vmem:[%s242 + $0x3c] sm:$0xff]
        %v258 = vld [vmem:[%s242 + $0x44] sm:$0xf]
        %v259 = vld [vmem:[%s242 + $0x48] sm:$0xff]
        %v260 = vld [vmem:[%s242 + $0x50] sm:$0xf]
        %v261 = vld [vmem:[%s242 + $0x54] sm:$0xff]
        %v262 = vld [vmem:[%s242 + $0x5c] sm:$0xf]
        %v263 = vunpack.c.l.bf16 %v247
        %v264 = vunpack.c.h.bf16 %v247
        %v265 = vunpack.c.l.bf16 %v248
        %v266 = vunpack.c.l.bf16 %v249
        %v267 = vunpack.c.h.bf16 %v249
        %v268 = vunpack.c.l.bf16 %v250
        %v269 = vunpack.c.l.bf16 %v251
        %v270 = vunpack.c.h.bf16 %v251
        %v271 = vunpack.c.l.bf16 %v252
        %v272 = vunpack.c.l.bf16 %v253
        %v273 = vunpack.c.h.bf16 %v253
        %v274 = vunpack.c.l.bf16 %v254
        %v275 = vunpack.c.l.bf16 %v255
        %v276 = vunpack.c.h.bf16 %v255
        %v277 = vunpack.c.l.bf16 %v256
        %v278 = vunpack.c.l.bf16 %v257
        %v279 = vunpack.c.h.bf16 %v257
        %v280 = vunpack.c.l.bf16 %v258
        %v281 = vunpack.c.l.bf16 %v259
        %v282 = vunpack.c.h.bf16 %v259
        %v283 = vunpack.c.l.bf16 %v260
        %v284 = vunpack.c.l.bf16 %v261
        %v285 = vunpack.c.h.bf16 %v261
        %v286 = vunpack.c.l.bf16 %v262
        %v287 = vld [vmem:[%s246] sm:$0x7]
        %v289 = vlaneseq
        %v290 = vshrl.u32 %v289, 7
        %v291 = vsub.s32 0, %v290
        %v292 = vrot.slane %v287, %v291
        %v293 = vlaneseq
        %v294 = vshrl.u32 %v293, 7
        %v295 = vsub.s32 1, %v294
        %v296 = vrot.slane %v287, %v295
        %v297 = vlaneseq
        %v298 = vshrl.u32 %v297, 7
        %v299 = vsub.s32 2, %v298
        %v300 = vrot.slane %v287, %v299
        %v304 = vmul.f32 %v263, %v292
        %v305 = vmul.f32 %v264, %v296
        %v306 = vmul.f32 %v265, %v300
        %v307 = vmul.f32 %v266, %v292
        %v308 = vmul.f32 %v267, %v296
        %v309 = vmul.f32 %v268, %v300
        %v310 = vmul.f32 %v269, %v292
        %v311 = vmul.f32 %v270, %v296
        %v312 = vmul.f32 %v271, %v300
        %v313 = vmul.f32 %v272, %v292
        %v314 = vmul.f32 %v273, %v296
        %v315 = vmul.f32 %v274, %v300
        %v316 = vmul.f32 %v275, %v292
        %v317 = vmul.f32 %v276, %v296
        %v318 = vmul.f32 %v277, %v300
        %v319 = vmul.f32 %v278, %v292
        %v320 = vmul.f32 %v279, %v296
        %v321 = vmul.f32 %v280, %v300
        %v322 = vmul.f32 %v281, %v292
        %v323 = vmul.f32 %v282, %v296
        %v324 = vmul.f32 %v283, %v300
        %v325 = vmul.f32 %v284, %v292
        %v326 = vmul.f32 %v285, %v296
        %v327 = vmul.f32 %v286, %v300
        %v328 = vadd.f32 %v304, %v305
        %v329 = vadd.f32 %v328, %v306
        %330 = vadd.xlane.f32.xlu0 %v329
        %v331 = vpop.xlane.xlu0 %330
        %v332 = vadd.f32 %v307, %v308
        %v333 = vadd.f32 %v332, %v309
        %334 = vadd.xlane.f32.xlu0 %v333
        %v335 = vpop.xlane.xlu0 %334
        %v336 = vadd.f32 %v310, %v311
        %v337 = vadd.f32 %v336, %v312
        %338 = vadd.xlane.f32.xlu0 %v337
        %v339 = vpop.xlane.xlu0 %338
        %v340 = vadd.f32 %v313, %v314
        %v341 = vadd.f32 %v340, %v315
        %342 = vadd.xlane.f32.xlu0 %v341
        %v343 = vpop.xlane.xlu0 %342
        %v344 = vadd.f32 %v316, %v317
        %v345 = vadd.f32 %v344, %v318
        %346 = vadd.xlane.f32.xlu0 %v345
        %v347 = vpop.xlane.xlu0 %346
        %v348 = vadd.f32 %v319, %v320
        %v349 = vadd.f32 %v348, %v321
        %350 = vadd.xlane.f32.xlu0 %v349
        %v351 = vpop.xlane.xlu0 %350
        %v352 = vadd.f32 %v322, %v323
        %v353 = vadd.f32 %v352, %v324
        %354 = vadd.xlane.f32.xlu0 %v353
        %v355 = vpop.xlane.xlu0 %354
        %v356 = vadd.f32 %v325, %v326
        %v357 = vadd.f32 %v356, %v327
        %358 = vadd.xlane.f32.xlu0 %v357
        %v359 = vpop.xlane.xlu0 %358
        %v360 = vrcp.pop 384.0
        %v361 = vmul.f32 %v331, %v360
        %v362 = vmul.f32 %v335, %v360
        %v363 = vmul.f32 %v339, %v360
        %v364 = vmul.f32 %v343, %v360
        %v365 = vmul.f32 %v347, %v360
        %v366 = vmul.f32 %v351, %v360
        %v367 = vmul.f32 %v355, %v360
        %v368 = vmul.f32 %v359, %v360
        %v369 = vmax.f32 %v304, %v305
        %v370 = vmax.f32 %v369, %v306
        %371 = vmax.xlane.f32.xlu0 %v370
        %v372 = vpop.xlane.xlu0 %371
        %v373 = vmax.f32 %v307, %v308
        %v374 = vmax.f32 %v373, %v309
        %375 = vmax.xlane.f32.xlu0 %v374
        %v376 = vpop.xlane.xlu0 %375
        %v377 = vmax.f32 %v310, %v311
        %v378 = vmax.f32 %v377, %v312
        %379 = vmax.xlane.f32.xlu0 %v378
        %v380 = vpop.xlane.xlu0 %379
        %v381 = vmax.f32 %v313, %v314
        %v382 = vmax.f32 %v381, %v315
        %383 = vmax.xlane.f32.xlu0 %v382
        %v384 = vpop.xlane.xlu0 %383
        %v385 = vmax.f32 %v316, %v317
        %v386 = vmax.f32 %v385, %v318
        %387 = vmax.xlane.f32.xlu0 %v386
        %v388 = vpop.xlane.xlu0 %387
        %v389 = vmax.f32 %v319, %v320
        %v390 = vmax.f32 %v389, %v321
        %391 = vmax.xlane.f32.xlu0 %v390
        %v392 = vpop.xlane.xlu0 %391
        %v393 = vmax.f32 %v322, %v323
        %v394 = vmax.f32 %v393, %v324
        %395 = vmax.xlane.f32.xlu0 %v394
        %v396 = vpop.xlane.xlu0 %395
        %v397 = vmax.f32 %v325, %v326
        %v398 = vmax.f32 %v397, %v327
        %399 = vmax.xlane.f32.xlu0 %v398
        %v400 = vpop.xlane.xlu0 %399
        %v409 = vlaneseq
        %v410 = vand.u32 %v409, 127
        %v411 = vlaneseq
        %v412 = vshrl.u32 %v411, 7
        %v413 = vsub.s32 %v410, %v412
        %v414 = vrot.slane %v361, %v413
        %v415 = vlaneseq
        %v416 = vshrl.u32 %v415, 7
        %v417 = vsub.s32 %v410, %v416
        %v418 = vrot.slane %v362, %v417
        %v419 = vlaneseq
        %v420 = vshrl.u32 %v419, 7
        %v421 = vsub.s32 %v410, %v420
        %v422 = vrot.slane %v363, %v421
        %v423 = vlaneseq
        %v424 = vshrl.u32 %v423, 7
        %v425 = vsub.s32 %v410, %v424
        %v426 = vrot.slane %v364, %v425
        %v427 = vlaneseq
        %v428 = vshrl.u32 %v427, 7
        %v429 = vsub.s32 %v410, %v428
        %v430 = vrot.slane %v365, %v429
        %v431 = vlaneseq
        %v432 = vshrl.u32 %v431, 7
        %v433 = vsub.s32 %v410, %v432
        %v434 = vrot.slane %v366, %v433
        %v435 = vlaneseq
        %v436 = vshrl.u32 %v435, 7
        %v437 = vsub.s32 %v410, %v436
        %v438 = vrot.slane %v367, %v437
        %v439 = vlaneseq
        %v440 = vshrl.u32 %v439, 7
        %v441 = vsub.s32 %v410, %v440
        %v442 = vrot.slane %v368, %v441
        %vm443 = vcmask 1044484
        %v444 = vsel %vm443, %v418, %v414
        %vm445 = vcmask 1045509
        %v446 = vsel %vm445, %v422, %v444
        %vm447 = vcmask 1046534
        %v448 = vsel %vm447, %v426, %v446
        %vm449 = vcmask 1047559
        %v450 = vsel %vm449, %v430, %v448
        %vm451 = vcmask 1041409
        %v452 = vsel %vm451, %v438, %v434
        %vm453 = vcmask 1042434
        %v454 = vsel %vm453, %v442, %v452
        %vm457 = vcmask 1042432
        %v458 = vsel %vm457, 0.0, %v450
        %v459 = vsel %vm457, %v454, 0.0
        %462 = vrot.lane.b32.xlu0 %v458, 3
        %v463 = vpop.permute.xlu0 %462
        %464 = vrot.lane.b32.xlu0 %v459, 3
        %v465 = vpop.permute.xlu0 %464
        %vm468 = vcmask 23552
        %v469 = vsel %vm468, 0.0, %v463
        %v470 = vsel %vm468, 0.0, %v465
        %vm471 = vcmask 89088
        %v472 = vsel %vm471, %v469, 0.0
        %v473 = vsel %vm471, %v470, 0.0
        %v482 = vlaneseq
        %v483 = vshrl.u32 %v482, 7
        %v484 = vsub.s32 %v410, %v483
        %v485 = vrot.slane %v372, %v484
        %v486 = vlaneseq
        %v487 = vshrl.u32 %v486, 7
        %v488 = vsub.s32 %v410, %v487
        %v489 = vrot.slane %v376, %v488
        %v490 = vlaneseq
        %v491 = vshrl.u32 %v490, 7
        %v492 = vsub.s32 %v410, %v491
        %v493 = vrot.slane %v380, %v492
        %v494 = vlaneseq
        %v495 = vshrl.u32 %v494, 7
        %v496 = vsub.s32 %v410, %v495
        %v497 = vrot.slane %v384, %v496
        %v498 = vlaneseq
        %v499 = vshrl.u32 %v498, 7
        %v500 = vsub.s32 %v410, %v499
        %v501 = vrot.slane %v388, %v500
        %v502 = vlaneseq
        %v503 = vshrl.u32 %v502, 7
        %v504 = vsub.s32 %v410, %v503
        %v505 = vrot.slane %v392, %v504
        %v506 = vlaneseq
        %v507 = vshrl.u32 %v506, 7
        %v508 = vsub.s32 %v410, %v507
        %v509 = vrot.slane %v396, %v508
        %v510 = vlaneseq
        %v511 = vshrl.u32 %v510, 7
        %v512 = vsub.s32 %v410, %v511
        %v513 = vrot.slane %v400, %v512
        %v514 = vsel %vm443, %v489, %v485
        %v515 = vsel %vm445, %v493, %v514
        %v516 = vsel %vm447, %v497, %v515
        %v517 = vsel %vm449, %v501, %v516
        %v518 = vsel %vm451, %v509, %v505
        %v519 = vsel %vm453, %v513, %v518
        %v522 = vsel %vm457, 0.0, %v517
        %v523 = vsel %vm457, %v519, 0.0
        %526 = vrot.lane.b32.xlu0 %v522, 3
        %v527 = vpop.permute.xlu0 %526
        %528 = vrot.lane.b32.xlu0 %v523, 3
        %v529 = vpop.permute.xlu0 %528
        %v532 = vsel %vm468, 0.0, %v527
        %v533 = vsel %vm468, 0.0, %v529
        %v534 = vsel %vm471, %v532, 0.0
        %v535 = vsel %vm471, %v533, 0.0
        %s536 = sld [smem:[#allocation2 + $0x62]]
        %v537 = vstv %s536
        %v538 = vadd.f32 %v537, 0.0
        %s539 = sld [smem:[#allocation2]]
        %v540 = vstv %s539
        %v541 = vmul.f32 %v540, %v472
        %v542 = vadd.f32 %v538, %v541
        %s543 = sld [smem:[#allocation2 + $0x1]]
        %v544 = vstv %s543
        %v545 = vmul.f32 %v544, %v472
        %547 = vrot.lane.b32.xlu0 %v545, 127
        %v548 = vpop.permute.xlu0 %547
        %v550 = vadd.f32 %v542, %v548
        %s551 = sld [smem:[#allocation2 + $0x2]]
        %v552 = vstv %s551
        %v553 = vmul.f32 %v552, %v472
        %555 = vrot.lane.b32.xlu0 %v553, 126
        %v556 = vpop.permute.xlu0 %555
        %v558 = vadd.f32 %v550, %v556
        %s559 = sld [smem:[#allocation2 + $0x3]]
        %v560 = vstv %s559
        %v561 = vmul.f32 %v560, %v472
        %563 = vrot.lane.b32.xlu0 %v561, 125
        %v564 = vpop.permute.xlu0 %563
        %v566 = vadd.f32 %v558, %v564
        %s567 = sld [smem:[#allocation2 + $0x4]]
        %v568 = vstv %s567
        %v569 = vmul.f32 %v568, %v472
        %571 = vrot.lane.b32.xlu0 %v569, 124
        %v572 = vpop.permute.xlu0 %571
        %v574 = vadd.f32 %v566, %v572
        %s575 = sld [smem:[#allocation2 + $0x5]]
        %v576 = vstv %s575
        %v577 = vmul.f32 %v576, %v472
        %579 = vrot.lane.b32.xlu0 %v577, 123
        %v580 = vpop.permute.xlu0 %579
        %v582 = vadd.f32 %v574, %v580
        %s583 = sld [smem:[#allocation2 + $0x6]]
        %v584 = vstv %s583
        %v585 = vmul.f32 %v584, %v472
        %587 = vrot.lane.b32.xlu0 %v585, 122
        %v588 = vpop.permute.xlu0 %587
        %v590 = vadd.f32 %v582, %v588
        %s591 = sld [smem:[#allocation2 + $0x7]]
        %v592 = vstv %s591
        %v593 = vmul.f32 %v592, %v472
        %v594 = vmul.f32 %v592, %v473
        %vm597 = vcmask 1046528
        %v598 = vrot.slane %v593, 1
        %v599 = vrot.slane %v594, 1
        %v600 = vsel %vm597, %v598, %v599
        %v602 = vadd.f32 %v590, %v600
        %s603 = sld [smem:[#allocation2 + $0x8]]
        %v604 = vstv %s603
        %v605 = vmul.f32 %v604, %v472
        %v606 = vmul.f32 %v604, %v473
        %v609 = vrot.slane %v605, 1
        %v610 = vrot.slane %v606, 1
        %v611 = vsel %vm597, %v609, %v610
        %612 = vrot.lane.b32.xlu0 %v611, 127
        %v613 = vpop.permute.xlu0 %612
        %v615 = vadd.f32 %v602, %v613
        %s616 = sld [smem:[#allocation2 + $0x9]]
        %v617 = vstv %s616
        %v618 = vmul.f32 %v617, %v472
        %v619 = vmul.f32 %v617, %v473
        %v622 = vrot.slane %v618, 1
        %v623 = vrot.slane %v619, 1
        %v624 = vsel %vm597, %v622, %v623
        %625 = vrot.lane.b32.xlu0 %v624, 126
        %v626 = vpop.permute.xlu0 %625
        %v628 = vadd.f32 %v615, %v626
        %s629 = sld [smem:[#allocation2 + $0xa]]
        %v630 = vstv %s629
        %v631 = vmul.f32 %v630, %v472
        %v632 = vmul.f32 %v630, %v473
        %v635 = vrot.slane %v631, 1
        %v636 = vrot.slane %v632, 1
        %v637 = vsel %vm597, %v635, %v636
        %638 = vrot.lane.b32.xlu0 %v637, 125
        %v639 = vpop.permute.xlu0 %638
        %v641 = vadd.f32 %v628, %v639
        %s642 = sld [smem:[#allocation2 + $0xb]]
        %v643 = vstv %s642
        %v644 = vmul.f32 %v643, %v472
        %v645 = vmul.f32 %v643, %v473
        %v648 = vrot.slane %v644, 1
        %v649 = vrot.slane %v645, 1
        %v650 = vsel %vm597, %v648, %v649
        %651 = vrot.lane.b32.xlu0 %v650, 124
        %v652 = vpop.permute.xlu0 %651
        %v654 = vadd.f32 %v641, %v652
        %s655 = sld [smem:[#allocation2 + $0xc]]
        %v656 = vstv %s655
        %v657 = vmul.f32 %v656, %v472
        %v658 = vmul.f32 %v656, %v473
        %v661 = vrot.slane %v657, 1
        %v662 = vrot.slane %v658, 1
        %v663 = vsel %vm597, %v661, %v662
        %664 = vrot.lane.b32.xlu0 %v663, 123
        %v665 = vpop.permute.xlu0 %664
        %v667 = vadd.f32 %v654, %v665
        %s668 = sld [smem:[#allocation2 + $0xd]]
        %v669 = vstv %s668
        %v670 = vmul.f32 %v669, %v472
        %v671 = vmul.f32 %v669, %v473
        %v674 = vrot.slane %v670, 1
        %v675 = vrot.slane %v671, 1
        %v676 = vsel %vm597, %v674, %v675
        %677 = vrot.lane.b32.xlu0 %v676, 122
        %v678 = vpop.permute.xlu0 %677
        %v680 = vadd.f32 %v667, %v678
        %s681 = sld [smem:[#allocation2 + $0xe]]
        %v682 = vstv %s681
        %v683 = vmul.f32 %v682, %v472
        %v684 = vmul.f32 %v682, %v473
        %vm687 = vcmask 1045504
        %v688 = vrot.slane %v683, 2
        %v689 = vrot.slane %v684, 2
        %v690 = vsel %vm687, %v688, %v689
        %v692 = vadd.f32 %v680, %v690
        %s693 = sld [smem:[#allocation2 + $0xf]]
        %v694 = vstv %s693
        %v695 = vmul.f32 %v694, %v472
        %v696 = vmul.f32 %v694, %v473
        %v699 = vrot.slane %v695, 2
        %v700 = vrot.slane %v696, 2
        %v701 = vsel %vm687, %v699, %v700
        %702 = vrot.lane.b32.xlu0 %v701, 127
        %v703 = vpop.permute.xlu0 %702
        %v705 = vadd.f32 %v692, %v703
        %s706 = sld [smem:[#allocation2 + $0x10]]
        %v707 = vstv %s706
        %v708 = vmul.f32 %v707, %v472
        %v709 = vmul.f32 %v707, %v473
        %v712 = vrot.slane %v708, 2
        %v713 = vrot.slane %v709, 2
        %v714 = vsel %vm687, %v712, %v713
        %715 = vrot.lane.b32.xlu0 %v714, 126
        %v716 = vpop.permute.xlu0 %715
        %v718 = vadd.f32 %v705, %v716
        %s719 = sld [smem:[#allocation2 + $0x11]]
        %v720 = vstv %s719
        %v721 = vmul.f32 %v720, %v472
        %v722 = vmul.f32 %v720, %v473
        %v725 = vrot.slane %v721, 2
        %v726 = vrot.slane %v722, 2
        %v727 = vsel %vm687, %v725, %v726
        %728 = vrot.lane.b32.xlu0 %v727, 125
        %v729 = vpop.permute.xlu0 %728
        %v731 = vadd.f32 %v718, %v729
        %s732 = sld [smem:[#allocation2 + $0x12]]
        %v733 = vstv %s732
        %v734 = vmul.f32 %v733, %v472
        %v735 = vmul.f32 %v733, %v473
        %v738 = vrot.slane %v734, 2
        %v739 = vrot.slane %v735, 2
        %v740 = vsel %vm687, %v738, %v739
        %741 = vrot.lane.b32.xlu0 %v740, 124
        %v742 = vpop.permute.xlu0 %741
        %v744 = vadd.f32 %v731, %v742
        %s745 = sld [smem:[#allocation2 + $0x13]]
        %v746 = vstv %s745
        %v747 = vmul.f32 %v746, %v472
        %v748 = vmul.f32 %v746, %v473
        %v751 = vrot.slane %v747, 2
        %v752 = vrot.slane %v748, 2
        %v753 = vsel %vm687, %v751, %v752
        %754 = vrot.lane.b32.xlu0 %v753, 123
        %v755 = vpop.permute.xlu0 %754
        %v757 = vadd.f32 %v744, %v755
        %s758 = sld [smem:[#allocation2 + $0x14]]
        %v759 = vstv %s758
        %v760 = vmul.f32 %v759, %v472
        %v761 = vmul.f32 %v759, %v473
        %v764 = vrot.slane %v760, 2
        %v765 = vrot.slane %v761, 2
        %v766 = vsel %vm687, %v764, %v765
        %767 = vrot.lane.b32.xlu0 %v766, 122
        %v768 = vpop.permute.xlu0 %767
        %v770 = vadd.f32 %v757, %v768
        %s771 = sld [smem:[#allocation2 + $0x15]]
        %v772 = vstv %s771
        %v773 = vmul.f32 %v772, %v472
        %v774 = vmul.f32 %v772, %v473
        %vm777 = vcmask 1044480
        %v778 = vrot.slane %v773, 3
        %v779 = vrot.slane %v774, 3
        %v780 = vsel %vm777, %v778, %v779
        %v782 = vadd.f32 %v770, %v780
        %s783 = sld [smem:[#allocation2 + $0x16]]
        %v784 = vstv %s783
        %v785 = vmul.f32 %v784, %v472
        %v786 = vmul.f32 %v784, %v473
        %v789 = vrot.slane %v785, 3
        %v790 = vrot.slane %v786, 3
        %v791 = vsel %vm777, %v789, %v790
        %792 = vrot.lane.b32.xlu0 %v791, 127
        %v793 = vpop.permute.xlu0 %792
        %v795 = vadd.f32 %v782, %v793
        %s796 = sld [smem:[#allocation2 + $0x17]]
        %v797 = vstv %s796
        %v798 = vmul.f32 %v797, %v472
        %v799 = vmul.f32 %v797, %v473
        %v802 = vrot.slane %v798, 3
        %v803 = vrot.slane %v799, 3
        %v804 = vsel %vm777, %v802, %v803
        %805 = vrot.lane.b32.xlu0 %v804, 126
        %v806 = vpop.permute.xlu0 %805
        %v808 = vadd.f32 %v795, %v806
        %s809 = sld [smem:[#allocation2 + $0x18]]
        %v810 = vstv %s809
        %v811 = vmul.f32 %v810, %v472
        %v812 = vmul.f32 %v810, %v473
        %v815 = vrot.slane %v811, 3
        %v816 = vrot.slane %v812, 3
        %v817 = vsel %vm777, %v815, %v816
        %818 = vrot.lane.b32.xlu0 %v817, 125
        %v819 = vpop.permute.xlu0 %818
        %v821 = vadd.f32 %v808, %v819
        %s822 = sld [smem:[#allocation2 + $0x19]]
        %v823 = vstv %s822
        %v824 = vmul.f32 %v823, %v472
        %v825 = vmul.f32 %v823, %v473
        %v828 = vrot.slane %v824, 3
        %v829 = vrot.slane %v825, 3
        %v830 = vsel %vm777, %v828, %v829
        %831 = vrot.lane.b32.xlu0 %v830, 124
        %v832 = vpop.permute.xlu0 %831
        %v834 = vadd.f32 %v821, %v832
        %s835 = sld [smem:[#allocation2 + $0x1a]]
        %v836 = vstv %s835
        %v837 = vmul.f32 %v836, %v472
        %v838 = vmul.f32 %v836, %v473
        %v841 = vrot.slane %v837, 3
        %v842 = vrot.slane %v838, 3
        %v843 = vsel %vm777, %v841, %v842
        %844 = vrot.lane.b32.xlu0 %v843, 123
        %v845 = vpop.permute.xlu0 %844
        %v847 = vadd.f32 %v834, %v845
        %s848 = sld [smem:[#allocation2 + $0x1b]]
        %v849 = vstv %s848
        %v850 = vmul.f32 %v849, %v472
        %v851 = vmul.f32 %v849, %v473
        %v854 = vrot.slane %v850, 3
        %v855 = vrot.slane %v851, 3
        %v856 = vsel %vm777, %v854, %v855
        %857 = vrot.lane.b32.xlu0 %v856, 122
        %v858 = vpop.permute.xlu0 %857
        %v860 = vadd.f32 %v847, %v858
        %s861 = sld [smem:[#allocation2 + $0x1c]]
        %v862 = vstv %s861
        %v863 = vmul.f32 %v862, %v472
        %v864 = vmul.f32 %v862, %v473
        %vm867 = vcmask 1043456
        %v868 = vrot.slane %v863, 4
        %v869 = vrot.slane %v864, 4
        %v870 = vsel %vm867, %v868, %v869
        %v872 = vadd.f32 %v860, %v870
        %s873 = sld [smem:[#allocation2 + $0x1d]]
        %v874 = vstv %s873
        %v875 = vmul.f32 %v874, %v472
        %v876 = vmul.f32 %v874, %v473
        %v879 = vrot.slane %v875, 4
        %v880 = vrot.slane %v876, 4
        %v881 = vsel %vm867, %v879, %v880
        %882 = vrot.lane.b32.xlu0 %v881, 127
        %v883 = vpop.permute.xlu0 %882
        %v885 = vadd.f32 %v872, %v883
        %s886 = sld [smem:[#allocation2 + $0x1e]]
        %v887 = vstv %s886
        %v888 = vmul.f32 %v887, %v472
        %v889 = vmul.f32 %v887, %v473
        %v892 = vrot.slane %v888, 4
        %v893 = vrot.slane %v889, 4
        %v894 = vsel %vm867, %v892, %v893
        %895 = vrot.lane.b32.xlu0 %v894, 126
        %v896 = vpop.permute.xlu0 %895
        %v898 = vadd.f32 %v885, %v896
        %s899 = sld [smem:[#allocation2 + $0x1f]]
        %v900 = vstv %s899
        %v901 = vmul.f32 %v900, %v472
        %v902 = vmul.f32 %v900, %v473
        %v905 = vrot.slane %v901, 4
        %v906 = vrot.slane %v902, 4
        %v907 = vsel %vm867, %v905, %v906
        %908 = vrot.lane.b32.xlu0 %v907, 125
        %v909 = vpop.permute.xlu0 %908
        %v911 = vadd.f32 %v898, %v909
        %s912 = sld [smem:[#allocation2 + $0x20]]
        %v913 = vstv %s912
        %v914 = vmul.f32 %v913, %v472
        %v915 = vmul.f32 %v913, %v473
        %v918 = vrot.slane %v914, 4
        %v919 = vrot.slane %v915, 4
        %v920 = vsel %vm867, %v918, %v919
        %921 = vrot.lane.b32.xlu0 %v920, 124
        %v922 = vpop.permute.xlu0 %921
        %v924 = vadd.f32 %v911, %v922
        %s925 = sld [smem:[#allocation2 + $0x21]]
        %v926 = vstv %s925
        %v927 = vmul.f32 %v926, %v472
        %v928 = vmul.f32 %v926, %v473
        %v931 = vrot.slane %v927, 4
        %v932 = vrot.slane %v928, 4
        %v933 = vsel %vm867, %v931, %v932
        %934 = vrot.lane.b32.xlu0 %v933, 123
        %v935 = vpop.permute.xlu0 %934
        %v937 = vadd.f32 %v924, %v935
        %s938 = sld [smem:[#allocation2 + $0x22]]
        %v939 = vstv %s938
        %v940 = vmul.f32 %v939, %v472
        %v941 = vmul.f32 %v939, %v473
        %v944 = vrot.slane %v940, 4
        %v945 = vrot.slane %v941, 4
        %v946 = vsel %vm867, %v944, %v945
        %947 = vrot.lane.b32.xlu0 %v946, 122
        %v948 = vpop.permute.xlu0 %947
        %v950 = vadd.f32 %v937, %v948
        %s951 = sld [smem:[#allocation2 + $0x23]]
        %v952 = vstv %s951
        %v953 = vmul.f32 %v952, %v472
        %v954 = vmul.f32 %v952, %v473
        %v957 = vrot.slane %v953, 5
        %v958 = vrot.slane %v954, 5
        %v959 = vsel %vm457, %v957, %v958
        %v961 = vadd.f32 %v950, %v959
        %s962 = sld [smem:[#allocation2 + $0x24]]
        %v963 = vstv %s962
        %v964 = vmul.f32 %v963, %v472
        %v965 = vmul.f32 %v963, %v473
        %v968 = vrot.slane %v964, 5
        %v969 = vrot.slane %v965, 5
        %v970 = vsel %vm457, %v968, %v969
        %971 = vrot.lane.b32.xlu0 %v970, 127
        %v972 = vpop.permute.xlu0 %971
        %v974 = vadd.f32 %v961, %v972
        %s975 = sld [smem:[#allocation2 + $0x25]]
        %v976 = vstv %s975
        %v977 = vmul.f32 %v976, %v472
        %v978 = vmul.f32 %v976, %v473
        %v981 = vrot.slane %v977, 5
        %v982 = vrot.slane %v978, 5
        %v983 = vsel %vm457, %v981, %v982
        %984 = vrot.lane.b32.xlu0 %v983, 126
        %v985 = vpop.permute.xlu0 %984
        %v987 = vadd.f32 %v974, %v985
        %s988 = sld [smem:[#allocation2 + $0x26]]
        %v989 = vstv %s988
        %v990 = vmul.f32 %v989, %v472
        %v991 = vmul.f32 %v989, %v473
        %v994 = vrot.slane %v990, 5
        %v995 = vrot.slane %v991, 5
        %v996 = vsel %vm457, %v994, %v995
        %997 = vrot.lane.b32.xlu0 %v996, 125
        %v998 = vpop.permute.xlu0 %997
        %v1000 = vadd.f32 %v987, %v998
        %s1001 = sld [smem:[#allocation2 + $0x27]]
        %v1002 = vstv %s1001
        %v1003 = vmul.f32 %v1002, %v472
        %v1004 = vmul.f32 %v1002, %v473
        %v1007 = vrot.slane %v1003, 5
        %v1008 = vrot.slane %v1004, 5
        %v1009 = vsel %vm457, %v1007, %v1008
        %1010 = vrot.lane.b32.xlu0 %v1009, 124
        %v1011 = vpop.permute.xlu0 %1010
        %v1013 = vadd.f32 %v1000, %v1011
        %s1014 = sld [smem:[#allocation2 + $0x28]]
        %v1015 = vstv %s1014
        %v1016 = vmul.f32 %v1015, %v472
        %v1017 = vmul.f32 %v1015, %v473
        %v1020 = vrot.slane %v1016, 5
        %v1021 = vrot.slane %v1017, 5
        %v1022 = vsel %vm457, %v1020, %v1021
        %1023 = vrot.lane.b32.xlu0 %v1022, 123
        %v1024 = vpop.permute.xlu0 %1023
        %v1026 = vadd.f32 %v1013, %v1024
        %s1027 = sld [smem:[#allocation2 + $0x29]]
        %v1028 = vstv %s1027
        %v1029 = vmul.f32 %v1028, %v472
        %v1030 = vmul.f32 %v1028, %v473
        %v1033 = vrot.slane %v1029, 5
        %v1034 = vrot.slane %v1030, 5
        %v1035 = vsel %vm457, %v1033, %v1034
        %1036 = vrot.lane.b32.xlu0 %v1035, 122
        %v1037 = vpop.permute.xlu0 %1036
        %v1039 = vadd.f32 %v1026, %v1037
        %s1040 = sld [smem:[#allocation2 + $0x2a]]
        %v1041 = vstv %s1040
        %v1042 = vmul.f32 %v1041, %v472
        %v1043 = vmul.f32 %v1041, %v473
        %vm1046 = vcmask 1041408
        %v1047 = vrot.slane %v1042, 6
        %v1048 = vrot.slane %v1043, 6
        %v1049 = vsel %vm1046, %v1047, %v1048
        %v1051 = vadd.f32 %v1039, %v1049
        %s1052 = sld [smem:[#allocation2 + $0x2b]]
        %v1053 = vstv %s1052
        %v1054 = vmul.f32 %v1053, %v472
        %v1055 = vmul.f32 %v1053, %v473
        %v1058 = vrot.slane %v1054, 6
        %v1059 = vrot.slane %v1055, 6
        %v1060 = vsel %vm1046, %v1058, %v1059
        %1061 = vrot.lane.b32.xlu0 %v1060, 127
        %v1062 = vpop.permute.xlu0 %1061
        %v1064 = vadd.f32 %v1051, %v1062
        %s1065 = sld [smem:[#allocation2 + $0x2c]]
        %v1066 = vstv %s1065
        %v1067 = vmul.f32 %v1066, %v472
        %v1068 = vmul.f32 %v1066, %v473
        %v1071 = vrot.slane %v1067, 6
        %v1072 = vrot.slane %v1068, 6
        %v1073 = vsel %vm1046, %v1071, %v1072
        %1074 = vrot.lane.b32.xlu0 %v1073, 126
        %v1075 = vpop.permute.xlu0 %1074
        %v1077 = vadd.f32 %v1064, %v1075
        %s1078 = sld [smem:[#allocation2 + $0x2d]]
        %v1079 = vstv %s1078
        %v1080 = vmul.f32 %v1079, %v472
        %v1081 = vmul.f32 %v1079, %v473
        %v1084 = vrot.slane %v1080, 6
        %v1085 = vrot.slane %v1081, 6
        %v1086 = vsel %vm1046, %v1084, %v1085
        %1087 = vrot.lane.b32.xlu0 %v1086, 125
        %v1088 = vpop.permute.xlu0 %1087
        %v1090 = vadd.f32 %v1077, %v1088
        %s1091 = sld [smem:[#allocation2 + $0x2e]]
        %v1092 = vstv %s1091
        %v1093 = vmul.f32 %v1092, %v472
        %v1094 = vmul.f32 %v1092, %v473
        %v1097 = vrot.slane %v1093, 6
        %v1098 = vrot.slane %v1094, 6
        %v1099 = vsel %vm1046, %v1097, %v1098
        %1100 = vrot.lane.b32.xlu0 %v1099, 124
        %v1101 = vpop.permute.xlu0 %1100
        %v1103 = vadd.f32 %v1090, %v1101
        %s1104 = sld [smem:[#allocation2 + $0x2f]]
        %v1105 = vstv %s1104
        %v1106 = vmul.f32 %v1105, %v472
        %v1107 = vmul.f32 %v1105, %v473
        %v1110 = vrot.slane %v1106, 6
        %v1111 = vrot.slane %v1107, 6
        %v1112 = vsel %vm1046, %v1110, %v1111
        %1113 = vrot.lane.b32.xlu0 %v1112, 123
        %v1114 = vpop.permute.xlu0 %1113
        %v1116 = vadd.f32 %v1103, %v1114
        %s1117 = sld [smem:[#allocation2 + $0x30]]
        %v1118 = vstv %s1117
        %v1119 = vmul.f32 %v1118, %v472
        %v1120 = vmul.f32 %v1118, %v473
        %v1123 = vrot.slane %v1119, 6
        %v1124 = vrot.slane %v1120, 6
        %v1125 = vsel %vm1046, %v1123, %v1124
        %1126 = vrot.lane.b32.xlu0 %v1125, 122
        %v1127 = vpop.permute.xlu0 %1126
        %v1129 = vadd.f32 %v1116, %v1127
        %s1130 = sld [smem:[#allocation2 + $0x31]]
        %v1131 = vstv %s1130
        %v1132 = vmul.f32 %v1131, %v534
        %v1133 = vadd.f32 %v1129, %v1132
        %s1134 = sld [smem:[#allocation2 + $0x32]]
        %v1135 = vstv %s1134
        %v1136 = vmul.f32 %v1135, %v534
        %1138 = vrot.lane.b32.xlu0 %v1136, 127
        %v1139 = vpop.permute.xlu0 %1138
        %v1141 = vadd.f32 %v1133, %v1139
        %s1142 = sld [smem:[#allocation2 + $0x33]]
        %v1143 = vstv %s1142
        %v1144 = vmul.f32 %v1143, %v534
        %1146 = vrot.lane.b32.xlu0 %v1144, 126
        %v1147 = vpop.permute.xlu0 %1146
        %v1149 = vadd.f32 %v1141, %v1147
        %s1150 = sld [smem:[#allocation2 + $0x34]]
        %v1151 = vstv %s1150
        %v1152 = vmul.f32 %v1151, %v534
        %1154 = vrot.lane.b32.xlu0 %v1152, 125
        %v1155 = vpop.permute.xlu0 %1154
        %v1157 = vadd.f32 %v1149, %v1155
        %s1158 = sld [smem:[#allocation2 + $0x35]]
        %v1159 = vstv %s1158
        %v1160 = vmul.f32 %v1159, %v534
        %1162 = vrot.lane.b32.xlu0 %v1160, 124
        %v1163 = vpop.permute.xlu0 %1162
        %v1165 = vadd.f32 %v1157, %v1163
        %s1166 = sld [smem:[#allocation2 + $0x36]]
        %v1167 = vstv %s1166
        %v1168 = vmul.f32 %v1167, %v534
        %1170 = vrot.lane.b32.xlu0 %v1168, 123
        %v1171 = vpop.permute.xlu0 %1170
        %v1173 = vadd.f32 %v1165, %v1171
        %s1174 = sld [smem:[#allocation2 + $0x37]]
        %v1175 = vstv %s1174
        %v1176 = vmul.f32 %v1175, %v534
        %1178 = vrot.lane.b32.xlu0 %v1176, 122
        %v1179 = vpop.permute.xlu0 %1178
        %v1181 = vadd.f32 %v1173, %v1179
        %s1182 = sld [smem:[#allocation2 + $0x38]]
        %v1183 = vstv %s1182
        %v1184 = vmul.f32 %v1183, %v534
        %v1185 = vmul.f32 %v1183, %v535
        %v1188 = vrot.slane %v1184, 1
        %v1189 = vrot.slane %v1185, 1
        %v1190 = vsel %vm597, %v1188, %v1189
        %v1192 = vadd.f32 %v1181, %v1190
        %s1193 = sld [smem:[#allocation2 + $0x39]]
        %v1194 = vstv %s1193
        %v1195 = vmul.f32 %v1194, %v534
        %v1196 = vmul.f32 %v1194, %v535
        %v1199 = vrot.slane %v1195, 1
        %v1200 = vrot.slane %v1196, 1
        %v1201 = vsel %vm597, %v1199, %v1200
        %1202 = vrot.lane.b32.xlu0 %v1201, 127
        %v1203 = vpop.permute.xlu0 %1202
        %v1205 = vadd.f32 %v1192, %v1203
        %s1206 = sld [smem:[#allocation2 + $0x3a]]
        %v1207 = vstv %s1206
        %v1208 = vmul.f32 %v1207, %v534
        %v1209 = vmul.f32 %v1207, %v535
        %v1212 = vrot.slane %v1208, 1
        %v1213 = vrot.slane %v1209, 1
        %v1214 = vsel %vm597, %v1212, %v1213
        %1215 = vrot.lane.b32.xlu0 %v1214, 126
        %v1216 = vpop.permute.xlu0 %1215
        %v1218 = vadd.f32 %v1205, %v1216
        %s1219 = sld [smem:[#allocation2 + $0x3b]]
        %v1220 = vstv %s1219
        %v1221 = vmul.f32 %v1220, %v534
        %v1222 = vmul.f32 %v1220, %v535
        %v1225 = vrot.slane %v1221, 1
        %v1226 = vrot.slane %v1222, 1
        %v1227 = vsel %vm597, %v1225, %v1226
        %1228 = vrot.lane.b32.xlu0 %v1227, 125
        %v1229 = vpop.permute.xlu0 %1228
        %v1231 = vadd.f32 %v1218, %v1229
        %s1232 = sld [smem:[#allocation2 + $0x3c]]
        %v1233 = vstv %s1232
        %v1234 = vmul.f32 %v1233, %v534
        %v1235 = vmul.f32 %v1233, %v535
        %v1238 = vrot.slane %v1234, 1
        %v1239 = vrot.slane %v1235, 1
        %v1240 = vsel %vm597, %v1238, %v1239
        %1241 = vrot.lane.b32.xlu0 %v1240, 124
        %v1242 = vpop.permute.xlu0 %1241
        %v1244 = vadd.f32 %v1231, %v1242
        %s1245 = sld [smem:[#allocation2 + $0x3d]]
        %v1246 = vstv %s1245
        %v1247 = vmul.f32 %v1246, %v534
        %v1248 = vmul.f32 %v1246, %v535
        %v1251 = vrot.slane %v1247, 1
        %v1252 = vrot.slane %v1248, 1
        %v1253 = vsel %vm597, %v1251, %v1252
        %1254 = vrot.lane.b32.xlu0 %v1253, 123
        %v1255 = vpop.permute.xlu0 %1254
        %v1257 = vadd.f32 %v1244, %v1255
        %s1258 = sld [smem:[#allocation2 + $0x3e]]
        %v1259 = vstv %s1258
        %v1260 = vmul.f32 %v1259, %v534
        %v1261 = vmul.f32 %v1259, %v535
        %v1264 = vrot.slane %v1260, 1
        %v1265 = vrot.slane %v1261, 1
        %v1266 = vsel %vm597, %v1264, %v1265
        %1267 = vrot.lane.b32.xlu0 %v1266, 122
        %v1268 = vpop.permute.xlu0 %1267
        %v1270 = vadd.f32 %v1257, %v1268
        %s1271 = sld [smem:[#allocation2 + $0x3f]]
        %v1272 = vstv %s1271
        %v1273 = vmul.f32 %v1272, %v534
        %v1274 = vmul.f32 %v1272, %v535
        %v1277 = vrot.slane %v1273, 2
        %v1278 = vrot.slane %v1274, 2
        %v1279 = vsel %vm687, %v1277, %v1278
        %v1281 = vadd.f32 %v1270, %v1279
        %s1282 = sld [smem:[#allocation2 + $0x40]]
        %v1283 = vstv %s1282
        %v1284 = vmul.f32 %v1283, %v534
        %v1285 = vmul.f32 %v1283, %v535
        %v1288 = vrot.slane %v1284, 2
        %v1289 = vrot.slane %v1285, 2
        %v1290 = vsel %vm687, %v1288, %v1289
        %1291 = vrot.lane.b32.xlu0 %v1290, 127
        %v1292 = vpop.permute.xlu0 %1291
        %v1294 = vadd.f32 %v1281, %v1292
        %s1295 = sld [smem:[#allocation2 + $0x41]]
        %v1296 = vstv %s1295
        %v1297 = vmul.f32 %v1296, %v534
        %v1298 = vmul.f32 %v1296, %v535
        %v1301 = vrot.slane %v1297, 2
        %v1302 = vrot.slane %v1298, 2
        %v1303 = vsel %vm687, %v1301, %v1302
        %1304 = vrot.lane.b32.xlu0 %v1303, 126
        %v1305 = vpop.permute.xlu0 %1304
        %v1307 = vadd.f32 %v1294, %v1305
        %s1308 = sld [smem:[#allocation2 + $0x42]]
        %v1309 = vstv %s1308
        %v1310 = vmul.f32 %v1309, %v534
        %v1311 = vmul.f32 %v1309, %v535
        %v1314 = vrot.slane %v1310, 2
        %v1315 = vrot.slane %v1311, 2
        %v1316 = vsel %vm687, %v1314, %v1315
        %1317 = vrot.lane.b32.xlu0 %v1316, 125
        %v1318 = vpop.permute.xlu0 %1317
        %v1320 = vadd.f32 %v1307, %v1318
        %s1321 = sld [smem:[#allocation2 + $0x43]]
        %v1322 = vstv %s1321
        %v1323 = vmul.f32 %v1322, %v534
        %v1324 = vmul.f32 %v1322, %v535
        %v1327 = vrot.slane %v1323, 2
        %v1328 = vrot.slane %v1324, 2
        %v1329 = vsel %vm687, %v1327, %v1328
        %1330 = vrot.lane.b32.xlu0 %v1329, 124
        %v1331 = vpop.permute.xlu0 %1330
        %v1333 = vadd.f32 %v1320, %v1331
        %s1334 = sld [smem:[#allocation2 + $0x44]]
        %v1335 = vstv %s1334
        %v1336 = vmul.f32 %v1335, %v534
        %v1337 = vmul.f32 %v1335, %v535
        %v1340 = vrot.slane %v1336, 2
        %v1341 = vrot.slane %v1337, 2
        %v1342 = vsel %vm687, %v1340, %v1341
        %1343 = vrot.lane.b32.xlu0 %v1342, 123
        %v1344 = vpop.permute.xlu0 %1343
        %v1346 = vadd.f32 %v1333, %v1344
        %s1347 = sld [smem:[#allocation2 + $0x45]]
        %v1348 = vstv %s1347
        %v1349 = vmul.f32 %v1348, %v534
        %v1350 = vmul.f32 %v1348, %v535
        %v1353 = vrot.slane %v1349, 2
        %v1354 = vrot.slane %v1350, 2
        %v1355 = vsel %vm687, %v1353, %v1354
        %1356 = vrot.lane.b32.xlu0 %v1355, 122
        %v1357 = vpop.permute.xlu0 %1356
        %v1359 = vadd.f32 %v1346, %v1357
        %s1360 = sld [smem:[#allocation2 + $0x46]]
        %v1361 = vstv %s1360
        %v1362 = vmul.f32 %v1361, %v534
        %v1363 = vmul.f32 %v1361, %v535
        %v1366 = vrot.slane %v1362, 3
        %v1367 = vrot.slane %v1363, 3
        %v1368 = vsel %vm777, %v1366, %v1367
        %v1370 = vadd.f32 %v1359, %v1368
        %s1371 = sld [smem:[#allocation2 + $0x47]]
        %v1372 = vstv %s1371
        %v1373 = vmul.f32 %v1372, %v534
        %v1374 = vmul.f32 %v1372, %v535
        %v1377 = vrot.slane %v1373, 3
        %v1378 = vrot.slane %v1374, 3
        %v1379 = vsel %vm777, %v1377, %v1378
        %1380 = vrot.lane.b32.xlu0 %v1379, 127
        %v1381 = vpop.permute.xlu0 %1380
        %v1383 = vadd.f32 %v1370, %v1381
        %s1384 = sld [smem:[#allocation2 + $0x48]]
        %v1385 = vstv %s1384
        %v1386 = vmul.f32 %v1385, %v534
        %v1387 = vmul.f32 %v1385, %v535
        %v1390 = vrot.slane %v1386, 3
        %v1391 = vrot.slane %v1387, 3
        %v1392 = vsel %vm777, %v1390, %v1391
        %1393 = vrot.lane.b32.xlu0 %v1392, 126
        %v1394 = vpop.permute.xlu0 %1393
        %v1396 = vadd.f32 %v1383, %v1394
        %s1397 = sld [smem:[#allocation2 + $0x49]]
        %v1398 = vstv %s1397
        %v1399 = vmul.f32 %v1398, %v534
        %v1400 = vmul.f32 %v1398, %v535
        %v1403 = vrot.slane %v1399, 3
        %v1404 = vrot.slane %v1400, 3
        %v1405 = vsel %vm777, %v1403, %v1404
        %1406 = vrot.lane.b32.xlu0 %v1405, 125
        %v1407 = vpop.permute.xlu0 %1406
        %v1409 = vadd.f32 %v1396, %v1407
        %s1410 = sld [smem:[#allocation2 + $0x4a]]
        %v1411 = vstv %s1410
        %v1412 = vmul.f32 %v1411, %v534
        %v1413 = vmul.f32 %v1411, %v535
        %v1416 = vrot.slane %v1412, 3
        %v1417 = vrot.slane %v1413, 3
        %v1418 = vsel %vm777, %v1416, %v1417
        %1419 = vrot.lane.b32.xlu0 %v1418, 124
        %v1420 = vpop.permute.xlu0 %1419
        %v1422 = vadd.f32 %v1409, %v1420
        %s1423 = sld [smem:[#allocation2 + $0x4b]]
        %v1424 = vstv %s1423
        %v1425 = vmul.f32 %v1424, %v534
        %v1426 = vmul.f32 %v1424, %v535
        %v1429 = vrot.slane %v1425, 3
        %v1430 = vrot.slane %v1426, 3
        %v1431 = vsel %vm777, %v1429, %v1430
        %1432 = vrot.lane.b32.xlu0 %v1431, 123
        %v1433 = vpop.permute.xlu0 %1432
        %v1435 = vadd.f32 %v1422, %v1433
        %s1436 = sld [smem:[#allocation2 + $0x4c]]
        %v1437 = vstv %s1436
        %v1438 = vmul.f32 %v1437, %v534
        %v1439 = vmul.f32 %v1437, %v535
        %v1442 = vrot.slane %v1438, 3
        %v1443 = vrot.slane %v1439, 3
        %v1444 = vsel %vm777, %v1442, %v1443
        %1445 = vrot.lane.b32.xlu0 %v1444, 122
        %v1446 = vpop.permute.xlu0 %1445
        %v1448 = vadd.f32 %v1435, %v1446
        %s1449 = sld [smem:[#allocation2 + $0x4d]]
        %v1450 = vstv %s1449
        %v1451 = vmul.f32 %v1450, %v534
        %v1452 = vmul.f32 %v1450, %v535
        %v1455 = vrot.slane %v1451, 4
        %v1456 = vrot.slane %v1452, 4
        %v1457 = vsel %vm867, %v1455, %v1456
        %v1459 = vadd.f32 %v1448, %v1457
        %s1460 = sld [smem:[#allocation2 + $0x4e]]
        %v1461 = vstv %s1460
        %v1462 = vmul.f32 %v1461, %v534
        %v1463 = vmul.f32 %v1461, %v535
        %v1466 = vrot.slane %v1462, 4
        %v1467 = vrot.slane %v1463, 4
        %v1468 = vsel %vm867, %v1466, %v1467
        %1469 = vrot.lane.b32.xlu0 %v1468, 127
        %v1470 = vpop.permute.xlu0 %1469
        %v1472 = vadd.f32 %v1459, %v1470
        %s1473 = sld [smem:[#allocation2 + $0x4f]]
        %v1474 = vstv %s1473
        %v1475 = vmul.f32 %v1474, %v534
        %v1476 = vmul.f32 %v1474, %v535
        %v1479 = vrot.slane %v1475, 4
        %v1480 = vrot.slane %v1476, 4
        %v1481 = vsel %vm867, %v1479, %v1480
        %1482 = vrot.lane.b32.xlu0 %v1481, 126
        %v1483 = vpop.permute.xlu0 %1482
        %v1485 = vadd.f32 %v1472, %v1483
        %s1486 = sld [smem:[#allocation2 + $0x50]]
        %v1487 = vstv %s1486
        %v1488 = vmul.f32 %v1487, %v534
        %v1489 = vmul.f32 %v1487, %v535
        %v1492 = vrot.slane %v1488, 4
        %v1493 = vrot.slane %v1489, 4
        %v1494 = vsel %vm867, %v1492, %v1493
        %1495 = vrot.lane.b32.xlu0 %v1494, 125
        %v1496 = vpop.permute.xlu0 %1495
        %v1498 = vadd.f32 %v1485, %v1496
        %s1499 = sld [smem:[#allocation2 + $0x51]]
        %v1500 = vstv %s1499
        %v1501 = vmul.f32 %v1500, %v534
        %v1502 = vmul.f32 %v1500, %v535
        %v1505 = vrot.slane %v1501, 4
        %v1506 = vrot.slane %v1502, 4
        %v1507 = vsel %vm867, %v1505, %v1506
        %1508 = vrot.lane.b32.xlu0 %v1507, 124
        %v1509 = vpop.permute.xlu0 %1508
        %v1511 = vadd.f32 %v1498, %v1509
        %s1512 = sld [smem:[#allocation2 + $0x52]]
        %v1513 = vstv %s1512
        %v1514 = vmul.f32 %v1513, %v534
        %v1515 = vmul.f32 %v1513, %v535
        %v1518 = vrot.slane %v1514, 4
        %v1519 = vrot.slane %v1515, 4
        %v1520 = vsel %vm867, %v1518, %v1519
        %1521 = vrot.lane.b32.xlu0 %v1520, 123
        %v1522 = vpop.permute.xlu0 %1521
        %v1524 = vadd.f32 %v1511, %v1522
        %s1525 = sld [smem:[#allocation2 + $0x53]]
        %v1526 = vstv %s1525
        %v1527 = vmul.f32 %v1526, %v534
        %v1528 = vmul.f32 %v1526, %v535
        %v1531 = vrot.slane %v1527, 4
        %v1532 = vrot.slane %v1528, 4
        %v1533 = vsel %vm867, %v1531, %v1532
        %1534 = vrot.lane.b32.xlu0 %v1533, 122
        %v1535 = vpop.permute.xlu0 %1534
        %v1537 = vadd.f32 %v1524, %v1535
        %s1538 = sld [smem:[#allocation2 + $0x54]]
        %v1539 = vstv %s1538
        %v1540 = vmul.f32 %v1539, %v534
        %v1541 = vmul.f32 %v1539, %v535
        %v1544 = vrot.slane %v1540, 5
        %v1545 = vrot.slane %v1541, 5
        %v1546 = vsel %vm457, %v1544, %v1545
        %v1548 = vadd.f32 %v1537, %v1546
        %s1549 = sld [smem:[#allocation2 + $0x55]]
        %v1550 = vstv %s1549
        %v1551 = vmul.f32 %v1550, %v534
        %v1552 = vmul.f32 %v1550, %v535
        %v1555 = vrot.slane %v1551, 5
        %v1556 = vrot.slane %v1552, 5
        %v1557 = vsel %vm457, %v1555, %v1556
        %1558 = vrot.lane.b32.xlu0 %v1557, 127
        %v1559 = vpop.permute.xlu0 %1558
        %v1561 = vadd.f32 %v1548, %v1559
        %s1562 = sld [smem:[#allocation2 + $0x56]]
        %v1563 = vstv %s1562
        %v1564 = vmul.f32 %v1563, %v534
        %v1565 = vmul.f32 %v1563, %v535
        %v1568 = vrot.slane %v1564, 5
        %v1569 = vrot.slane %v1565, 5
        %v1570 = vsel %vm457, %v1568, %v1569
        %1571 = vrot.lane.b32.xlu0 %v1570, 126
        %v1572 = vpop.permute.xlu0 %1571
        %v1574 = vadd.f32 %v1561, %v1572
        %s1575 = sld [smem:[#allocation2 + $0x57]]
        %v1576 = vstv %s1575
        %v1577 = vmul.f32 %v1576, %v534
        %v1578 = vmul.f32 %v1576, %v535
        %v1581 = vrot.slane %v1577, 5
        %v1582 = vrot.slane %v1578, 5
        %v1583 = vsel %vm457, %v1581, %v1582
        %1584 = vrot.lane.b32.xlu0 %v1583, 125
        %v1585 = vpop.permute.xlu0 %1584
        %v1587 = vadd.f32 %v1574, %v1585
        %s1588 = sld [smem:[#allocation2 + $0x58]]
        %v1589 = vstv %s1588
        %v1590 = vmul.f32 %v1589, %v534
        %v1591 = vmul.f32 %v1589, %v535
        %v1594 = vrot.slane %v1590, 5
        %v1595 = vrot.slane %v1591, 5
        %v1596 = vsel %vm457, %v1594, %v1595
        %1597 = vrot.lane.b32.xlu0 %v1596, 124
        %v1598 = vpop.permute.xlu0 %1597
        %v1600 = vadd.f32 %v1587, %v1598
        %s1601 = sld [smem:[#allocation2 + $0x59]]
        %v1602 = vstv %s1601
        %v1603 = vmul.f32 %v1602, %v534
        %v1604 = vmul.f32 %v1602, %v535
        %v1607 = vrot.slane %v1603, 5
        %v1608 = vrot.slane %v1604, 5
        %v1609 = vsel %vm457, %v1607, %v1608
        %1610 = vrot.lane.b32.xlu0 %v1609, 123
        %v1611 = vpop.permute.xlu0 %1610
        %v1613 = vadd.f32 %v1600, %v1611
        %s1614 = sld [smem:[#allocation2 + $0x5a]]
        %v1615 = vstv %s1614
        %v1616 = vmul.f32 %v1615, %v534
        %v1617 = vmul.f32 %v1615, %v535
        %v1620 = vrot.slane %v1616, 5
        %v1621 = vrot.slane %v1617, 5
        %v1622 = vsel %vm457, %v1620, %v1621
        %1623 = vrot.lane.b32.xlu0 %v1622, 122
        %v1624 = vpop.permute.xlu0 %1623
        %v1626 = vadd.f32 %v1613, %v1624
        %s1627 = sld [smem:[#allocation2 + $0x5b]]
        %v1628 = vstv %s1627
        %v1629 = vmul.f32 %v1628, %v534
        %v1630 = vmul.f32 %v1628, %v535
        %v1633 = vrot.slane %v1629, 6
        %v1634 = vrot.slane %v1630, 6
        %v1635 = vsel %vm1046, %v1633, %v1634
        %v1637 = vadd.f32 %v1626, %v1635
        %s1638 = sld [smem:[#allocation2 + $0x5c]]
        %v1639 = vstv %s1638
        %v1640 = vmul.f32 %v1639, %v534
        %v1641 = vmul.f32 %v1639, %v535
        %v1644 = vrot.slane %v1640, 6
        %v1645 = vrot.slane %v1641, 6
        %v1646 = vsel %vm1046, %v1644, %v1645
        %1647 = vrot.lane.b32.xlu0 %v1646, 127
        %v1648 = vpop.permute.xlu0 %1647
        %v1650 = vadd.f32 %v1637, %v1648
        %s1651 = sld [smem:[#allocation2 + $0x5d]]
        %v1652 = vstv %s1651
        %v1653 = vmul.f32 %v1652, %v534
        %v1654 = vmul.f32 %v1652, %v535
        %v1657 = vrot.slane %v1653, 6
        %v1658 = vrot.slane %v1654, 6
        %v1659 = vsel %vm1046, %v1657, %v1658
        %1660 = vrot.lane.b32.xlu0 %v1659, 126
        %v1661 = vpop.permute.xlu0 %1660
        %v1663 = vadd.f32 %v1650, %v1661
        %s1664 = sld [smem:[#allocation2 + $0x5e]]
        %v1665 = vstv %s1664
        %v1666 = vmul.f32 %v1665, %v534
        %v1667 = vmul.f32 %v1665, %v535
        %v1670 = vrot.slane %v1666, 6
        %v1671 = vrot.slane %v1667, 6
        %v1672 = vsel %vm1046, %v1670, %v1671
        %1673 = vrot.lane.b32.xlu0 %v1672, 125
        %v1674 = vpop.permute.xlu0 %1673
        %v1676 = vadd.f32 %v1663, %v1674
        %s1677 = sld [smem:[#allocation2 + $0x5f]]
        %v1678 = vstv %s1677
        %v1679 = vmul.f32 %v1678, %v534
        %v1680 = vmul.f32 %v1678, %v535
        %v1683 = vrot.slane %v1679, 6
        %v1684 = vrot.slane %v1680, 6
        %v1685 = vsel %vm1046, %v1683, %v1684
        %1686 = vrot.lane.b32.xlu0 %v1685, 124
        %v1687 = vpop.permute.xlu0 %1686
        %v1689 = vadd.f32 %v1676, %v1687
        %s1690 = sld [smem:[#allocation2 + $0x60]]
        %v1691 = vstv %s1690
        %v1692 = vmul.f32 %v1691, %v534
        %v1693 = vmul.f32 %v1691, %v535
        %v1696 = vrot.slane %v1692, 6
        %v1697 = vrot.slane %v1693, 6
        %v1698 = vsel %vm1046, %v1696, %v1697
        %1699 = vrot.lane.b32.xlu0 %v1698, 123
        %v1700 = vpop.permute.xlu0 %1699
        %v1702 = vadd.f32 %v1689, %v1700
        %s1703 = sld [smem:[#allocation2 + $0x61]]
        %v1704 = vstv %s1703
        %v1705 = vmul.f32 %v1704, %v534
        %v1706 = vmul.f32 %v1704, %v535
        %v1709 = vrot.slane %v1705, 6
        %v1710 = vrot.slane %v1706, 6
        %v1711 = vsel %vm1046, %v1709, %v1710
        %1712 = vrot.lane.b32.xlu0 %v1711, 122
        %v1713 = vpop.permute.xlu0 %1712
        %v1715 = vadd.f32 %v1702, %v1713
        %v1716 = vxor.u32 %v1715, 2147483648
        %v1717 = vmul.f32 %v1716, 1.442695
        %v1718 = vpow.pop %v1717
        %v1719 = vadd.f32 %v1718, 1.0
        %v1720 = vrcp.pop %v1719
        %v1721 = vmul.f32 1.0, %v1720
        %v1722 = vlaneseq
        %v1723 = vshrl.u32 %v1722, 7
        %v1724 = vsub.s32 0, %v1723
        %v1725 = vrot.slane %v1721, %v1724
        %1727 = vbcast.lane.b32.xlu0 %v1725, 256
        %v1728 = vpop.permute.xlu0 %1727
        %v1729 = vlaneseq
        %v1730 = vshrl.u32 %v1729, 7
        %v1731 = vsub.s32 1, %v1730
        %v1732 = vrot.slane %v1721, %v1731
        %1734 = vbcast.lane.b32.xlu0 %v1732, 256
        %v1735 = vpop.permute.xlu0 %1734
        %v1736 = vlaneseq
        %v1737 = vshrl.u32 %v1736, 7
        %v1738 = vsub.s32 2, %v1737
        %v1739 = vrot.slane %v1721, %v1738
        %1741 = vbcast.lane.b32.xlu0 %v1739, 256
        %v1742 = vpop.permute.xlu0 %1741
        %v1743 = vlaneseq
        %v1744 = vshrl.u32 %v1743, 7
        %v1745 = vsub.s32 3, %v1744
        %v1746 = vrot.slane %v1721, %v1745
        %1748 = vbcast.lane.b32.xlu0 %v1746, 256
        %v1749 = vpop.permute.xlu0 %1748
        %v1750 = vlaneseq
        %v1751 = vshrl.u32 %v1750, 7
        %v1752 = vsub.s32 4, %v1751
        %v1753 = vrot.slane %v1721, %v1752
        %1755 = vbcast.lane.b32.xlu0 %v1753, 256
        %v1756 = vpop.permute.xlu0 %1755
        %v1757 = vlaneseq
        %v1758 = vshrl.u32 %v1757, 7
        %v1759 = vsub.s32 5, %v1758
        %v1760 = vrot.slane %v1721, %v1759
        %1762 = vbcast.lane.b32.xlu0 %v1760, 256
        %v1763 = vpop.permute.xlu0 %1762
        %v1764 = vlaneseq
        %v1765 = vshrl.u32 %v1764, 7
        %v1766 = vsub.s32 6, %v1765
        %v1767 = vrot.slane %v1721, %v1766
        %1769 = vbcast.lane.b32.xlu0 %v1767, 256
        %v1770 = vpop.permute.xlu0 %1769
        %v1771 = vlaneseq
        %v1772 = vshrl.u32 %v1771, 7
        %v1773 = vsub.s32 7, %v1772
        %v1774 = vrot.slane %v1721, %v1773
        %1776 = vbcast.lane.b32.xlu0 %v1774, 256
        %v1777 = vpop.permute.xlu0 %1776
        %v1778 = vld [vmem:[%s237] sm:$0xff]
        %v1779 = vld [vmem:[%s237 + $0x8] sm:$0xf]
        %v1780 = vld [vmem:[%s237 + $0xc] sm:$0xff]
        %v1781 = vld [vmem:[%s237 + $0x14] sm:$0xf]
        %v1782 = vld [vmem:[%s237 + $0x18] sm:$0xff]
        %v1783 = vld [vmem:[%s237 + $0x20] sm:$0xf]
        %v1784 = vld [vmem:[%s237 + $0x24] sm:$0xff]
        %v1785 = vld [vmem:[%s237 + $0x2c] sm:$0xf]
        %v1786 = vld [vmem:[%s237 + $0x30] sm:$0xff]
        %v1787 = vld [vmem:[%s237 + $0x38] sm:$0xf]
        %v1788 = vld [vmem:[%s237 + $0x3c] sm:$0xff]
        %v1789 = vld [vmem:[%s237 + $0x44] sm:$0xf]
        %v1790 = vld [vmem:[%s237 + $0x48] sm:$0xff]
        %v1791 = vld [vmem:[%s237 + $0x50] sm:$0xf]
        %v1792 = vld [vmem:[%s237 + $0x54] sm:$0xff]
        %v1793 = vld [vmem:[%s237 + $0x5c] sm:$0xf]
        %v1794 = vunpack.c.l.bf16 %v1778
        %v1795 = vunpack.c.h.bf16 %v1778
        %v1796 = vunpack.c.l.bf16 %v1779
        %v1797 = vunpack.c.l.bf16 %v1780
        %v1798 = vunpack.c.h.bf16 %v1780
        %v1799 = vunpack.c.l.bf16 %v1781
        %v1800 = vunpack.c.l.bf16 %v1782
        %v1801 = vunpack.c.h.bf16 %v1782
        %v1802 = vunpack.c.l.bf16 %v1783
        %v1803 = vunpack.c.l.bf16 %v1784
        %v1804 = vunpack.c.h.bf16 %v1784
        %v1805 = vunpack.c.l.bf16 %v1785
        %v1806 = vunpack.c.l.bf16 %v1786
        %v1807 = vunpack.c.h.bf16 %v1786
        %v1808 = vunpack.c.l.bf16 %v1787
        %v1809 = vunpack.c.l.bf16 %v1788
        %v1810 = vunpack.c.h.bf16 %v1788
        %v1811 = vunpack.c.l.bf16 %v1789
        %v1812 = vunpack.c.l.bf16 %v1790
        %v1813 = vunpack.c.h.bf16 %v1790
        %v1814 = vunpack.c.l.bf16 %v1791
        %v1815 = vunpack.c.l.bf16 %v1792
        %v1816 = vunpack.c.h.bf16 %v1792
        %v1817 = vunpack.c.l.bf16 %v1793
        %v1818 = vmul.f32 %v304, %v1728
        %v1819 = vmul.f32 %v305, %v1728
        %v1820 = vmul.f32 %v306, %v1728
        %v1821 = vmul.f32 %v307, %v1735
        %v1822 = vmul.f32 %v308, %v1735
        %v1823 = vmul.f32 %v309, %v1735
        %v1824 = vmul.f32 %v310, %v1742
        %v1825 = vmul.f32 %v311, %v1742
        %v1826 = vmul.f32 %v312, %v1742
        %v1827 = vmul.f32 %v313, %v1749
        %v1828 = vmul.f32 %v314, %v1749
        %v1829 = vmul.f32 %v315, %v1749
        %v1830 = vmul.f32 %v316, %v1756
        %v1831 = vmul.f32 %v317, %v1756
        %v1832 = vmul.f32 %v318, %v1756
        %v1833 = vmul.f32 %v319, %v1763
        %v1834 = vmul.f32 %v320, %v1763
        %v1835 = vmul.f32 %v321, %v1763
        %v1836 = vmul.f32 %v322, %v1770
        %v1837 = vmul.f32 %v323, %v1770
        %v1838 = vmul.f32 %v324, %v1770
        %v1839 = vmul.f32 %v325, %v1777
        %v1840 = vmul.f32 %v326, %v1777
        %v1841 = vmul.f32 %v327, %v1777
        %v1842 = vadd.f32 %v1794, %v1818
        %v1843 = vadd.f32 %v1795, %v1819
        %v1844 = vadd.f32 %v1796, %v1820
        %v1845 = vadd.f32 %v1797, %v1821
        %v1846 = vadd.f32 %v1798, %v1822
        %v1847 = vadd.f32 %v1799, %v1823
        %v1848 = vadd.f32 %v1800, %v1824
        %v1849 = vadd.f32 %v1801, %v1825
        %v1850 = vadd.f32 %v1802, %v1826
        %v1851 = vadd.f32 %v1803, %v1827
        %v1852 = vadd.f32 %v1804, %v1828
        %v1853 = vadd.f32 %v1805, %v1829
        %v1854 = vadd.f32 %v1806, %v1830
        %v1855 = vadd.f32 %v1807, %v1831
        %v1856 = vadd.f32 %v1808, %v1832
        %v1857 = vadd.f32 %v1809, %v1833
        %v1858 = vadd.f32 %v1810, %v1834
        %v1859 = vadd.f32 %v1811, %v1835
        %v1860 = vadd.f32 %v1812, %v1836
        %v1861 = vadd.f32 %v1813, %v1837
        %v1862 = vadd.f32 %v1814, %v1838
        %v1863 = vadd.f32 %v1815, %v1839
        %v1864 = vadd.f32 %v1816, %v1840
        %v1865 = vadd.f32 %v1817, %v1841
        %v1866 = vmax.f32 %v1842, 0.0
        %v1867 = vmax.f32 %v1843, 0.0
        %v1868 = vmax.f32 %v1844, 0.0
        %v1869 = vmax.f32 %v1845, 0.0
        %v1870 = vmax.f32 %v1846, 0.0
        %v1871 = vmax.f32 %v1847, 0.0
        %v1872 = vmax.f32 %v1848, 0.0
        %v1873 = vmax.f32 %v1849, 0.0
        %v1874 = vmax.f32 %v1850, 0.0
        %v1875 = vmax.f32 %v1851, 0.0
        %v1876 = vmax.f32 %v1852, 0.0
        %v1877 = vmax.f32 %v1853, 0.0
        %v1878 = vmax.f32 %v1854, 0.0
        %v1879 = vmax.f32 %v1855, 0.0
        %v1880 = vmax.f32 %v1856, 0.0
        %v1881 = vmax.f32 %v1857, 0.0
        %v1882 = vmax.f32 %v1858, 0.0
        %v1883 = vmax.f32 %v1859, 0.0
        %v1884 = vmax.f32 %v1860, 0.0
        %v1885 = vmax.f32 %v1861, 0.0
        %v1886 = vmax.f32 %v1862, 0.0
        %v1887 = vmax.f32 %v1863, 0.0
        %v1888 = vmax.f32 %v1864, 0.0
        %v1889 = vmax.f32 %v1865, 0.0
        %1890 = vst [vmem:[%s232] sm:$0xff] %v1866
        %1891 = vst [vmem:[%s232 + $0x8] sm:$0xff] %v1867
        %1892 = vst [vmem:[%s232 + $0x10] sm:$0xff] %v1868
        %1893 = vst [vmem:[%s232 + $0x18] sm:$0xff] %v1869
        %1894 = vst [vmem:[%s232 + $0x20] sm:$0xff] %v1870
        %1895 = vst [vmem:[%s232 + $0x28] sm:$0xff] %v1871
        %1896 = vst [vmem:[%s232 + $0x30] sm:$0xff] %v1872
        %1897 = vst [vmem:[%s232 + $0x38] sm:$0xff] %v1873
        %1898 = vst [vmem:[%s232 + $0x40] sm:$0xff] %v1874
        %1899 = vst [vmem:[%s232 + $0x48] sm:$0xff] %v1875
        %1900 = vst [vmem:[%s232 + $0x50] sm:$0xff] %v1876
        %1901 = vst [vmem:[%s232 + $0x58] sm:$0xff] %v1877
        %1902 = vst [vmem:[%s232 + $0x60] sm:$0xff] %v1878
        %1903 = vst [vmem:[%s232 + $0x68] sm:$0xff] %v1879
        %1904 = vst [vmem:[%s232 + $0x70] sm:$0xff] %v1880
        %1905 = vst [vmem:[%s232 + $0x78] sm:$0xff] %v1881
        %1906 = vst [vmem:[%s232 + $0x80] sm:$0xff] %v1882
        %1907 = vst [vmem:[%s232 + $0x88] sm:$0xff] %v1883
        %1908 = vst [vmem:[%s232 + $0x90] sm:$0xff] %v1884
        %1909 = vst [vmem:[%s232 + $0x98] sm:$0xff] %v1885
        %1910 = vst [vmem:[%s232 + $0xa0] sm:$0xff] %v1886
        %1911 = vst [vmem:[%s232 + $0xa8] sm:$0xff] %v1887
        %1912 = vst [vmem:[%s232 + $0xb0] sm:$0xff] %v1888
        %1913 = vst [vmem:[%s232 + $0xb8] sm:$0xff] %v1889
        %s1914 = sand.u32 %s126, 1
        %s1915 = scalar_lea.sflag [#allocation3], %s1914
        %s1916 = sand.u32 %s126, 1
        %s1917 = smul.addr %s1916, 192
        %s1918 = scalar_lea.vmem [#allocation5], %s1917
        // Predicated region
        $region41: #{_lambda_.11} parent=35 // pred_check
          %p1919 = pneg %p136
        $region42: #{_lambda_.11} parent=35 // pred_check_branch
          %1921 = sbr.rel (%p1919) target = $region44
        $region43: #{_lambda_.11} parent=35 // pred_region
          %s1923 = ssub.s32 3072, 3072
          %1924 = vsyncadd %s1915, %s1923
          %s1925 = smul.addr %s19, 24
          %s1926 = smul.addr %s1925, 128
          %s1927 = scalar_lea.hbm %s4, %s1926
          %s1928 = sshll.u32 %s1918, 4
          %s1929 = int_to_ptr.vmem [resolvable:$true] %s1928
          %1934 = dma.vmem_to_hbm [thread:$0]  %s1929, 3072, %s1927, %s1915, 384, 384, 24
        $region44: #{_lambda_.11} parent=35 // pred_fallthru
          _
      $region36: #{_lambda_.11} parent=5 // pred_fallthru
        _
      %p1935 = scmp.le.s32.totalorder 2, %s14
      // Predicated region
      $region45: #{_lambda_.11} parent=5 // pred_check
        %p1936 = pneg %p1935
      $region46: #{_lambda_.11} parent=5 // pred_check_branch
        %1938 = sbr.rel (%p1936) target = $region48
      $region47: #{_lambda_.11} parent=5 // pred_region
        %s1939 = ssub.s32 %s14, 2
        // Predicated region
        $region49: #{_lambda_.11} parent=47 // pred_check
          %p1940 = pneg %p142
        $region50: #{_lambda_.11} parent=47 // pred_check_branch
          %1942 = sbr.rel (%p1940) target = $region52
        $region51: #{_lambda_.11} parent=47 // pred_region
          %s1943 = sand.u32 %s127, 1
          %s1944 = scalar_lea.sflag [#allocation3], %s1943
          %s1945 = sand.u32 %s127, 1
          %s1946 = smul.addr %s1945, 192
          %s1947 = scalar_lea.vmem [#allocation5], %s1946
          %1948 = dma.done %s1944, 3072
        $region52: #{_lambda_.11} parent=47 // pred_fallthru
          _
      $region48: #{_lambda_.11} parent=5 // pred_fallthru
        _
    $region6: #{_lambda_.11} parent=1 // loop_footer
      %s18 = sadd.s32 1, %s14
    $region7: #{_lambda_.11} parent=1 // loop_footer_branch
      %13 = sbr.rel target = $region3
    $region8: #{_lambda_.11} parent=1 // loop_exit
      _
    %1949 = vsyncpa [#allocation3], 1
    %s1950 = scalar_lea.sflag [#allocation3], 1
    %1951 = vsyncpa %s1950, 1
    %1952 = vsyncpa [#allocation4], 1
    %s1953 = scalar_lea.sflag [#allocation4], 1
    %1954 = vsyncpa %s1953, 1

</llo_original>
